<compile_context>
chip_gen: v7x
topology: tpu7x:2x2x1
jax: 0.10.0
libtpu: 0.0.40
codegen_flags: <defaults>
</compile_context>

<pallas_src>
import functools

import jax
import jax.numpy as jnp
from jax.experimental import pallas as pl
from jax.experimental.pallas import tpu as pltpu


# ----------------- the single fused kernel -----------------
def _fused_kernel(
    # inputs
    xpad_ref,                    # (Lp*B, Cin)  f32  time-major flat, zero-padded in time
    convw_ref,                   # (K*Cin, Cout) bf16
    convb_ref,                   # (1, Cout)     f32
    bnsx_ref, bnhx_ref,          # (1, Cin)      f32  BN scale/shift for the x channels
    bnsc_ref, bnhc_ref,          # (1, Cout)     f32  BN scale/shift for the conv channels
    w1x_ref,                     # (2, Cin, 4H)  bf16 layer-1 W_ih rows for x channels
    w1c_ref,                     # (2, Cout, 4H) bf16 layer-1 W_ih rows for conv channels
    w1h_ref,                     # (2, H, 4H)    bf16 layer-1 W_hh
    b1_ref,                      # (2, 1, 4H)    f32  layer-1 b_ih + b_hh
    w2hf_ref,                    # (2, H, 4H)    bf16 layer-2 W_ih rows for fwd-half input
    w2hb_ref,                    # (2, H, 4H)    bf16 layer-2 W_ih rows for bwd-half input
    w2h_ref,                     # (2, H, 4H)    bf16 layer-2 W_hh
    b2_ref,                      # (2, 1, 4H)    f32
    fc1wf_ref,                   # (W, H, hid1)  bf16 fc1 rows for fwd hidden per window pos
    fc1wb_ref,                   # (W, H, hid1)  bf16 fc1 rows for bwd hidden per window pos
    fc1b_ref,                    # (1, hid1)     f32
    fc2w_ref,                    # (hid1, n_out) bf16
    fc2b_ref,                    # (1, n_out)    f32
    # output
    out_ref,                     # (B, n_out)    f32
    # scratch (all flat time-major: row = t*B + b)
    gx1f, gx1b,                  # (L*B, 4H) f32 precomputed input gates, layer 1
    h1f, h1b,                    # (L*B, H)  f32 layer-1 hidden histories
    gx2f, gx2b,                  # (L*B, 4H) f32 precomputed input gates, layer 2
    h2f, h2b,                    # (L*B, H)  f32 layer-2 hidden histories
    *, L, B, H, K, pad, W, w_lo,
):
    f32 = jnp.float32

    def bdot(a, b):              # bf16 MXU matmul with f32 accumulation
        return jnp.dot(a.astype(jnp.bfloat16), b, preferred_element_type=f32)

    # ---------- Conv1d (im2col -> one MXU matmul) + ReLU ----------
    cols = jnp.concatenate(
        [xpad_ref[k * B:(k + L) * B, :] for k in range(K)], axis=1)       # (L*B, K*Cin)
    conv = jnp.maximum(bdot(cols, convw_ref[...]) + convb_ref[...], 0.0)  # (L*B, Cout)

    # ---------- cat((x, conv)) + BatchNorm (eval, folded) -- channel groups kept split ----------
    x_tm = xpad_ref[pad * B:(pad + L) * B, :]                             # (L*B, Cin)
    x_bn = x_tm * bnsx_ref[...] + bnhx_ref[...]
    c_bn = conv * bnsc_ref[...] + bnhc_ref[...]

    # ---------- bidirectional LSTM machinery ----------
    def cell(gates, c):
        sg = jax.nn.sigmoid(gates)        # one EUP pass over the packed (B, 4H) gates
        th = jnp.tanh(gates)              # one EUP pass
        i, f, o = sg[:, 0:H], sg[:, H:2 * H], sg[:, 3 * H:4 * H]
        g = th[:, 2 * H:3 * H]
        c_new = f * c + i * g
        return o * jnp.tanh(c_new), c_new

    def run_layer(gxf_ref, gxb_ref, whf, whb, hf_out, hb_out):
        # Both directions advanced each step; fully unrolled (L static, offsets static)
        # so the LLO scheduler can interleave the two independent matmul/EUP chains.
        hf = jnp.zeros((B, H), f32)
        cf = jnp.zeros((B, H), f32)
        hb = jnp.zeros((B, H), f32)
        cb = jnp.zeros((B, H), f32)
        for t in range(L):
            tt = L - 1 - t
            gf = gxf_ref[t * B:(t + 1) * B, :] + bdot(hf, whf)
            gb = gxb_ref[tt * B:(tt + 1) * B, :] + bdot(hb, whb)
            hf, cf = cell(gf, cf)
            hb, cb = cell(gb, cb)
            hf_out[t * B:(t + 1) * B, :] = hf
            hb_out[tt * B:(tt + 1) * B, :] = hb

    # ---------- LSTM layer 1 (input projections hoisted out of the recurrence) ----------
    gx1f[...] = bdot(x_bn, w1x_ref[0]) + bdot(c_bn, w1c_ref[0]) + b1_ref[0]
    gx1b[...] = bdot(x_bn, w1x_ref[1]) + bdot(c_bn, w1c_ref[1]) + b1_ref[1]
    run_layer(gx1f, gx1b, w1h_ref[0], w1h_ref[1], h1f, h1b)

    # ---------- LSTM layer 2 ----------
    h1f_all = h1f[...]
    h1b_all = h1b[...]
    gx2f[...] = bdot(h1f_all, w2hf_ref[0]) + bdot(h1b_all, w2hb_ref[0]) + b2_ref[0]
    gx2b[...] = bdot(h1f_all, w2hf_ref[1]) + bdot(h1b_all, w2hb_ref[1]) + b2_ref[1]
    run_layer(gx2f, gx2b, w2h_ref[0], w2h_ref[1], h2f, h2b)

    # ---------- center window + Linear -> ReLU -> Linear -> Sigmoid (fused) ----------
    hpre = jnp.zeros((B, fc1b_ref.shape[1]), f32)
    for wi in range(W):                          # static unroll; W = 2*aa_window + 1
        t = w_lo + wi
        hpre = hpre + bdot(h2f[t * B:(t + 1) * B, :], fc1wf_ref[wi])
        hpre = hpre + bdot(h2b[t * B:(t + 1) * B, :], fc1wb_ref[wi])
    hid = jnp.maximum(hpre + fc1b_ref[...], 0.0)
    out_ref[...] = jax.nn.sigmoid(bdot(hid, fc2w_ref[...]) + fc2b_ref[...])


# ----------------- wrapper: weight re-layout (pure XLA glue) + one pallas_call -----------------
@functools.partial(jax.jit, static_argnames=("aa_window", "padding_1"))
def cnn1_rnn_ffnn_forward(x, params, *, aa_window, padding_1):
    B, L, Cin = x.shape
    K = 2 * padding_1 + 1
    Cout = params["conv_w"].shape[2]
    H = params["l1_f"][1].shape[0]
    hid1 = params["fc1_w"].shape[1]
    n_out = params["fc2_w"].shape[1]
    W = 2 * aa_window + 1
    w_lo = L // 2 - aa_window
    Lp = L + 2 * padding_1
    bf16 = jnp.bfloat16

    # time-major flattened input (row = t*B + b), zero-padded along time for "same" conv
    xpad = jnp.pad(jnp.transpose(x, (1, 0, 2)),
                   ((padding_1, padding_1), (0, 0), (0, 0))).reshape(Lp * B, Cin)

    convw = params["conv_w"].reshape(K * Cin, Cout).astype(bf16)   # rows ordered (k, ci)
    convb = params["conv_b"]

    bn_s, bn_h = params["bn_scale"], params["bn_shift"]
    bnsx, bnhx = bn_s[:, :Cin], bn_h[:, :Cin]
    bnsc, bnhc = bn_s[:, Cin:], bn_h[:, Cin:]

    stack = lambda a, b: jnp.stack([a, b], axis=0)                 # dir 0 = fwd, 1 = bwd

    w1f_i, w1f_h, b1f = params["l1_f"]
    w1b_i, w1b_h, b1b = params["l1_b"]
    w1x = stack(w1f_i[:Cin], w1b_i[:Cin]).astype(bf16)             # (2, Cin, 4H)
    w1c = stack(w1f_i[Cin:], w1b_i[Cin:]).astype(bf16)             # (2, Cout, 4H)
    w1h = stack(w1f_h, w1b_h).astype(bf16)                         # (2, H, 4H)
    b1 = stack(b1f, b1b)                                           # (2, 1, 4H)

    w2f_i, w2f_h, b2f = params["l2_f"]
    w2b_i, w2b_h, b2b = params["l2_b"]
    w2hf = stack(w2f_i[:H], w2b_i[:H]).astype(bf16)                # (2, H, 4H)
    w2hb = stack(w2f_i[H:], w2b_i[H:]).astype(bf16)                # (2, H, 4H)
    w2h = stack(w2f_h, w2b_h).astype(bf16)                         # (2, H, 4H)
    b2 = stack(b2f, b2b)                                           # (2, 1, 4H)

    # fc1 rows are ordered (window_pos, direction, hidden) by PyTorch's x[:, i:j].flatten(1)
    fc1 = params["fc1_w"].reshape(W, 2, H, hid1)
    fc1wf = fc1[:, 0].astype(bf16)                                 # (W, H, hid1)
    fc1wb = fc1[:, 1].astype(bf16)                                 # (W, H, hid1)
    fc1b = params["fc1_b"]
    fc2w = params["fc2_w"].astype(bf16)
    fc2b = params["fc2_b"]

    kernel = functools.partial(_fused_kernel, L=L, B=B, H=H, K=K,
                               pad=padding_1, W=W, w_lo=w_lo)
    vmem = pl.BlockSpec(memory_space=pltpu.MemorySpace.VMEM)

    return pl.pallas_call(
        kernel,
        out_shape=jax.ShapeDtypeStruct((B, n_out), jnp.float32),
        in_specs=[vmem] * 20,
        out_specs=vmem,
        scratch_shapes=[
            pltpu.VMEM((L * B, 4 * H), jnp.float32),   # gx1f
            pltpu.VMEM((L * B, 4 * H), jnp.float32),   # gx1b
            pltpu.VMEM((L * B, H), jnp.float32),       # h1f
            pltpu.VMEM((L * B, H), jnp.float32),       # h1b
            pltpu.VMEM((L * B, 4 * H), jnp.float32),   # gx2f
            pltpu.VMEM((L * B, 4 * H), jnp.float32),   # gx2b
            pltpu.VMEM((L * B, H), jnp.float32),       # h2f
            pltpu.VMEM((L * B, H), jnp.float32),       # h2b
        ],
    )(xpad, convw, convb, bnsx, bnhx, bnsc, bnhc,
      w1x, w1c, w1h, b1, w2hf, w2hb, w2h, b2,
      fc1wf, fc1wb, fc1b, fc2w, fc2b)


# ----------------- Parameters (deterministic synthetic init) -----------------
def init_params(key, n_input, out_channels, padding_1, hidden_lstm,
                hidden_linear_1, aa_window, n_output):
    K = 2 * padding_1 + 1
    C = n_input + out_channels
    H = hidden_lstm
    F = hidden_lstm * 2 * (aa_window * 2 + 1)
    keys = iter(jax.random.split(key, 32))

    def rnd(shape, s=0.1):
        return jax.random.normal(next(keys), shape, jnp.float32) * s

    p = {}
    p["conv_w"] = rnd((K, n_input, out_channels))      # Conv1d weight, layout (k, Cin, Cout)
    p["conv_b"] = rnd((1, out_channels))
    # BatchNorm1d eval-mode affine folded into scale/shift per channel
    gamma = 1.0 + rnd((C,))
    beta = rnd((C,))
    rmean = rnd((C,))
    rvar = 1.0 + jnp.abs(rnd((C,)))
    eps = 1e-5
    scale = gamma / jnp.sqrt(rvar + eps)
    p["bn_scale"] = scale[None, :]
    p["bn_shift"] = (beta - rmean * scale)[None, :]

    # 2-layer bidirectional LSTM; biases are b_ih + b_hh combined (equivalent math)
    def lstm_dir(D):
        return rnd((D, 4 * H)), rnd((H, 4 * H)), rnd((1, 4 * H))

    p["l1_f"] = lstm_dir(C)
    p["l1_b"] = lstm_dir(C)
    p["l2_f"] = lstm_dir(2 * H)
    p["l2_b"] = lstm_dir(2 * H)

    p["fc1_w"] = rnd((F, hidden_linear_1))
    p["fc1_b"] = rnd((1, hidden_linear_1))
    p["fc2_w"] = rnd((hidden_linear_1, n_output))
    p["fc2_b"] = rnd((1, n_output))
    return p


if __name__ == "__main__":
    # small, module-consistent shapes
    aa_window, n_input, hidden_lstm, hidden_linear_1 = 2, 4, 16, 32
    padding_1, out_channels, n_output = 6, 8, 1
    B, L = 2, 16

    key = jax.random.PRNGKey(0)
    kx, kp = jax.random.split(key)
    x = jax.random.normal(kx, (B, L, n_input), jnp.float32)
    params = init_params(kp, n_input, out_channels, padding_1, hidden_lstm,
                         hidden_linear_1, aa_window, n_output)

    out = cnn1_rnn_ffnn_forward(x, params, aa_window=aa_window, padding_1=padding_1)
    out = jax.block_until_ready(out)
    assert out.shape == (B, n_output), out.shape
    assert bool(jnp.all(jnp.isfinite(out)))
    assert bool(jnp.all((out >= 0.0) & (out <= 1.0)))   # sigmoid output range
    print("KERNEL_OK")
</pallas_src>

<mosaic_0001>
module attributes {stable_mosaic.version = 11 : i64} {
  func.func @_fused_kernel(%arg0: memref<56x4xf32, #tpu.memory_space<vmem>>, %arg1: memref<52x8xbf16, #tpu.memory_space<vmem>>, %arg2: memref<1x8xf32, #tpu.memory_space<vmem>>, %arg3: memref<1x4xf32, #tpu.memory_space<vmem>>, %arg4: memref<1x4xf32, #tpu.memory_space<vmem>>, %arg5: memref<1x8xf32, #tpu.memory_space<vmem>>, %arg6: memref<1x8xf32, #tpu.memory_space<vmem>>, %arg7: memref<2x4x64xbf16, #tpu.memory_space<vmem>>, %arg8: memref<2x8x64xbf16, #tpu.memory_space<vmem>>, %arg9: memref<2x16x64xbf16, #tpu.memory_space<vmem>>, %arg10: memref<2x1x64xf32, #tpu.memory_space<vmem>>, %arg11: memref<2x16x64xbf16, #tpu.memory_space<vmem>>, %arg12: memref<2x16x64xbf16, #tpu.memory_space<vmem>>, %arg13: memref<2x16x64xbf16, #tpu.memory_space<vmem>>, %arg14: memref<2x1x64xf32, #tpu.memory_space<vmem>>, %arg15: memref<5x16x32xbf16, #tpu.memory_space<vmem>>, %arg16: memref<5x16x32xbf16, #tpu.memory_space<vmem>>, %arg17: memref<1x32xf32, #tpu.memory_space<vmem>>, %arg18: memref<32x1xbf16, #tpu.memory_space<vmem>>, %arg19: memref<1x1xf32, #tpu.memory_space<vmem>>, %arg20: memref<2x1xf32, #tpu.memory_space<vmem>>, %arg21: memref<32x64xf32, #tpu.memory_space<vmem>>, %arg22: memref<32x64xf32, #tpu.memory_space<vmem>>, %arg23: memref<32x16xf32, #tpu.memory_space<vmem>>, %arg24: memref<32x16xf32, #tpu.memory_space<vmem>>, %arg25: memref<32x64xf32, #tpu.memory_space<vmem>>, %arg26: memref<32x64xf32, #tpu.memory_space<vmem>>, %arg27: memref<32x16xf32, #tpu.memory_space<vmem>>, %arg28: memref<32x16xf32, #tpu.memory_space<vmem>>) attributes {dimension_semantics = [], scalar_prefetch = 0 : i64, scratch_operands = 8 : i64, tpu.core_type = #tpu.core_type<tc>} {
    %c0 = arith.constant 0 : index
    %c0_0 = arith.constant 0 : index
    %0 = vector.load %arg0[%c0, %c0_0] : memref<56x4xf32, #tpu.memory_space<vmem>>, vector<32x4xf32>
    %c2 = arith.constant 2 : index
    %c0_1 = arith.constant 0 : index
    %1 = vector.load %arg0[%c2, %c0_1] : memref<56x4xf32, #tpu.memory_space<vmem>>, vector<32x4xf32>
    %c4 = arith.constant 4 : index
    %c0_2 = arith.constant 0 : index
    %2 = vector.load %arg0[%c4, %c0_2] : memref<56x4xf32, #tpu.memory_space<vmem>>, vector<32x4xf32>
    %c6 = arith.constant 6 : index
    %c0_3 = arith.constant 0 : index
    %3 = vector.load %arg0[%c6, %c0_3] : memref<56x4xf32, #tpu.memory_space<vmem>>, vector<32x4xf32>
    %c8 = arith.constant 8 : index
    %c0_4 = arith.constant 0 : index
    %4 = vector.load %arg0[%c8, %c0_4] : memref<56x4xf32, #tpu.memory_space<vmem>>, vector<32x4xf32>
    %c10 = arith.constant 10 : index
    %c0_5 = arith.constant 0 : index
    %5 = vector.load %arg0[%c10, %c0_5] : memref<56x4xf32, #tpu.memory_space<vmem>>, vector<32x4xf32>
    %c12 = arith.constant 12 : index
    %c0_6 = arith.constant 0 : index
    %6 = vector.load %arg0[%c12, %c0_6] : memref<56x4xf32, #tpu.memory_space<vmem>>, vector<32x4xf32>
    %c14 = arith.constant 14 : index
    %c0_7 = arith.constant 0 : index
    %7 = vector.load %arg0[%c14, %c0_7] : memref<56x4xf32, #tpu.memory_space<vmem>>, vector<32x4xf32>
    %c16 = arith.constant 16 : index
    %c0_8 = arith.constant 0 : index
    %8 = vector.load %arg0[%c16, %c0_8] : memref<56x4xf32, #tpu.memory_space<vmem>>, vector<32x4xf32>
    %c18 = arith.constant 18 : index
    %c0_9 = arith.constant 0 : index
    %9 = vector.load %arg0[%c18, %c0_9] : memref<56x4xf32, #tpu.memory_space<vmem>>, vector<32x4xf32>
    %c20 = arith.constant 20 : index
    %c0_10 = arith.constant 0 : index
    %10 = vector.load %arg0[%c20, %c0_10] : memref<56x4xf32, #tpu.memory_space<vmem>>, vector<32x4xf32>
    %c22 = arith.constant 22 : index
    %c0_11 = arith.constant 0 : index
    %11 = vector.load %arg0[%c22, %c0_11] : memref<56x4xf32, #tpu.memory_space<vmem>>, vector<32x4xf32>
    %c24 = arith.constant 24 : index
    %c0_12 = arith.constant 0 : index
    %12 = vector.load %arg0[%c24, %c0_12] : memref<56x4xf32, #tpu.memory_space<vmem>>, vector<32x4xf32>
    %13 = tpu.concatenate %0, %1, %2, %3, %4, %5, %6, %7, %8, %9, %10, %11, %12 in 1 : vector<32x4xf32>, vector<32x4xf32>, vector<32x4xf32>, vector<32x4xf32>, vector<32x4xf32>, vector<32x4xf32>, vector<32x4xf32>, vector<32x4xf32>, vector<32x4xf32>, vector<32x4xf32>, vector<32x4xf32>, vector<32x4xf32>, vector<32x4xf32> -> vector<32x52xf32>
    %c0_13 = arith.constant 0 : index
    %c0_14 = arith.constant 0 : index
    %14 = vector.load %arg1[%c0_13, %c0_14] : memref<52x8xbf16, #tpu.memory_space<vmem>>, vector<52x8xbf16>
    %15 = arith.truncf %13 : vector<32x52xf32> to vector<32x52xbf16>
    %cst = arith.constant dense<0.000000e+00> : vector<32x8xf32>
    %16 = tpu.matmul %15, %14, %cst {dimension_numbers = #tpu.dot_dimension_numbers<[1], [0], [0], [1], [0, 0, 1, 1], [], []>} : vector<32x52xbf16>, vector<52x8xbf16>, vector<32x8xf32> -> vector<32x8xf32>
    %c0_15 = arith.constant 0 : index
    %c0_16 = arith.constant 0 : index
    %17 = vector.load %arg2[%c0_15, %c0_16] : memref<1x8xf32, #tpu.memory_space<vmem>>, vector<1x8xf32>
    %18 = vector.broadcast %17 : vector<1x8xf32> to vector<32x8xf32>
    %19 = arith.addf %16, %18 : vector<32x8xf32>
    %cst_17 = arith.constant 0.000000e+00 : f32
    %20 = vector.broadcast %cst_17 : f32 to vector<32x8xf32>
    %21 = arith.maximumf %19, %20 : vector<32x8xf32>
    %c12_18 = arith.constant 12 : index
    %c0_19 = arith.constant 0 : index
    %22 = vector.load %arg0[%c12_18, %c0_19] : memref<56x4xf32, #tpu.memory_space<vmem>>, vector<32x4xf32>
    %c0_20 = arith.constant 0 : index
    %c0_21 = arith.constant 0 : index
    %23 = vector.load %arg3[%c0_20, %c0_21] : memref<1x4xf32, #tpu.memory_space<vmem>>, vector<1x4xf32>
    %24 = vector.broadcast %23 : vector<1x4xf32> to vector<32x4xf32>
    %25 = arith.mulf %22, %24 : vector<32x4xf32>
    %c0_22 = arith.constant 0 : index
    %c0_23 = arith.constant 0 : index
    %26 = vector.load %arg4[%c0_22, %c0_23] : memref<1x4xf32, #tpu.memory_space<vmem>>, vector<1x4xf32>
    %27 = vector.broadcast %26 : vector<1x4xf32> to vector<32x4xf32>
    %28 = arith.addf %25, %27 : vector<32x4xf32>
    %c0_24 = arith.constant 0 : index
    %c0_25 = arith.constant 0 : index
    %29 = vector.load %arg5[%c0_24, %c0_25] : memref<1x8xf32, #tpu.memory_space<vmem>>, vector<1x8xf32>
    %30 = vector.broadcast %29 : vector<1x8xf32> to vector<32x8xf32>
    %31 = arith.mulf %21, %30 : vector<32x8xf32>
    %c0_26 = arith.constant 0 : index
    %c0_27 = arith.constant 0 : index
    %32 = vector.load %arg6[%c0_26, %c0_27] : memref<1x8xf32, #tpu.memory_space<vmem>>, vector<1x8xf32>
    %33 = vector.broadcast %32 : vector<1x8xf32> to vector<32x8xf32>
    %34 = arith.addf %31, %33 : vector<32x8xf32>
    %c0_28 = arith.constant 0 : index
    %c0_29 = arith.constant 0 : index
    %c0_30 = arith.constant 0 : index
    %35 = vector.load %arg7[%c0_28, %c0_29, %c0_30] : memref<2x4x64xbf16, #tpu.memory_space<vmem>>, vector<1x4x64xbf16>
    %36 = vector.shape_cast %35 : vector<1x4x64xbf16> to vector<4x64xbf16>
    %37 = arith.truncf %28 : vector<32x4xf32> to vector<32x4xbf16>
    %cst_31 = arith.constant dense<0.000000e+00> : vector<32x64xf32>
    %38 = tpu.matmul %37, %36, %cst_31 {dimension_numbers = #tpu.dot_dimension_numbers<[1], [0], [0], [1], [0, 0, 1, 1], [], []>} : vector<32x4xbf16>, vector<4x64xbf16>, vector<32x64xf32> -> vector<32x64xf32>
    %c0_32 = arith.constant 0 : index
    %c0_33 = arith.constant 0 : index
    %c0_34 = arith.constant 0 : index
    %39 = vector.load %arg8[%c0_32, %c0_33, %c0_34] : memref<2x8x64xbf16, #tpu.memory_space<vmem>>, vector<1x8x64xbf16>
    %40 = vector.shape_cast %39 : vector<1x8x64xbf16> to vector<8x64xbf16>
    %41 = arith.truncf %34 : vector<32x8xf32> to vector<32x8xbf16>
    %cst_35 = arith.constant dense<0.000000e+00> : vector<32x64xf32>
    %42 = tpu.matmul %41, %40, %cst_35 {dimension_numbers = #tpu.dot_dimension_numbers<[1], [0], [0], [1], [0, 0, 1, 1], [], []>} : vector<32x8xbf16>, vector<8x64xbf16>, vector<32x64xf32> -> vector<32x64xf32>
    %43 = arith.addf %38, %42 : vector<32x64xf32>
    %c0_36 = arith.constant 0 : index
    %c0_37 = arith.constant 0 : index
    %c0_38 = arith.constant 0 : index
    %44 = vector.load %arg10[%c0_36, %c0_37, %c0_38] : memref<2x1x64xf32, #tpu.memory_space<vmem>>, vector<1x1x64xf32>
    %45 = vector.shape_cast %44 : vector<1x1x64xf32> to vector<1x64xf32>
    %46 = vector.broadcast %45 : vector<1x64xf32> to vector<32x64xf32>
    %47 = arith.addf %43, %46 : vector<32x64xf32>
    %c0_39 = arith.constant 0 : index
    %c0_40 = arith.constant 0 : index
    %48 = vector.load %arg21[%c0_39, %c0_40] : memref<32x64xf32, #tpu.memory_space<vmem>>, vector<32x64xf32>
    tpu.vector_store %arg21[%c0_39, %c0_40], %47 {strides = array<i32>} : memref<32x64xf32, #tpu.memory_space<vmem>>, vector<32x64xf32>,
    %c1 = arith.constant 1 : index
    %c0_41 = arith.constant 0 : index
    %c0_42 = arith.constant 0 : index
    %49 = vector.load %arg7[%c1, %c0_41, %c0_42] : memref<2x4x64xbf16, #tpu.memory_space<vmem>>, vector<1x4x64xbf16>
    %50 = vector.shape_cast %49 : vector<1x4x64xbf16> to vector<4x64xbf16>
    %51 = arith.truncf %28 : vector<32x4xf32> to vector<32x4xbf16>
    %cst_43 = arith.constant dense<0.000000e+00> : vector<32x64xf32>
    %52 = tpu.matmul %51, %50, %cst_43 {dimension_numbers = #tpu.dot_dimension_numbers<[1], [0], [0], [1], [0, 0, 1, 1], [], []>} : vector<32x4xbf16>, vector<4x64xbf16>, vector<32x64xf32> -> vector<32x64xf32>
    %c1_44 = arith.constant 1 : index
    %c0_45 = arith.constant 0 : index
    %c0_46 = arith.constant 0 : index
    %53 = vector.load %arg8[%c1_44, %c0_45, %c0_46] : memref<2x8x64xbf16, #tpu.memory_space<vmem>>, vector<1x8x64xbf16>
    %54 = vector.shape_cast %53 : vector<1x8x64xbf16> to vector<8x64xbf16>
    %55 = arith.truncf %34 : vector<32x8xf32> to vector<32x8xbf16>
    %cst_47 = arith.constant dense<0.000000e+00> : vector<32x64xf32>
    %56 = tpu.matmul %55, %54, %cst_47 {dimension_numbers = #tpu.dot_dimension_numbers<[1], [0], [0], [1], [0, 0, 1, 1], [], []>} : vector<32x8xbf16>, vector<8x64xbf16>, vector<32x64xf32> -> vector<32x64xf32>
    %57 = arith.addf %52, %56 : vector<32x64xf32>
    %c1_48 = arith.constant 1 : index
    %c0_49 = arith.constant 0 : index
    %c0_50 = arith.constant 0 : index
    %58 = vector.load %arg10[%c1_48, %c0_49, %c0_50] : memref<2x1x64xf32, #tpu.memory_space<vmem>>, vector<1x1x64xf32>
    %59 = vector.shape_cast %58 : vector<1x1x64xf32> to vector<1x64xf32>
    %60 = vector.broadcast %59 : vector<1x64xf32> to vector<32x64xf32>
    %61 = arith.addf %57, %60 : vector<32x64xf32>
    %c0_51 = arith.constant 0 : index
    %c0_52 = arith.constant 0 : index
    %62 = vector.load %arg22[%c0_51, %c0_52] : memref<32x64xf32, #tpu.memory_space<vmem>>, vector<32x64xf32>
    tpu.vector_store %arg22[%c0_51, %c0_52], %61 {strides = array<i32>} : memref<32x64xf32, #tpu.memory_space<vmem>>, vector<32x64xf32>,
    %c0_53 = arith.constant 0 : index
    %c0_54 = arith.constant 0 : index
    %c0_55 = arith.constant 0 : index
    %63 = vector.load %arg9[%c0_53, %c0_54, %c0_55] : memref<2x16x64xbf16, #tpu.memory_space<vmem>>, vector<1x16x64xbf16>
    %64 = vector.shape_cast %63 : vector<1x16x64xbf16> to vector<16x64xbf16>
    %c1_56 = arith.constant 1 : index
    %c0_57 = arith.constant 0 : index
    %c0_58 = arith.constant 0 : index
    %65 = vector.load %arg9[%c1_56, %c0_57, %c0_58] : memref<2x16x64xbf16, #tpu.memory_space<vmem>>, vector<1x16x64xbf16>
    %66 = vector.shape_cast %65 : vector<1x16x64xbf16> to vector<16x64xbf16>
    %cst_59 = arith.constant 0.000000e+00 : f32
    %67 = vector.broadcast %cst_59 : f32 to vector<2x16xf32>
    %cst_60 = arith.constant 0.000000e+00 : f32
    %68 = vector.broadcast %cst_60 : f32 to vector<2x16xf32>
    %cst_61 = arith.constant 0.000000e+00 : f32
    %69 = vector.broadcast %cst_61 : f32 to vector<2x16xf32>
    %cst_62 = arith.constant 0.000000e+00 : f32
    %70 = vector.broadcast %cst_62 : f32 to vector<2x16xf32>
    %c0_63 = arith.constant 0 : index
    %c0_64 = arith.constant 0 : index
    %71 = vector.load %arg21[%c0_63, %c0_64] : memref<32x64xf32, #tpu.memory_space<vmem>>, vector<2x64xf32>
    %72 = arith.truncf %67 : vector<2x16xf32> to vector<2x16xbf16>
    %cst_65 = arith.constant dense<0.000000e+00> : vector<2x64xf32>
    %73 = tpu.matmul %72, %64, %cst_65 {dimension_numbers = #tpu.dot_dimension_numbers<[1], [0], [0], [1], [0, 0, 1, 1], [], []>} : vector<2x16xbf16>, vector<16x64xbf16>, vector<2x64xf32> -> vector<2x64xf32>
    %74 = arith.addf %71, %73 : vector<2x64xf32>
    %c30 = arith.constant 30 : index
    %c0_66 = arith.constant 0 : index
    %75 = vector.load %arg22[%c30, %c0_66] : memref<32x64xf32, #tpu.memory_space<vmem>>, vector<2x64xf32>
    %76 = arith.truncf %69 : vector<2x16xf32> to vector<2x16xbf16>
    %cst_67 = arith.constant dense<0.000000e+00> : vector<2x64xf32>
    %77 = tpu.matmul %76, %66, %cst_67 {dimension_numbers = #tpu.dot_dimension_numbers<[1], [0], [0], [1], [0, 0, 1, 1], [], []>} : vector<2x16xbf16>, vector<16x64xbf16>, vector<2x64xf32> -> vector<2x64xf32>
    %78 = arith.addf %75, %77 : vector<2x64xf32>
    %79 = arith.negf %74 : vector<2x64xf32>
    %80 = math.exp %79 : vector<2x64xf32>
    %cst_68 = arith.constant 1.000000e+00 : f32
    %81 = vector.broadcast %cst_68 : f32 to vector<2x64xf32>
    %82 = arith.addf %81, %80 : vector<2x64xf32>
    %83 = arith.divf %81, %82 : vector<2x64xf32>
    %84 = math.tanh %74 : vector<2x64xf32>
    %85 = vector.extract_strided_slice %83 {offsets = [0, 0], sizes = [2, 16], strides = [1, 1]} : vector<2x64xf32> to vector<2x16xf32>
    %86 = vector.extract_strided_slice %83 {offsets = [0, 16], sizes = [2, 16], strides = [1, 1]} : vector<2x64xf32> to vector<2x16xf32>
    %87 = vector.extract_strided_slice %83 {offsets = [0, 48], sizes = [2, 16], strides = [1, 1]} : vector<2x64xf32> to vector<2x16xf32>
    %88 = vector.extract_strided_slice %84 {offsets = [0, 32], sizes = [2, 16], strides = [1, 1]} : vector<2x64xf32> to vector<2x16xf32>
    %89 = arith.mulf %86, %68 : vector<2x16xf32>
    %90 = arith.mulf %85, %88 : vector<2x16xf32>
    %91 = arith.addf %89, %90 : vector<2x16xf32>
    %92 = math.tanh %91 : vector<2x16xf32>
    %93 = arith.mulf %87, %92 : vector<2x16xf32>
    %94 = arith.negf %78 : vector<2x64xf32>
    %95 = math.exp %94 : vector<2x64xf32>
    %cst_69 = arith.constant 1.000000e+00 : f32
    %96 = vector.broadcast %cst_69 : f32 to vector<2x64xf32>
    %97 = arith.addf %96, %95 : vector<2x64xf32>
    %98 = arith.divf %96, %97 : vector<2x64xf32>
    %99 = math.tanh %78 : vector<2x64xf32>
    %100 = vector.extract_strided_slice %98 {offsets = [0, 0], sizes = [2, 16], strides = [1, 1]} : vector<2x64xf32> to vector<2x16xf32>
    %101 = vector.extract_strided_slice %98 {offsets = [0, 16], sizes = [2, 16], strides = [1, 1]} : vector<2x64xf32> to vector<2x16xf32>
    %102 = vector.extract_strided_slice %98 {offsets = [0, 48], sizes = [2, 16], strides = [1, 1]} : vector<2x64xf32> to vector<2x16xf32>
    %103 = vector.extract_strided_slice %99 {offsets = [0, 32], sizes = [2, 16], strides = [1, 1]} : vector<2x64xf32> to vector<2x16xf32>
    %104 = arith.mulf %101, %70 : vector<2x16xf32>
    %105 = arith.mulf %100, %103 : vector<2x16xf32>
    %106 = arith.addf %104, %105 : vector<2x16xf32>
    %107 = math.tanh %106 : vector<2x16xf32>
    %108 = arith.mulf %102, %107 : vector<2x16xf32>
    %c0_70 = arith.constant 0 : index
    %c0_71 = arith.constant 0 : index
    %109 = vector.load %arg23[%c0_70, %c0_71] : memref<32x16xf32, #tpu.memory_space<vmem>>, vector<2x16xf32>
    tpu.vector_store %arg23[%c0_70, %c0_71], %93 {strides = array<i32>} : memref<32x16xf32, #tpu.memory_space<vmem>>, vector<2x16xf32>,
    %c30_72 = arith.constant 30 : index
    %c0_73 = arith.constant 0 : index
    %110 = vector.load %arg24[%c30_72, %c0_73] : memref<32x16xf32, #tpu.memory_space<vmem>>, vector<2x16xf32>
    tpu.vector_store %arg24[%c30_72, %c0_73], %108 {strides = array<i32>} : memref<32x16xf32, #tpu.memory_space<vmem>>, vector<2x16xf32>,
    %c2_74 = arith.constant 2 : index
    %c0_75 = arith.constant 0 : index
    %111 = vector.load %arg21[%c2_74, %c0_75] : memref<32x64xf32, #tpu.memory_space<vmem>>, vector<2x64xf32>
    %112 = arith.truncf %93 : vector<2x16xf32> to vector<2x16xbf16>
    %cst_76 = arith.constant dense<0.000000e+00> : vector<2x64xf32>
    %113 = tpu.matmul %112, %64, %cst_76 {dimension_numbers = #tpu.dot_dimension_numbers<[1], [0], [0], [1], [0, 0, 1, 1], [], []>} : vector<2x16xbf16>, vector<16x64xbf16>, vector<2x64xf32> -> vector<2x64xf32>
    %114 = arith.addf %111, %113 : vector<2x64xf32>
    %c28 = arith.constant 28 : index
    %c0_77 = arith.constant 0 : index
    %115 = vector.load %arg22[%c28, %c0_77] : memref<32x64xf32, #tpu.memory_space<vmem>>, vector<2x64xf32>
    %116 = arith.truncf %108 : vector<2x16xf32> to vector<2x16xbf16>
    %cst_78 = arith.constant dense<0.000000e+00> : vector<2x64xf32>
    %117 = tpu.matmul %116, %66, %cst_78 {dimension_numbers = #tpu.dot_dimension_numbers<[1], [0], [0], [1], [0, 0, 1, 1], [], []>} : vector<2x16xbf16>, vector<16x64xbf16>, vector<2x64xf32> -> vector<2x64xf32>
    %118 = arith.addf %115, %117 : vector<2x64xf32>
    %119 = arith.negf %114 : vector<2x64xf32>
    %120 = math.exp %119 : vector<2x64xf32>
    %cst_79 = arith.constant 1.000000e+00 : f32
    %121 = vector.broadcast %cst_79 : f32 to vector<2x64xf32>
    %122 = arith.addf %121, %120 : vector<2x64xf32>
    %123 = arith.divf %121, %122 : vector<2x64xf32>
    %124 = math.tanh %114 : vector<2x64xf32>
    %125 = vector.extract_strided_slice %123 {offsets = [0, 0], sizes = [2, 16], strides = [1, 1]} : vector<2x64xf32> to vector<2x16xf32>
    %126 = vector.extract_strided_slice %123 {offsets = [0, 16], sizes = [2, 16], strides = [1, 1]} : vector<2x64xf32> to vector<2x16xf32>
    %127 = vector.extract_strided_slice %123 {offsets = [0, 48], sizes = [2, 16], strides = [1, 1]} : vector<2x64xf32> to vector<2x16xf32>
    %128 = vector.extract_strided_slice %124 {offsets = [0, 32], sizes = [2, 16], strides = [1, 1]} : vector<2x64xf32> to vector<2x16xf32>
    %129 = arith.mulf %126, %91 : vector<2x16xf32>
    %130 = arith.mulf %125, %128 : vector<2x16xf32>
    %131 = arith.addf %129, %130 : vector<2x16xf32>
    %132 = math.tanh %131 : vector<2x16xf32>
    %133 = arith.mulf %127, %132 : vector<2x16xf32>
    %134 = arith.negf %118 : vector<2x64xf32>
    %135 = math.exp %134 : vector<2x64xf32>
    %cst_80 = arith.constant 1.000000e+00 : f32
    %136 = vector.broadcast %cst_80 : f32 to vector<2x64xf32>
    %137 = arith.addf %136, %135 : vector<2x64xf32>
    %138 = arith.divf %136, %137 : vector<2x64xf32>
    %139 = math.tanh %118 : vector<2x64xf32>
    %140 = vector.extract_strided_slice %138 {offsets = [0, 0], sizes = [2, 16], strides = [1, 1]} : vector<2x64xf32> to vector<2x16xf32>
    %141 = vector.extract_strided_slice %138 {offsets = [0, 16], sizes = [2, 16], strides = [1, 1]} : vector<2x64xf32> to vector<2x16xf32>
    %142 = vector.extract_strided_slice %138 {offsets = [0, 48], sizes = [2, 16], strides = [1, 1]} : vector<2x64xf32> to vector<2x16xf32>
    %143 = vector.extract_strided_slice %139 {offsets = [0, 32], sizes = [2, 16], strides = [1, 1]} : vector<2x64xf32> to vector<2x16xf32>
    %144 = arith.mulf %141, %106 : vector<2x16xf32>
    %145 = arith.mulf %140, %143 : vector<2x16xf32>
    %146 = arith.addf %144, %145 : vector<2x16xf32>
    %147 = math.tanh %146 : vector<2x16xf32>
    %148 = arith.mulf %142, %147 : vector<2x16xf32>
    %c2_81 = arith.constant 2 : index
    %c0_82 = arith.constant 0 : index
    %149 = vector.load %arg23[%c2_81, %c0_82] : memref<32x16xf32, #tpu.memory_space<vmem>>, vector<2x16xf32>
    tpu.vector_store %arg23[%c2_81, %c0_82], %133 {strides = array<i32>} : memref<32x16xf32, #tpu.memory_space<vmem>>, vector<2x16xf32>,
    %c28_83 = arith.constant 28 : index
    %c0_84 = arith.constant 0 : index
    %150 = vector.load %arg24[%c28_83, %c0_84] : memref<32x16xf32, #tpu.memory_space<vmem>>, vector<2x16xf32>
    tpu.vector_store %arg24[%c28_83, %c0_84], %148 {strides = array<i32>} : memref<32x16xf32, #tpu.memory_space<vmem>>, vector<2x16xf32>,
    %c4_85 = arith.constant 4 : index
    %c0_86 = arith.constant 0 : index
    %151 = vector.load %arg21[%c4_85, %c0_86] : memref<32x64xf32, #tpu.memory_space<vmem>>, vector<2x64xf32>
    %152 = arith.truncf %133 : vector<2x16xf32> to vector<2x16xbf16>
    %cst_87 = arith.constant dense<0.000000e+00> : vector<2x64xf32>
    %153 = tpu.matmul %152, %64, %cst_87 {dimension_numbers = #tpu.dot_dimension_numbers<[1], [0], [0], [1], [0, 0, 1, 1], [], []>} : vector<2x16xbf16>, vector<16x64xbf16>, vector<2x64xf32> -> vector<2x64xf32>
    %154 = arith.addf %151, %153 : vector<2x64xf32>
    %c26 = arith.constant 26 : index
    %c0_88 = arith.constant 0 : index
    %155 = vector.load %arg22[%c26, %c0_88] : memref<32x64xf32, #tpu.memory_space<vmem>>, vector<2x64xf32>
    %156 = arith.truncf %148 : vector<2x16xf32> to vector<2x16xbf16>
    %cst_89 = arith.constant dense<0.000000e+00> : vector<2x64xf32>
    %157 = tpu.matmul %156, %66, %cst_89 {dimension_numbers = #tpu.dot_dimension_numbers<[1], [0], [0], [1], [0, 0, 1, 1], [], []>} : vector<2x16xbf16>, vector<16x64xbf16>, vector<2x64xf32> -> vector<2x64xf32>
    %158 = arith.addf %155, %157 : vector<2x64xf32>
    %159 = arith.negf %154 : vector<2x64xf32>
    %160 = math.exp %159 : vector<2x64xf32>
    %cst_90 = arith.constant 1.000000e+00 : f32
    %161 = vector.broadcast %cst_90 : f32 to vector<2x64xf32>
    %162 = arith.addf %161, %160 : vector<2x64xf32>
    %163 = arith.divf %161, %162 : vector<2x64xf32>
    %164 = math.tanh %154 : vector<2x64xf32>
    %165 = vector.extract_strided_slice %163 {offsets = [0, 0], sizes = [2, 16], strides = [1, 1]} : vector<2x64xf32> to vector<2x16xf32>
    %166 = vector.extract_strided_slice %163 {offsets = [0, 16], sizes = [2, 16], strides = [1, 1]} : vector<2x64xf32> to vector<2x16xf32>
    %167 = vector.extract_strided_slice %163 {offsets = [0, 48], sizes = [2, 16], strides = [1, 1]} : vector<2x64xf32> to vector<2x16xf32>
    %168 = vector.extract_strided_slice %164 {offsets = [0, 32], sizes = [2, 16], strides = [1, 1]} : vector<2x64xf32> to vector<2x16xf32>
    %169 = arith.mulf %166, %131 : vector<2x16xf32>
    %170 = arith.mulf %165, %168 : vector<2x16xf32>
    %171 = arith.addf %169, %170 : vector<2x16xf32>
    %172 = math.tanh %171 : vector<2x16xf32>
    %173 = arith.mulf %167, %172 : vector<2x16xf32>
    %174 = arith.negf %158 : vector<2x64xf32>
    %175 = math.exp %174 : vector<2x64xf32>
    %cst_91 = arith.constant 1.000000e+00 : f32
    %176 = vector.broadcast %cst_91 : f32 to vector<2x64xf32>
    %177 = arith.addf %176, %175 : vector<2x64xf32>
    %178 = arith.divf %176, %177 : vector<2x64xf32>
    %179 = math.tanh %158 : vector<2x64xf32>
    %180 = vector.extract_strided_slice %178 {offsets = [0, 0], sizes = [2, 16], strides = [1, 1]} : vector<2x64xf32> to vector<2x16xf32>
    %181 = vector.extract_strided_slice %178 {offsets = [0, 16], sizes = [2, 16], strides = [1, 1]} : vector<2x64xf32> to vector<2x16xf32>
    %182 = vector.extract_strided_slice %178 {offsets = [0, 48], sizes = [2, 16], strides = [1, 1]} : vector<2x64xf32> to vector<2x16xf32>
    %183 = vector.extract_strided_slice %179 {offsets = [0, 32], sizes = [2, 16], strides = [1, 1]} : vector<2x64xf32> to vector<2x16xf32>
    %184 = arith.mulf %181, %146 : vector<2x16xf32>
    %185 = arith.mulf %180, %183 : vector<2x16xf32>
    %186 = arith.addf %184, %185 : vector<2x16xf32>
    %187 = math.tanh %186 : vector<2x16xf32>
    %188 = arith.mulf %182, %187 : vector<2x16xf32>
    %c4_92 = arith.constant 4 : index
    %c0_93 = arith.constant 0 : index
    %189 = vector.load %arg23[%c4_92, %c0_93] : memref<32x16xf32, #tpu.memory_space<vmem>>, vector<2x16xf32>
    tpu.vector_store %arg23[%c4_92, %c0_93], %173 {strides = array<i32>} : memref<32x16xf32, #tpu.memory_space<vmem>>, vector<2x16xf32>,
    %c26_94 = arith.constant 26 : index
    %c0_95 = arith.constant 0 : index
    %190 = vector.load %arg24[%c26_94, %c0_95] : memref<32x16xf32, #tpu.memory_space<vmem>>, vector<2x16xf32>
    tpu.vector_store %arg24[%c26_94, %c0_95], %188 {strides = array<i32>} : memref<32x16xf32, #tpu.memory_space<vmem>>, vector<2x16xf32>,
    %c6_96 = arith.constant 6 : index
    %c0_97 = arith.constant 0 : index
    %191 = vector.load %arg21[%c6_96, %c0_97] : memref<32x64xf32, #tpu.memory_space<vmem>>, vector<2x64xf32>
    %192 = arith.truncf %173 : vector<2x16xf32> to vector<2x16xbf16>
    %cst_98 = arith.constant dense<0.000000e+00> : vector<2x64xf32>
    %193 = tpu.matmul %192, %64, %cst_98 {dimension_numbers = #tpu.dot_dimension_numbers<[1], [0], [0], [1], [0, 0, 1, 1], [], []>} : vector<2x16xbf16>, vector<16x64xbf16>, vector<2x64xf32> -> vector<2x64xf32>
    %194 = arith.addf %191, %193 : vector<2x64xf32>
    %c24_99 = arith.constant 24 : index
    %c0_100 = arith.constant 0 : index
    %195 = vector.load %arg22[%c24_99, %c0_100] : memref<32x64xf32, #tpu.memory_space<vmem>>, vector<2x64xf32>
    %196 = arith.truncf %188 : vector<2x16xf32> to vector<2x16xbf16>
    %cst_101 = arith.constant dense<0.000000e+00> : vector<2x64xf32>
    %197 = tpu.matmul %196, %66, %cst_101 {dimension_numbers = #tpu.dot_dimension_numbers<[1], [0], [0], [1], [0, 0, 1, 1], [], []>} : vector<2x16xbf16>, vector<16x64xbf16>, vector<2x64xf32> -> vector<2x64xf32>
    %198 = arith.addf %195, %197 : vector<2x64xf32>
    %199 = arith.negf %194 : vector<2x64xf32>
    %200 = math.exp %199 : vector<2x64xf32>
    %cst_102 = arith.constant 1.000000e+00 : f32
    %201 = vector.broadcast %cst_102 : f32 to vector<2x64xf32>
    %202 = arith.addf %201, %200 : vector<2x64xf32>
    %203 = arith.divf %201, %202 : vector<2x64xf32>
    %204 = math.tanh %194 : vector<2x64xf32>
    %205 = vector.extract_strided_slice %203 {offsets = [0, 0], sizes = [2, 16], strides = [1, 1]} : vector<2x64xf32> to vector<2x16xf32>
    %206 = vector.extract_strided_slice %203 {offsets = [0, 16], sizes = [2, 16], strides = [1, 1]} : vector<2x64xf32> to vector<2x16xf32>
    %207 = vector.extract_strided_slice %203 {offsets = [0, 48], sizes = [2, 16], strides = [1, 1]} : vector<2x64xf32> to vector<2x16xf32>
    %208 = vector.extract_strided_slice %204 {offsets = [0, 32], sizes = [2, 16], strides = [1, 1]} : vector<2x64xf32> to vector<2x16xf32>
    %209 = arith.mulf %206, %171 : vector<2x16xf32>
    %210 = arith.mulf %205, %208 : vector<2x16xf32>
    %211 = arith.addf %209, %210 : vector<2x16xf32>
    %212 = math.tanh %211 : vector<2x16xf32>
    %213 = arith.mulf %207, %212 : vector<2x16xf32>
    %214 = arith.negf %198 : vector<2x64xf32>
    %215 = math.exp %214 : vector<2x64xf32>
    %cst_103 = arith.constant 1.000000e+00 : f32
    %216 = vector.broadcast %cst_103 : f32 to vector<2x64xf32>
    %217 = arith.addf %216, %215 : vector<2x64xf32>
    %218 = arith.divf %216, %217 : vector<2x64xf32>
    %219 = math.tanh %198 : vector<2x64xf32>
    %220 = vector.extract_strided_slice %218 {offsets = [0, 0], sizes = [2, 16], strides = [1, 1]} : vector<2x64xf32> to vector<2x16xf32>
    %221 = vector.extract_strided_slice %218 {offsets = [0, 16], sizes = [2, 16], strides = [1, 1]} : vector<2x64xf32> to vector<2x16xf32>
    %222 = vector.extract_strided_slice %218 {offsets = [0, 48], sizes = [2, 16], strides = [1, 1]} : vector<2x64xf32> to vector<2x16xf32>
    %223 = vector.extract_strided_slice %219 {offsets = [0, 32], sizes = [2, 16], strides = [1, 1]} : vector<2x64xf32> to vector<2x16xf32>
    %224 = arith.mulf %221, %186 : vector<2x16xf32>
    %225 = arith.mulf %220, %223 : vector<2x16xf32>
    %226 = arith.addf %224, %225 : vector<2x16xf32>
    %227 = math.tanh %226 : vector<2x16xf32>
    %228 = arith.mulf %222, %227 : vector<2x16xf32>
    %c6_104 = arith.constant 6 : index
    %c0_105 = arith.constant 0 : index
    %229 = vector.load %arg23[%c6_104, %c0_105] : memref<32x16xf32, #tpu.memory_space<vmem>>, vector<2x16xf32>
    tpu.vector_store %arg23[%c6_104, %c0_105], %213 {strides = array<i32>} : memref<32x16xf32, #tpu.memory_space<vmem>>, vector<2x16xf32>,
    %c24_106 = arith.constant 24 : index
    %c0_107 = arith.constant 0 : index
    %230 = vector.load %arg24[%c24_106, %c0_107] : memref<32x16xf32, #tpu.memory_space<vmem>>, vector<2x16xf32>
    tpu.vector_store %arg24[%c24_106, %c0_107], %228 {strides = array<i32>} : memref<32x16xf32, #tpu.memory_space<vmem>>, vector<2x16xf32>,
    %c8_108 = arith.constant 8 : index
    %c0_109 = arith.constant 0 : index
    %231 = vector.load %arg21[%c8_108, %c0_109] : memref<32x64xf32, #tpu.memory_space<vmem>>, vector<2x64xf32>
    %232 = arith.truncf %213 : vector<2x16xf32> to vector<2x16xbf16>
    %cst_110 = arith.constant dense<0.000000e+00> : vector<2x64xf32>
    %233 = tpu.matmul %232, %64, %cst_110 {dimension_numbers = #tpu.dot_dimension_numbers<[1], [0], [0], [1], [0, 0, 1, 1], [], []>} : vector<2x16xbf16>, vector<16x64xbf16>, vector<2x64xf32> -> vector<2x64xf32>
    %234 = arith.addf %231, %233 : vector<2x64xf32>
    %c22_111 = arith.constant 22 : index
    %c0_112 = arith.constant 0 : index
    %235 = vector.load %arg22[%c22_111, %c0_112] : memref<32x64xf32, #tpu.memory_space<vmem>>, vector<2x64xf32>
    %236 = arith.truncf %228 : vector<2x16xf32> to vector<2x16xbf16>
    %cst_113 = arith.constant dense<0.000000e+00> : vector<2x64xf32>
    %237 = tpu.matmul %236, %66, %cst_113 {dimension_numbers = #tpu.dot_dimension_numbers<[1], [0], [0], [1], [0, 0, 1, 1], [], []>} : vector<2x16xbf16>, vector<16x64xbf16>, vector<2x64xf32> -> vector<2x64xf32>
    %238 = arith.addf %235, %237 : vector<2x64xf32>
    %239 = arith.negf %234 : vector<2x64xf32>
    %240 = math.exp %239 : vector<2x64xf32>
    %cst_114 = arith.constant 1.000000e+00 : f32
    %241 = vector.broadcast %cst_114 : f32 to vector<2x64xf32>
    %242 = arith.addf %241, %240 : vector<2x64xf32>
    %243 = arith.divf %241, %242 : vector<2x64xf32>
    %244 = math.tanh %234 : vector<2x64xf32>
    %245 = vector.extract_strided_slice %243 {offsets = [0, 0], sizes = [2, 16], strides = [1, 1]} : vector<2x64xf32> to vector<2x16xf32>
    %246 = vector.extract_strided_slice %243 {offsets = [0, 16], sizes = [2, 16], strides = [1, 1]} : vector<2x64xf32> to vector<2x16xf32>
    %247 = vector.extract_strided_slice %243 {offsets = [0, 48], sizes = [2, 16], strides = [1, 1]} : vector<2x64xf32> to vector<2x16xf32>
    %248 = vector.extract_strided_slice %244 {offsets = [0, 32], sizes = [2, 16], strides = [1, 1]} : vector<2x64xf32> to vector<2x16xf32>
    %249 = arith.mulf %246, %211 : vector<2x16xf32>
    %250 = arith.mulf %245, %248 : vector<2x16xf32>
    %251 = arith.addf %249, %250 : vector<2x16xf32>
    %252 = math.tanh %251 : vector<2x16xf32>
    %253 = arith.mulf %247, %252 : vector<2x16xf32>
    %254 = arith.negf %238 : vector<2x64xf32>
    %255 = math.exp %254 : vector<2x64xf32>
    %cst_115 = arith.constant 1.000000e+00 : f32
    %256 = vector.broadcast %cst_115 : f32 to vector<2x64xf32>
    %257 = arith.addf %256, %255 : vector<2x64xf32>
    %258 = arith.divf %256, %257 : vector<2x64xf32>
    %259 = math.tanh %238 : vector<2x64xf32>
    %260 = vector.extract_strided_slice %258 {offsets = [0, 0], sizes = [2, 16], strides = [1, 1]} : vector<2x64xf32> to vector<2x16xf32>
    %261 = vector.extract_strided_slice %258 {offsets = [0, 16], sizes = [2, 16], strides = [1, 1]} : vector<2x64xf32> to vector<2x16xf32>
    %262 = vector.extract_strided_slice %258 {offsets = [0, 48], sizes = [2, 16], strides = [1, 1]} : vector<2x64xf32> to vector<2x16xf32>
    %263 = vector.extract_strided_slice %259 {offsets = [0, 32], sizes = [2, 16], strides = [1, 1]} : vector<2x64xf32> to vector<2x16xf32>
    %264 = arith.mulf %261, %226 : vector<2x16xf32>
    %265 = arith.mulf %260, %263 : vector<2x16xf32>
    %266 = arith.addf %264, %265 : vector<2x16xf32>
    %267 = math.tanh %266 : vector<2x16xf32>
    %268 = arith.mulf %262, %267 : vector<2x16xf32>
    %c8_116 = arith.constant 8 : index
    %c0_117 = arith.constant 0 : index
    %269 = vector.load %arg23[%c8_116, %c0_117] : memref<32x16xf32, #tpu.memory_space<vmem>>, vector<2x16xf32>
    tpu.vector_store %arg23[%c8_116, %c0_117], %253 {strides = array<i32>} : memref<32x16xf32, #tpu.memory_space<vmem>>, vector<2x16xf32>,
    %c22_118 = arith.constant 22 : index
    %c0_119 = arith.constant 0 : index
    %270 = vector.load %arg24[%c22_118, %c0_119] : memref<32x16xf32, #tpu.memory_space<vmem>>, vector<2x16xf32>
    tpu.vector_store %arg24[%c22_118, %c0_119], %268 {strides = array<i32>} : memref<32x16xf32, #tpu.memory_space<vmem>>, vector<2x16xf32>,
    %c10_120 = arith.constant 10 : index
    %c0_121 = arith.constant 0 : index
    %271 = vector.load %arg21[%c10_120, %c0_121] : memref<32x64xf32, #tpu.memory_space<vmem>>, vector<2x64xf32>
    %272 = arith.truncf %253 : vector<2x16xf32> to vector<2x16xbf16>
    %cst_122 = arith.constant dense<0.000000e+00> : vector<2x64xf32>
    %273 = tpu.matmul %272, %64, %cst_122 {dimension_numbers = #tpu.dot_dimension_numbers<[1], [0], [0], [1], [0, 0, 1, 1], [], []>} : vector<2x16xbf16>, vector<16x64xbf16>, vector<2x64xf32> -> vector<2x64xf32>
    %274 = arith.addf %271, %273 : vector<2x64xf32>
    %c20_123 = arith.constant 20 : index
    %c0_124 = arith.constant 0 : index
    %275 = vector.load %arg22[%c20_123, %c0_124] : memref<32x64xf32, #tpu.memory_space<vmem>>, vector<2x64xf32>
    %276 = arith.truncf %268 : vector<2x16xf32> to vector<2x16xbf16>
    %cst_125 = arith.constant dense<0.000000e+00> : vector<2x64xf32>
    %277 = tpu.matmul %276, %66, %cst_125 {dimension_numbers = #tpu.dot_dimension_numbers<[1], [0], [0], [1], [0, 0, 1, 1], [], []>} : vector<2x16xbf16>, vector<16x64xbf16>, vector<2x64xf32> -> vector<2x64xf32>
    %278 = arith.addf %275, %277 : vector<2x64xf32>
    %279 = arith.negf %274 : vector<2x64xf32>
    %280 = math.exp %279 : vector<2x64xf32>
    %cst_126 = arith.constant 1.000000e+00 : f32
    %281 = vector.broadcast %cst_126 : f32 to vector<2x64xf32>
    %282 = arith.addf %281, %280 : vector<2x64xf32>
    %283 = arith.divf %281, %282 : vector<2x64xf32>
    %284 = math.tanh %274 : vector<2x64xf32>
    %285 = vector.extract_strided_slice %283 {offsets = [0, 0], sizes = [2, 16], strides = [1, 1]} : vector<2x64xf32> to vector<2x16xf32>
    %286 = vector.extract_strided_slice %283 {offsets = [0, 16], sizes = [2, 16], strides = [1, 1]} : vector<2x64xf32> to vector<2x16xf32>
    %287 = vector.extract_strided_slice %283 {offsets = [0, 48], sizes = [2, 16], strides = [1, 1]} : vector<2x64xf32> to vector<2x16xf32>
    %288 = vector.extract_strided_slice %284 {offsets = [0, 32], sizes = [2, 16], strides = [1, 1]} : vector<2x64xf32> to vector<2x16xf32>
    %289 = arith.mulf %286, %251 : vector<2x16xf32>
    %290 = arith.mulf %285, %288 : vector<2x16xf32>
    %291 = arith.addf %289, %290 : vector<2x16xf32>
    %292 = math.tanh %291 : vector<2x16xf32>
    %293 = arith.mulf %287, %292 : vector<2x16xf32>
    %294 = arith.negf %278 : vector<2x64xf32>
    %295 = math.exp %294 : vector<2x64xf32>
    %cst_127 = arith.constant 1.000000e+00 : f32
    %296 = vector.broadcast %cst_127 : f32 to vector<2x64xf32>
    %297 = arith.addf %296, %295 : vector<2x64xf32>
    %298 = arith.divf %296, %297 : vector<2x64xf32>
    %299 = math.tanh %278 : vector<2x64xf32>
    %300 = vector.extract_strided_slice %298 {offsets = [0, 0], sizes = [2, 16], strides = [1, 1]} : vector<2x64xf32> to vector<2x16xf32>
    %301 = vector.extract_strided_slice %298 {offsets = [0, 16], sizes = [2, 16], strides = [1, 1]} : vector<2x64xf32> to vector<2x16xf32>
    %302 = vector.extract_strided_slice %298 {offsets = [0, 48], sizes = [2, 16], strides = [1, 1]} : vector<2x64xf32> to vector<2x16xf32>
    %303 = vector.extract_strided_slice %299 {offsets = [0, 32], sizes = [2, 16], strides = [1, 1]} : vector<2x64xf32> to vector<2x16xf32>
    %304 = arith.mulf %301, %266 : vector<2x16xf32>
    %305 = arith.mulf %300, %303 : vector<2x16xf32>
    %306 = arith.addf %304, %305 : vector<2x16xf32>
    %307 = math.tanh %306 : vector<2x16xf32>
    %308 = arith.mulf %302, %307 : vector<2x16xf32>
    %c10_128 = arith.constant 10 : index
    %c0_129 = arith.constant 0 : index
    %309 = vector.load %arg23[%c10_128, %c0_129] : memref<32x16xf32, #tpu.memory_space<vmem>>, vector<2x16xf32>
    tpu.vector_store %arg23[%c10_128, %c0_129], %293 {strides = array<i32>} : memref<32x16xf32, #tpu.memory_space<vmem>>, vector<2x16xf32>,
    %c20_130 = arith.constant 20 : index
    %c0_131 = arith.constant 0 : index
    %310 = vector.load %arg24[%c20_130, %c0_131] : memref<32x16xf32, #tpu.memory_space<vmem>>, vector<2x16xf32>
    tpu.vector_store %arg24[%c20_130, %c0_131], %308 {strides = array<i32>} : memref<32x16xf32, #tpu.memory_space<vmem>>, vector<2x16xf32>,
    %c12_132 = arith.constant 12 : index
    %c0_133 = arith.constant 0 : index
    %311 = vector.load %arg21[%c12_132, %c0_133] : memref<32x64xf32, #tpu.memory_space<vmem>>, vector<2x64xf32>
    %312 = arith.truncf %293 : vector<2x16xf32> to vector<2x16xbf16>
    %cst_134 = arith.constant dense<0.000000e+00> : vector<2x64xf32>
    %313 = tpu.matmul %312, %64, %cst_134 {dimension_numbers = #tpu.dot_dimension_numbers<[1], [0], [0], [1], [0, 0, 1, 1], [], []>} : vector<2x16xbf16>, vector<16x64xbf16>, vector<2x64xf32> -> vector<2x64xf32>
    %314 = arith.addf %311, %313 : vector<2x64xf32>
    %c18_135 = arith.constant 18 : index
    %c0_136 = arith.constant 0 : index
    %315 = vector.load %arg22[%c18_135, %c0_136] : memref<32x64xf32, #tpu.memory_space<vmem>>, vector<2x64xf32>
    %316 = arith.truncf %308 : vector<2x16xf32> to vector<2x16xbf16>
    %cst_137 = arith.constant dense<0.000000e+00> : vector<2x64xf32>
    %317 = tpu.matmul %316, %66, %cst_137 {dimension_numbers = #tpu.dot_dimension_numbers<[1], [0], [0], [1], [0, 0, 1, 1], [], []>} : vector<2x16xbf16>, vector<16x64xbf16>, vector<2x64xf32> -> vector<2x64xf32>
    %318 = arith.addf %315, %317 : vector<2x64xf32>
    %319 = arith.negf %314 : vector<2x64xf32>
    %320 = math.exp %319 : vector<2x64xf32>
    %cst_138 = arith.constant 1.000000e+00 : f32
    %321 = vector.broadcast %cst_138 : f32 to vector<2x64xf32>
    %322 = arith.addf %321, %320 : vector<2x64xf32>
    %323 = arith.divf %321, %322 : vector<2x64xf32>
    %324 = math.tanh %314 : vector<2x64xf32>
    %325 = vector.extract_strided_slice %323 {offsets = [0, 0], sizes = [2, 16], strides = [1, 1]} : vector<2x64xf32> to vector<2x16xf32>
    %326 = vector.extract_strided_slice %323 {offsets = [0, 16], sizes = [2, 16], strides = [1, 1]} : vector<2x64xf32> to vector<2x16xf32>
    %327 = vector.extract_strided_slice %323 {offsets = [0, 48], sizes = [2, 16], strides = [1, 1]} : vector<2x64xf32> to vector<2x16xf32>
    %328 = vector.extract_strided_slice %324 {offsets = [0, 32], sizes = [2, 16], strides = [1, 1]} : vector<2x64xf32> to vector<2x16xf32>
    %329 = arith.mulf %326, %291 : vector<2x16xf32>
    %330 = arith.mulf %325, %328 : vector<2x16xf32>
    %331 = arith.addf %329, %330 : vector<2x16xf32>
    %332 = math.tanh %331 : vector<2x16xf32>
    %333 = arith.mulf %327, %332 : vector<2x16xf32>
    %334 = arith.negf %318 : vector<2x64xf32>
    %335 = math.exp %334 : vector<2x64xf32>
    %cst_139 = arith.constant 1.000000e+00 : f32
    %336 = vector.broadcast %cst_139 : f32 to vector<2x64xf32>
    %337 = arith.addf %336, %335 : vector<2x64xf32>
    %338 = arith.divf %336, %337 : vector<2x64xf32>
    %339 = math.tanh %318 : vector<2x64xf32>
    %340 = vector.extract_strided_slice %338 {offsets = [0, 0], sizes = [2, 16], strides = [1, 1]} : vector<2x64xf32> to vector<2x16xf32>
    %341 = vector.extract_strided_slice %338 {offsets = [0, 16], sizes = [2, 16], strides = [1, 1]} : vector<2x64xf32> to vector<2x16xf32>
    %342 = vector.extract_strided_slice %338 {offsets = [0, 48], sizes = [2, 16], strides = [1, 1]} : vector<2x64xf32> to vector<2x16xf32>
    %343 = vector.extract_strided_slice %339 {offsets = [0, 32], sizes = [2, 16], strides = [1, 1]} : vector<2x64xf32> to vector<2x16xf32>
    %344 = arith.mulf %341, %306 : vector<2x16xf32>
    %345 = arith.mulf %340, %343 : vector<2x16xf32>
    %346 = arith.addf %344, %345 : vector<2x16xf32>
    %347 = math.tanh %346 : vector<2x16xf32>
    %348 = arith.mulf %342, %347 : vector<2x16xf32>
    %c12_140 = arith.constant 12 : index
    %c0_141 = arith.constant 0 : index
    %349 = vector.load %arg23[%c12_140, %c0_141] : memref<32x16xf32, #tpu.memory_space<vmem>>, vector<2x16xf32>
    tpu.vector_store %arg23[%c12_140, %c0_141], %333 {strides = array<i32>} : memref<32x16xf32, #tpu.memory_space<vmem>>, vector<2x16xf32>,
    %c18_142 = arith.constant 18 : index
    %c0_143 = arith.constant 0 : index
    %350 = vector.load %arg24[%c18_142, %c0_143] : memref<32x16xf32, #tpu.memory_space<vmem>>, vector<2x16xf32>
    tpu.vector_store %arg24[%c18_142, %c0_143], %348 {strides = array<i32>} : memref<32x16xf32, #tpu.memory_space<vmem>>, vector<2x16xf32>,
    %c14_144 = arith.constant 14 : index
    %c0_145 = arith.constant 0 : index
    %351 = vector.load %arg21[%c14_144, %c0_145] : memref<32x64xf32, #tpu.memory_space<vmem>>, vector<2x64xf32>
    %352 = arith.truncf %333 : vector<2x16xf32> to vector<2x16xbf16>
    %cst_146 = arith.constant dense<0.000000e+00> : vector<2x64xf32>
    %353 = tpu.matmul %352, %64, %cst_146 {dimension_numbers = #tpu.dot_dimension_numbers<[1], [0], [0], [1], [0, 0, 1, 1], [], []>} : vector<2x16xbf16>, vector<16x64xbf16>, vector<2x64xf32> -> vector<2x64xf32>
    %354 = arith.addf %351, %353 : vector<2x64xf32>
    %c16_147 = arith.constant 16 : index
    %c0_148 = arith.constant 0 : index
    %355 = vector.load %arg22[%c16_147, %c0_148] : memref<32x64xf32, #tpu.memory_space<vmem>>, vector<2x64xf32>
    %356 = arith.truncf %348 : vector<2x16xf32> to vector<2x16xbf16>
    %cst_149 = arith.constant dense<0.000000e+00> : vector<2x64xf32>
    %357 = tpu.matmul %356, %66, %cst_149 {dimension_numbers = #tpu.dot_dimension_numbers<[1], [0], [0], [1], [0, 0, 1, 1], [], []>} : vector<2x16xbf16>, vector<16x64xbf16>, vector<2x64xf32> -> vector<2x64xf32>
    %358 = arith.addf %355, %357 : vector<2x64xf32>
    %359 = arith.negf %354 : vector<2x64xf32>
    %360 = math.exp %359 : vector<2x64xf32>
    %cst_150 = arith.constant 1.000000e+00 : f32
    %361 = vector.broadcast %cst_150 : f32 to vector<2x64xf32>
    %362 = arith.addf %361, %360 : vector<2x64xf32>
    %363 = arith.divf %361, %362 : vector<2x64xf32>
    %364 = math.tanh %354 : vector<2x64xf32>
    %365 = vector.extract_strided_slice %363 {offsets = [0, 0], sizes = [2, 16], strides = [1, 1]} : vector<2x64xf32> to vector<2x16xf32>
    %366 = vector.extract_strided_slice %363 {offsets = [0, 16], sizes = [2, 16], strides = [1, 1]} : vector<2x64xf32> to vector<2x16xf32>
    %367 = vector.extract_strided_slice %363 {offsets = [0, 48], sizes = [2, 16], strides = [1, 1]} : vector<2x64xf32> to vector<2x16xf32>
    %368 = vector.extract_strided_slice %364 {offsets = [0, 32], sizes = [2, 16], strides = [1, 1]} : vector<2x64xf32> to vector<2x16xf32>
    %369 = arith.mulf %366, %331 : vector<2x16xf32>
    %370 = arith.mulf %365, %368 : vector<2x16xf32>
    %371 = arith.addf %369, %370 : vector<2x16xf32>
    %372 = math.tanh %371 : vector<2x16xf32>
    %373 = arith.mulf %367, %372 : vector<2x16xf32>
    %374 = arith.negf %358 : vector<2x64xf32>
    %375 = math.exp %374 : vector<2x64xf32>
    %cst_151 = arith.constant 1.000000e+00 : f32
    %376 = vector.broadcast %cst_151 : f32 to vector<2x64xf32>
    %377 = arith.addf %376, %375 : vector<2x64xf32>
    %378 = arith.divf %376, %377 : vector<2x64xf32>
    %379 = math.tanh %358 : vector<2x64xf32>
    %380 = vector.extract_strided_slice %378 {offsets = [0, 0], sizes = [2, 16], strides = [1, 1]} : vector<2x64xf32> to vector<2x16xf32>
    %381 = vector.extract_strided_slice %378 {offsets = [0, 16], sizes = [2, 16], strides = [1, 1]} : vector<2x64xf32> to vector<2x16xf32>
    %382 = vector.extract_strided_slice %378 {offsets = [0, 48], sizes = [2, 16], strides = [1, 1]} : vector<2x64xf32> to vector<2x16xf32>
    %383 = vector.extract_strided_slice %379 {offsets = [0, 32], sizes = [2, 16], strides = [1, 1]} : vector<2x64xf32> to vector<2x16xf32>
    %384 = arith.mulf %381, %346 : vector<2x16xf32>
    %385 = arith.mulf %380, %383 : vector<2x16xf32>
    %386 = arith.addf %384, %385 : vector<2x16xf32>
    %387 = math.tanh %386 : vector<2x16xf32>
    %388 = arith.mulf %382, %387 : vector<2x16xf32>
    %c14_152 = arith.constant 14 : index
    %c0_153 = arith.constant 0 : index
    %389 = vector.load %arg23[%c14_152, %c0_153] : memref<32x16xf32, #tpu.memory_space<vmem>>, vector<2x16xf32>
    tpu.vector_store %arg23[%c14_152, %c0_153], %373 {strides = array<i32>} : memref<32x16xf32, #tpu.memory_space<vmem>>, vector<2x16xf32>,
    %c16_154 = arith.constant 16 : index
    %c0_155 = arith.constant 0 : index
    %390 = vector.load %arg24[%c16_154, %c0_155] : memref<32x16xf32, #tpu.memory_space<vmem>>, vector<2x16xf32>
    tpu.vector_store %arg24[%c16_154, %c0_155], %388 {strides = array<i32>} : memref<32x16xf32, #tpu.memory_space<vmem>>, vector<2x16xf32>,
    %c16_156 = arith.constant 16 : index
    %c0_157 = arith.constant 0 : index
    %391 = vector.load %arg21[%c16_156, %c0_157] : memref<32x64xf32, #tpu.memory_space<vmem>>, vector<2x64xf32>
    %392 = arith.truncf %373 : vector<2x16xf32> to vector<2x16xbf16>
    %cst_158 = arith.constant dense<0.000000e+00> : vector<2x64xf32>
    %393 = tpu.matmul %392, %64, %cst_158 {dimension_numbers = #tpu.dot_dimension_numbers<[1], [0], [0], [1], [0, 0, 1, 1], [], []>} : vector<2x16xbf16>, vector<16x64xbf16>, vector<2x64xf32> -> vector<2x64xf32>
    %394 = arith.addf %391, %393 : vector<2x64xf32>
    %c14_159 = arith.constant 14 : index
    %c0_160 = arith.constant 0 : index
    %395 = vector.load %arg22[%c14_159, %c0_160] : memref<32x64xf32, #tpu.memory_space<vmem>>, vector<2x64xf32>
    %396 = arith.truncf %388 : vector<2x16xf32> to vector<2x16xbf16>
    %cst_161 = arith.constant dense<0.000000e+00> : vector<2x64xf32>
    %397 = tpu.matmul %396, %66, %cst_161 {dimension_numbers = #tpu.dot_dimension_numbers<[1], [0], [0], [1], [0, 0, 1, 1], [], []>} : vector<2x16xbf16>, vector<16x64xbf16>, vector<2x64xf32> -> vector<2x64xf32>
    %398 = arith.addf %395, %397 : vector<2x64xf32>
    %399 = arith.negf %394 : vector<2x64xf32>
    %400 = math.exp %399 : vector<2x64xf32>
    %cst_162 = arith.constant 1.000000e+00 : f32
    %401 = vector.broadcast %cst_162 : f32 to vector<2x64xf32>
    %402 = arith.addf %401, %400 : vector<2x64xf32>
    %403 = arith.divf %401, %402 : vector<2x64xf32>
    %404 = math.tanh %394 : vector<2x64xf32>
    %405 = vector.extract_strided_slice %403 {offsets = [0, 0], sizes = [2, 16], strides = [1, 1]} : vector<2x64xf32> to vector<2x16xf32>
    %406 = vector.extract_strided_slice %403 {offsets = [0, 16], sizes = [2, 16], strides = [1, 1]} : vector<2x64xf32> to vector<2x16xf32>
    %407 = vector.extract_strided_slice %403 {offsets = [0, 48], sizes = [2, 16], strides = [1, 1]} : vector<2x64xf32> to vector<2x16xf32>
    %408 = vector.extract_strided_slice %404 {offsets = [0, 32], sizes = [2, 16], strides = [1, 1]} : vector<2x64xf32> to vector<2x16xf32>
    %409 = arith.mulf %406, %371 : vector<2x16xf32>
    %410 = arith.mulf %405, %408 : vector<2x16xf32>
    %411 = arith.addf %409, %410 : vector<2x16xf32>
    %412 = math.tanh %411 : vector<2x16xf32>
    %413 = arith.mulf %407, %412 : vector<2x16xf32>
    %414 = arith.negf %398 : vector<2x64xf32>
    %415 = math.exp %414 : vector<2x64xf32>
    %cst_163 = arith.constant 1.000000e+00 : f32
    %416 = vector.broadcast %cst_163 : f32 to vector<2x64xf32>
    %417 = arith.addf %416, %415 : vector<2x64xf32>
    %418 = arith.divf %416, %417 : vector<2x64xf32>
    %419 = math.tanh %398 : vector<2x64xf32>
    %420 = vector.extract_strided_slice %418 {offsets = [0, 0], sizes = [2, 16], strides = [1, 1]} : vector<2x64xf32> to vector<2x16xf32>
    %421 = vector.extract_strided_slice %418 {offsets = [0, 16], sizes = [2, 16], strides = [1, 1]} : vector<2x64xf32> to vector<2x16xf32>
    %422 = vector.extract_strided_slice %418 {offsets = [0, 48], sizes = [2, 16], strides = [1, 1]} : vector<2x64xf32> to vector<2x16xf32>
    %423 = vector.extract_strided_slice %419 {offsets = [0, 32], sizes = [2, 16], strides = [1, 1]} : vector<2x64xf32> to vector<2x16xf32>
    %424 = arith.mulf %421, %386 : vector<2x16xf32>
    %425 = arith.mulf %420, %423 : vector<2x16xf32>
    %426 = arith.addf %424, %425 : vector<2x16xf32>
    %427 = math.tanh %426 : vector<2x16xf32>
    %428 = arith.mulf %422, %427 : vector<2x16xf32>
    %c16_164 = arith.constant 16 : index
    %c0_165 = arith.constant 0 : index
    %429 = vector.load %arg23[%c16_164, %c0_165] : memref<32x16xf32, #tpu.memory_space<vmem>>, vector<2x16xf32>
    tpu.vector_store %arg23[%c16_164, %c0_165], %413 {strides = array<i32>} : memref<32x16xf32, #tpu.memory_space<vmem>>, vector<2x16xf32>,
    %c14_166 = arith.constant 14 : index
    %c0_167 = arith.constant 0 : index
    %430 = vector.load %arg24[%c14_166, %c0_167] : memref<32x16xf32, #tpu.memory_space<vmem>>, vector<2x16xf32>
    tpu.vector_store %arg24[%c14_166, %c0_167], %428 {strides = array<i32>} : memref<32x16xf32, #tpu.memory_space<vmem>>, vector<2x16xf32>,
    %c18_168 = arith.constant 18 : index
    %c0_169 = arith.constant 0 : index
    %431 = vector.load %arg21[%c18_168, %c0_169] : memref<32x64xf32, #tpu.memory_space<vmem>>, vector<2x64xf32>
    %432 = arith.truncf %413 : vector<2x16xf32> to vector<2x16xbf16>
    %cst_170 = arith.constant dense<0.000000e+00> : vector<2x64xf32>
    %433 = tpu.matmul %432, %64, %cst_170 {dimension_numbers = #tpu.dot_dimension_numbers<[1], [0], [0], [1], [0, 0, 1, 1], [], []>} : vector<2x16xbf16>, vector<16x64xbf16>, vector<2x64xf32> -> vector<2x64xf32>
    %434 = arith.addf %431, %433 : vector<2x64xf32>
    %c12_171 = arith.constant 12 : index
    %c0_172 = arith.constant 0 : index
    %435 = vector.load %arg22[%c12_171, %c0_172] : memref<32x64xf32, #tpu.memory_space<vmem>>, vector<2x64xf32>
    %436 = arith.truncf %428 : vector<2x16xf32> to vector<2x16xbf16>
    %cst_173 = arith.constant dense<0.000000e+00> : vector<2x64xf32>
    %437 = tpu.matmul %436, %66, %cst_173 {dimension_numbers = #tpu.dot_dimension_numbers<[1], [0], [0], [1], [0, 0, 1, 1], [], []>} : vector<2x16xbf16>, vector<16x64xbf16>, vector<2x64xf32> -> vector<2x64xf32>
    %438 = arith.addf %435, %437 : vector<2x64xf32>
    %439 = arith.negf %434 : vector<2x64xf32>
    %440 = math.exp %439 : vector<2x64xf32>
    %cst_174 = arith.constant 1.000000e+00 : f32
    %441 = vector.broadcast %cst_174 : f32 to vector<2x64xf32>
    %442 = arith.addf %441, %440 : vector<2x64xf32>
    %443 = arith.divf %441, %442 : vector<2x64xf32>
    %444 = math.tanh %434 : vector<2x64xf32>
    %445 = vector.extract_strided_slice %443 {offsets = [0, 0], sizes = [2, 16], strides = [1, 1]} : vector<2x64xf32> to vector<2x16xf32>
    %446 = vector.extract_strided_slice %443 {offsets = [0, 16], sizes = [2, 16], strides = [1, 1]} : vector<2x64xf32> to vector<2x16xf32>
    %447 = vector.extract_strided_slice %443 {offsets = [0, 48], sizes = [2, 16], strides = [1, 1]} : vector<2x64xf32> to vector<2x16xf32>
    %448 = vector.extract_strided_slice %444 {offsets = [0, 32], sizes = [2, 16], strides = [1, 1]} : vector<2x64xf32> to vector<2x16xf32>
    %449 = arith.mulf %446, %411 : vector<2x16xf32>
    %450 = arith.mulf %445, %448 : vector<2x16xf32>
    %451 = arith.addf %449, %450 : vector<2x16xf32>
    %452 = math.tanh %451 : vector<2x16xf32>
    %453 = arith.mulf %447, %452 : vector<2x16xf32>
    %454 = arith.negf %438 : vector<2x64xf32>
    %455 = math.exp %454 : vector<2x64xf32>
    %cst_175 = arith.constant 1.000000e+00 : f32
    %456 = vector.broadcast %cst_175 : f32 to vector<2x64xf32>
    %457 = arith.addf %456, %455 : vector<2x64xf32>
    %458 = arith.divf %456, %457 : vector<2x64xf32>
    %459 = math.tanh %438 : vector<2x64xf32>
    %460 = vector.extract_strided_slice %458 {offsets = [0, 0], sizes = [2, 16], strides = [1, 1]} : vector<2x64xf32> to vector<2x16xf32>
    %461 = vector.extract_strided_slice %458 {offsets = [0, 16], sizes = [2, 16], strides = [1, 1]} : vector<2x64xf32> to vector<2x16xf32>
    %462 = vector.extract_strided_slice %458 {offsets = [0, 48], sizes = [2, 16], strides = [1, 1]} : vector<2x64xf32> to vector<2x16xf32>
    %463 = vector.extract_strided_slice %459 {offsets = [0, 32], sizes = [2, 16], strides = [1, 1]} : vector<2x64xf32> to vector<2x16xf32>
    %464 = arith.mulf %461, %426 : vector<2x16xf32>
    %465 = arith.mulf %460, %463 : vector<2x16xf32>
    %466 = arith.addf %464, %465 : vector<2x16xf32>
    %467 = math.tanh %466 : vector<2x16xf32>
    %468 = arith.mulf %462, %467 : vector<2x16xf32>
    %c18_176 = arith.constant 18 : index
    %c0_177 = arith.constant 0 : index
    %469 = vector.load %arg23[%c18_176, %c0_177] : memref<32x16xf32, #tpu.memory_space<vmem>>, vector<2x16xf32>
    tpu.vector_store %arg23[%c18_176, %c0_177], %453 {strides = array<i32>} : memref<32x16xf32, #tpu.memory_space<vmem>>, vector<2x16xf32>,
    %c12_178 = arith.constant 12 : index
    %c0_179 = arith.constant 0 : index
    %470 = vector.load %arg24[%c12_178, %c0_179] : memref<32x16xf32, #tpu.memory_space<vmem>>, vector<2x16xf32>
    tpu.vector_store %arg24[%c12_178, %c0_179], %468 {strides = array<i32>} : memref<32x16xf32, #tpu.memory_space<vmem>>, vector<2x16xf32>,
    %c20_180 = arith.constant 20 : index
    %c0_181 = arith.constant 0 : index
    %471 = vector.load %arg21[%c20_180, %c0_181] : memref<32x64xf32, #tpu.memory_space<vmem>>, vector<2x64xf32>
    %472 = arith.truncf %453 : vector<2x16xf32> to vector<2x16xbf16>
    %cst_182 = arith.constant dense<0.000000e+00> : vector<2x64xf32>
    %473 = tpu.matmul %472, %64, %cst_182 {dimension_numbers = #tpu.dot_dimension_numbers<[1], [0], [0], [1], [0, 0, 1, 1], [], []>} : vector<2x16xbf16>, vector<16x64xbf16>, vector<2x64xf32> -> vector<2x64xf32>
    %474 = arith.addf %471, %473 : vector<2x64xf32>
    %c10_183 = arith.constant 10 : index
    %c0_184 = arith.constant 0 : index
    %475 = vector.load %arg22[%c10_183, %c0_184] : memref<32x64xf32, #tpu.memory_space<vmem>>, vector<2x64xf32>
    %476 = arith.truncf %468 : vector<2x16xf32> to vector<2x16xbf16>
    %cst_185 = arith.constant dense<0.000000e+00> : vector<2x64xf32>
    %477 = tpu.matmul %476, %66, %cst_185 {dimension_numbers = #tpu.dot_dimension_numbers<[1], [0], [0], [1], [0, 0, 1, 1], [], []>} : vector<2x16xbf16>, vector<16x64xbf16>, vector<2x64xf32> -> vector<2x64xf32>
    %478 = arith.addf %475, %477 : vector<2x64xf32>
    %479 = arith.negf %474 : vector<2x64xf32>
    %480 = math.exp %479 : vector<2x64xf32>
    %cst_186 = arith.constant 1.000000e+00 : f32
    %481 = vector.broadcast %cst_186 : f32 to vector<2x64xf32>
    %482 = arith.addf %481, %480 : vector<2x64xf32>
    %483 = arith.divf %481, %482 : vector<2x64xf32>
    %484 = math.tanh %474 : vector<2x64xf32>
    %485 = vector.extract_strided_slice %483 {offsets = [0, 0], sizes = [2, 16], strides = [1, 1]} : vector<2x64xf32> to vector<2x16xf32>
    %486 = vector.extract_strided_slice %483 {offsets = [0, 16], sizes = [2, 16], strides = [1, 1]} : vector<2x64xf32> to vector<2x16xf32>
    %487 = vector.extract_strided_slice %483 {offsets = [0, 48], sizes = [2, 16], strides = [1, 1]} : vector<2x64xf32> to vector<2x16xf32>
    %488 = vector.extract_strided_slice %484 {offsets = [0, 32], sizes = [2, 16], strides = [1, 1]} : vector<2x64xf32> to vector<2x16xf32>
    %489 = arith.mulf %486, %451 : vector<2x16xf32>
    %490 = arith.mulf %485, %488 : vector<2x16xf32>
    %491 = arith.addf %489, %490 : vector<2x16xf32>
    %492 = math.tanh %491 : vector<2x16xf32>
    %493 = arith.mulf %487, %492 : vector<2x16xf32>
    %494 = arith.negf %478 : vector<2x64xf32>
    %495 = math.exp %494 : vector<2x64xf32>
    %cst_187 = arith.constant 1.000000e+00 : f32
    %496 = vector.broadcast %cst_187 : f32 to vector<2x64xf32>
    %497 = arith.addf %496, %495 : vector<2x64xf32>
    %498 = arith.divf %496, %497 : vector<2x64xf32>
    %499 = math.tanh %478 : vector<2x64xf32>
    %500 = vector.extract_strided_slice %498 {offsets = [0, 0], sizes = [2, 16], strides = [1, 1]} : vector<2x64xf32> to vector<2x16xf32>
    %501 = vector.extract_strided_slice %498 {offsets = [0, 16], sizes = [2, 16], strides = [1, 1]} : vector<2x64xf32> to vector<2x16xf32>
    %502 = vector.extract_strided_slice %498 {offsets = [0, 48], sizes = [2, 16], strides = [1, 1]} : vector<2x64xf32> to vector<2x16xf32>
    %503 = vector.extract_strided_slice %499 {offsets = [0, 32], sizes = [2, 16], strides = [1, 1]} : vector<2x64xf32> to vector<2x16xf32>
    %504 = arith.mulf %501, %466 : vector<2x16xf32>
    %505 = arith.mulf %500, %503 : vector<2x16xf32>
    %506 = arith.addf %504, %505 : vector<2x16xf32>
    %507 = math.tanh %506 : vector<2x16xf32>
    %508 = arith.mulf %502, %507 : vector<2x16xf32>
    %c20_188 = arith.constant 20 : index
    %c0_189 = arith.constant 0 : index
    %509 = vector.load %arg23[%c20_188, %c0_189] : memref<32x16xf32, #tpu.memory_space<vmem>>, vector<2x16xf32>
    tpu.vector_store %arg23[%c20_188, %c0_189], %493 {strides = array<i32>} : memref<32x16xf32, #tpu.memory_space<vmem>>, vector<2x16xf32>,
    %c10_190 = arith.constant 10 : index
    %c0_191 = arith.constant 0 : index
    %510 = vector.load %arg24[%c10_190, %c0_191] : memref<32x16xf32, #tpu.memory_space<vmem>>, vector<2x16xf32>
    tpu.vector_store %arg24[%c10_190, %c0_191], %508 {strides = array<i32>} : memref<32x16xf32, #tpu.memory_space<vmem>>, vector<2x16xf32>,
    %c22_192 = arith.constant 22 : index
    %c0_193 = arith.constant 0 : index
    %511 = vector.load %arg21[%c22_192, %c0_193] : memref<32x64xf32, #tpu.memory_space<vmem>>, vector<2x64xf32>
    %512 = arith.truncf %493 : vector<2x16xf32> to vector<2x16xbf16>
    %cst_194 = arith.constant dense<0.000000e+00> : vector<2x64xf32>
    %513 = tpu.matmul %512, %64, %cst_194 {dimension_numbers = #tpu.dot_dimension_numbers<[1], [0], [0], [1], [0, 0, 1, 1], [], []>} : vector<2x16xbf16>, vector<16x64xbf16>, vector<2x64xf32> -> vector<2x64xf32>
    %514 = arith.addf %511, %513 : vector<2x64xf32>
    %c8_195 = arith.constant 8 : index
    %c0_196 = arith.constant 0 : index
    %515 = vector.load %arg22[%c8_195, %c0_196] : memref<32x64xf32, #tpu.memory_space<vmem>>, vector<2x64xf32>
    %516 = arith.truncf %508 : vector<2x16xf32> to vector<2x16xbf16>
    %cst_197 = arith.constant dense<0.000000e+00> : vector<2x64xf32>
    %517 = tpu.matmul %516, %66, %cst_197 {dimension_numbers = #tpu.dot_dimension_numbers<[1], [0], [0], [1], [0, 0, 1, 1], [], []>} : vector<2x16xbf16>, vector<16x64xbf16>, vector<2x64xf32> -> vector<2x64xf32>
    %518 = arith.addf %515, %517 : vector<2x64xf32>
    %519 = arith.negf %514 : vector<2x64xf32>
    %520 = math.exp %519 : vector<2x64xf32>
    %cst_198 = arith.constant 1.000000e+00 : f32
    %521 = vector.broadcast %cst_198 : f32 to vector<2x64xf32>
    %522 = arith.addf %521, %520 : vector<2x64xf32>
    %523 = arith.divf %521, %522 : vector<2x64xf32>
    %524 = math.tanh %514 : vector<2x64xf32>
    %525 = vector.extract_strided_slice %523 {offsets = [0, 0], sizes = [2, 16], strides = [1, 1]} : vector<2x64xf32> to vector<2x16xf32>
    %526 = vector.extract_strided_slice %523 {offsets = [0, 16], sizes = [2, 16], strides = [1, 1]} : vector<2x64xf32> to vector<2x16xf32>
    %527 = vector.extract_strided_slice %523 {offsets = [0, 48], sizes = [2, 16], strides = [1, 1]} : vector<2x64xf32> to vector<2x16xf32>
    %528 = vector.extract_strided_slice %524 {offsets = [0, 32], sizes = [2, 16], strides = [1, 1]} : vector<2x64xf32> to vector<2x16xf32>
    %529 = arith.mulf %526, %491 : vector<2x16xf32>
    %530 = arith.mulf %525, %528 : vector<2x16xf32>
    %531 = arith.addf %529, %530 : vector<2x16xf32>
    %532 = math.tanh %531 : vector<2x16xf32>
    %533 = arith.mulf %527, %532 : vector<2x16xf32>
    %534 = arith.negf %518 : vector<2x64xf32>
    %535 = math.exp %534 : vector<2x64xf32>
    %cst_199 = arith.constant 1.000000e+00 : f32
    %536 = vector.broadcast %cst_199 : f32 to vector<2x64xf32>
    %537 = arith.addf %536, %535 : vector<2x64xf32>
    %538 = arith.divf %536, %537 : vector<2x64xf32>
    %539 = math.tanh %518 : vector<2x64xf32>
    %540 = vector.extract_strided_slice %538 {offsets = [0, 0], sizes = [2, 16], strides = [1, 1]} : vector<2x64xf32> to vector<2x16xf32>
    %541 = vector.extract_strided_slice %538 {offsets = [0, 16], sizes = [2, 16], strides = [1, 1]} : vector<2x64xf32> to vector<2x16xf32>
    %542 = vector.extract_strided_slice %538 {offsets = [0, 48], sizes = [2, 16], strides = [1, 1]} : vector<2x64xf32> to vector<2x16xf32>
    %543 = vector.extract_strided_slice %539 {offsets = [0, 32], sizes = [2, 16], strides = [1, 1]} : vector<2x64xf32> to vector<2x16xf32>
    %544 = arith.mulf %541, %506 : vector<2x16xf32>
    %545 = arith.mulf %540, %543 : vector<2x16xf32>
    %546 = arith.addf %544, %545 : vector<2x16xf32>
    %547 = math.tanh %546 : vector<2x16xf32>
    %548 = arith.mulf %542, %547 : vector<2x16xf32>
    %c22_200 = arith.constant 22 : index
    %c0_201 = arith.constant 0 : index
    %549 = vector.load %arg23[%c22_200, %c0_201] : memref<32x16xf32, #tpu.memory_space<vmem>>, vector<2x16xf32>
    tpu.vector_store %arg23[%c22_200, %c0_201], %533 {strides = array<i32>} : memref<32x16xf32, #tpu.memory_space<vmem>>, vector<2x16xf32>,
    %c8_202 = arith.constant 8 : index
    %c0_203 = arith.constant 0 : index
    %550 = vector.load %arg24[%c8_202, %c0_203] : memref<32x16xf32, #tpu.memory_space<vmem>>, vector<2x16xf32>
    tpu.vector_store %arg24[%c8_202, %c0_203], %548 {strides = array<i32>} : memref<32x16xf32, #tpu.memory_space<vmem>>, vector<2x16xf32>,
    %c24_204 = arith.constant 24 : index
    %c0_205 = arith.constant 0 : index
    %551 = vector.load %arg21[%c24_204, %c0_205] : memref<32x64xf32, #tpu.memory_space<vmem>>, vector<2x64xf32>
    %552 = arith.truncf %533 : vector<2x16xf32> to vector<2x16xbf16>
    %cst_206 = arith.constant dense<0.000000e+00> : vector<2x64xf32>
    %553 = tpu.matmul %552, %64, %cst_206 {dimension_numbers = #tpu.dot_dimension_numbers<[1], [0], [0], [1], [0, 0, 1, 1], [], []>} : vector<2x16xbf16>, vector<16x64xbf16>, vector<2x64xf32> -> vector<2x64xf32>
    %554 = arith.addf %551, %553 : vector<2x64xf32>
    %c6_207 = arith.constant 6 : index
    %c0_208 = arith.constant 0 : index
    %555 = vector.load %arg22[%c6_207, %c0_208] : memref<32x64xf32, #tpu.memory_space<vmem>>, vector<2x64xf32>
    %556 = arith.truncf %548 : vector<2x16xf32> to vector<2x16xbf16>
    %cst_209 = arith.constant dense<0.000000e+00> : vector<2x64xf32>
    %557 = tpu.matmul %556, %66, %cst_209 {dimension_numbers = #tpu.dot_dimension_numbers<[1], [0], [0], [1], [0, 0, 1, 1], [], []>} : vector<2x16xbf16>, vector<16x64xbf16>, vector<2x64xf32> -> vector<2x64xf32>
    %558 = arith.addf %555, %557 : vector<2x64xf32>
    %559 = arith.negf %554 : vector<2x64xf32>
    %560 = math.exp %559 : vector<2x64xf32>
    %cst_210 = arith.constant 1.000000e+00 : f32
    %561 = vector.broadcast %cst_210 : f32 to vector<2x64xf32>
    %562 = arith.addf %561, %560 : vector<2x64xf32>
    %563 = arith.divf %561, %562 : vector<2x64xf32>
    %564 = math.tanh %554 : vector<2x64xf32>
    %565 = vector.extract_strided_slice %563 {offsets = [0, 0], sizes = [2, 16], strides = [1, 1]} : vector<2x64xf32> to vector<2x16xf32>
    %566 = vector.extract_strided_slice %563 {offsets = [0, 16], sizes = [2, 16], strides = [1, 1]} : vector<2x64xf32> to vector<2x16xf32>
    %567 = vector.extract_strided_slice %563 {offsets = [0, 48], sizes = [2, 16], strides = [1, 1]} : vector<2x64xf32> to vector<2x16xf32>
    %568 = vector.extract_strided_slice %564 {offsets = [0, 32], sizes = [2, 16], strides = [1, 1]} : vector<2x64xf32> to vector<2x16xf32>
    %569 = arith.mulf %566, %531 : vector<2x16xf32>
    %570 = arith.mulf %565, %568 : vector<2x16xf32>
    %571 = arith.addf %569, %570 : vector<2x16xf32>
    %572 = math.tanh %571 : vector<2x16xf32>
    %573 = arith.mulf %567, %572 : vector<2x16xf32>
    %574 = arith.negf %558 : vector<2x64xf32>
    %575 = math.exp %574 : vector<2x64xf32>
    %cst_211 = arith.constant 1.000000e+00 : f32
    %576 = vector.broadcast %cst_211 : f32 to vector<2x64xf32>
    %577 = arith.addf %576, %575 : vector<2x64xf32>
    %578 = arith.divf %576, %577 : vector<2x64xf32>
    %579 = math.tanh %558 : vector<2x64xf32>
    %580 = vector.extract_strided_slice %578 {offsets = [0, 0], sizes = [2, 16], strides = [1, 1]} : vector<2x64xf32> to vector<2x16xf32>
    %581 = vector.extract_strided_slice %578 {offsets = [0, 16], sizes = [2, 16], strides = [1, 1]} : vector<2x64xf32> to vector<2x16xf32>
    %582 = vector.extract_strided_slice %578 {offsets = [0, 48], sizes = [2, 16], strides = [1, 1]} : vector<2x64xf32> to vector<2x16xf32>
    %583 = vector.extract_strided_slice %579 {offsets = [0, 32], sizes = [2, 16], strides = [1, 1]} : vector<2x64xf32> to vector<2x16xf32>
    %584 = arith.mulf %581, %546 : vector<2x16xf32>
    %585 = arith.mulf %580, %583 : vector<2x16xf32>
    %586 = arith.addf %584, %585 : vector<2x16xf32>
    %587 = math.tanh %586 : vector<2x16xf32>
    %588 = arith.mulf %582, %587 : vector<2x16xf32>
    %c24_212 = arith.constant 24 : index
    %c0_213 = arith.constant 0 : index
    %589 = vector.load %arg23[%c24_212, %c0_213] : memref<32x16xf32, #tpu.memory_space<vmem>>, vector<2x16xf32>
    tpu.vector_store %arg23[%c24_212, %c0_213], %573 {strides = array<i32>} : memref<32x16xf32, #tpu.memory_space<vmem>>, vector<2x16xf32>,
    %c6_214 = arith.constant 6 : index
    %c0_215 = arith.constant 0 : index
    %590 = vector.load %arg24[%c6_214, %c0_215] : memref<32x16xf32, #tpu.memory_space<vmem>>, vector<2x16xf32>
    tpu.vector_store %arg24[%c6_214, %c0_215], %588 {strides = array<i32>} : memref<32x16xf32, #tpu.memory_space<vmem>>, vector<2x16xf32>,
    %c26_216 = arith.constant 26 : index
    %c0_217 = arith.constant 0 : index
    %591 = vector.load %arg21[%c26_216, %c0_217] : memref<32x64xf32, #tpu.memory_space<vmem>>, vector<2x64xf32>
    %592 = arith.truncf %573 : vector<2x16xf32> to vector<2x16xbf16>
    %cst_218 = arith.constant dense<0.000000e+00> : vector<2x64xf32>
    %593 = tpu.matmul %592, %64, %cst_218 {dimension_numbers = #tpu.dot_dimension_numbers<[1], [0], [0], [1], [0, 0, 1, 1], [], []>} : vector<2x16xbf16>, vector<16x64xbf16>, vector<2x64xf32> -> vector<2x64xf32>
    %594 = arith.addf %591, %593 : vector<2x64xf32>
    %c4_219 = arith.constant 4 : index
    %c0_220 = arith.constant 0 : index
    %595 = vector.load %arg22[%c4_219, %c0_220] : memref<32x64xf32, #tpu.memory_space<vmem>>, vector<2x64xf32>
    %596 = arith.truncf %588 : vector<2x16xf32> to vector<2x16xbf16>
    %cst_221 = arith.constant dense<0.000000e+00> : vector<2x64xf32>
    %597 = tpu.matmul %596, %66, %cst_221 {dimension_numbers = #tpu.dot_dimension_numbers<[1], [0], [0], [1], [0, 0, 1, 1], [], []>} : vector<2x16xbf16>, vector<16x64xbf16>, vector<2x64xf32> -> vector<2x64xf32>
    %598 = arith.addf %595, %597 : vector<2x64xf32>
    %599 = arith.negf %594 : vector<2x64xf32>
    %600 = math.exp %599 : vector<2x64xf32>
    %cst_222 = arith.constant 1.000000e+00 : f32
    %601 = vector.broadcast %cst_222 : f32 to vector<2x64xf32>
    %602 = arith.addf %601, %600 : vector<2x64xf32>
    %603 = arith.divf %601, %602 : vector<2x64xf32>
    %604 = math.tanh %594 : vector<2x64xf32>
    %605 = vector.extract_strided_slice %603 {offsets = [0, 0], sizes = [2, 16], strides = [1, 1]} : vector<2x64xf32> to vector<2x16xf32>
    %606 = vector.extract_strided_slice %603 {offsets = [0, 16], sizes = [2, 16], strides = [1, 1]} : vector<2x64xf32> to vector<2x16xf32>
    %607 = vector.extract_strided_slice %603 {offsets = [0, 48], sizes = [2, 16], strides = [1, 1]} : vector<2x64xf32> to vector<2x16xf32>
    %608 = vector.extract_strided_slice %604 {offsets = [0, 32], sizes = [2, 16], strides = [1, 1]} : vector<2x64xf32> to vector<2x16xf32>
    %609 = arith.mulf %606, %571 : vector<2x16xf32>
    %610 = arith.mulf %605, %608 : vector<2x16xf32>
    %611 = arith.addf %609, %610 : vector<2x16xf32>
    %612 = math.tanh %611 : vector<2x16xf32>
    %613 = arith.mulf %607, %612 : vector<2x16xf32>
    %614 = arith.negf %598 : vector<2x64xf32>
    %615 = math.exp %614 : vector<2x64xf32>
    %cst_223 = arith.constant 1.000000e+00 : f32
    %616 = vector.broadcast %cst_223 : f32 to vector<2x64xf32>
    %617 = arith.addf %616, %615 : vector<2x64xf32>
    %618 = arith.divf %616, %617 : vector<2x64xf32>
    %619 = math.tanh %598 : vector<2x64xf32>
    %620 = vector.extract_strided_slice %618 {offsets = [0, 0], sizes = [2, 16], strides = [1, 1]} : vector<2x64xf32> to vector<2x16xf32>
    %621 = vector.extract_strided_slice %618 {offsets = [0, 16], sizes = [2, 16], strides = [1, 1]} : vector<2x64xf32> to vector<2x16xf32>
    %622 = vector.extract_strided_slice %618 {offsets = [0, 48], sizes = [2, 16], strides = [1, 1]} : vector<2x64xf32> to vector<2x16xf32>
    %623 = vector.extract_strided_slice %619 {offsets = [0, 32], sizes = [2, 16], strides = [1, 1]} : vector<2x64xf32> to vector<2x16xf32>
    %624 = arith.mulf %621, %586 : vector<2x16xf32>
    %625 = arith.mulf %620, %623 : vector<2x16xf32>
    %626 = arith.addf %624, %625 : vector<2x16xf32>
    %627 = math.tanh %626 : vector<2x16xf32>
    %628 = arith.mulf %622, %627 : vector<2x16xf32>
    %c26_224 = arith.constant 26 : index
    %c0_225 = arith.constant 0 : index
    %629 = vector.load %arg23[%c26_224, %c0_225] : memref<32x16xf32, #tpu.memory_space<vmem>>, vector<2x16xf32>
    tpu.vector_store %arg23[%c26_224, %c0_225], %613 {strides = array<i32>} : memref<32x16xf32, #tpu.memory_space<vmem>>, vector<2x16xf32>,
    %c4_226 = arith.constant 4 : index
    %c0_227 = arith.constant 0 : index
    %630 = vector.load %arg24[%c4_226, %c0_227] : memref<32x16xf32, #tpu.memory_space<vmem>>, vector<2x16xf32>
    tpu.vector_store %arg24[%c4_226, %c0_227], %628 {strides = array<i32>} : memref<32x16xf32, #tpu.memory_space<vmem>>, vector<2x16xf32>,
    %c28_228 = arith.constant 28 : index
    %c0_229 = arith.constant 0 : index
    %631 = vector.load %arg21[%c28_228, %c0_229] : memref<32x64xf32, #tpu.memory_space<vmem>>, vector<2x64xf32>
    %632 = arith.truncf %613 : vector<2x16xf32> to vector<2x16xbf16>
    %cst_230 = arith.constant dense<0.000000e+00> : vector<2x64xf32>
    %633 = tpu.matmul %632, %64, %cst_230 {dimension_numbers = #tpu.dot_dimension_numbers<[1], [0], [0], [1], [0, 0, 1, 1], [], []>} : vector<2x16xbf16>, vector<16x64xbf16>, vector<2x64xf32> -> vector<2x64xf32>
    %634 = arith.addf %631, %633 : vector<2x64xf32>
    %c2_231 = arith.constant 2 : index
    %c0_232 = arith.constant 0 : index
    %635 = vector.load %arg22[%c2_231, %c0_232] : memref<32x64xf32, #tpu.memory_space<vmem>>, vector<2x64xf32>
    %636 = arith.truncf %628 : vector<2x16xf32> to vector<2x16xbf16>
    %cst_233 = arith.constant dense<0.000000e+00> : vector<2x64xf32>
    %637 = tpu.matmul %636, %66, %cst_233 {dimension_numbers = #tpu.dot_dimension_numbers<[1], [0], [0], [1], [0, 0, 1, 1], [], []>} : vector<2x16xbf16>, vector<16x64xbf16>, vector<2x64xf32> -> vector<2x64xf32>
    %638 = arith.addf %635, %637 : vector<2x64xf32>
    %639 = arith.negf %634 : vector<2x64xf32>
    %640 = math.exp %639 : vector<2x64xf32>
    %cst_234 = arith.constant 1.000000e+00 : f32
    %641 = vector.broadcast %cst_234 : f32 to vector<2x64xf32>
    %642 = arith.addf %641, %640 : vector<2x64xf32>
    %643 = arith.divf %641, %642 : vector<2x64xf32>
    %644 = math.tanh %634 : vector<2x64xf32>
    %645 = vector.extract_strided_slice %643 {offsets = [0, 0], sizes = [2, 16], strides = [1, 1]} : vector<2x64xf32> to vector<2x16xf32>
    %646 = vector.extract_strided_slice %643 {offsets = [0, 16], sizes = [2, 16], strides = [1, 1]} : vector<2x64xf32> to vector<2x16xf32>
    %647 = vector.extract_strided_slice %643 {offsets = [0, 48], sizes = [2, 16], strides = [1, 1]} : vector<2x64xf32> to vector<2x16xf32>
    %648 = vector.extract_strided_slice %644 {offsets = [0, 32], sizes = [2, 16], strides = [1, 1]} : vector<2x64xf32> to vector<2x16xf32>
    %649 = arith.mulf %646, %611 : vector<2x16xf32>
    %650 = arith.mulf %645, %648 : vector<2x16xf32>
    %651 = arith.addf %649, %650 : vector<2x16xf32>
    %652 = math.tanh %651 : vector<2x16xf32>
    %653 = arith.mulf %647, %652 : vector<2x16xf32>
    %654 = arith.negf %638 : vector<2x64xf32>
    %655 = math.exp %654 : vector<2x64xf32>
    %cst_235 = arith.constant 1.000000e+00 : f32
    %656 = vector.broadcast %cst_235 : f32 to vector<2x64xf32>
    %657 = arith.addf %656, %655 : vector<2x64xf32>
    %658 = arith.divf %656, %657 : vector<2x64xf32>
    %659 = math.tanh %638 : vector<2x64xf32>
    %660 = vector.extract_strided_slice %658 {offsets = [0, 0], sizes = [2, 16], strides = [1, 1]} : vector<2x64xf32> to vector<2x16xf32>
    %661 = vector.extract_strided_slice %658 {offsets = [0, 16], sizes = [2, 16], strides = [1, 1]} : vector<2x64xf32> to vector<2x16xf32>
    %662 = vector.extract_strided_slice %658 {offsets = [0, 48], sizes = [2, 16], strides = [1, 1]} : vector<2x64xf32> to vector<2x16xf32>
    %663 = vector.extract_strided_slice %659 {offsets = [0, 32], sizes = [2, 16], strides = [1, 1]} : vector<2x64xf32> to vector<2x16xf32>
    %664 = arith.mulf %661, %626 : vector<2x16xf32>
    %665 = arith.mulf %660, %663 : vector<2x16xf32>
    %666 = arith.addf %664, %665 : vector<2x16xf32>
    %667 = math.tanh %666 : vector<2x16xf32>
    %668 = arith.mulf %662, %667 : vector<2x16xf32>
    %c28_236 = arith.constant 28 : index
    %c0_237 = arith.constant 0 : index
    %669 = vector.load %arg23[%c28_236, %c0_237] : memref<32x16xf32, #tpu.memory_space<vmem>>, vector<2x16xf32>
    tpu.vector_store %arg23[%c28_236, %c0_237], %653 {strides = array<i32>} : memref<32x16xf32, #tpu.memory_space<vmem>>, vector<2x16xf32>,
    %c2_238 = arith.constant 2 : index
    %c0_239 = arith.constant 0 : index
    %670 = vector.load %arg24[%c2_238, %c0_239] : memref<32x16xf32, #tpu.memory_space<vmem>>, vector<2x16xf32>
    tpu.vector_store %arg24[%c2_238, %c0_239], %668 {strides = array<i32>} : memref<32x16xf32, #tpu.memory_space<vmem>>, vector<2x16xf32>,
    %c30_240 = arith.constant 30 : index
    %c0_241 = arith.constant 0 : index
    %671 = vector.load %arg21[%c30_240, %c0_241] : memref<32x64xf32, #tpu.memory_space<vmem>>, vector<2x64xf32>
    %672 = arith.truncf %653 : vector<2x16xf32> to vector<2x16xbf16>
    %cst_242 = arith.constant dense<0.000000e+00> : vector<2x64xf32>
    %673 = tpu.matmul %672, %64, %cst_242 {dimension_numbers = #tpu.dot_dimension_numbers<[1], [0], [0], [1], [0, 0, 1, 1], [], []>} : vector<2x16xbf16>, vector<16x64xbf16>, vector<2x64xf32> -> vector<2x64xf32>
    %674 = arith.addf %671, %673 : vector<2x64xf32>
    %c0_243 = arith.constant 0 : index
    %c0_244 = arith.constant 0 : index
    %675 = vector.load %arg22[%c0_243, %c0_244] : memref<32x64xf32, #tpu.memory_space<vmem>>, vector<2x64xf32>
    %676 = arith.truncf %668 : vector<2x16xf32> to vector<2x16xbf16>
    %cst_245 = arith.constant dense<0.000000e+00> : vector<2x64xf32>
    %677 = tpu.matmul %676, %66, %cst_245 {dimension_numbers = #tpu.dot_dimension_numbers<[1], [0], [0], [1], [0, 0, 1, 1], [], []>} : vector<2x16xbf16>, vector<16x64xbf16>, vector<2x64xf32> -> vector<2x64xf32>
    %678 = arith.addf %675, %677 : vector<2x64xf32>
    %679 = arith.negf %674 : vector<2x64xf32>
    %680 = math.exp %679 : vector<2x64xf32>
    %cst_246 = arith.constant 1.000000e+00 : f32
    %681 = vector.broadcast %cst_246 : f32 to vector<2x64xf32>
    %682 = arith.addf %681, %680 : vector<2x64xf32>
    %683 = arith.divf %681, %682 : vector<2x64xf32>
    %684 = math.tanh %674 : vector<2x64xf32>
    %685 = vector.extract_strided_slice %683 {offsets = [0, 0], sizes = [2, 16], strides = [1, 1]} : vector<2x64xf32> to vector<2x16xf32>
    %686 = vector.extract_strided_slice %683 {offsets = [0, 16], sizes = [2, 16], strides = [1, 1]} : vector<2x64xf32> to vector<2x16xf32>
    %687 = vector.extract_strided_slice %683 {offsets = [0, 48], sizes = [2, 16], strides = [1, 1]} : vector<2x64xf32> to vector<2x16xf32>
    %688 = vector.extract_strided_slice %684 {offsets = [0, 32], sizes = [2, 16], strides = [1, 1]} : vector<2x64xf32> to vector<2x16xf32>
    %689 = arith.mulf %686, %651 : vector<2x16xf32>
    %690 = arith.mulf %685, %688 : vector<2x16xf32>
    %691 = arith.addf %689, %690 : vector<2x16xf32>
    %692 = math.tanh %691 : vector<2x16xf32>
    %693 = arith.mulf %687, %692 : vector<2x16xf32>
    %694 = arith.negf %678 : vector<2x64xf32>
    %695 = math.exp %694 : vector<2x64xf32>
    %cst_247 = arith.constant 1.000000e+00 : f32
    %696 = vector.broadcast %cst_247 : f32 to vector<2x64xf32>
    %697 = arith.addf %696, %695 : vector<2x64xf32>
    %698 = arith.divf %696, %697 : vector<2x64xf32>
    %699 = math.tanh %678 : vector<2x64xf32>
    %700 = vector.extract_strided_slice %698 {offsets = [0, 0], sizes = [2, 16], strides = [1, 1]} : vector<2x64xf32> to vector<2x16xf32>
    %701 = vector.extract_strided_slice %698 {offsets = [0, 16], sizes = [2, 16], strides = [1, 1]} : vector<2x64xf32> to vector<2x16xf32>
    %702 = vector.extract_strided_slice %698 {offsets = [0, 48], sizes = [2, 16], strides = [1, 1]} : vector<2x64xf32> to vector<2x16xf32>
    %703 = vector.extract_strided_slice %699 {offsets = [0, 32], sizes = [2, 16], strides = [1, 1]} : vector<2x64xf32> to vector<2x16xf32>
    %704 = arith.mulf %701, %666 : vector<2x16xf32>
    %705 = arith.mulf %700, %703 : vector<2x16xf32>
    %706 = arith.addf %704, %705 : vector<2x16xf32>
    %707 = math.tanh %706 : vector<2x16xf32>
    %708 = arith.mulf %702, %707 : vector<2x16xf32>
    %c30_248 = arith.constant 30 : index
    %c0_249 = arith.constant 0 : index
    %709 = vector.load %arg23[%c30_248, %c0_249] : memref<32x16xf32, #tpu.memory_space<vmem>>, vector<2x16xf32>
    tpu.vector_store %arg23[%c30_248, %c0_249], %693 {strides = array<i32>} : memref<32x16xf32, #tpu.memory_space<vmem>>, vector<2x16xf32>,
    %c0_250 = arith.constant 0 : index
    %c0_251 = arith.constant 0 : index
    %710 = vector.load %arg24[%c0_250, %c0_251] : memref<32x16xf32, #tpu.memory_space<vmem>>, vector<2x16xf32>
    tpu.vector_store %arg24[%c0_250, %c0_251], %708 {strides = array<i32>} : memref<32x16xf32, #tpu.memory_space<vmem>>, vector<2x16xf32>,
    %c0_252 = arith.constant 0 : index
    %c0_253 = arith.constant 0 : index
    %711 = vector.load %arg23[%c0_252, %c0_253] : memref<32x16xf32, #tpu.memory_space<vmem>>, vector<32x16xf32>
    %c0_254 = arith.constant 0 : index
    %c0_255 = arith.constant 0 : index
    %712 = vector.load %arg24[%c0_254, %c0_255] : memref<32x16xf32, #tpu.memory_space<vmem>>, vector<32x16xf32>
    %c0_256 = arith.constant 0 : index
    %c0_257 = arith.constant 0 : index
    %c0_258 = arith.constant 0 : index
    %713 = vector.load %arg11[%c0_256, %c0_257, %c0_258] : memref<2x16x64xbf16, #tpu.memory_space<vmem>>, vector<1x16x64xbf16>
    %714 = vector.shape_cast %713 : vector<1x16x64xbf16> to vector<16x64xbf16>
    %715 = arith.truncf %711 : vector<32x16xf32> to vector<32x16xbf16>
    %cst_259 = arith.constant dense<0.000000e+00> : vector<32x64xf32>
    %716 = tpu.matmul %715, %714, %cst_259 {dimension_numbers = #tpu.dot_dimension_numbers<[1], [0], [0], [1], [0, 0, 1, 1], [], []>} : vector<32x16xbf16>, vector<16x64xbf16>, vector<32x64xf32> -> vector<32x64xf32>
    %c0_260 = arith.constant 0 : index
    %c0_261 = arith.constant 0 : index
    %c0_262 = arith.constant 0 : index
    %717 = vector.load %arg12[%c0_260, %c0_261, %c0_262] : memref<2x16x64xbf16, #tpu.memory_space<vmem>>, vector<1x16x64xbf16>
    %718 = vector.shape_cast %717 : vector<1x16x64xbf16> to vector<16x64xbf16>
    %719 = arith.truncf %712 : vector<32x16xf32> to vector<32x16xbf16>
    %cst_263 = arith.constant dense<0.000000e+00> : vector<32x64xf32>
    %720 = tpu.matmul %719, %718, %cst_263 {dimension_numbers = #tpu.dot_dimension_numbers<[1], [0], [0], [1], [0, 0, 1, 1], [], []>} : vector<32x16xbf16>, vector<16x64xbf16>, vector<32x64xf32> -> vector<32x64xf32>
    %721 = arith.addf %716, %720 : vector<32x64xf32>
    %c0_264 = arith.constant 0 : index
    %c0_265 = arith.constant 0 : index
    %c0_266 = arith.constant 0 : index
    %722 = vector.load %arg14[%c0_264, %c0_265, %c0_266] : memref<2x1x64xf32, #tpu.memory_space<vmem>>, vector<1x1x64xf32>
    %723 = vector.shape_cast %722 : vector<1x1x64xf32> to vector<1x64xf32>
    %724 = vector.broadcast %723 : vector<1x64xf32> to vector<32x64xf32>
    %725 = arith.addf %721, %724 : vector<32x64xf32>
    %c0_267 = arith.constant 0 : index
    %c0_268 = arith.constant 0 : index
    %726 = vector.load %arg25[%c0_267, %c0_268] : memref<32x64xf32, #tpu.memory_space<vmem>>, vector<32x64xf32>
    tpu.vector_store %arg25[%c0_267, %c0_268], %725 {strides = array<i32>} : memref<32x64xf32, #tpu.memory_space<vmem>>, vector<32x64xf32>,
    %c1_269 = arith.constant 1 : index
    %c0_270 = arith.constant 0 : index
    %c0_271 = arith.constant 0 : index
    %727 = vector.load %arg11[%c1_269, %c0_270, %c0_271] : memref<2x16x64xbf16, #tpu.memory_space<vmem>>, vector<1x16x64xbf16>
    %728 = vector.shape_cast %727 : vector<1x16x64xbf16> to vector<16x64xbf16>
    %729 = arith.truncf %711 : vector<32x16xf32> to vector<32x16xbf16>
    %cst_272 = arith.constant dense<0.000000e+00> : vector<32x64xf32>
    %730 = tpu.matmul %729, %728, %cst_272 {dimension_numbers = #tpu.dot_dimension_numbers<[1], [0], [0], [1], [0, 0, 1, 1], [], []>} : vector<32x16xbf16>, vector<16x64xbf16>, vector<32x64xf32> -> vector<32x64xf32>
    %c1_273 = arith.constant 1 : index
    %c0_274 = arith.constant 0 : index
    %c0_275 = arith.constant 0 : index
    %731 = vector.load %arg12[%c1_273, %c0_274, %c0_275] : memref<2x16x64xbf16, #tpu.memory_space<vmem>>, vector<1x16x64xbf16>
    %732 = vector.shape_cast %731 : vector<1x16x64xbf16> to vector<16x64xbf16>
    %733 = arith.truncf %712 : vector<32x16xf32> to vector<32x16xbf16>
    %cst_276 = arith.constant dense<0.000000e+00> : vector<32x64xf32>
    %734 = tpu.matmul %733, %732, %cst_276 {dimension_numbers = #tpu.dot_dimension_numbers<[1], [0], [0], [1], [0, 0, 1, 1], [], []>} : vector<32x16xbf16>, vector<16x64xbf16>, vector<32x64xf32> -> vector<32x64xf32>
    %735 = arith.addf %730, %734 : vector<32x64xf32>
    %c1_277 = arith.constant 1 : index
    %c0_278 = arith.constant 0 : index
    %c0_279 = arith.constant 0 : index
    %736 = vector.load %arg14[%c1_277, %c0_278, %c0_279] : memref<2x1x64xf32, #tpu.memory_space<vmem>>, vector<1x1x64xf32>
    %737 = vector.shape_cast %736 : vector<1x1x64xf32> to vector<1x64xf32>
    %738 = vector.broadcast %737 : vector<1x64xf32> to vector<32x64xf32>
    %739 = arith.addf %735, %738 : vector<32x64xf32>
    %c0_280 = arith.constant 0 : index
    %c0_281 = arith.constant 0 : index
    %740 = vector.load %arg26[%c0_280, %c0_281] : memref<32x64xf32, #tpu.memory_space<vmem>>, vector<32x64xf32>
    tpu.vector_store %arg26[%c0_280, %c0_281], %739 {strides = array<i32>} : memref<32x64xf32, #tpu.memory_space<vmem>>, vector<32x64xf32>,
    %c0_282 = arith.constant 0 : index
    %c0_283 = arith.constant 0 : index
    %c0_284 = arith.constant 0 : index
    %741 = vector.load %arg13[%c0_282, %c0_283, %c0_284] : memref<2x16x64xbf16, #tpu.memory_space<vmem>>, vector<1x16x64xbf16>
    %742 = vector.shape_cast %741 : vector<1x16x64xbf16> to vector<16x64xbf16>
    %c1_285 = arith.constant 1 : index
    %c0_286 = arith.constant 0 : index
    %c0_287 = arith.constant 0 : index
    %743 = vector.load %arg13[%c1_285, %c0_286, %c0_287] : memref<2x16x64xbf16, #tpu.memory_space<vmem>>, vector<1x16x64xbf16>
    %744 = vector.shape_cast %743 : vector<1x16x64xbf16> to vector<16x64xbf16>
    %cst_288 = arith.constant 0.000000e+00 : f32
    %745 = vector.broadcast %cst_288 : f32 to vector<2x16xf32>
    %cst_289 = arith.constant 0.000000e+00 : f32
    %746 = vector.broadcast %cst_289 : f32 to vector<2x16xf32>
    %cst_290 = arith.constant 0.000000e+00 : f32
    %747 = vector.broadcast %cst_290 : f32 to vector<2x16xf32>
    %cst_291 = arith.constant 0.000000e+00 : f32
    %748 = vector.broadcast %cst_291 : f32 to vector<2x16xf32>
    %c0_292 = arith.constant 0 : index
    %c0_293 = arith.constant 0 : index
    %749 = vector.load %arg25[%c0_292, %c0_293] : memref<32x64xf32, #tpu.memory_space<vmem>>, vector<2x64xf32>
    %750 = arith.truncf %745 : vector<2x16xf32> to vector<2x16xbf16>
    %cst_294 = arith.constant dense<0.000000e+00> : vector<2x64xf32>
    %751 = tpu.matmul %750, %742, %cst_294 {dimension_numbers = #tpu.dot_dimension_numbers<[1], [0], [0], [1], [0, 0, 1, 1], [], []>} : vector<2x16xbf16>, vector<16x64xbf16>, vector<2x64xf32> -> vector<2x64xf32>
    %752 = arith.addf %749, %751 : vector<2x64xf32>
    %c30_295 = arith.constant 30 : index
    %c0_296 = arith.constant 0 : index
    %753 = vector.load %arg26[%c30_295, %c0_296] : memref<32x64xf32, #tpu.memory_space<vmem>>, vector<2x64xf32>
    %754 = arith.truncf %747 : vector<2x16xf32> to vector<2x16xbf16>
    %cst_297 = arith.constant dense<0.000000e+00> : vector<2x64xf32>
    %755 = tpu.matmul %754, %744, %cst_297 {dimension_numbers = #tpu.dot_dimension_numbers<[1], [0], [0], [1], [0, 0, 1, 1], [], []>} : vector<2x16xbf16>, vector<16x64xbf16>, vector<2x64xf32> -> vector<2x64xf32>
    %756 = arith.addf %753, %755 : vector<2x64xf32>
    %757 = arith.negf %752 : vector<2x64xf32>
    %758 = math.exp %757 : vector<2x64xf32>
    %cst_298 = arith.constant 1.000000e+00 : f32
    %759 = vector.broadcast %cst_298 : f32 to vector<2x64xf32>
    %760 = arith.addf %759, %758 : vector<2x64xf32>
    %761 = arith.divf %759, %760 : vector<2x64xf32>
    %762 = math.tanh %752 : vector<2x64xf32>
    %763 = vector.extract_strided_slice %761 {offsets = [0, 0], sizes = [2, 16], strides = [1, 1]} : vector<2x64xf32> to vector<2x16xf32>
    %764 = vector.extract_strided_slice %761 {offsets = [0, 16], sizes = [2, 16], strides = [1, 1]} : vector<2x64xf32> to vector<2x16xf32>
    %765 = vector.extract_strided_slice %761 {offsets = [0, 48], sizes = [2, 16], strides = [1, 1]} : vector<2x64xf32> to vector<2x16xf32>
    %766 = vector.extract_strided_slice %762 {offsets = [0, 32], sizes = [2, 16], strides = [1, 1]} : vector<2x64xf32> to vector<2x16xf32>
    %767 = arith.mulf %764, %746 : vector<2x16xf32>
    %768 = arith.mulf %763, %766 : vector<2x16xf32>
    %769 = arith.addf %767, %768 : vector<2x16xf32>
    %770 = math.tanh %769 : vector<2x16xf32>
    %771 = arith.mulf %765, %770 : vector<2x16xf32>
    %772 = arith.negf %756 : vector<2x64xf32>
    %773 = math.exp %772 : vector<2x64xf32>
    %cst_299 = arith.constant 1.000000e+00 : f32
    %774 = vector.broadcast %cst_299 : f32 to vector<2x64xf32>
    %775 = arith.addf %774, %773 : vector<2x64xf32>
    %776 = arith.divf %774, %775 : vector<2x64xf32>
    %777 = math.tanh %756 : vector<2x64xf32>
    %778 = vector.extract_strided_slice %776 {offsets = [0, 0], sizes = [2, 16], strides = [1, 1]} : vector<2x64xf32> to vector<2x16xf32>
    %779 = vector.extract_strided_slice %776 {offsets = [0, 16], sizes = [2, 16], strides = [1, 1]} : vector<2x64xf32> to vector<2x16xf32>
    %780 = vector.extract_strided_slice %776 {offsets = [0, 48], sizes = [2, 16], strides = [1, 1]} : vector<2x64xf32> to vector<2x16xf32>
    %781 = vector.extract_strided_slice %777 {offsets = [0, 32], sizes = [2, 16], strides = [1, 1]} : vector<2x64xf32> to vector<2x16xf32>
    %782 = arith.mulf %779, %748 : vector<2x16xf32>
    %783 = arith.mulf %778, %781 : vector<2x16xf32>
    %784 = arith.addf %782, %783 : vector<2x16xf32>
    %785 = math.tanh %784 : vector<2x16xf32>
    %786 = arith.mulf %780, %785 : vector<2x16xf32>
    %c0_300 = arith.constant 0 : index
    %c0_301 = arith.constant 0 : index
    %787 = vector.load %arg27[%c0_300, %c0_301] : memref<32x16xf32, #tpu.memory_space<vmem>>, vector<2x16xf32>
    tpu.vector_store %arg27[%c0_300, %c0_301], %771 {strides = array<i32>} : memref<32x16xf32, #tpu.memory_space<vmem>>, vector<2x16xf32>,
    %c30_302 = arith.constant 30 : index
    %c0_303 = arith.constant 0 : index
    %788 = vector.load %arg28[%c30_302, %c0_303] : memref<32x16xf32, #tpu.memory_space<vmem>>, vector<2x16xf32>
    tpu.vector_store %arg28[%c30_302, %c0_303], %786 {strides = array<i32>} : memref<32x16xf32, #tpu.memory_space<vmem>>, vector<2x16xf32>,
    %c2_304 = arith.constant 2 : index
    %c0_305 = arith.constant 0 : index
    %789 = vector.load %arg25[%c2_304, %c0_305] : memref<32x64xf32, #tpu.memory_space<vmem>>, vector<2x64xf32>
    %790 = arith.truncf %771 : vector<2x16xf32> to vector<2x16xbf16>
    %cst_306 = arith.constant dense<0.000000e+00> : vector<2x64xf32>
    %791 = tpu.matmul %790, %742, %cst_306 {dimension_numbers = #tpu.dot_dimension_numbers<[1], [0], [0], [1], [0, 0, 1, 1], [], []>} : vector<2x16xbf16>, vector<16x64xbf16>, vector<2x64xf32> -> vector<2x64xf32>
    %792 = arith.addf %789, %791 : vector<2x64xf32>
    %c28_307 = arith.constant 28 : index
    %c0_308 = arith.constant 0 : index
    %793 = vector.load %arg26[%c28_307, %c0_308] : memref<32x64xf32, #tpu.memory_space<vmem>>, vector<2x64xf32>
    %794 = arith.truncf %786 : vector<2x16xf32> to vector<2x16xbf16>
    %cst_309 = arith.constant dense<0.000000e+00> : vector<2x64xf32>
    %795 = tpu.matmul %794, %744, %cst_309 {dimension_numbers = #tpu.dot_dimension_numbers<[1], [0], [0], [1], [0, 0, 1, 1], [], []>} : vector<2x16xbf16>, vector<16x64xbf16>, vector<2x64xf32> -> vector<2x64xf32>
    %796 = arith.addf %793, %795 : vector<2x64xf32>
    %797 = arith.negf %792 : vector<2x64xf32>
    %798 = math.exp %797 : vector<2x64xf32>
    %cst_310 = arith.constant 1.000000e+00 : f32
    %799 = vector.broadcast %cst_310 : f32 to vector<2x64xf32>
    %800 = arith.addf %799, %798 : vector<2x64xf32>
    %801 = arith.divf %799, %800 : vector<2x64xf32>
    %802 = math.tanh %792 : vector<2x64xf32>
    %803 = vector.extract_strided_slice %801 {offsets = [0, 0], sizes = [2, 16], strides = [1, 1]} : vector<2x64xf32> to vector<2x16xf32>
    %804 = vector.extract_strided_slice %801 {offsets = [0, 16], sizes = [2, 16], strides = [1, 1]} : vector<2x64xf32> to vector<2x16xf32>
    %805 = vector.extract_strided_slice %801 {offsets = [0, 48], sizes = [2, 16], strides = [1, 1]} : vector<2x64xf32> to vector<2x16xf32>
    %806 = vector.extract_strided_slice %802 {offsets = [0, 32], sizes = [2, 16], strides = [1, 1]} : vector<2x64xf32> to vector<2x16xf32>
    %807 = arith.mulf %804, %769 : vector<2x16xf32>
    %808 = arith.mulf %803, %806 : vector<2x16xf32>
    %809 = arith.addf %807, %808 : vector<2x16xf32>
    %810 = math.tanh %809 : vector<2x16xf32>
    %811 = arith.mulf %805, %810 : vector<2x16xf32>
    %812 = arith.negf %796 : vector<2x64xf32>
    %813 = math.exp %812 : vector<2x64xf32>
    %cst_311 = arith.constant 1.000000e+00 : f32
    %814 = vector.broadcast %cst_311 : f32 to vector<2x64xf32>
    %815 = arith.addf %814, %813 : vector<2x64xf32>
    %816 = arith.divf %814, %815 : vector<2x64xf32>
    %817 = math.tanh %796 : vector<2x64xf32>
    %818 = vector.extract_strided_slice %816 {offsets = [0, 0], sizes = [2, 16], strides = [1, 1]} : vector<2x64xf32> to vector<2x16xf32>
    %819 = vector.extract_strided_slice %816 {offsets = [0, 16], sizes = [2, 16], strides = [1, 1]} : vector<2x64xf32> to vector<2x16xf32>
    %820 = vector.extract_strided_slice %816 {offsets = [0, 48], sizes = [2, 16], strides = [1, 1]} : vector<2x64xf32> to vector<2x16xf32>
    %821 = vector.extract_strided_slice %817 {offsets = [0, 32], sizes = [2, 16], strides = [1, 1]} : vector<2x64xf32> to vector<2x16xf32>
    %822 = arith.mulf %819, %784 : vector<2x16xf32>
    %823 = arith.mulf %818, %821 : vector<2x16xf32>
    %824 = arith.addf %822, %823 : vector<2x16xf32>
    %825 = math.tanh %824 : vector<2x16xf32>
    %826 = arith.mulf %820, %825 : vector<2x16xf32>
    %c2_312 = arith.constant 2 : index
    %c0_313 = arith.constant 0 : index
    %827 = vector.load %arg27[%c2_312, %c0_313] : memref<32x16xf32, #tpu.memory_space<vmem>>, vector<2x16xf32>
    tpu.vector_store %arg27[%c2_312, %c0_313], %811 {strides = array<i32>} : memref<32x16xf32, #tpu.memory_space<vmem>>, vector<2x16xf32>,
    %c28_314 = arith.constant 28 : index
    %c0_315 = arith.constant 0 : index
    %828 = vector.load %arg28[%c28_314, %c0_315] : memref<32x16xf32, #tpu.memory_space<vmem>>, vector<2x16xf32>
    tpu.vector_store %arg28[%c28_314, %c0_315], %826 {strides = array<i32>} : memref<32x16xf32, #tpu.memory_space<vmem>>, vector<2x16xf32>,
    %c4_316 = arith.constant 4 : index
    %c0_317 = arith.constant 0 : index
    %829 = vector.load %arg25[%c4_316, %c0_317] : memref<32x64xf32, #tpu.memory_space<vmem>>, vector<2x64xf32>
    %830 = arith.truncf %811 : vector<2x16xf32> to vector<2x16xbf16>
    %cst_318 = arith.constant dense<0.000000e+00> : vector<2x64xf32>
    %831 = tpu.matmul %830, %742, %cst_318 {dimension_numbers = #tpu.dot_dimension_numbers<[1], [0], [0], [1], [0, 0, 1, 1], [], []>} : vector<2x16xbf16>, vector<16x64xbf16>, vector<2x64xf32> -> vector<2x64xf32>
    %832 = arith.addf %829, %831 : vector<2x64xf32>
    %c26_319 = arith.constant 26 : index
    %c0_320 = arith.constant 0 : index
    %833 = vector.load %arg26[%c26_319, %c0_320] : memref<32x64xf32, #tpu.memory_space<vmem>>, vector<2x64xf32>
    %834 = arith.truncf %826 : vector<2x16xf32> to vector<2x16xbf16>
    %cst_321 = arith.constant dense<0.000000e+00> : vector<2x64xf32>
    %835 = tpu.matmul %834, %744, %cst_321 {dimension_numbers = #tpu.dot_dimension_numbers<[1], [0], [0], [1], [0, 0, 1, 1], [], []>} : vector<2x16xbf16>, vector<16x64xbf16>, vector<2x64xf32> -> vector<2x64xf32>
    %836 = arith.addf %833, %835 : vector<2x64xf32>
    %837 = arith.negf %832 : vector<2x64xf32>
    %838 = math.exp %837 : vector<2x64xf32>
    %cst_322 = arith.constant 1.000000e+00 : f32
    %839 = vector.broadcast %cst_322 : f32 to vector<2x64xf32>
    %840 = arith.addf %839, %838 : vector<2x64xf32>
    %841 = arith.divf %839, %840 : vector<2x64xf32>
    %842 = math.tanh %832 : vector<2x64xf32>
    %843 = vector.extract_strided_slice %841 {offsets = [0, 0], sizes = [2, 16], strides = [1, 1]} : vector<2x64xf32> to vector<2x16xf32>
    %844 = vector.extract_strided_slice %841 {offsets = [0, 16], sizes = [2, 16], strides = [1, 1]} : vector<2x64xf32> to vector<2x16xf32>
    %845 = vector.extract_strided_slice %841 {offsets = [0, 48], sizes = [2, 16], strides = [1, 1]} : vector<2x64xf32> to vector<2x16xf32>
    %846 = vector.extract_strided_slice %842 {offsets = [0, 32], sizes = [2, 16], strides = [1, 1]} : vector<2x64xf32> to vector<2x16xf32>
    %847 = arith.mulf %844, %809 : vector<2x16xf32>
    %848 = arith.mulf %843, %846 : vector<2x16xf32>
    %849 = arith.addf %847, %848 : vector<2x16xf32>
    %850 = math.tanh %849 : vector<2x16xf32>
    %851 = arith.mulf %845, %850 : vector<2x16xf32>
    %852 = arith.negf %836 : vector<2x64xf32>
    %853 = math.exp %852 : vector<2x64xf32>
    %cst_323 = arith.constant 1.000000e+00 : f32
    %854 = vector.broadcast %cst_323 : f32 to vector<2x64xf32>
    %855 = arith.addf %854, %853 : vector<2x64xf32>
    %856 = arith.divf %854, %855 : vector<2x64xf32>
    %857 = math.tanh %836 : vector<2x64xf32>
    %858 = vector.extract_strided_slice %856 {offsets = [0, 0], sizes = [2, 16], strides = [1, 1]} : vector<2x64xf32> to vector<2x16xf32>
    %859 = vector.extract_strided_slice %856 {offsets = [0, 16], sizes = [2, 16], strides = [1, 1]} : vector<2x64xf32> to vector<2x16xf32>
    %860 = vector.extract_strided_slice %856 {offsets = [0, 48], sizes = [2, 16], strides = [1, 1]} : vector<2x64xf32> to vector<2x16xf32>
    %861 = vector.extract_strided_slice %857 {offsets = [0, 32], sizes = [2, 16], strides = [1, 1]} : vector<2x64xf32> to vector<2x16xf32>
    %862 = arith.mulf %859, %824 : vector<2x16xf32>
    %863 = arith.mulf %858, %861 : vector<2x16xf32>
    %864 = arith.addf %862, %863 : vector<2x16xf32>
    %865 = math.tanh %864 : vector<2x16xf32>
    %866 = arith.mulf %860, %865 : vector<2x16xf32>
    %c4_324 = arith.constant 4 : index
    %c0_325 = arith.constant 0 : index
    %867 = vector.load %arg27[%c4_324, %c0_325] : memref<32x16xf32, #tpu.memory_space<vmem>>, vector<2x16xf32>
    tpu.vector_store %arg27[%c4_324, %c0_325], %851 {strides = array<i32>} : memref<32x16xf32, #tpu.memory_space<vmem>>, vector<2x16xf32>,
    %c26_326 = arith.constant 26 : index
    %c0_327 = arith.constant 0 : index
    %868 = vector.load %arg28[%c26_326, %c0_327] : memref<32x16xf32, #tpu.memory_space<vmem>>, vector<2x16xf32>
    tpu.vector_store %arg28[%c26_326, %c0_327], %866 {strides = array<i32>} : memref<32x16xf32, #tpu.memory_space<vmem>>, vector<2x16xf32>,
    %c6_328 = arith.constant 6 : index
    %c0_329 = arith.constant 0 : index
    %869 = vector.load %arg25[%c6_328, %c0_329] : memref<32x64xf32, #tpu.memory_space<vmem>>, vector<2x64xf32>
    %870 = arith.truncf %851 : vector<2x16xf32> to vector<2x16xbf16>
    %cst_330 = arith.constant dense<0.000000e+00> : vector<2x64xf32>
    %871 = tpu.matmul %870, %742, %cst_330 {dimension_numbers = #tpu.dot_dimension_numbers<[1], [0], [0], [1], [0, 0, 1, 1], [], []>} : vector<2x16xbf16>, vector<16x64xbf16>, vector<2x64xf32> -> vector<2x64xf32>
    %872 = arith.addf %869, %871 : vector<2x64xf32>
    %c24_331 = arith.constant 24 : index
    %c0_332 = arith.constant 0 : index
    %873 = vector.load %arg26[%c24_331, %c0_332] : memref<32x64xf32, #tpu.memory_space<vmem>>, vector<2x64xf32>
    %874 = arith.truncf %866 : vector<2x16xf32> to vector<2x16xbf16>
    %cst_333 = arith.constant dense<0.000000e+00> : vector<2x64xf32>
    %875 = tpu.matmul %874, %744, %cst_333 {dimension_numbers = #tpu.dot_dimension_numbers<[1], [0], [0], [1], [0, 0, 1, 1], [], []>} : vector<2x16xbf16>, vector<16x64xbf16>, vector<2x64xf32> -> vector<2x64xf32>
    %876 = arith.addf %873, %875 : vector<2x64xf32>
    %877 = arith.negf %872 : vector<2x64xf32>
    %878 = math.exp %877 : vector<2x64xf32>
    %cst_334 = arith.constant 1.000000e+00 : f32
    %879 = vector.broadcast %cst_334 : f32 to vector<2x64xf32>
    %880 = arith.addf %879, %878 : vector<2x64xf32>
    %881 = arith.divf %879, %880 : vector<2x64xf32>
    %882 = math.tanh %872 : vector<2x64xf32>
    %883 = vector.extract_strided_slice %881 {offsets = [0, 0], sizes = [2, 16], strides = [1, 1]} : vector<2x64xf32> to vector<2x16xf32>
    %884 = vector.extract_strided_slice %881 {offsets = [0, 16], sizes = [2, 16], strides = [1, 1]} : vector<2x64xf32> to vector<2x16xf32>
    %885 = vector.extract_strided_slice %881 {offsets = [0, 48], sizes = [2, 16], strides = [1, 1]} : vector<2x64xf32> to vector<2x16xf32>
    %886 = vector.extract_strided_slice %882 {offsets = [0, 32], sizes = [2, 16], strides = [1, 1]} : vector<2x64xf32> to vector<2x16xf32>
    %887 = arith.mulf %884, %849 : vector<2x16xf32>
    %888 = arith.mulf %883, %886 : vector<2x16xf32>
    %889 = arith.addf %887, %888 : vector<2x16xf32>
    %890 = math.tanh %889 : vector<2x16xf32>
    %891 = arith.mulf %885, %890 : vector<2x16xf32>
    %892 = arith.negf %876 : vector<2x64xf32>
    %893 = math.exp %892 : vector<2x64xf32>
    %cst_335 = arith.constant 1.000000e+00 : f32
    %894 = vector.broadcast %cst_335 : f32 to vector<2x64xf32>
    %895 = arith.addf %894, %893 : vector<2x64xf32>
    %896 = arith.divf %894, %895 : vector<2x64xf32>
    %897 = math.tanh %876 : vector<2x64xf32>
    %898 = vector.extract_strided_slice %896 {offsets = [0, 0], sizes = [2, 16], strides = [1, 1]} : vector<2x64xf32> to vector<2x16xf32>
    %899 = vector.extract_strided_slice %896 {offsets = [0, 16], sizes = [2, 16], strides = [1, 1]} : vector<2x64xf32> to vector<2x16xf32>
    %900 = vector.extract_strided_slice %896 {offsets = [0, 48], sizes = [2, 16], strides = [1, 1]} : vector<2x64xf32> to vector<2x16xf32>
    %901 = vector.extract_strided_slice %897 {offsets = [0, 32], sizes = [2, 16], strides = [1, 1]} : vector<2x64xf32> to vector<2x16xf32>
    %902 = arith.mulf %899, %864 : vector<2x16xf32>
    %903 = arith.mulf %898, %901 : vector<2x16xf32>
    %904 = arith.addf %902, %903 : vector<2x16xf32>
    %905 = math.tanh %904 : vector<2x16xf32>
    %906 = arith.mulf %900, %905 : vector<2x16xf32>
    %c6_336 = arith.constant 6 : index
    %c0_337 = arith.constant 0 : index
    %907 = vector.load %arg27[%c6_336, %c0_337] : memref<32x16xf32, #tpu.memory_space<vmem>>, vector<2x16xf32>
    tpu.vector_store %arg27[%c6_336, %c0_337], %891 {strides = array<i32>} : memref<32x16xf32, #tpu.memory_space<vmem>>, vector<2x16xf32>,
    %c24_338 = arith.constant 24 : index
    %c0_339 = arith.constant 0 : index
    %908 = vector.load %arg28[%c24_338, %c0_339] : memref<32x16xf32, #tpu.memory_space<vmem>>, vector<2x16xf32>
    tpu.vector_store %arg28[%c24_338, %c0_339], %906 {strides = array<i32>} : memref<32x16xf32, #tpu.memory_space<vmem>>, vector<2x16xf32>,
    %c8_340 = arith.constant 8 : index
    %c0_341 = arith.constant 0 : index
    %909 = vector.load %arg25[%c8_340, %c0_341] : memref<32x64xf32, #tpu.memory_space<vmem>>, vector<2x64xf32>
    %910 = arith.truncf %891 : vector<2x16xf32> to vector<2x16xbf16>
    %cst_342 = arith.constant dense<0.000000e+00> : vector<2x64xf32>
    %911 = tpu.matmul %910, %742, %cst_342 {dimension_numbers = #tpu.dot_dimension_numbers<[1], [0], [0], [1], [0, 0, 1, 1], [], []>} : vector<2x16xbf16>, vector<16x64xbf16>, vector<2x64xf32> -> vector<2x64xf32>
    %912 = arith.addf %909, %911 : vector<2x64xf32>
    %c22_343 = arith.constant 22 : index
    %c0_344 = arith.constant 0 : index
    %913 = vector.load %arg26[%c22_343, %c0_344] : memref<32x64xf32, #tpu.memory_space<vmem>>, vector<2x64xf32>
    %914 = arith.truncf %906 : vector<2x16xf32> to vector<2x16xbf16>
    %cst_345 = arith.constant dense<0.000000e+00> : vector<2x64xf32>
    %915 = tpu.matmul %914, %744, %cst_345 {dimension_numbers = #tpu.dot_dimension_numbers<[1], [0], [0], [1], [0, 0, 1, 1], [], []>} : vector<2x16xbf16>, vector<16x64xbf16>, vector<2x64xf32> -> vector<2x64xf32>
    %916 = arith.addf %913, %915 : vector<2x64xf32>
    %917 = arith.negf %912 : vector<2x64xf32>
    %918 = math.exp %917 : vector<2x64xf32>
    %cst_346 = arith.constant 1.000000e+00 : f32
    %919 = vector.broadcast %cst_346 : f32 to vector<2x64xf32>
    %920 = arith.addf %919, %918 : vector<2x64xf32>
    %921 = arith.divf %919, %920 : vector<2x64xf32>
    %922 = math.tanh %912 : vector<2x64xf32>
    %923 = vector.extract_strided_slice %921 {offsets = [0, 0], sizes = [2, 16], strides = [1, 1]} : vector<2x64xf32> to vector<2x16xf32>
    %924 = vector.extract_strided_slice %921 {offsets = [0, 16], sizes = [2, 16], strides = [1, 1]} : vector<2x64xf32> to vector<2x16xf32>
    %925 = vector.extract_strided_slice %921 {offsets = [0, 48], sizes = [2, 16], strides = [1, 1]} : vector<2x64xf32> to vector<2x16xf32>
    %926 = vector.extract_strided_slice %922 {offsets = [0, 32], sizes = [2, 16], strides = [1, 1]} : vector<2x64xf32> to vector<2x16xf32>
    %927 = arith.mulf %924, %889 : vector<2x16xf32>
    %928 = arith.mulf %923, %926 : vector<2x16xf32>
    %929 = arith.addf %927, %928 : vector<2x16xf32>
    %930 = math.tanh %929 : vector<2x16xf32>
    %931 = arith.mulf %925, %930 : vector<2x16xf32>
    %932 = arith.negf %916 : vector<2x64xf32>
    %933 = math.exp %932 : vector<2x64xf32>
    %cst_347 = arith.constant 1.000000e+00 : f32
    %934 = vector.broadcast %cst_347 : f32 to vector<2x64xf32>
    %935 = arith.addf %934, %933 : vector<2x64xf32>
    %936 = arith.divf %934, %935 : vector<2x64xf32>
    %937 = math.tanh %916 : vector<2x64xf32>
    %938 = vector.extract_strided_slice %936 {offsets = [0, 0], sizes = [2, 16], strides = [1, 1]} : vector<2x64xf32> to vector<2x16xf32>
    %939 = vector.extract_strided_slice %936 {offsets = [0, 16], sizes = [2, 16], strides = [1, 1]} : vector<2x64xf32> to vector<2x16xf32>
    %940 = vector.extract_strided_slice %936 {offsets = [0, 48], sizes = [2, 16], strides = [1, 1]} : vector<2x64xf32> to vector<2x16xf32>
    %941 = vector.extract_strided_slice %937 {offsets = [0, 32], sizes = [2, 16], strides = [1, 1]} : vector<2x64xf32> to vector<2x16xf32>
    %942 = arith.mulf %939, %904 : vector<2x16xf32>
    %943 = arith.mulf %938, %941 : vector<2x16xf32>
    %944 = arith.addf %942, %943 : vector<2x16xf32>
    %945 = math.tanh %944 : vector<2x16xf32>
    %946 = arith.mulf %940, %945 : vector<2x16xf32>
    %c8_348 = arith.constant 8 : index
    %c0_349 = arith.constant 0 : index
    %947 = vector.load %arg27[%c8_348, %c0_349] : memref<32x16xf32, #tpu.memory_space<vmem>>, vector<2x16xf32>
    tpu.vector_store %arg27[%c8_348, %c0_349], %931 {strides = array<i32>} : memref<32x16xf32, #tpu.memory_space<vmem>>, vector<2x16xf32>,
    %c22_350 = arith.constant 22 : index
    %c0_351 = arith.constant 0 : index
    %948 = vector.load %arg28[%c22_350, %c0_351] : memref<32x16xf32, #tpu.memory_space<vmem>>, vector<2x16xf32>
    tpu.vector_store %arg28[%c22_350, %c0_351], %946 {strides = array<i32>} : memref<32x16xf32, #tpu.memory_space<vmem>>, vector<2x16xf32>,
    %c10_352 = arith.constant 10 : index
    %c0_353 = arith.constant 0 : index
    %949 = vector.load %arg25[%c10_352, %c0_353] : memref<32x64xf32, #tpu.memory_space<vmem>>, vector<2x64xf32>
    %950 = arith.truncf %931 : vector<2x16xf32> to vector<2x16xbf16>
    %cst_354 = arith.constant dense<0.000000e+00> : vector<2x64xf32>
    %951 = tpu.matmul %950, %742, %cst_354 {dimension_numbers = #tpu.dot_dimension_numbers<[1], [0], [0], [1], [0, 0, 1, 1], [], []>} : vector<2x16xbf16>, vector<16x64xbf16>, vector<2x64xf32> -> vector<2x64xf32>
    %952 = arith.addf %949, %951 : vector<2x64xf32>
    %c20_355 = arith.constant 20 : index
    %c0_356 = arith.constant 0 : index
    %953 = vector.load %arg26[%c20_355, %c0_356] : memref<32x64xf32, #tpu.memory_space<vmem>>, vector<2x64xf32>
    %954 = arith.truncf %946 : vector<2x16xf32> to vector<2x16xbf16>
    %cst_357 = arith.constant dense<0.000000e+00> : vector<2x64xf32>
    %955 = tpu.matmul %954, %744, %cst_357 {dimension_numbers = #tpu.dot_dimension_numbers<[1], [0], [0], [1], [0, 0, 1, 1], [], []>} : vector<2x16xbf16>, vector<16x64xbf16>, vector<2x64xf32> -> vector<2x64xf32>
    %956 = arith.addf %953, %955 : vector<2x64xf32>
    %957 = arith.negf %952 : vector<2x64xf32>
    %958 = math.exp %957 : vector<2x64xf32>
    %cst_358 = arith.constant 1.000000e+00 : f32
    %959 = vector.broadcast %cst_358 : f32 to vector<2x64xf32>
    %960 = arith.addf %959, %958 : vector<2x64xf32>
    %961 = arith.divf %959, %960 : vector<2x64xf32>
    %962 = math.tanh %952 : vector<2x64xf32>
    %963 = vector.extract_strided_slice %961 {offsets = [0, 0], sizes = [2, 16], strides = [1, 1]} : vector<2x64xf32> to vector<2x16xf32>
    %964 = vector.extract_strided_slice %961 {offsets = [0, 16], sizes = [2, 16], strides = [1, 1]} : vector<2x64xf32> to vector<2x16xf32>
    %965 = vector.extract_strided_slice %961 {offsets = [0, 48], sizes = [2, 16], strides = [1, 1]} : vector<2x64xf32> to vector<2x16xf32>
    %966 = vector.extract_strided_slice %962 {offsets = [0, 32], sizes = [2, 16], strides = [1, 1]} : vector<2x64xf32> to vector<2x16xf32>
    %967 = arith.mulf %964, %929 : vector<2x16xf32>
    %968 = arith.mulf %963, %966 : vector<2x16xf32>
    %969 = arith.addf %967, %968 : vector<2x16xf32>
    %970 = math.tanh %969 : vector<2x16xf32>
    %971 = arith.mulf %965, %970 : vector<2x16xf32>
    %972 = arith.negf %956 : vector<2x64xf32>
    %973 = math.exp %972 : vector<2x64xf32>
    %cst_359 = arith.constant 1.000000e+00 : f32
    %974 = vector.broadcast %cst_359 : f32 to vector<2x64xf32>
    %975 = arith.addf %974, %973 : vector<2x64xf32>
    %976 = arith.divf %974, %975 : vector<2x64xf32>
    %977 = math.tanh %956 : vector<2x64xf32>
    %978 = vector.extract_strided_slice %976 {offsets = [0, 0], sizes = [2, 16], strides = [1, 1]} : vector<2x64xf32> to vector<2x16xf32>
    %979 = vector.extract_strided_slice %976 {offsets = [0, 16], sizes = [2, 16], strides = [1, 1]} : vector<2x64xf32> to vector<2x16xf32>
    %980 = vector.extract_strided_slice %976 {offsets = [0, 48], sizes = [2, 16], strides = [1, 1]} : vector<2x64xf32> to vector<2x16xf32>
    %981 = vector.extract_strided_slice %977 {offsets = [0, 32], sizes = [2, 16], strides = [1, 1]} : vector<2x64xf32> to vector<2x16xf32>
    %982 = arith.mulf %979, %944 : vector<2x16xf32>
    %983 = arith.mulf %978, %981 : vector<2x16xf32>
    %984 = arith.addf %982, %983 : vector<2x16xf32>
    %985 = math.tanh %984 : vector<2x16xf32>
    %986 = arith.mulf %980, %985 : vector<2x16xf32>
    %c10_360 = arith.constant 10 : index
    %c0_361 = arith.constant 0 : index
    %987 = vector.load %arg27[%c10_360, %c0_361] : memref<32x16xf32, #tpu.memory_space<vmem>>, vector<2x16xf32>
    tpu.vector_store %arg27[%c10_360, %c0_361], %971 {strides = array<i32>} : memref<32x16xf32, #tpu.memory_space<vmem>>, vector<2x16xf32>,
    %c20_362 = arith.constant 20 : index
    %c0_363 = arith.constant 0 : index
    %988 = vector.load %arg28[%c20_362, %c0_363] : memref<32x16xf32, #tpu.memory_space<vmem>>, vector<2x16xf32>
    tpu.vector_store %arg28[%c20_362, %c0_363], %986 {strides = array<i32>} : memref<32x16xf32, #tpu.memory_space<vmem>>, vector<2x16xf32>,
    %c12_364 = arith.constant 12 : index
    %c0_365 = arith.constant 0 : index
    %989 = vector.load %arg25[%c12_364, %c0_365] : memref<32x64xf32, #tpu.memory_space<vmem>>, vector<2x64xf32>
    %990 = arith.truncf %971 : vector<2x16xf32> to vector<2x16xbf16>
    %cst_366 = arith.constant dense<0.000000e+00> : vector<2x64xf32>
    %991 = tpu.matmul %990, %742, %cst_366 {dimension_numbers = #tpu.dot_dimension_numbers<[1], [0], [0], [1], [0, 0, 1, 1], [], []>} : vector<2x16xbf16>, vector<16x64xbf16>, vector<2x64xf32> -> vector<2x64xf32>
    %992 = arith.addf %989, %991 : vector<2x64xf32>
    %c18_367 = arith.constant 18 : index
    %c0_368 = arith.constant 0 : index
    %993 = vector.load %arg26[%c18_367, %c0_368] : memref<32x64xf32, #tpu.memory_space<vmem>>, vector<2x64xf32>
    %994 = arith.truncf %986 : vector<2x16xf32> to vector<2x16xbf16>
    %cst_369 = arith.constant dense<0.000000e+00> : vector<2x64xf32>
    %995 = tpu.matmul %994, %744, %cst_369 {dimension_numbers = #tpu.dot_dimension_numbers<[1], [0], [0], [1], [0, 0, 1, 1], [], []>} : vector<2x16xbf16>, vector<16x64xbf16>, vector<2x64xf32> -> vector<2x64xf32>
    %996 = arith.addf %993, %995 : vector<2x64xf32>
    %997 = arith.negf %992 : vector<2x64xf32>
    %998 = math.exp %997 : vector<2x64xf32>
    %cst_370 = arith.constant 1.000000e+00 : f32
    %999 = vector.broadcast %cst_370 : f32 to vector<2x64xf32>
    %1000 = arith.addf %999, %998 : vector<2x64xf32>
    %1001 = arith.divf %999, %1000 : vector<2x64xf32>
    %1002 = math.tanh %992 : vector<2x64xf32>
    %1003 = vector.extract_strided_slice %1001 {offsets = [0, 0], sizes = [2, 16], strides = [1, 1]} : vector<2x64xf32> to vector<2x16xf32>
    %1004 = vector.extract_strided_slice %1001 {offsets = [0, 16], sizes = [2, 16], strides = [1, 1]} : vector<2x64xf32> to vector<2x16xf32>
    %1005 = vector.extract_strided_slice %1001 {offsets = [0, 48], sizes = [2, 16], strides = [1, 1]} : vector<2x64xf32> to vector<2x16xf32>
    %1006 = vector.extract_strided_slice %1002 {offsets = [0, 32], sizes = [2, 16], strides = [1, 1]} : vector<2x64xf32> to vector<2x16xf32>
    %1007 = arith.mulf %1004, %969 : vector<2x16xf32>
    %1008 = arith.mulf %1003, %1006 : vector<2x16xf32>
    %1009 = arith.addf %1007, %1008 : vector<2x16xf32>
    %1010 = math.tanh %1009 : vector<2x16xf32>
    %1011 = arith.mulf %1005, %1010 : vector<2x16xf32>
    %1012 = arith.negf %996 : vector<2x64xf32>
    %1013 = math.exp %1012 : vector<2x64xf32>
    %cst_371 = arith.constant 1.000000e+00 : f32
    %1014 = vector.broadcast %cst_371 : f32 to vector<2x64xf32>
    %1015 = arith.addf %1014, %1013 : vector<2x64xf32>
    %1016 = arith.divf %1014, %1015 : vector<2x64xf32>
    %1017 = math.tanh %996 : vector<2x64xf32>
    %1018 = vector.extract_strided_slice %1016 {offsets = [0, 0], sizes = [2, 16], strides = [1, 1]} : vector<2x64xf32> to vector<2x16xf32>
    %1019 = vector.extract_strided_slice %1016 {offsets = [0, 16], sizes = [2, 16], strides = [1, 1]} : vector<2x64xf32> to vector<2x16xf32>
    %1020 = vector.extract_strided_slice %1016 {offsets = [0, 48], sizes = [2, 16], strides = [1, 1]} : vector<2x64xf32> to vector<2x16xf32>
    %1021 = vector.extract_strided_slice %1017 {offsets = [0, 32], sizes = [2, 16], strides = [1, 1]} : vector<2x64xf32> to vector<2x16xf32>
    %1022 = arith.mulf %1019, %984 : vector<2x16xf32>
    %1023 = arith.mulf %1018, %1021 : vector<2x16xf32>
    %1024 = arith.addf %1022, %1023 : vector<2x16xf32>
    %1025 = math.tanh %1024 : vector<2x16xf32>
    %1026 = arith.mulf %1020, %1025 : vector<2x16xf32>
    %c12_372 = arith.constant 12 : index
    %c0_373 = arith.constant 0 : index
    %1027 = vector.load %arg27[%c12_372, %c0_373] : memref<32x16xf32, #tpu.memory_space<vmem>>, vector<2x16xf32>
    tpu.vector_store %arg27[%c12_372, %c0_373], %1011 {strides = array<i32>} : memref<32x16xf32, #tpu.memory_space<vmem>>, vector<2x16xf32>,
    %c18_374 = arith.constant 18 : index
    %c0_375 = arith.constant 0 : index
    %1028 = vector.load %arg28[%c18_374, %c0_375] : memref<32x16xf32, #tpu.memory_space<vmem>>, vector<2x16xf32>
    tpu.vector_store %arg28[%c18_374, %c0_375], %1026 {strides = array<i32>} : memref<32x16xf32, #tpu.memory_space<vmem>>, vector<2x16xf32>,
    %c14_376 = arith.constant 14 : index
    %c0_377 = arith.constant 0 : index
    %1029 = vector.load %arg25[%c14_376, %c0_377] : memref<32x64xf32, #tpu.memory_space<vmem>>, vector<2x64xf32>
    %1030 = arith.truncf %1011 : vector<2x16xf32> to vector<2x16xbf16>
    %cst_378 = arith.constant dense<0.000000e+00> : vector<2x64xf32>
    %1031 = tpu.matmul %1030, %742, %cst_378 {dimension_numbers = #tpu.dot_dimension_numbers<[1], [0], [0], [1], [0, 0, 1, 1], [], []>} : vector<2x16xbf16>, vector<16x64xbf16>, vector<2x64xf32> -> vector<2x64xf32>
    %1032 = arith.addf %1029, %1031 : vector<2x64xf32>
    %c16_379 = arith.constant 16 : index
    %c0_380 = arith.constant 0 : index
    %1033 = vector.load %arg26[%c16_379, %c0_380] : memref<32x64xf32, #tpu.memory_space<vmem>>, vector<2x64xf32>
    %1034 = arith.truncf %1026 : vector<2x16xf32> to vector<2x16xbf16>
    %cst_381 = arith.constant dense<0.000000e+00> : vector<2x64xf32>
    %1035 = tpu.matmul %1034, %744, %cst_381 {dimension_numbers = #tpu.dot_dimension_numbers<[1], [0], [0], [1], [0, 0, 1, 1], [], []>} : vector<2x16xbf16>, vector<16x64xbf16>, vector<2x64xf32> -> vector<2x64xf32>
    %1036 = arith.addf %1033, %1035 : vector<2x64xf32>
    %1037 = arith.negf %1032 : vector<2x64xf32>
    %1038 = math.exp %1037 : vector<2x64xf32>
    %cst_382 = arith.constant 1.000000e+00 : f32
    %1039 = vector.broadcast %cst_382 : f32 to vector<2x64xf32>
    %1040 = arith.addf %1039, %1038 : vector<2x64xf32>
    %1041 = arith.divf %1039, %1040 : vector<2x64xf32>
    %1042 = math.tanh %1032 : vector<2x64xf32>
    %1043 = vector.extract_strided_slice %1041 {offsets = [0, 0], sizes = [2, 16], strides = [1, 1]} : vector<2x64xf32> to vector<2x16xf32>
    %1044 = vector.extract_strided_slice %1041 {offsets = [0, 16], sizes = [2, 16], strides = [1, 1]} : vector<2x64xf32> to vector<2x16xf32>
    %1045 = vector.extract_strided_slice %1041 {offsets = [0, 48], sizes = [2, 16], strides = [1, 1]} : vector<2x64xf32> to vector<2x16xf32>
    %1046 = vector.extract_strided_slice %1042 {offsets = [0, 32], sizes = [2, 16], strides = [1, 1]} : vector<2x64xf32> to vector<2x16xf32>
    %1047 = arith.mulf %1044, %1009 : vector<2x16xf32>
    %1048 = arith.mulf %1043, %1046 : vector<2x16xf32>
    %1049 = arith.addf %1047, %1048 : vector<2x16xf32>
    %1050 = math.tanh %1049 : vector<2x16xf32>
    %1051 = arith.mulf %1045, %1050 : vector<2x16xf32>
    %1052 = arith.negf %1036 : vector<2x64xf32>
    %1053 = math.exp %1052 : vector<2x64xf32>
    %cst_383 = arith.constant 1.000000e+00 : f32
    %1054 = vector.broadcast %cst_383 : f32 to vector<2x64xf32>
    %1055 = arith.addf %1054, %1053 : vector<2x64xf32>
    %1056 = arith.divf %1054, %1055 : vector<2x64xf32>
    %1057 = math.tanh %1036 : vector<2x64xf32>
    %1058 = vector.extract_strided_slice %1056 {offsets = [0, 0], sizes = [2, 16], strides = [1, 1]} : vector<2x64xf32> to vector<2x16xf32>
    %1059 = vector.extract_strided_slice %1056 {offsets = [0, 16], sizes = [2, 16], strides = [1, 1]} : vector<2x64xf32> to vector<2x16xf32>
    %1060 = vector.extract_strided_slice %1056 {offsets = [0, 48], sizes = [2, 16], strides = [1, 1]} : vector<2x64xf32> to vector<2x16xf32>
    %1061 = vector.extract_strided_slice %1057 {offsets = [0, 32], sizes = [2, 16], strides = [1, 1]} : vector<2x64xf32> to vector<2x16xf32>
    %1062 = arith.mulf %1059, %1024 : vector<2x16xf32>
    %1063 = arith.mulf %1058, %1061 : vector<2x16xf32>
    %1064 = arith.addf %1062, %1063 : vector<2x16xf32>
    %1065 = math.tanh %1064 : vector<2x16xf32>
    %1066 = arith.mulf %1060, %1065 : vector<2x16xf32>
    %c14_384 = arith.constant 14 : index
    %c0_385 = arith.constant 0 : index
    %1067 = vector.load %arg27[%c14_384, %c0_385] : memref<32x16xf32, #tpu.memory_space<vmem>>, vector<2x16xf32>
    tpu.vector_store %arg27[%c14_384, %c0_385], %1051 {strides = array<i32>} : memref<32x16xf32, #tpu.memory_space<vmem>>, vector<2x16xf32>,
    %c16_386 = arith.constant 16 : index
    %c0_387 = arith.constant 0 : index
    %1068 = vector.load %arg28[%c16_386, %c0_387] : memref<32x16xf32, #tpu.memory_space<vmem>>, vector<2x16xf32>
    tpu.vector_store %arg28[%c16_386, %c0_387], %1066 {strides = array<i32>} : memref<32x16xf32, #tpu.memory_space<vmem>>, vector<2x16xf32>,
    %c16_388 = arith.constant 16 : index
    %c0_389 = arith.constant 0 : index
    %1069 = vector.load %arg25[%c16_388, %c0_389] : memref<32x64xf32, #tpu.memory_space<vmem>>, vector<2x64xf32>
    %1070 = arith.truncf %1051 : vector<2x16xf32> to vector<2x16xbf16>
    %cst_390 = arith.constant dense<0.000000e+00> : vector<2x64xf32>
    %1071 = tpu.matmul %1070, %742, %cst_390 {dimension_numbers = #tpu.dot_dimension_numbers<[1], [0], [0], [1], [0, 0, 1, 1], [], []>} : vector<2x16xbf16>, vector<16x64xbf16>, vector<2x64xf32> -> vector<2x64xf32>
    %1072 = arith.addf %1069, %1071 : vector<2x64xf32>
    %c14_391 = arith.constant 14 : index
    %c0_392 = arith.constant 0 : index
    %1073 = vector.load %arg26[%c14_391, %c0_392] : memref<32x64xf32, #tpu.memory_space<vmem>>, vector<2x64xf32>
    %1074 = arith.truncf %1066 : vector<2x16xf32> to vector<2x16xbf16>
    %cst_393 = arith.constant dense<0.000000e+00> : vector<2x64xf32>
    %1075 = tpu.matmul %1074, %744, %cst_393 {dimension_numbers = #tpu.dot_dimension_numbers<[1], [0], [0], [1], [0, 0, 1, 1], [], []>} : vector<2x16xbf16>, vector<16x64xbf16>, vector<2x64xf32> -> vector<2x64xf32>
    %1076 = arith.addf %1073, %1075 : vector<2x64xf32>
    %1077 = arith.negf %1072 : vector<2x64xf32>
    %1078 = math.exp %1077 : vector<2x64xf32>
    %cst_394 = arith.constant 1.000000e+00 : f32
    %1079 = vector.broadcast %cst_394 : f32 to vector<2x64xf32>
    %1080 = arith.addf %1079, %1078 : vector<2x64xf32>
    %1081 = arith.divf %1079, %1080 : vector<2x64xf32>
    %1082 = math.tanh %1072 : vector<2x64xf32>
    %1083 = vector.extract_strided_slice %1081 {offsets = [0, 0], sizes = [2, 16], strides = [1, 1]} : vector<2x64xf32> to vector<2x16xf32>
    %1084 = vector.extract_strided_slice %1081 {offsets = [0, 16], sizes = [2, 16], strides = [1, 1]} : vector<2x64xf32> to vector<2x16xf32>
    %1085 = vector.extract_strided_slice %1081 {offsets = [0, 48], sizes = [2, 16], strides = [1, 1]} : vector<2x64xf32> to vector<2x16xf32>
    %1086 = vector.extract_strided_slice %1082 {offsets = [0, 32], sizes = [2, 16], strides = [1, 1]} : vector<2x64xf32> to vector<2x16xf32>
    %1087 = arith.mulf %1084, %1049 : vector<2x16xf32>
    %1088 = arith.mulf %1083, %1086 : vector<2x16xf32>
    %1089 = arith.addf %1087, %1088 : vector<2x16xf32>
    %1090 = math.tanh %1089 : vector<2x16xf32>
    %1091 = arith.mulf %1085, %1090 : vector<2x16xf32>
    %1092 = arith.negf %1076 : vector<2x64xf32>
    %1093 = math.exp %1092 : vector<2x64xf32>
    %cst_395 = arith.constant 1.000000e+00 : f32
    %1094 = vector.broadcast %cst_395 : f32 to vector<2x64xf32>
    %1095 = arith.addf %1094, %1093 : vector<2x64xf32>
    %1096 = arith.divf %1094, %1095 : vector<2x64xf32>
    %1097 = math.tanh %1076 : vector<2x64xf32>
    %1098 = vector.extract_strided_slice %1096 {offsets = [0, 0], sizes = [2, 16], strides = [1, 1]} : vector<2x64xf32> to vector<2x16xf32>
    %1099 = vector.extract_strided_slice %1096 {offsets = [0, 16], sizes = [2, 16], strides = [1, 1]} : vector<2x64xf32> to vector<2x16xf32>
    %1100 = vector.extract_strided_slice %1096 {offsets = [0, 48], sizes = [2, 16], strides = [1, 1]} : vector<2x64xf32> to vector<2x16xf32>
    %1101 = vector.extract_strided_slice %1097 {offsets = [0, 32], sizes = [2, 16], strides = [1, 1]} : vector<2x64xf32> to vector<2x16xf32>
    %1102 = arith.mulf %1099, %1064 : vector<2x16xf32>
    %1103 = arith.mulf %1098, %1101 : vector<2x16xf32>
    %1104 = arith.addf %1102, %1103 : vector<2x16xf32>
    %1105 = math.tanh %1104 : vector<2x16xf32>
    %1106 = arith.mulf %1100, %1105 : vector<2x16xf32>
    %c16_396 = arith.constant 16 : index
    %c0_397 = arith.constant 0 : index
    %1107 = vector.load %arg27[%c16_396, %c0_397] : memref<32x16xf32, #tpu.memory_space<vmem>>, vector<2x16xf32>
    tpu.vector_store %arg27[%c16_396, %c0_397], %1091 {strides = array<i32>} : memref<32x16xf32, #tpu.memory_space<vmem>>, vector<2x16xf32>,
    %c14_398 = arith.constant 14 : index
    %c0_399 = arith.constant 0 : index
    %1108 = vector.load %arg28[%c14_398, %c0_399] : memref<32x16xf32, #tpu.memory_space<vmem>>, vector<2x16xf32>
    tpu.vector_store %arg28[%c14_398, %c0_399], %1106 {strides = array<i32>} : memref<32x16xf32, #tpu.memory_space<vmem>>, vector<2x16xf32>,
    %c18_400 = arith.constant 18 : index
    %c0_401 = arith.constant 0 : index
    %1109 = vector.load %arg25[%c18_400, %c0_401] : memref<32x64xf32, #tpu.memory_space<vmem>>, vector<2x64xf32>
    %1110 = arith.truncf %1091 : vector<2x16xf32> to vector<2x16xbf16>
    %cst_402 = arith.constant dense<0.000000e+00> : vector<2x64xf32>
    %1111 = tpu.matmul %1110, %742, %cst_402 {dimension_numbers = #tpu.dot_dimension_numbers<[1], [0], [0], [1], [0, 0, 1, 1], [], []>} : vector<2x16xbf16>, vector<16x64xbf16>, vector<2x64xf32> -> vector<2x64xf32>
    %1112 = arith.addf %1109, %1111 : vector<2x64xf32>
    %c12_403 = arith.constant 12 : index
    %c0_404 = arith.constant 0 : index
    %1113 = vector.load %arg26[%c12_403, %c0_404] : memref<32x64xf32, #tpu.memory_space<vmem>>, vector<2x64xf32>
    %1114 = arith.truncf %1106 : vector<2x16xf32> to vector<2x16xbf16>
    %cst_405 = arith.constant dense<0.000000e+00> : vector<2x64xf32>
    %1115 = tpu.matmul %1114, %744, %cst_405 {dimension_numbers = #tpu.dot_dimension_numbers<[1], [0], [0], [1], [0, 0, 1, 1], [], []>} : vector<2x16xbf16>, vector<16x64xbf16>, vector<2x64xf32> -> vector<2x64xf32>
    %1116 = arith.addf %1113, %1115 : vector<2x64xf32>
    %1117 = arith.negf %1112 : vector<2x64xf32>
    %1118 = math.exp %1117 : vector<2x64xf32>
    %cst_406 = arith.constant 1.000000e+00 : f32
    %1119 = vector.broadcast %cst_406 : f32 to vector<2x64xf32>
    %1120 = arith.addf %1119, %1118 : vector<2x64xf32>
    %1121 = arith.divf %1119, %1120 : vector<2x64xf32>
    %1122 = math.tanh %1112 : vector<2x64xf32>
    %1123 = vector.extract_strided_slice %1121 {offsets = [0, 0], sizes = [2, 16], strides = [1, 1]} : vector<2x64xf32> to vector<2x16xf32>
    %1124 = vector.extract_strided_slice %1121 {offsets = [0, 16], sizes = [2, 16], strides = [1, 1]} : vector<2x64xf32> to vector<2x16xf32>
    %1125 = vector.extract_strided_slice %1121 {offsets = [0, 48], sizes = [2, 16], strides = [1, 1]} : vector<2x64xf32> to vector<2x16xf32>
    %1126 = vector.extract_strided_slice %1122 {offsets = [0, 32], sizes = [2, 16], strides = [1, 1]} : vector<2x64xf32> to vector<2x16xf32>
    %1127 = arith.mulf %1124, %1089 : vector<2x16xf32>
    %1128 = arith.mulf %1123, %1126 : vector<2x16xf32>
    %1129 = arith.addf %1127, %1128 : vector<2x16xf32>
    %1130 = math.tanh %1129 : vector<2x16xf32>
    %1131 = arith.mulf %1125, %1130 : vector<2x16xf32>
    %1132 = arith.negf %1116 : vector<2x64xf32>
    %1133 = math.exp %1132 : vector<2x64xf32>
    %cst_407 = arith.constant 1.000000e+00 : f32
    %1134 = vector.broadcast %cst_407 : f32 to vector<2x64xf32>
    %1135 = arith.addf %1134, %1133 : vector<2x64xf32>
    %1136 = arith.divf %1134, %1135 : vector<2x64xf32>
    %1137 = math.tanh %1116 : vector<2x64xf32>
    %1138 = vector.extract_strided_slice %1136 {offsets = [0, 0], sizes = [2, 16], strides = [1, 1]} : vector<2x64xf32> to vector<2x16xf32>
    %1139 = vector.extract_strided_slice %1136 {offsets = [0, 16], sizes = [2, 16], strides = [1, 1]} : vector<2x64xf32> to vector<2x16xf32>
    %1140 = vector.extract_strided_slice %1136 {offsets = [0, 48], sizes = [2, 16], strides = [1, 1]} : vector<2x64xf32> to vector<2x16xf32>
    %1141 = vector.extract_strided_slice %1137 {offsets = [0, 32], sizes = [2, 16], strides = [1, 1]} : vector<2x64xf32> to vector<2x16xf32>
    %1142 = arith.mulf %1139, %1104 : vector<2x16xf32>
    %1143 = arith.mulf %1138, %1141 : vector<2x16xf32>
    %1144 = arith.addf %1142, %1143 : vector<2x16xf32>
    %1145 = math.tanh %1144 : vector<2x16xf32>
    %1146 = arith.mulf %1140, %1145 : vector<2x16xf32>
    %c18_408 = arith.constant 18 : index
    %c0_409 = arith.constant 0 : index
    %1147 = vector.load %arg27[%c18_408, %c0_409] : memref<32x16xf32, #tpu.memory_space<vmem>>, vector<2x16xf32>
    tpu.vector_store %arg27[%c18_408, %c0_409], %1131 {strides = array<i32>} : memref<32x16xf32, #tpu.memory_space<vmem>>, vector<2x16xf32>,
    %c12_410 = arith.constant 12 : index
    %c0_411 = arith.constant 0 : index
    %1148 = vector.load %arg28[%c12_410, %c0_411] : memref<32x16xf32, #tpu.memory_space<vmem>>, vector<2x16xf32>
    tpu.vector_store %arg28[%c12_410, %c0_411], %1146 {strides = array<i32>} : memref<32x16xf32, #tpu.memory_space<vmem>>, vector<2x16xf32>,
    %c20_412 = arith.constant 20 : index
    %c0_413 = arith.constant 0 : index
    %1149 = vector.load %arg25[%c20_412, %c0_413] : memref<32x64xf32, #tpu.memory_space<vmem>>, vector<2x64xf32>
    %1150 = arith.truncf %1131 : vector<2x16xf32> to vector<2x16xbf16>
    %cst_414 = arith.constant dense<0.000000e+00> : vector<2x64xf32>
    %1151 = tpu.matmul %1150, %742, %cst_414 {dimension_numbers = #tpu.dot_dimension_numbers<[1], [0], [0], [1], [0, 0, 1, 1], [], []>} : vector<2x16xbf16>, vector<16x64xbf16>, vector<2x64xf32> -> vector<2x64xf32>
    %1152 = arith.addf %1149, %1151 : vector<2x64xf32>
    %c10_415 = arith.constant 10 : index
    %c0_416 = arith.constant 0 : index
    %1153 = vector.load %arg26[%c10_415, %c0_416] : memref<32x64xf32, #tpu.memory_space<vmem>>, vector<2x64xf32>
    %1154 = arith.truncf %1146 : vector<2x16xf32> to vector<2x16xbf16>
    %cst_417 = arith.constant dense<0.000000e+00> : vector<2x64xf32>
    %1155 = tpu.matmul %1154, %744, %cst_417 {dimension_numbers = #tpu.dot_dimension_numbers<[1], [0], [0], [1], [0, 0, 1, 1], [], []>} : vector<2x16xbf16>, vector<16x64xbf16>, vector<2x64xf32> -> vector<2x64xf32>
    %1156 = arith.addf %1153, %1155 : vector<2x64xf32>
    %1157 = arith.negf %1152 : vector<2x64xf32>
    %1158 = math.exp %1157 : vector<2x64xf32>
    %cst_418 = arith.constant 1.000000e+00 : f32
    %1159 = vector.broadcast %cst_418 : f32 to vector<2x64xf32>
    %1160 = arith.addf %1159, %1158 : vector<2x64xf32>
    %1161 = arith.divf %1159, %1160 : vector<2x64xf32>
    %1162 = math.tanh %1152 : vector<2x64xf32>
    %1163 = vector.extract_strided_slice %1161 {offsets = [0, 0], sizes = [2, 16], strides = [1, 1]} : vector<2x64xf32> to vector<2x16xf32>
    %1164 = vector.extract_strided_slice %1161 {offsets = [0, 16], sizes = [2, 16], strides = [1, 1]} : vector<2x64xf32> to vector<2x16xf32>
    %1165 = vector.extract_strided_slice %1161 {offsets = [0, 48], sizes = [2, 16], strides = [1, 1]} : vector<2x64xf32> to vector<2x16xf32>
    %1166 = vector.extract_strided_slice %1162 {offsets = [0, 32], sizes = [2, 16], strides = [1, 1]} : vector<2x64xf32> to vector<2x16xf32>
    %1167 = arith.mulf %1164, %1129 : vector<2x16xf32>
    %1168 = arith.mulf %1163, %1166 : vector<2x16xf32>
    %1169 = arith.addf %1167, %1168 : vector<2x16xf32>
    %1170 = math.tanh %1169 : vector<2x16xf32>
    %1171 = arith.mulf %1165, %1170 : vector<2x16xf32>
    %1172 = arith.negf %1156 : vector<2x64xf32>
    %1173 = math.exp %1172 : vector<2x64xf32>
    %cst_419 = arith.constant 1.000000e+00 : f32
    %1174 = vector.broadcast %cst_419 : f32 to vector<2x64xf32>
    %1175 = arith.addf %1174, %1173 : vector<2x64xf32>
    %1176 = arith.divf %1174, %1175 : vector<2x64xf32>
    %1177 = math.tanh %1156 : vector<2x64xf32>
    %1178 = vector.extract_strided_slice %1176 {offsets = [0, 0], sizes = [2, 16], strides = [1, 1]} : vector<2x64xf32> to vector<2x16xf32>
    %1179 = vector.extract_strided_slice %1176 {offsets = [0, 16], sizes = [2, 16], strides = [1, 1]} : vector<2x64xf32> to vector<2x16xf32>
    %1180 = vector.extract_strided_slice %1176 {offsets = [0, 48], sizes = [2, 16], strides = [1, 1]} : vector<2x64xf32> to vector<2x16xf32>
    %1181 = vector.extract_strided_slice %1177 {offsets = [0, 32], sizes = [2, 16], strides = [1, 1]} : vector<2x64xf32> to vector<2x16xf32>
    %1182 = arith.mulf %1179, %1144 : vector<2x16xf32>
    %1183 = arith.mulf %1178, %1181 : vector<2x16xf32>
    %1184 = arith.addf %1182, %1183 : vector<2x16xf32>
    %1185 = math.tanh %1184 : vector<2x16xf32>
    %1186 = arith.mulf %1180, %1185 : vector<2x16xf32>
    %c20_420 = arith.constant 20 : index
    %c0_421 = arith.constant 0 : index
    %1187 = vector.load %arg27[%c20_420, %c0_421] : memref<32x16xf32, #tpu.memory_space<vmem>>, vector<2x16xf32>
    tpu.vector_store %arg27[%c20_420, %c0_421], %1171 {strides = array<i32>} : memref<32x16xf32, #tpu.memory_space<vmem>>, vector<2x16xf32>,
    %c10_422 = arith.constant 10 : index
    %c0_423 = arith.constant 0 : index
    %1188 = vector.load %arg28[%c10_422, %c0_423] : memref<32x16xf32, #tpu.memory_space<vmem>>, vector<2x16xf32>
    tpu.vector_store %arg28[%c10_422, %c0_423], %1186 {strides = array<i32>} : memref<32x16xf32, #tpu.memory_space<vmem>>, vector<2x16xf32>,
    %c22_424 = arith.constant 22 : index
    %c0_425 = arith.constant 0 : index
    %1189 = vector.load %arg25[%c22_424, %c0_425] : memref<32x64xf32, #tpu.memory_space<vmem>>, vector<2x64xf32>
    %1190 = arith.truncf %1171 : vector<2x16xf32> to vector<2x16xbf16>
    %cst_426 = arith.constant dense<0.000000e+00> : vector<2x64xf32>
    %1191 = tpu.matmul %1190, %742, %cst_426 {dimension_numbers = #tpu.dot_dimension_numbers<[1], [0], [0], [1], [0, 0, 1, 1], [], []>} : vector<2x16xbf16>, vector<16x64xbf16>, vector<2x64xf32> -> vector<2x64xf32>
    %1192 = arith.addf %1189, %1191 : vector<2x64xf32>
    %c8_427 = arith.constant 8 : index
    %c0_428 = arith.constant 0 : index
    %1193 = vector.load %arg26[%c8_427, %c0_428] : memref<32x64xf32, #tpu.memory_space<vmem>>, vector<2x64xf32>
    %1194 = arith.truncf %1186 : vector<2x16xf32> to vector<2x16xbf16>
    %cst_429 = arith.constant dense<0.000000e+00> : vector<2x64xf32>
    %1195 = tpu.matmul %1194, %744, %cst_429 {dimension_numbers = #tpu.dot_dimension_numbers<[1], [0], [0], [1], [0, 0, 1, 1], [], []>} : vector<2x16xbf16>, vector<16x64xbf16>, vector<2x64xf32> -> vector<2x64xf32>
    %1196 = arith.addf %1193, %1195 : vector<2x64xf32>
    %1197 = arith.negf %1192 : vector<2x64xf32>
    %1198 = math.exp %1197 : vector<2x64xf32>
    %cst_430 = arith.constant 1.000000e+00 : f32
    %1199 = vector.broadcast %cst_430 : f32 to vector<2x64xf32>
    %1200 = arith.addf %1199, %1198 : vector<2x64xf32>
    %1201 = arith.divf %1199, %1200 : vector<2x64xf32>
    %1202 = math.tanh %1192 : vector<2x64xf32>
    %1203 = vector.extract_strided_slice %1201 {offsets = [0, 0], sizes = [2, 16], strides = [1, 1]} : vector<2x64xf32> to vector<2x16xf32>
    %1204 = vector.extract_strided_slice %1201 {offsets = [0, 16], sizes = [2, 16], strides = [1, 1]} : vector<2x64xf32> to vector<2x16xf32>
    %1205 = vector.extract_strided_slice %1201 {offsets = [0, 48], sizes = [2, 16], strides = [1, 1]} : vector<2x64xf32> to vector<2x16xf32>
    %1206 = vector.extract_strided_slice %1202 {offsets = [0, 32], sizes = [2, 16], strides = [1, 1]} : vector<2x64xf32> to vector<2x16xf32>
    %1207 = arith.mulf %1204, %1169 : vector<2x16xf32>
    %1208 = arith.mulf %1203, %1206 : vector<2x16xf32>
    %1209 = arith.addf %1207, %1208 : vector<2x16xf32>
    %1210 = math.tanh %1209 : vector<2x16xf32>
    %1211 = arith.mulf %1205, %1210 : vector<2x16xf32>
    %1212 = arith.negf %1196 : vector<2x64xf32>
    %1213 = math.exp %1212 : vector<2x64xf32>
    %cst_431 = arith.constant 1.000000e+00 : f32
    %1214 = vector.broadcast %cst_431 : f32 to vector<2x64xf32>
    %1215 = arith.addf %1214, %1213 : vector<2x64xf32>
    %1216 = arith.divf %1214, %1215 : vector<2x64xf32>
    %1217 = math.tanh %1196 : vector<2x64xf32>
    %1218 = vector.extract_strided_slice %1216 {offsets = [0, 0], sizes = [2, 16], strides = [1, 1]} : vector<2x64xf32> to vector<2x16xf32>
    %1219 = vector.extract_strided_slice %1216 {offsets = [0, 16], sizes = [2, 16], strides = [1, 1]} : vector<2x64xf32> to vector<2x16xf32>
    %1220 = vector.extract_strided_slice %1216 {offsets = [0, 48], sizes = [2, 16], strides = [1, 1]} : vector<2x64xf32> to vector<2x16xf32>
    %1221 = vector.extract_strided_slice %1217 {offsets = [0, 32], sizes = [2, 16], strides = [1, 1]} : vector<2x64xf32> to vector<2x16xf32>
    %1222 = arith.mulf %1219, %1184 : vector<2x16xf32>
    %1223 = arith.mulf %1218, %1221 : vector<2x16xf32>
    %1224 = arith.addf %1222, %1223 : vector<2x16xf32>
    %1225 = math.tanh %1224 : vector<2x16xf32>
    %1226 = arith.mulf %1220, %1225 : vector<2x16xf32>
    %c22_432 = arith.constant 22 : index
    %c0_433 = arith.constant 0 : index
    %1227 = vector.load %arg27[%c22_432, %c0_433] : memref<32x16xf32, #tpu.memory_space<vmem>>, vector<2x16xf32>
    tpu.vector_store %arg27[%c22_432, %c0_433], %1211 {strides = array<i32>} : memref<32x16xf32, #tpu.memory_space<vmem>>, vector<2x16xf32>,
    %c8_434 = arith.constant 8 : index
    %c0_435 = arith.constant 0 : index
    %1228 = vector.load %arg28[%c8_434, %c0_435] : memref<32x16xf32, #tpu.memory_space<vmem>>, vector<2x16xf32>
    tpu.vector_store %arg28[%c8_434, %c0_435], %1226 {strides = array<i32>} : memref<32x16xf32, #tpu.memory_space<vmem>>, vector<2x16xf32>,
    %c24_436 = arith.constant 24 : index
    %c0_437 = arith.constant 0 : index
    %1229 = vector.load %arg25[%c24_436, %c0_437] : memref<32x64xf32, #tpu.memory_space<vmem>>, vector<2x64xf32>
    %1230 = arith.truncf %1211 : vector<2x16xf32> to vector<2x16xbf16>
    %cst_438 = arith.constant dense<0.000000e+00> : vector<2x64xf32>
    %1231 = tpu.matmul %1230, %742, %cst_438 {dimension_numbers = #tpu.dot_dimension_numbers<[1], [0], [0], [1], [0, 0, 1, 1], [], []>} : vector<2x16xbf16>, vector<16x64xbf16>, vector<2x64xf32> -> vector<2x64xf32>
    %1232 = arith.addf %1229, %1231 : vector<2x64xf32>
    %c6_439 = arith.constant 6 : index
    %c0_440 = arith.constant 0 : index
    %1233 = vector.load %arg26[%c6_439, %c0_440] : memref<32x64xf32, #tpu.memory_space<vmem>>, vector<2x64xf32>
    %1234 = arith.truncf %1226 : vector<2x16xf32> to vector<2x16xbf16>
    %cst_441 = arith.constant dense<0.000000e+00> : vector<2x64xf32>
    %1235 = tpu.matmul %1234, %744, %cst_441 {dimension_numbers = #tpu.dot_dimension_numbers<[1], [0], [0], [1], [0, 0, 1, 1], [], []>} : vector<2x16xbf16>, vector<16x64xbf16>, vector<2x64xf32> -> vector<2x64xf32>
    %1236 = arith.addf %1233, %1235 : vector<2x64xf32>
    %1237 = arith.negf %1232 : vector<2x64xf32>
    %1238 = math.exp %1237 : vector<2x64xf32>
    %cst_442 = arith.constant 1.000000e+00 : f32
    %1239 = vector.broadcast %cst_442 : f32 to vector<2x64xf32>
    %1240 = arith.addf %1239, %1238 : vector<2x64xf32>
    %1241 = arith.divf %1239, %1240 : vector<2x64xf32>
    %1242 = math.tanh %1232 : vector<2x64xf32>
    %1243 = vector.extract_strided_slice %1241 {offsets = [0, 0], sizes = [2, 16], strides = [1, 1]} : vector<2x64xf32> to vector<2x16xf32>
    %1244 = vector.extract_strided_slice %1241 {offsets = [0, 16], sizes = [2, 16], strides = [1, 1]} : vector<2x64xf32> to vector<2x16xf32>
    %1245 = vector.extract_strided_slice %1241 {offsets = [0, 48], sizes = [2, 16], strides = [1, 1]} : vector<2x64xf32> to vector<2x16xf32>
    %1246 = vector.extract_strided_slice %1242 {offsets = [0, 32], sizes = [2, 16], strides = [1, 1]} : vector<2x64xf32> to vector<2x16xf32>
    %1247 = arith.mulf %1244, %1209 : vector<2x16xf32>
    %1248 = arith.mulf %1243, %1246 : vector<2x16xf32>
    %1249 = arith.addf %1247, %1248 : vector<2x16xf32>
    %1250 = math.tanh %1249 : vector<2x16xf32>
    %1251 = arith.mulf %1245, %1250 : vector<2x16xf32>
    %1252 = arith.negf %1236 : vector<2x64xf32>
    %1253 = math.exp %1252 : vector<2x64xf32>
    %cst_443 = arith.constant 1.000000e+00 : f32
    %1254 = vector.broadcast %cst_443 : f32 to vector<2x64xf32>
    %1255 = arith.addf %1254, %1253 : vector<2x64xf32>
    %1256 = arith.divf %1254, %1255 : vector<2x64xf32>
    %1257 = math.tanh %1236 : vector<2x64xf32>
    %1258 = vector.extract_strided_slice %1256 {offsets = [0, 0], sizes = [2, 16], strides = [1, 1]} : vector<2x64xf32> to vector<2x16xf32>
    %1259 = vector.extract_strided_slice %1256 {offsets = [0, 16], sizes = [2, 16], strides = [1, 1]} : vector<2x64xf32> to vector<2x16xf32>
    %1260 = vector.extract_strided_slice %1256 {offsets = [0, 48], sizes = [2, 16], strides = [1, 1]} : vector<2x64xf32> to vector<2x16xf32>
    %1261 = vector.extract_strided_slice %1257 {offsets = [0, 32], sizes = [2, 16], strides = [1, 1]} : vector<2x64xf32> to vector<2x16xf32>
    %1262 = arith.mulf %1259, %1224 : vector<2x16xf32>
    %1263 = arith.mulf %1258, %1261 : vector<2x16xf32>
    %1264 = arith.addf %1262, %1263 : vector<2x16xf32>
    %1265 = math.tanh %1264 : vector<2x16xf32>
    %1266 = arith.mulf %1260, %1265 : vector<2x16xf32>
    %c24_444 = arith.constant 24 : index
    %c0_445 = arith.constant 0 : index
    %1267 = vector.load %arg27[%c24_444, %c0_445] : memref<32x16xf32, #tpu.memory_space<vmem>>, vector<2x16xf32>
    tpu.vector_store %arg27[%c24_444, %c0_445], %1251 {strides = array<i32>} : memref<32x16xf32, #tpu.memory_space<vmem>>, vector<2x16xf32>,
    %c6_446 = arith.constant 6 : index
    %c0_447 = arith.constant 0 : index
    %1268 = vector.load %arg28[%c6_446, %c0_447] : memref<32x16xf32, #tpu.memory_space<vmem>>, vector<2x16xf32>
    tpu.vector_store %arg28[%c6_446, %c0_447], %1266 {strides = array<i32>} : memref<32x16xf32, #tpu.memory_space<vmem>>, vector<2x16xf32>,
    %c26_448 = arith.constant 26 : index
    %c0_449 = arith.constant 0 : index
    %1269 = vector.load %arg25[%c26_448, %c0_449] : memref<32x64xf32, #tpu.memory_space<vmem>>, vector<2x64xf32>
    %1270 = arith.truncf %1251 : vector<2x16xf32> to vector<2x16xbf16>
    %cst_450 = arith.constant dense<0.000000e+00> : vector<2x64xf32>
    %1271 = tpu.matmul %1270, %742, %cst_450 {dimension_numbers = #tpu.dot_dimension_numbers<[1], [0], [0], [1], [0, 0, 1, 1], [], []>} : vector<2x16xbf16>, vector<16x64xbf16>, vector<2x64xf32> -> vector<2x64xf32>
    %1272 = arith.addf %1269, %1271 : vector<2x64xf32>
    %c4_451 = arith.constant 4 : index
    %c0_452 = arith.constant 0 : index
    %1273 = vector.load %arg26[%c4_451, %c0_452] : memref<32x64xf32, #tpu.memory_space<vmem>>, vector<2x64xf32>
    %1274 = arith.truncf %1266 : vector<2x16xf32> to vector<2x16xbf16>
    %cst_453 = arith.constant dense<0.000000e+00> : vector<2x64xf32>
    %1275 = tpu.matmul %1274, %744, %cst_453 {dimension_numbers = #tpu.dot_dimension_numbers<[1], [0], [0], [1], [0, 0, 1, 1], [], []>} : vector<2x16xbf16>, vector<16x64xbf16>, vector<2x64xf32> -> vector<2x64xf32>
    %1276 = arith.addf %1273, %1275 : vector<2x64xf32>
    %1277 = arith.negf %1272 : vector<2x64xf32>
    %1278 = math.exp %1277 : vector<2x64xf32>
    %cst_454 = arith.constant 1.000000e+00 : f32
    %1279 = vector.broadcast %cst_454 : f32 to vector<2x64xf32>
    %1280 = arith.addf %1279, %1278 : vector<2x64xf32>
    %1281 = arith.divf %1279, %1280 : vector<2x64xf32>
    %1282 = math.tanh %1272 : vector<2x64xf32>
    %1283 = vector.extract_strided_slice %1281 {offsets = [0, 0], sizes = [2, 16], strides = [1, 1]} : vector<2x64xf32> to vector<2x16xf32>
    %1284 = vector.extract_strided_slice %1281 {offsets = [0, 16], sizes = [2, 16], strides = [1, 1]} : vector<2x64xf32> to vector<2x16xf32>
    %1285 = vector.extract_strided_slice %1281 {offsets = [0, 48], sizes = [2, 16], strides = [1, 1]} : vector<2x64xf32> to vector<2x16xf32>
    %1286 = vector.extract_strided_slice %1282 {offsets = [0, 32], sizes = [2, 16], strides = [1, 1]} : vector<2x64xf32> to vector<2x16xf32>
    %1287 = arith.mulf %1284, %1249 : vector<2x16xf32>
    %1288 = arith.mulf %1283, %1286 : vector<2x16xf32>
    %1289 = arith.addf %1287, %1288 : vector<2x16xf32>
    %1290 = math.tanh %1289 : vector<2x16xf32>
    %1291 = arith.mulf %1285, %1290 : vector<2x16xf32>
    %1292 = arith.negf %1276 : vector<2x64xf32>
    %1293 = math.exp %1292 : vector<2x64xf32>
    %cst_455 = arith.constant 1.000000e+00 : f32
    %1294 = vector.broadcast %cst_455 : f32 to vector<2x64xf32>
    %1295 = arith.addf %1294, %1293 : vector<2x64xf32>
    %1296 = arith.divf %1294, %1295 : vector<2x64xf32>
    %1297 = math.tanh %1276 : vector<2x64xf32>
    %1298 = vector.extract_strided_slice %1296 {offsets = [0, 0], sizes = [2, 16], strides = [1, 1]} : vector<2x64xf32> to vector<2x16xf32>
    %1299 = vector.extract_strided_slice %1296 {offsets = [0, 16], sizes = [2, 16], strides = [1, 1]} : vector<2x64xf32> to vector<2x16xf32>
    %1300 = vector.extract_strided_slice %1296 {offsets = [0, 48], sizes = [2, 16], strides = [1, 1]} : vector<2x64xf32> to vector<2x16xf32>
    %1301 = vector.extract_strided_slice %1297 {offsets = [0, 32], sizes = [2, 16], strides = [1, 1]} : vector<2x64xf32> to vector<2x16xf32>
    %1302 = arith.mulf %1299, %1264 : vector<2x16xf32>
    %1303 = arith.mulf %1298, %1301 : vector<2x16xf32>
    %1304 = arith.addf %1302, %1303 : vector<2x16xf32>
    %1305 = math.tanh %1304 : vector<2x16xf32>
    %1306 = arith.mulf %1300, %1305 : vector<2x16xf32>
    %c26_456 = arith.constant 26 : index
    %c0_457 = arith.constant 0 : index
    %1307 = vector.load %arg27[%c26_456, %c0_457] : memref<32x16xf32, #tpu.memory_space<vmem>>, vector<2x16xf32>
    tpu.vector_store %arg27[%c26_456, %c0_457], %1291 {strides = array<i32>} : memref<32x16xf32, #tpu.memory_space<vmem>>, vector<2x16xf32>,
    %c4_458 = arith.constant 4 : index
    %c0_459 = arith.constant 0 : index
    %1308 = vector.load %arg28[%c4_458, %c0_459] : memref<32x16xf32, #tpu.memory_space<vmem>>, vector<2x16xf32>
    tpu.vector_store %arg28[%c4_458, %c0_459], %1306 {strides = array<i32>} : memref<32x16xf32, #tpu.memory_space<vmem>>, vector<2x16xf32>,
    %c28_460 = arith.constant 28 : index
    %c0_461 = arith.constant 0 : index
    %1309 = vector.load %arg25[%c28_460, %c0_461] : memref<32x64xf32, #tpu.memory_space<vmem>>, vector<2x64xf32>
    %1310 = arith.truncf %1291 : vector<2x16xf32> to vector<2x16xbf16>
    %cst_462 = arith.constant dense<0.000000e+00> : vector<2x64xf32>
    %1311 = tpu.matmul %1310, %742, %cst_462 {dimension_numbers = #tpu.dot_dimension_numbers<[1], [0], [0], [1], [0, 0, 1, 1], [], []>} : vector<2x16xbf16>, vector<16x64xbf16>, vector<2x64xf32> -> vector<2x64xf32>
    %1312 = arith.addf %1309, %1311 : vector<2x64xf32>
    %c2_463 = arith.constant 2 : index
    %c0_464 = arith.constant 0 : index
    %1313 = vector.load %arg26[%c2_463, %c0_464] : memref<32x64xf32, #tpu.memory_space<vmem>>, vector<2x64xf32>
    %1314 = arith.truncf %1306 : vector<2x16xf32> to vector<2x16xbf16>
    %cst_465 = arith.constant dense<0.000000e+00> : vector<2x64xf32>
    %1315 = tpu.matmul %1314, %744, %cst_465 {dimension_numbers = #tpu.dot_dimension_numbers<[1], [0], [0], [1], [0, 0, 1, 1], [], []>} : vector<2x16xbf16>, vector<16x64xbf16>, vector<2x64xf32> -> vector<2x64xf32>
    %1316 = arith.addf %1313, %1315 : vector<2x64xf32>
    %1317 = arith.negf %1312 : vector<2x64xf32>
    %1318 = math.exp %1317 : vector<2x64xf32>
    %cst_466 = arith.constant 1.000000e+00 : f32
    %1319 = vector.broadcast %cst_466 : f32 to vector<2x64xf32>
    %1320 = arith.addf %1319, %1318 : vector<2x64xf32>
    %1321 = arith.divf %1319, %1320 : vector<2x64xf32>
    %1322 = math.tanh %1312 : vector<2x64xf32>
    %1323 = vector.extract_strided_slice %1321 {offsets = [0, 0], sizes = [2, 16], strides = [1, 1]} : vector<2x64xf32> to vector<2x16xf32>
    %1324 = vector.extract_strided_slice %1321 {offsets = [0, 16], sizes = [2, 16], strides = [1, 1]} : vector<2x64xf32> to vector<2x16xf32>
    %1325 = vector.extract_strided_slice %1321 {offsets = [0, 48], sizes = [2, 16], strides = [1, 1]} : vector<2x64xf32> to vector<2x16xf32>
    %1326 = vector.extract_strided_slice %1322 {offsets = [0, 32], sizes = [2, 16], strides = [1, 1]} : vector<2x64xf32> to vector<2x16xf32>
    %1327 = arith.mulf %1324, %1289 : vector<2x16xf32>
    %1328 = arith.mulf %1323, %1326 : vector<2x16xf32>
    %1329 = arith.addf %1327, %1328 : vector<2x16xf32>
    %1330 = math.tanh %1329 : vector<2x16xf32>
    %1331 = arith.mulf %1325, %1330 : vector<2x16xf32>
    %1332 = arith.negf %1316 : vector<2x64xf32>
    %1333 = math.exp %1332 : vector<2x64xf32>
    %cst_467 = arith.constant 1.000000e+00 : f32
    %1334 = vector.broadcast %cst_467 : f32 to vector<2x64xf32>
    %1335 = arith.addf %1334, %1333 : vector<2x64xf32>
    %1336 = arith.divf %1334, %1335 : vector<2x64xf32>
    %1337 = math.tanh %1316 : vector<2x64xf32>
    %1338 = vector.extract_strided_slice %1336 {offsets = [0, 0], sizes = [2, 16], strides = [1, 1]} : vector<2x64xf32> to vector<2x16xf32>
    %1339 = vector.extract_strided_slice %1336 {offsets = [0, 16], sizes = [2, 16], strides = [1, 1]} : vector<2x64xf32> to vector<2x16xf32>
    %1340 = vector.extract_strided_slice %1336 {offsets = [0, 48], sizes = [2, 16], strides = [1, 1]} : vector<2x64xf32> to vector<2x16xf32>
    %1341 = vector.extract_strided_slice %1337 {offsets = [0, 32], sizes = [2, 16], strides = [1, 1]} : vector<2x64xf32> to vector<2x16xf32>
    %1342 = arith.mulf %1339, %1304 : vector<2x16xf32>
    %1343 = arith.mulf %1338, %1341 : vector<2x16xf32>
    %1344 = arith.addf %1342, %1343 : vector<2x16xf32>
    %1345 = math.tanh %1344 : vector<2x16xf32>
    %1346 = arith.mulf %1340, %1345 : vector<2x16xf32>
    %c28_468 = arith.constant 28 : index
    %c0_469 = arith.constant 0 : index
    %1347 = vector.load %arg27[%c28_468, %c0_469] : memref<32x16xf32, #tpu.memory_space<vmem>>, vector<2x16xf32>
    tpu.vector_store %arg27[%c28_468, %c0_469], %1331 {strides = array<i32>} : memref<32x16xf32, #tpu.memory_space<vmem>>, vector<2x16xf32>,
    %c2_470 = arith.constant 2 : index
    %c0_471 = arith.constant 0 : index
    %1348 = vector.load %arg28[%c2_470, %c0_471] : memref<32x16xf32, #tpu.memory_space<vmem>>, vector<2x16xf32>
    tpu.vector_store %arg28[%c2_470, %c0_471], %1346 {strides = array<i32>} : memref<32x16xf32, #tpu.memory_space<vmem>>, vector<2x16xf32>,
    %c30_472 = arith.constant 30 : index
    %c0_473 = arith.constant 0 : index
    %1349 = vector.load %arg25[%c30_472, %c0_473] : memref<32x64xf32, #tpu.memory_space<vmem>>, vector<2x64xf32>
    %1350 = arith.truncf %1331 : vector<2x16xf32> to vector<2x16xbf16>
    %cst_474 = arith.constant dense<0.000000e+00> : vector<2x64xf32>
    %1351 = tpu.matmul %1350, %742, %cst_474 {dimension_numbers = #tpu.dot_dimension_numbers<[1], [0], [0], [1], [0, 0, 1, 1], [], []>} : vector<2x16xbf16>, vector<16x64xbf16>, vector<2x64xf32> -> vector<2x64xf32>
    %1352 = arith.addf %1349, %1351 : vector<2x64xf32>
    %c0_475 = arith.constant 0 : index
    %c0_476 = arith.constant 0 : index
    %1353 = vector.load %arg26[%c0_475, %c0_476] : memref<32x64xf32, #tpu.memory_space<vmem>>, vector<2x64xf32>
    %1354 = arith.truncf %1346 : vector<2x16xf32> to vector<2x16xbf16>
    %cst_477 = arith.constant dense<0.000000e+00> : vector<2x64xf32>
    %1355 = tpu.matmul %1354, %744, %cst_477 {dimension_numbers = #tpu.dot_dimension_numbers<[1], [0], [0], [1], [0, 0, 1, 1], [], []>} : vector<2x16xbf16>, vector<16x64xbf16>, vector<2x64xf32> -> vector<2x64xf32>
    %1356 = arith.addf %1353, %1355 : vector<2x64xf32>
    %1357 = arith.negf %1352 : vector<2x64xf32>
    %1358 = math.exp %1357 : vector<2x64xf32>
    %cst_478 = arith.constant 1.000000e+00 : f32
    %1359 = vector.broadcast %cst_478 : f32 to vector<2x64xf32>
    %1360 = arith.addf %1359, %1358 : vector<2x64xf32>
    %1361 = arith.divf %1359, %1360 : vector<2x64xf32>
    %1362 = math.tanh %1352 : vector<2x64xf32>
    %1363 = vector.extract_strided_slice %1361 {offsets = [0, 0], sizes = [2, 16], strides = [1, 1]} : vector<2x64xf32> to vector<2x16xf32>
    %1364 = vector.extract_strided_slice %1361 {offsets = [0, 16], sizes = [2, 16], strides = [1, 1]} : vector<2x64xf32> to vector<2x16xf32>
    %1365 = vector.extract_strided_slice %1361 {offsets = [0, 48], sizes = [2, 16], strides = [1, 1]} : vector<2x64xf32> to vector<2x16xf32>
    %1366 = vector.extract_strided_slice %1362 {offsets = [0, 32], sizes = [2, 16], strides = [1, 1]} : vector<2x64xf32> to vector<2x16xf32>
    %1367 = arith.mulf %1364, %1329 : vector<2x16xf32>
    %1368 = arith.mulf %1363, %1366 : vector<2x16xf32>
    %1369 = arith.addf %1367, %1368 : vector<2x16xf32>
    %1370 = math.tanh %1369 : vector<2x16xf32>
    %1371 = arith.mulf %1365, %1370 : vector<2x16xf32>
    %1372 = arith.negf %1356 : vector<2x64xf32>
    %1373 = math.exp %1372 : vector<2x64xf32>
    %cst_479 = arith.constant 1.000000e+00 : f32
    %1374 = vector.broadcast %cst_479 : f32 to vector<2x64xf32>
    %1375 = arith.addf %1374, %1373 : vector<2x64xf32>
    %1376 = arith.divf %1374, %1375 : vector<2x64xf32>
    %1377 = math.tanh %1356 : vector<2x64xf32>
    %1378 = vector.extract_strided_slice %1376 {offsets = [0, 0], sizes = [2, 16], strides = [1, 1]} : vector<2x64xf32> to vector<2x16xf32>
    %1379 = vector.extract_strided_slice %1376 {offsets = [0, 16], sizes = [2, 16], strides = [1, 1]} : vector<2x64xf32> to vector<2x16xf32>
    %1380 = vector.extract_strided_slice %1376 {offsets = [0, 48], sizes = [2, 16], strides = [1, 1]} : vector<2x64xf32> to vector<2x16xf32>
    %1381 = vector.extract_strided_slice %1377 {offsets = [0, 32], sizes = [2, 16], strides = [1, 1]} : vector<2x64xf32> to vector<2x16xf32>
    %1382 = arith.mulf %1379, %1344 : vector<2x16xf32>
    %1383 = arith.mulf %1378, %1381 : vector<2x16xf32>
    %1384 = arith.addf %1382, %1383 : vector<2x16xf32>
    %1385 = math.tanh %1384 : vector<2x16xf32>
    %1386 = arith.mulf %1380, %1385 : vector<2x16xf32>
    %c30_480 = arith.constant 30 : index
    %c0_481 = arith.constant 0 : index
    %1387 = vector.load %arg27[%c30_480, %c0_481] : memref<32x16xf32, #tpu.memory_space<vmem>>, vector<2x16xf32>
    tpu.vector_store %arg27[%c30_480, %c0_481], %1371 {strides = array<i32>} : memref<32x16xf32, #tpu.memory_space<vmem>>, vector<2x16xf32>,
    %c0_482 = arith.constant 0 : index
    %c0_483 = arith.constant 0 : index
    %1388 = vector.load %arg28[%c0_482, %c0_483] : memref<32x16xf32, #tpu.memory_space<vmem>>, vector<2x16xf32>
    tpu.vector_store %arg28[%c0_482, %c0_483], %1386 {strides = array<i32>} : memref<32x16xf32, #tpu.memory_space<vmem>>, vector<2x16xf32>,
    %cst_484 = arith.constant 0.000000e+00 : f32
    %1389 = vector.broadcast %cst_484 : f32 to vector<2x32xf32>
    %c12_485 = arith.constant 12 : index
    %c0_486 = arith.constant 0 : index
    %1390 = vector.load %arg27[%c12_485, %c0_486] : memref<32x16xf32, #tpu.memory_space<vmem>>, vector<2x16xf32>
    %c0_487 = arith.constant 0 : index
    %c0_488 = arith.constant 0 : index
    %c0_489 = arith.constant 0 : index
    %1391 = vector.load %arg15[%c0_487, %c0_488, %c0_489] : memref<5x16x32xbf16, #tpu.memory_space<vmem>>, vector<1x16x32xbf16>
    %1392 = vector.shape_cast %1391 : vector<1x16x32xbf16> to vector<16x32xbf16>
    %1393 = arith.truncf %1390 : vector<2x16xf32> to vector<2x16xbf16>
    %cst_490 = arith.constant dense<0.000000e+00> : vector<2x32xf32>
    %1394 = tpu.matmul %1393, %1392, %cst_490 {dimension_numbers = #tpu.dot_dimension_numbers<[1], [0], [0], [1], [0, 0, 1, 1], [], []>} : vector<2x16xbf16>, vector<16x32xbf16>, vector<2x32xf32> -> vector<2x32xf32>
    %1395 = arith.addf %1389, %1394 : vector<2x32xf32>
    %c12_491 = arith.constant 12 : index
    %c0_492 = arith.constant 0 : index
    %1396 = vector.load %arg28[%c12_491, %c0_492] : memref<32x16xf32, #tpu.memory_space<vmem>>, vector<2x16xf32>
    %c0_493 = arith.constant 0 : index
    %c0_494 = arith.constant 0 : index
    %c0_495 = arith.constant 0 : index
    %1397 = vector.load %arg16[%c0_493, %c0_494, %c0_495] : memref<5x16x32xbf16, #tpu.memory_space<vmem>>, vector<1x16x32xbf16>
    %1398 = vector.shape_cast %1397 : vector<1x16x32xbf16> to vector<16x32xbf16>
    %1399 = arith.truncf %1396 : vector<2x16xf32> to vector<2x16xbf16>
    %cst_496 = arith.constant dense<0.000000e+00> : vector<2x32xf32>
    %1400 = tpu.matmul %1399, %1398, %cst_496 {dimension_numbers = #tpu.dot_dimension_numbers<[1], [0], [0], [1], [0, 0, 1, 1], [], []>} : vector<2x16xbf16>, vector<16x32xbf16>, vector<2x32xf32> -> vector<2x32xf32>
    %1401 = arith.addf %1395, %1400 : vector<2x32xf32>
    %c14_497 = arith.constant 14 : index
    %c0_498 = arith.constant 0 : index
    %1402 = vector.load %arg27[%c14_497, %c0_498] : memref<32x16xf32, #tpu.memory_space<vmem>>, vector<2x16xf32>
    %c1_499 = arith.constant 1 : index
    %c0_500 = arith.constant 0 : index
    %c0_501 = arith.constant 0 : index
    %1403 = vector.load %arg15[%c1_499, %c0_500, %c0_501] : memref<5x16x32xbf16, #tpu.memory_space<vmem>>, vector<1x16x32xbf16>
    %1404 = vector.shape_cast %1403 : vector<1x16x32xbf16> to vector<16x32xbf16>
    %1405 = arith.truncf %1402 : vector<2x16xf32> to vector<2x16xbf16>
    %cst_502 = arith.constant dense<0.000000e+00> : vector<2x32xf32>
    %1406 = tpu.matmul %1405, %1404, %cst_502 {dimension_numbers = #tpu.dot_dimension_numbers<[1], [0], [0], [1], [0, 0, 1, 1], [], []>} : vector<2x16xbf16>, vector<16x32xbf16>, vector<2x32xf32> -> vector<2x32xf32>
    %1407 = arith.addf %1401, %1406 : vector<2x32xf32>
    %c14_503 = arith.constant 14 : index
    %c0_504 = arith.constant 0 : index
    %1408 = vector.load %arg28[%c14_503, %c0_504] : memref<32x16xf32, #tpu.memory_space<vmem>>, vector<2x16xf32>
    %c1_505 = arith.constant 1 : index
    %c0_506 = arith.constant 0 : index
    %c0_507 = arith.constant 0 : index
    %1409 = vector.load %arg16[%c1_505, %c0_506, %c0_507] : memref<5x16x32xbf16, #tpu.memory_space<vmem>>, vector<1x16x32xbf16>
    %1410 = vector.shape_cast %1409 : vector<1x16x32xbf16> to vector<16x32xbf16>
    %1411 = arith.truncf %1408 : vector<2x16xf32> to vector<2x16xbf16>
    %cst_508 = arith.constant dense<0.000000e+00> : vector<2x32xf32>
    %1412 = tpu.matmul %1411, %1410, %cst_508 {dimension_numbers = #tpu.dot_dimension_numbers<[1], [0], [0], [1], [0, 0, 1, 1], [], []>} : vector<2x16xbf16>, vector<16x32xbf16>, vector<2x32xf32> -> vector<2x32xf32>
    %1413 = arith.addf %1407, %1412 : vector<2x32xf32>
    %c16_509 = arith.constant 16 : index
    %c0_510 = arith.constant 0 : index
    %1414 = vector.load %arg27[%c16_509, %c0_510] : memref<32x16xf32, #tpu.memory_space<vmem>>, vector<2x16xf32>
    %c2_511 = arith.constant 2 : index
    %c0_512 = arith.constant 0 : index
    %c0_513 = arith.constant 0 : index
    %1415 = vector.load %arg15[%c2_511, %c0_512, %c0_513] : memref<5x16x32xbf16, #tpu.memory_space<vmem>>, vector<1x16x32xbf16>
    %1416 = vector.shape_cast %1415 : vector<1x16x32xbf16> to vector<16x32xbf16>
    %1417 = arith.truncf %1414 : vector<2x16xf32> to vector<2x16xbf16>
    %cst_514 = arith.constant dense<0.000000e+00> : vector<2x32xf32>
    %1418 = tpu.matmul %1417, %1416, %cst_514 {dimension_numbers = #tpu.dot_dimension_numbers<[1], [0], [0], [1], [0, 0, 1, 1], [], []>} : vector<2x16xbf16>, vector<16x32xbf16>, vector<2x32xf32> -> vector<2x32xf32>
    %1419 = arith.addf %1413, %1418 : vector<2x32xf32>
    %c16_515 = arith.constant 16 : index
    %c0_516 = arith.constant 0 : index
    %1420 = vector.load %arg28[%c16_515, %c0_516] : memref<32x16xf32, #tpu.memory_space<vmem>>, vector<2x16xf32>
    %c2_517 = arith.constant 2 : index
    %c0_518 = arith.constant 0 : index
    %c0_519 = arith.constant 0 : index
    %1421 = vector.load %arg16[%c2_517, %c0_518, %c0_519] : memref<5x16x32xbf16, #tpu.memory_space<vmem>>, vector<1x16x32xbf16>
    %1422 = vector.shape_cast %1421 : vector<1x16x32xbf16> to vector<16x32xbf16>
    %1423 = arith.truncf %1420 : vector<2x16xf32> to vector<2x16xbf16>
    %cst_520 = arith.constant dense<0.000000e+00> : vector<2x32xf32>
    %1424 = tpu.matmul %1423, %1422, %cst_520 {dimension_numbers = #tpu.dot_dimension_numbers<[1], [0], [0], [1], [0, 0, 1, 1], [], []>} : vector<2x16xbf16>, vector<16x32xbf16>, vector<2x32xf32> -> vector<2x32xf32>
    %1425 = arith.addf %1419, %1424 : vector<2x32xf32>
    %c18_521 = arith.constant 18 : index
    %c0_522 = arith.constant 0 : index
    %1426 = vector.load %arg27[%c18_521, %c0_522] : memref<32x16xf32, #tpu.memory_space<vmem>>, vector<2x16xf32>
    %c3 = arith.constant 3 : index
    %c0_523 = arith.constant 0 : index
    %c0_524 = arith.constant 0 : index
    %1427 = vector.load %arg15[%c3, %c0_523, %c0_524] : memref<5x16x32xbf16, #tpu.memory_space<vmem>>, vector<1x16x32xbf16>
    %1428 = vector.shape_cast %1427 : vector<1x16x32xbf16> to vector<16x32xbf16>
    %1429 = arith.truncf %1426 : vector<2x16xf32> to vector<2x16xbf16>
    %cst_525 = arith.constant dense<0.000000e+00> : vector<2x32xf32>
    %1430 = tpu.matmul %1429, %1428, %cst_525 {dimension_numbers = #tpu.dot_dimension_numbers<[1], [0], [0], [1], [0, 0, 1, 1], [], []>} : vector<2x16xbf16>, vector<16x32xbf16>, vector<2x32xf32> -> vector<2x32xf32>
    %1431 = arith.addf %1425, %1430 : vector<2x32xf32>
    %c18_526 = arith.constant 18 : index
    %c0_527 = arith.constant 0 : index
    %1432 = vector.load %arg28[%c18_526, %c0_527] : memref<32x16xf32, #tpu.memory_space<vmem>>, vector<2x16xf32>
    %c3_528 = arith.constant 3 : index
    %c0_529 = arith.constant 0 : index
    %c0_530 = arith.constant 0 : index
    %1433 = vector.load %arg16[%c3_528, %c0_529, %c0_530] : memref<5x16x32xbf16, #tpu.memory_space<vmem>>, vector<1x16x32xbf16>
    %1434 = vector.shape_cast %1433 : vector<1x16x32xbf16> to vector<16x32xbf16>
    %1435 = arith.truncf %1432 : vector<2x16xf32> to vector<2x16xbf16>
    %cst_531 = arith.constant dense<0.000000e+00> : vector<2x32xf32>
    %1436 = tpu.matmul %1435, %1434, %cst_531 {dimension_numbers = #tpu.dot_dimension_numbers<[1], [0], [0], [1], [0, 0, 1, 1], [], []>} : vector<2x16xbf16>, vector<16x32xbf16>, vector<2x32xf32> -> vector<2x32xf32>
    %1437 = arith.addf %1431, %1436 : vector<2x32xf32>
    %c20_532 = arith.constant 20 : index
    %c0_533 = arith.constant 0 : index
    %1438 = vector.load %arg27[%c20_532, %c0_533] : memref<32x16xf32, #tpu.memory_space<vmem>>, vector<2x16xf32>
    %c4_534 = arith.constant 4 : index
    %c0_535 = arith.constant 0 : index
    %c0_536 = arith.constant 0 : index
    %1439 = vector.load %arg15[%c4_534, %c0_535, %c0_536] : memref<5x16x32xbf16, #tpu.memory_space<vmem>>, vector<1x16x32xbf16>
    %1440 = vector.shape_cast %1439 : vector<1x16x32xbf16> to vector<16x32xbf16>
    %1441 = arith.truncf %1438 : vector<2x16xf32> to vector<2x16xbf16>
    %cst_537 = arith.constant dense<0.000000e+00> : vector<2x32xf32>
    %1442 = tpu.matmul %1441, %1440, %cst_537 {dimension_numbers = #tpu.dot_dimension_numbers<[1], [0], [0], [1], [0, 0, 1, 1], [], []>} : vector<2x16xbf16>, vector<16x32xbf16>, vector<2x32xf32> -> vector<2x32xf32>
    %1443 = arith.addf %1437, %1442 : vector<2x32xf32>
    %c20_538 = arith.constant 20 : index
    %c0_539 = arith.constant 0 : index
    %1444 = vector.load %arg28[%c20_538, %c0_539] : memref<32x16xf32, #tpu.memory_space<vmem>>, vector<2x16xf32>
    %c4_540 = arith.constant 4 : index
    %c0_541 = arith.constant 0 : index
    %c0_542 = arith.constant 0 : index
    %1445 = vector.load %arg16[%c4_540, %c0_541, %c0_542] : memref<5x16x32xbf16, #tpu.memory_space<vmem>>, vector<1x16x32xbf16>
    %1446 = vector.shape_cast %1445 : vector<1x16x32xbf16> to vector<16x32xbf16>
    %1447 = arith.truncf %1444 : vector<2x16xf32> to vector<2x16xbf16>
    %cst_543 = arith.constant dense<0.000000e+00> : vector<2x32xf32>
    %1448 = tpu.matmul %1447, %1446, %cst_543 {dimension_numbers = #tpu.dot_dimension_numbers<[1], [0], [0], [1], [0, 0, 1, 1], [], []>} : vector<2x16xbf16>, vector<16x32xbf16>, vector<2x32xf32> -> vector<2x32xf32>
    %1449 = arith.addf %1443, %1448 : vector<2x32xf32>
    %c0_544 = arith.constant 0 : index
    %c0_545 = arith.constant 0 : index
    %1450 = vector.load %arg17[%c0_544, %c0_545] : memref<1x32xf32, #tpu.memory_space<vmem>>, vector<1x32xf32>
    %1451 = vector.broadcast %1450 : vector<1x32xf32> to vector<2x32xf32>
    %1452 = arith.addf %1449, %1451 : vector<2x32xf32>
    %cst_546 = arith.constant 0.000000e+00 : f32
    %1453 = vector.broadcast %cst_546 : f32 to vector<2x32xf32>
    %1454 = arith.maximumf %1452, %1453 : vector<2x32xf32>
    %c0_547 = arith.constant 0 : index
    %c0_548 = arith.constant 0 : index
    %1455 = vector.load %arg18[%c0_547, %c0_548] : memref<32x1xbf16, #tpu.memory_space<vmem>>, vector<32x1xbf16>
    %1456 = arith.truncf %1454 : vector<2x32xf32> to vector<2x32xbf16>
    %cst_549 = arith.constant dense<0.000000e+00> : vector<2x1xf32>
    %1457 = tpu.matmul %1456, %1455, %cst_549 {dimension_numbers = #tpu.dot_dimension_numbers<[1], [0], [0], [1], [0, 0, 1, 1], [], []>} : vector<2x32xbf16>, vector<32x1xbf16>, vector<2x1xf32> -> vector<2x1xf32>
    %c0_550 = arith.constant 0 : index
    %c0_551 = arith.constant 0 : index
    %1458 = vector.load %arg19[%c0_550, %c0_551] : memref<1x1xf32, #tpu.memory_space<vmem>>, vector<1x1xf32>
    %1459 = vector.broadcast %1458 : vector<1x1xf32> to vector<2x1xf32>
    %1460 = arith.addf %1457, %1459 : vector<2x1xf32>
    %1461 = arith.negf %1460 : vector<2x1xf32>
    %1462 = math.exp %1461 : vector<2x1xf32>
    %cst_552 = arith.constant 1.000000e+00 : f32
    %1463 = vector.broadcast %cst_552 : f32 to vector<2x1xf32>
    %1464 = arith.addf %1463, %1462 : vector<2x1xf32>
    %1465 = arith.divf %1463, %1464 : vector<2x1xf32>
    %c0_553 = arith.constant 0 : index
    %c0_554 = arith.constant 0 : index
    %1466 = vector.load %arg20[%c0_553, %c0_554] : memref<2x1xf32, #tpu.memory_space<vmem>>, vector<2x1xf32>
    tpu.vector_store %arg20[%c0_553, %c0_554], %1465 {strides = array<i32>} : memref<2x1xf32, #tpu.memory_space<vmem>>, vector<2x1xf32>,
    return
  }
}

</mosaic_0001>

<llo_original>
// kernel: cnn1_rnn_ffnn_forward.1
$region0: #{cnn1_rnn_ffnn_forward.1}
  #allocation0 [shape = 'u32[]', space=smem, size = 0x4, offset = 0x4, fixed_abs, tag = 'smem constant byte address 0x4 - core index']
  #allocation1 [shape = 'u32[144,128]{1,0:T(1,128)}', space=vmem, size = 0x12000, scoped, tag = 'internal scratch']
  #allocation2 [shape = 'f32[32,64]{1,0:T(8,128)}', space=vmem, size = 0x4000, scoped, tag = 'scratch operand']
  #allocation3 [shape = 'f32[32,64]{1,0:T(8,128)}', space=vmem, size = 0x4000, scoped, tag = 'scratch operand']
  #allocation4 [shape = 'f32[32,16]{1,0:T(8,128)}', space=vmem, size = 0x4000, scoped, tag = 'scratch operand']
  #allocation5 [shape = 'f32[32,16]{1,0:T(8,128)}', space=vmem, size = 0x4000, scoped, tag = 'scratch operand']
  #allocation6 [shape = 'f32[32,64]{1,0:T(8,128)}', space=vmem, size = 0x4000, scoped, tag = 'scratch operand']
  #allocation7 [shape = 'f32[32,64]{1,0:T(8,128)}', space=vmem, size = 0x4000, scoped, tag = 'scratch operand']
  #allocation8 [shape = 'f32[32,16]{1,0:T(8,128)}', space=vmem, size = 0x4000, scoped, tag = 'scratch operand']
  #allocation9 [shape = 'f32[32,16]{1,0:T(8,128)}', space=vmem, size = 0x4000, scoped, tag = 'scratch operand']
  #allocation10 [shape = 'f32[1,1]{1,0:T(1,128)S(1)}', space=vmem, size = 0x200, scoped, tag = 'scoped memory for cnn1_rnn_ffnn_forward.1']
  %s0 = inlined_call_operand.vmem [shape: f32[56,4], index: 0, kind: input, shape index: {}]
  %s1 = inlined_call_operand.vmem [shape: bf16[52,8], index: 1, kind: input, shape index: {}]
  %s2 = inlined_call_operand.vmem [shape: f32[1,8], index: 2, kind: input, shape index: {}]
  %s3 = inlined_call_operand.vmem [shape: f32[1,4], index: 3, kind: input, shape index: {}]
  %s4 = inlined_call_operand.vmem [shape: f32[1,4], index: 4, kind: input, shape index: {}]
  %s5 = inlined_call_operand.vmem [shape: f32[1,8], index: 5, kind: input, shape index: {}]
  %s6 = inlined_call_operand.vmem [shape: f32[1,8], index: 6, kind: input, shape index: {}]
  %s7 = inlined_call_operand.vmem [shape: bf16[2,4,64], index: 7, kind: input, shape index: {}]
  %s8 = inlined_call_operand.vmem [shape: bf16[2,8,64], index: 8, kind: input, shape index: {}]
  %s9 = inlined_call_operand.vmem [shape: bf16[2,16,64], index: 9, kind: input, shape index: {}]
  %s10 = inlined_call_operand.vmem [shape: f32[2,1,64], index: 10, kind: input, shape index: {}]
  %s11 = inlined_call_operand.vmem [shape: bf16[2,16,64], index: 11, kind: input, shape index: {}]
  %s12 = inlined_call_operand.vmem [shape: bf16[2,16,64], index: 12, kind: input, shape index: {}]
  %s13 = inlined_call_operand.vmem [shape: bf16[2,16,64], index: 13, kind: input, shape index: {}]
  %s14 = inlined_call_operand.vmem [shape: f32[2,1,64], index: 14, kind: input, shape index: {}]
  %s15 = inlined_call_operand.vmem [shape: bf16[5,16,32], index: 15, kind: input, shape index: {}]
  %s16 = inlined_call_operand.vmem [shape: bf16[5,16,32], index: 16, kind: input, shape index: {}]
  %s17 = inlined_call_operand.vmem [shape: f32[1,32], index: 17, kind: input, shape index: {}]
  %s18 = inlined_call_operand.vmem [shape: bf16[32,1], index: 18, kind: input, shape index: {}]
  %s19 = inlined_call_operand.<no memory space> [shape: f32[1,1], index: 19, kind: input, shape index: {}]
  %s20 = inlined_call_operand.vmem [shape: f32[2,1], index: 20, kind: output, shape index: {}]
  %s21 = sld [smem:[#allocation0]]
  $region90: #{cnn1_rnn_ffnn_forward.1} parent=0
    _
  %s23 = ssub.s32 1, %s21
  %s24 = scalar_select 0, %s23, %s21
  %v25 = vstv %s19
  %26 = vst [vmem:[#allocation10] sm:$0x1] %v25
  // Predicated region
  $region2: #{cnn1_rnn_ffnn_forward.1} parent=0 // pred_check
    _
  $region3: #{cnn1_rnn_ffnn_forward.1} parent=0 // pred_check_branch
    %28 = sbr.rel (0) target = $region5
  $region4: #{cnn1_rnn_ffnn_forward.1} parent=0 // pred_region
    _
  $region5: #{cnn1_rnn_ffnn_forward.1} parent=0 // pred_fallthru
    _
  // Predicated region
  $region6: #{cnn1_rnn_ffnn_forward.1} parent=0 // pred_check
    _
  $region7: #{cnn1_rnn_ffnn_forward.1} parent=0 // pred_check_branch
    %30 = sbr.rel (0) target = $region9
  $region8: #{cnn1_rnn_ffnn_forward.1} parent=0 // pred_region
    _
  $region9: #{cnn1_rnn_ffnn_forward.1} parent=0 // pred_fallthru
    _
  // Predicated region
  $region10: #{cnn1_rnn_ffnn_forward.1} parent=0 // pred_check
    _
  $region11: #{cnn1_rnn_ffnn_forward.1} parent=0 // pred_check_branch
    %32 = sbr.rel (0) target = $region13
  $region12: #{cnn1_rnn_ffnn_forward.1} parent=0 // pred_region
    _
  $region13: #{cnn1_rnn_ffnn_forward.1} parent=0 // pred_fallthru
    _
  // Predicated region
  $region14: #{cnn1_rnn_ffnn_forward.1} parent=0 // pred_check
    _
  $region15: #{cnn1_rnn_ffnn_forward.1} parent=0 // pred_check_branch
    %34 = sbr.rel (0) target = $region17
  $region16: #{cnn1_rnn_ffnn_forward.1} parent=0 // pred_region
    _
  $region17: #{cnn1_rnn_ffnn_forward.1} parent=0 // pred_fallthru
    _
  // Predicated region
  $region18: #{cnn1_rnn_ffnn_forward.1} parent=0 // pred_check
    _
  $region19: #{cnn1_rnn_ffnn_forward.1} parent=0 // pred_check_branch
    %36 = sbr.rel (0) target = $region21
  $region20: #{cnn1_rnn_ffnn_forward.1} parent=0 // pred_region
    _
  $region21: #{cnn1_rnn_ffnn_forward.1} parent=0 // pred_fallthru
    _
  // Predicated region
  $region22: #{cnn1_rnn_ffnn_forward.1} parent=0 // pred_check
    _
  $region23: #{cnn1_rnn_ffnn_forward.1} parent=0 // pred_check_branch
    %38 = sbr.rel (0) target = $region25
  $region24: #{cnn1_rnn_ffnn_forward.1} parent=0 // pred_region
    _
  $region25: #{cnn1_rnn_ffnn_forward.1} parent=0 // pred_fallthru
    _
  // Predicated region
  $region26: #{cnn1_rnn_ffnn_forward.1} parent=0 // pred_check
    _
  $region27: #{cnn1_rnn_ffnn_forward.1} parent=0 // pred_check_branch
    %40 = sbr.rel (0) target = $region29
  $region28: #{cnn1_rnn_ffnn_forward.1} parent=0 // pred_region
    _
  $region29: #{cnn1_rnn_ffnn_forward.1} parent=0 // pred_fallthru
    _
  // Predicated region
  $region30: #{cnn1_rnn_ffnn_forward.1} parent=0 // pred_check
    _
  $region31: #{cnn1_rnn_ffnn_forward.1} parent=0 // pred_check_branch
    %42 = sbr.rel (0) target = $region33
  $region32: #{cnn1_rnn_ffnn_forward.1} parent=0 // pred_region
    _
  $region33: #{cnn1_rnn_ffnn_forward.1} parent=0 // pred_fallthru
    _
  // Predicated region
  $region34: #{cnn1_rnn_ffnn_forward.1} parent=0 // pred_check
    _
  $region35: #{cnn1_rnn_ffnn_forward.1} parent=0 // pred_check_branch
    %44 = sbr.rel (0) target = $region37
  $region36: #{cnn1_rnn_ffnn_forward.1} parent=0 // pred_region
    _
  $region37: #{cnn1_rnn_ffnn_forward.1} parent=0 // pred_fallthru
    _
  // Predicated region
  $region38: #{cnn1_rnn_ffnn_forward.1} parent=0 // pred_check
    _
  $region39: #{cnn1_rnn_ffnn_forward.1} parent=0 // pred_check_branch
    %46 = sbr.rel (0) target = $region41
  $region40: #{cnn1_rnn_ffnn_forward.1} parent=0 // pred_region
    _
  $region41: #{cnn1_rnn_ffnn_forward.1} parent=0 // pred_fallthru
    _
  // Predicated region
  $region42: #{cnn1_rnn_ffnn_forward.1} parent=0 // pred_check
    _
  $region43: #{cnn1_rnn_ffnn_forward.1} parent=0 // pred_check_branch
    %48 = sbr.rel (0) target = $region45
  $region44: #{cnn1_rnn_ffnn_forward.1} parent=0 // pred_region
    _
  $region45: #{cnn1_rnn_ffnn_forward.1} parent=0 // pred_fallthru
    _
  // Predicated region
  $region46: #{cnn1_rnn_ffnn_forward.1} parent=0 // pred_check
    _
  $region47: #{cnn1_rnn_ffnn_forward.1} parent=0 // pred_check_branch
    %50 = sbr.rel (0) target = $region49
  $region48: #{cnn1_rnn_ffnn_forward.1} parent=0 // pred_region
    _
  $region49: #{cnn1_rnn_ffnn_forward.1} parent=0 // pred_fallthru
    _
  // Predicated region
  $region50: #{cnn1_rnn_ffnn_forward.1} parent=0 // pred_check
    _
  $region51: #{cnn1_rnn_ffnn_forward.1} parent=0 // pred_check_branch
    %52 = sbr.rel (0) target = $region53
  $region52: #{cnn1_rnn_ffnn_forward.1} parent=0 // pred_region
    _
  $region53: #{cnn1_rnn_ffnn_forward.1} parent=0 // pred_fallthru
    _
  // Predicated region
  $region54: #{cnn1_rnn_ffnn_forward.1} parent=0 // pred_check
    _
  $region55: #{cnn1_rnn_ffnn_forward.1} parent=0 // pred_check_branch
    %54 = sbr.rel (0) target = $region57
  $region56: #{cnn1_rnn_ffnn_forward.1} parent=0 // pred_region
    _
  $region57: #{cnn1_rnn_ffnn_forward.1} parent=0 // pred_fallthru
    _
  // Predicated region
  $region58: #{cnn1_rnn_ffnn_forward.1} parent=0 // pred_check
    _
  $region59: #{cnn1_rnn_ffnn_forward.1} parent=0 // pred_check_branch
    %56 = sbr.rel (0) target = $region61
  $region60: #{cnn1_rnn_ffnn_forward.1} parent=0 // pred_region
    _
  $region61: #{cnn1_rnn_ffnn_forward.1} parent=0 // pred_fallthru
    _
  // Predicated region
  $region62: #{cnn1_rnn_ffnn_forward.1} parent=0 // pred_check
    _
  $region63: #{cnn1_rnn_ffnn_forward.1} parent=0 // pred_check_branch
    %58 = sbr.rel (0) target = $region65
  $region64: #{cnn1_rnn_ffnn_forward.1} parent=0 // pred_region
    _
  $region65: #{cnn1_rnn_ffnn_forward.1} parent=0 // pred_fallthru
    _
  // Predicated region
  $region66: #{cnn1_rnn_ffnn_forward.1} parent=0 // pred_check
    _
  $region67: #{cnn1_rnn_ffnn_forward.1} parent=0 // pred_check_branch
    %60 = sbr.rel (0) target = $region69
  $region68: #{cnn1_rnn_ffnn_forward.1} parent=0 // pred_region
    _
  $region69: #{cnn1_rnn_ffnn_forward.1} parent=0 // pred_fallthru
    _
  // Predicated region
  $region70: #{cnn1_rnn_ffnn_forward.1} parent=0 // pred_check
    _
  $region71: #{cnn1_rnn_ffnn_forward.1} parent=0 // pred_check_branch
    %62 = sbr.rel (0) target = $region73
  $region72: #{cnn1_rnn_ffnn_forward.1} parent=0 // pred_region
    _
  $region73: #{cnn1_rnn_ffnn_forward.1} parent=0 // pred_fallthru
    _
  // Predicated region
  $region74: #{cnn1_rnn_ffnn_forward.1} parent=0 // pred_check
    _
  $region75: #{cnn1_rnn_ffnn_forward.1} parent=0 // pred_check_branch
    %64 = sbr.rel (0) target = $region77
  $region76: #{cnn1_rnn_ffnn_forward.1} parent=0 // pred_region
    _
  $region77: #{cnn1_rnn_ffnn_forward.1} parent=0 // pred_fallthru
    _
  // Predicated region
  $region78: #{cnn1_rnn_ffnn_forward.1} parent=0 // pred_check
    _
  $region79: #{cnn1_rnn_ffnn_forward.1} parent=0 // pred_check_branch
    %66 = sbr.rel (0) target = $region81
  $region80: #{cnn1_rnn_ffnn_forward.1} parent=0 // pred_region
    _
  $region81: #{cnn1_rnn_ffnn_forward.1} parent=0 // pred_fallthru
    _
  %v68 = vld [vmem:[%s0] sm:$0xff]
  %v69 = vld [vmem:[%s0 + $0x8] sm:$0xff]
  %v70 = vld [vmem:[%s0 + $0x10] sm:$0xff]
  %v71 = vld [vmem:[%s0 + $0x18] sm:$0xff]
  %v72 = vld [vmem:[%s0 + $0x2] sm:$0xff]
  %v73 = vld [vmem:[%s0 + $0xa] sm:$0xff]
  %v74 = vld [vmem:[%s0 + $0x12] sm:$0xff]
  %v75 = vld [vmem:[%s0 + $0x1a] sm:$0xff]
  %v76 = vld [vmem:[%s0 + $0x4] sm:$0xff]
  %v77 = vld [vmem:[%s0 + $0xc] sm:$0xff]
  %v78 = vld [vmem:[%s0 + $0x14] sm:$0xff]
  %v79 = vld [vmem:[%s0 + $0x1c] sm:$0xff]
  %v80 = vld [vmem:[%s0 + $0x6] sm:$0xff]
  %v81 = vld [vmem:[%s0 + $0xe] sm:$0xff]
  %v82 = vld [vmem:[%s0 + $0x16] sm:$0xff]
  %v83 = vld [vmem:[%s0 + $0x1e] sm:$0xff]
  %v84 = vld [vmem:[%s0 + $0x20] sm:$0xff]
  %v85 = vld [vmem:[%s0 + $0x22] sm:$0xff]
  %v86 = vld [vmem:[%s0 + $0x24] sm:$0xff]
  %v87 = vld [vmem:[%s0 + $0x26] sm:$0xff]
  %v88 = vld [vmem:[%s0 + $0x28] sm:$0xff]
  %v89 = vld [vmem:[%s0 + $0x2a] sm:$0xff]
  %v90 = vld [vmem:[%s0 + $0x2c] sm:$0xff]
  %v91 = vld [vmem:[%s0 + $0x2e] sm:$0xff]
  %v92 = vld [vmem:[%s0 + $0x30] sm:$0xff]
  %97 = vrot.lane.b32.xlu0 %v72, 4
  %v98 = vpop.permute.xlu0 %97
  %99 = vrot.lane.b32.xlu0 %v73, 4
  %v100 = vpop.permute.xlu0 %99
  %101 = vrot.lane.b32.xlu0 %v74, 4
  %v102 = vpop.permute.xlu0 %101
  %103 = vrot.lane.b32.xlu0 %v75, 4
  %v104 = vpop.permute.xlu0 %103
  %113 = vrot.lane.b32.xlu0 %v76, 8
  %v114 = vpop.permute.xlu0 %113
  %115 = vrot.lane.b32.xlu0 %v77, 8
  %v116 = vpop.permute.xlu0 %115
  %117 = vrot.lane.b32.xlu0 %v78, 8
  %v118 = vpop.permute.xlu0 %117
  %119 = vrot.lane.b32.xlu0 %v79, 8
  %v120 = vpop.permute.xlu0 %119
  %129 = vrot.lane.b32.xlu0 %v80, 12
  %v130 = vpop.permute.xlu0 %129
  %131 = vrot.lane.b32.xlu0 %v81, 12
  %v132 = vpop.permute.xlu0 %131
  %133 = vrot.lane.b32.xlu0 %v82, 12
  %v134 = vpop.permute.xlu0 %133
  %135 = vrot.lane.b32.xlu0 %v83, 12
  %v136 = vpop.permute.xlu0 %135
  %145 = vrot.lane.b32.xlu0 %v69, 16
  %v146 = vpop.permute.xlu0 %145
  %147 = vrot.lane.b32.xlu0 %v70, 16
  %v148 = vpop.permute.xlu0 %147
  %149 = vrot.lane.b32.xlu0 %v71, 16
  %v150 = vpop.permute.xlu0 %149
  %151 = vrot.lane.b32.xlu0 %v84, 16
  %v152 = vpop.permute.xlu0 %151
  %158 = vrot.lane.b32.xlu0 %v73, 20
  %v159 = vpop.permute.xlu0 %158
  %160 = vrot.lane.b32.xlu0 %v74, 20
  %v161 = vpop.permute.xlu0 %160
  %162 = vrot.lane.b32.xlu0 %v75, 20
  %v163 = vpop.permute.xlu0 %162
  %164 = vrot.lane.b32.xlu0 %v85, 20
  %v165 = vpop.permute.xlu0 %164
  %171 = vrot.lane.b32.xlu0 %v77, 24
  %v172 = vpop.permute.xlu0 %171
  %173 = vrot.lane.b32.xlu0 %v78, 24
  %v174 = vpop.permute.xlu0 %173
  %175 = vrot.lane.b32.xlu0 %v79, 24
  %v176 = vpop.permute.xlu0 %175
  %177 = vrot.lane.b32.xlu0 %v86, 24
  %v178 = vpop.permute.xlu0 %177
  %184 = vrot.lane.b32.xlu0 %v81, 28
  %v185 = vpop.permute.xlu0 %184
  %186 = vrot.lane.b32.xlu0 %v82, 28
  %v187 = vpop.permute.xlu0 %186
  %188 = vrot.lane.b32.xlu0 %v83, 28
  %v189 = vpop.permute.xlu0 %188
  %190 = vrot.lane.b32.xlu0 %v87, 28
  %v191 = vpop.permute.xlu0 %190
  %197 = vrot.lane.b32.xlu0 %v70, 32
  %v198 = vpop.permute.xlu0 %197
  %199 = vrot.lane.b32.xlu0 %v71, 32
  %v200 = vpop.permute.xlu0 %199
  %201 = vrot.lane.b32.xlu0 %v84, 32
  %v202 = vpop.permute.xlu0 %201
  %203 = vrot.lane.b32.xlu0 %v88, 32
  %v204 = vpop.permute.xlu0 %203
  %210 = vrot.lane.b32.xlu0 %v74, 36
  %v211 = vpop.permute.xlu0 %210
  %212 = vrot.lane.b32.xlu0 %v75, 36
  %v213 = vpop.permute.xlu0 %212
  %214 = vrot.lane.b32.xlu0 %v85, 36
  %v215 = vpop.permute.xlu0 %214
  %216 = vrot.lane.b32.xlu0 %v89, 36
  %v217 = vpop.permute.xlu0 %216
  %223 = vrot.lane.b32.xlu0 %v78, 40
  %v224 = vpop.permute.xlu0 %223
  %225 = vrot.lane.b32.xlu0 %v79, 40
  %v226 = vpop.permute.xlu0 %225
  %227 = vrot.lane.b32.xlu0 %v86, 40
  %v228 = vpop.permute.xlu0 %227
  %229 = vrot.lane.b32.xlu0 %v90, 40
  %v230 = vpop.permute.xlu0 %229
  %236 = vrot.lane.b32.xlu0 %v82, 44
  %v237 = vpop.permute.xlu0 %236
  %238 = vrot.lane.b32.xlu0 %v83, 44
  %v239 = vpop.permute.xlu0 %238
  %240 = vrot.lane.b32.xlu0 %v87, 44
  %v241 = vpop.permute.xlu0 %240
  %242 = vrot.lane.b32.xlu0 %v91, 44
  %v243 = vpop.permute.xlu0 %242
  %249 = vrot.lane.b32.xlu0 %v71, 48
  %v250 = vpop.permute.xlu0 %249
  %251 = vrot.lane.b32.xlu0 %v84, 48
  %v252 = vpop.permute.xlu0 %251
  %253 = vrot.lane.b32.xlu0 %v88, 48
  %v254 = vpop.permute.xlu0 %253
  %255 = vrot.lane.b32.xlu0 %v92, 48
  %v256 = vpop.permute.xlu0 %255
  %vm261 = vcmask 31744
  %v262 = vsel %vm261, %v68, %v98
  %v263 = vsel %vm261, %v69, %v100
  %v264 = vsel %vm261, %v70, %v102
  %v265 = vsel %vm261, %v71, %v104
  %vm266 = vcmask 64512
  %v267 = vsel %vm266, %v262, %v114
  %v268 = vsel %vm266, %v263, %v116
  %v269 = vsel %vm266, %v264, %v118
  %v270 = vsel %vm266, %v265, %v120
  %vm271 = vcmask 97280
  %v272 = vsel %vm271, %v267, %v130
  %v273 = vsel %vm271, %v268, %v132
  %v274 = vsel %vm271, %v269, %v134
  %v275 = vsel %vm271, %v270, %v136
  %vm276 = vcmask 130048
  %v277 = vsel %vm276, %v272, %v146
  %v278 = vsel %vm276, %v273, %v148
  %v279 = vsel %vm276, %v274, %v150
  %v280 = vsel %vm276, %v275, %v152
  %vm281 = vcmask 162816
  %v282 = vsel %vm281, %v277, %v159
  %v283 = vsel %vm281, %v278, %v161
  %v284 = vsel %vm281, %v279, %v163
  %v285 = vsel %vm281, %v280, %v165
  %vm286 = vcmask 195584
  %v287 = vsel %vm286, %v282, %v172
  %v288 = vsel %vm286, %v283, %v174
  %v289 = vsel %vm286, %v284, %v176
  %v290 = vsel %vm286, %v285, %v178
  %vm291 = vcmask 228352
  %v292 = vsel %vm291, %v287, %v185
  %v293 = vsel %vm291, %v288, %v187
  %v294 = vsel %vm291, %v289, %v189
  %v295 = vsel %vm291, %v290, %v191
  %vm296 = vcmask 261120
  %v297 = vsel %vm296, %v292, %v198
  %v298 = vsel %vm296, %v293, %v200
  %v299 = vsel %vm296, %v294, %v202
  %v300 = vsel %vm296, %v295, %v204
  %vm301 = vcmask 293888
  %v302 = vsel %vm301, %v297, %v211
  %v303 = vsel %vm301, %v298, %v213
  %v304 = vsel %vm301, %v299, %v215
  %v305 = vsel %vm301, %v300, %v217
  %vm306 = vcmask 326656
  %v307 = vsel %vm306, %v302, %v224
  %v308 = vsel %vm306, %v303, %v226
  %v309 = vsel %vm306, %v304, %v228
  %v310 = vsel %vm306, %v305, %v230
  %vm311 = vcmask 359424
  %v312 = vsel %vm311, %v307, %v237
  %v313 = vsel %vm311, %v308, %v239
  %v314 = vsel %vm311, %v309, %v241
  %v315 = vsel %vm311, %v310, %v243
  %vm316 = vcmask 392192
  %v317 = vsel %vm316, %v312, %v250
  %v318 = vsel %vm316, %v313, %v252
  %v319 = vsel %vm316, %v314, %v254
  %v320 = vsel %vm316, %v315, %v256
  %v321 = vld [vmem:[%s1] sm:$0xf]
  %v322 = vld [vmem:[%s1 + $0x4] sm:$0xf]
  %v323 = vld [vmem:[%s1 + $0x8] sm:$0xf]
  %v324 = vld [vmem:[%s1 + $0xc] sm:$0xf]
  %v325 = vld [vmem:[%s1 + $0x10] sm:$0xf]
  %v326 = vld [vmem:[%s1 + $0x14] sm:$0xf]
  %v327 = vld [vmem:[%s1 + $0x18] sm:$0x3]
  %v328 = vpack.c.bf16 %v318, %v317
  %v329 = vpack.c.bf16 %v320, %v319
  %v330 = vld [vmem:[%s2] sm:$0x1]
  %v332 = vlaneseq
  %v333 = vshrl.u32 %v332, 7
  %v334 = vsub.s32 0, %v333
  %v335 = vrot.slane %v330, %v334
  %v344 = vunpack.c.l.b16 %v321
  %v345 = vunpack.c.l.b16 %v322
  %v346 = vunpack.c.l.b16 %v323
  %v347 = vunpack.c.l.b16 %v324
  %v348 = vunpack.c.l.b16 %v325
  %v349 = vunpack.c.l.b16 %v326
  %v350 = vunpack.c.l.b16 %v327
  %v351 = vpack.c.b16 %v345, %v344
  %v352 = vpack.c.b16 %v347, %v346
  %v353 = vpack.c.b16 %v349, %v348
  %v354 = vpack.c.b16 %v350, %v350
  %vm358 = vcmask 424960
  %v360 = vsel %vm358, %v328, 0
  %v363 = vsel %vm358, %v329, 0
  %vm365 = vcmask 1041408
  %v367 = vsel %vm365, %v354, 0
  %369 = vmatprep.subr.bf16.mxu0 0
  %370 = vmatpush1.bf16.msra.mxu0 %v351
  %371 = vmatprep.subr.bf16.mxu0 0
  %372 = vmatpush1.bf16.msra.mxu0 %v352
  %373 = vmatprep.subr.bf16.mxu0 0
  %374 = vmatpush1.bf16.msra.mxu0 %v353
  %375 = vmatprep.subr.bf16.mxu0 0
  %376 = vmatpush1.bf16.msra.mxu0 %v367
  %377 = vmatprep.subr.bf16.mxu0 0
  %378 = vmatpush1.bf16.msra.mxu0 0
  %379 = vmatprep.subr.bf16.mxu0 0
  %380 = vmatpush1.bf16.msra.mxu0 0
  %381 = vmatprep.subr.bf16.mxu0 0
  %382 = vmatpush1.bf16.msra.mxu0 0
  %383 = vmatprep.subr.bf16.mxu0 0
  %384 = vmatpush1.bf16.msra.mxu0 0
  %385 = vmatprep.subr.bf16.mxu0 0
  %386 = vmatpush1.bf16.msra.mxu0 0
  %387 = vmatprep.subr.bf16.mxu0 0
  %388 = vmatpush1.bf16.msra.mxu0 0
  %389 = vmatprep.subr.bf16.mxu0 0
  %390 = vmatpush1.bf16.msra.mxu0 0
  %391 = vmatprep.subr.bf16.mxu0 0
  %392 = vmatpush1.bf16.msra.mxu0 0
  %393 = vmatprep.subr.bf16.mxu0 0
  %394 = vmatpush1.bf16.msra.mxu0 0
  %395 = vmatprep.subr.bf16.mxu0 0
  %396 = vmatpush1.bf16.msra.mxu0 0
  %397 = vmatprep.subr.bf16.mxu0 0
  %398 = vmatpush1.bf16.msra.mxu0 0
  %399 = vmatprep.subr.bf16.mxu0 0
  %400 = vmatpush1.bf16.msra.mxu0 0
  %401 = vmatprep.mubr.bf16.mxu0 0
  %402 = vmatmul.mubr.bf16.gmra.mrb[0].mxu0 %v360
  %v403 = vpop.f32.mrb[0].mxu0
  %v404 = vadd.f32 %v335, %v403
  %v405 = vpop.f32.mrb[0].mxu0
  %v406 = vpop.f32.mrb[0].mxu0
  %v407 = vadd.f32 %v335, %v406
  %v408 = vpop.f32.mrb[0].mxu0
  %409 = vmatprep.mubr.bf16.mxu0 0
  %410 = vmatmul.mubr.bf16.gmra.mrb[0].mxu0 %v363
  %v411 = vpop.f32.mrb[0].mxu0
  %v412 = vadd.f32 %v335, %v411
  %v413 = vpop.f32.mrb[0].mxu0
  %v414 = vpop.f32.mrb[0].mxu0
  %v415 = vadd.f32 %v335, %v414
  %v416 = vpop.f32.mrb[0].mxu0
  %417 = vdwg.mxu0
  %v418 = vmax.f32 %v404, 0.0
  %v419 = vmax.f32 %v407, 0.0
  %v420 = vmax.f32 %v412, 0.0
  %v421 = vmax.f32 %v415, 0.0
  %v422 = vld [vmem:[%s3] sm:$0x1]
  %v424 = vlaneseq
  %v425 = vshrl.u32 %v424, 7
  %v426 = vsub.s32 0, %v425
  %v427 = vrot.slane %v422, %v426
  %v429 = vmul.f32 %v77, %v427
  %v430 = vmul.f32 %v78, %v427
  %v431 = vmul.f32 %v79, %v427
  %v432 = vmul.f32 %v86, %v427
  %v433 = vld [vmem:[%s4] sm:$0x1]
  %v435 = vlaneseq
  %v436 = vshrl.u32 %v435, 7
  %v437 = vsub.s32 0, %v436
  %v438 = vrot.slane %v433, %v437
  %v440 = vadd.f32 %v429, %v438
  %v441 = vadd.f32 %v430, %v438
  %v442 = vadd.f32 %v431, %v438
  %v443 = vadd.f32 %v432, %v438
  %v444 = vld [vmem:[%s5] sm:$0x1]
  %v446 = vlaneseq
  %v447 = vshrl.u32 %v446, 7
  %v448 = vsub.s32 0, %v447
  %v449 = vrot.slane %v444, %v448
  %v451 = vmul.f32 %v418, %v449
  %v452 = vmul.f32 %v419, %v449
  %v453 = vmul.f32 %v420, %v449
  %v454 = vmul.f32 %v421, %v449
  %v455 = vld [vmem:[%s6] sm:$0x1]
  %v457 = vlaneseq
  %v458 = vshrl.u32 %v457, 7
  %v459 = vsub.s32 0, %v458
  %v460 = vrot.slane %v455, %v459
  %v462 = vadd.f32 %v451, %v460
  %v463 = vadd.f32 %v452, %v460
  %v464 = vadd.f32 %v453, %v460
  %v465 = vadd.f32 %v454, %v460
  %v466 = vld [vmem:[%s7] sm:$0x3]
  %v467 = vpack.c.bf16 %v441, %v440
  %v468 = vpack.c.bf16 %v443, %v442
  %v469 = vld [vmem:[%s8] sm:$0xf]
  %v470 = vpack.c.bf16 %v463, %v462
  %v471 = vpack.c.bf16 %v465, %v464
  %v473 = vsel %vm266, %v470, 0
  %v476 = vsel %vm266, %v471, 0
  %vm478 = vcmask 1043456
  %v480 = vsel %vm478, %v469, 0
  %482 = vmatprep.subr.bf16.mxu0 0
  %483 = vmatpush1.bf16.msra.mxu0 %v480
  %484 = vmatprep.subr.bf16.mxu0 0
  %485 = vmatpush1.bf16.msra.mxu0 0
  %486 = vmatprep.subr.bf16.mxu0 0
  %487 = vmatpush1.bf16.msra.mxu0 0
  %488 = vmatprep.subr.bf16.mxu0 0
  %489 = vmatpush1.bf16.msra.mxu0 0
  %490 = vmatprep.subr.bf16.mxu0 0
  %491 = vmatpush1.bf16.msra.mxu0 0
  %492 = vmatprep.subr.bf16.mxu0 0
  %493 = vmatpush1.bf16.msra.mxu0 0
  %494 = vmatprep.subr.bf16.mxu0 0
  %495 = vmatpush1.bf16.msra.mxu0 0
  %496 = vmatprep.subr.bf16.mxu0 0
  %497 = vmatpush1.bf16.msra.mxu0 0
  %498 = vmatprep.subr.bf16.mxu0 0
  %499 = vmatpush1.bf16.msra.mxu0 0
  %500 = vmatprep.subr.bf16.mxu0 0
  %501 = vmatpush1.bf16.msra.mxu0 0
  %502 = vmatprep.subr.bf16.mxu0 0
  %503 = vmatpush1.bf16.msra.mxu0 0
  %504 = vmatprep.subr.bf16.mxu0 0
  %505 = vmatpush1.bf16.msra.mxu0 0
  %506 = vmatprep.subr.bf16.mxu0 0
  %507 = vmatpush1.bf16.msra.mxu0 0
  %508 = vmatprep.subr.bf16.mxu0 0
  %509 = vmatpush1.bf16.msra.mxu0 0
  %510 = vmatprep.subr.bf16.mxu0 0
  %511 = vmatpush1.bf16.msra.mxu0 0
  %512 = vmatprep.subr.bf16.mxu0 0
  %513 = vmatpush1.bf16.msra.mxu0 0
  %514 = vmatprep.mubr.bf16.mxu0 0
  %515 = vmatmul.mubr.bf16.gmra.mrb[0].mxu0 %v473
  %v516 = vpop.f32.mrb[0].mxu0
  %v517 = vadd.f32 0.0, %v516
  %v518 = vpop.f32.mrb[0].mxu0
  %v519 = vpop.f32.mrb[0].mxu0
  %v520 = vadd.f32 0.0, %v519
  %v521 = vpop.f32.mrb[0].mxu0
  %522 = vmatprep.mubr.bf16.mxu0 0
  %523 = vmatmul.mubr.bf16.gmra.mrb[0].mxu0 %v476
  %v524 = vpop.f32.mrb[0].mxu0
  %v525 = vadd.f32 0.0, %v524
  %v526 = vpop.f32.mrb[0].mxu0
  %v527 = vpop.f32.mrb[0].mxu0
  %v528 = vadd.f32 0.0, %v527
  %v529 = vpop.f32.mrb[0].mxu0
  %530 = vdwg.mxu0
  %v532 = vsel %vm261, %v467, 0
  %v535 = vsel %vm261, %v468, 0
  %v538 = vsel %vm365, %v466, 0
  %540 = vmatprep.subr.bf16.mxu0 0
  %541 = vmatpush1.bf16.msra.mxu0 %v538
  %542 = vmatprep.subr.bf16.mxu0 0
  %543 = vmatpush1.bf16.msra.mxu0 0
  %544 = vmatprep.subr.bf16.mxu0 0
  %545 = vmatpush1.bf16.msra.mxu0 0
  %546 = vmatprep.subr.bf16.mxu0 0
  %547 = vmatpush1.bf16.msra.mxu0 0
  %548 = vmatprep.subr.bf16.mxu0 0
  %549 = vmatpush1.bf16.msra.mxu0 0
  %550 = vmatprep.subr.bf16.mxu0 0
  %551 = vmatpush1.bf16.msra.mxu0 0
  %552 = vmatprep.subr.bf16.mxu0 0
  %553 = vmatpush1.bf16.msra.mxu0 0
  %554 = vmatprep.subr.bf16.mxu0 0
  %555 = vmatpush1.bf16.msra.mxu0 0
  %556 = vmatprep.subr.bf16.mxu0 0
  %557 = vmatpush1.bf16.msra.mxu0 0
  %558 = vmatprep.subr.bf16.mxu0 0
  %559 = vmatpush1.bf16.msra.mxu0 0
  %560 = vmatprep.subr.bf16.mxu0 0
  %561 = vmatpush1.bf16.msra.mxu0 0
  %562 = vmatprep.subr.bf16.mxu0 0
  %563 = vmatpush1.bf16.msra.mxu0 0
  %564 = vmatprep.subr.bf16.mxu0 0
  %565 = vmatpush1.bf16.msra.mxu0 0
  %566 = vmatprep.subr.bf16.mxu0 0
  %567 = vmatpush1.bf16.msra.mxu0 0
  %568 = vmatprep.subr.bf16.mxu0 0
  %569 = vmatpush1.bf16.msra.mxu0 0
  %570 = vmatprep.subr.bf16.mxu0 0
  %571 = vmatpush1.bf16.msra.mxu0 0
  %572 = vmatprep.mubr.bf16.mxu0 0
  %573 = vmatmul.mubr.bf16.gmra.mrb[0].mxu0 %v532
  %v574 = vpop.f32.mrb[0].mxu0
  %v575 = vadd.f32 %v517, %v574
  %v576 = vpop.f32.mrb[0].mxu0
  %v577 = vpop.f32.mrb[0].mxu0
  %v578 = vadd.f32 %v520, %v577
  %v579 = vpop.f32.mrb[0].mxu0
  %580 = vmatprep.mubr.bf16.mxu0 0
  %581 = vmatmul.mubr.bf16.gmra.mrb[0].mxu0 %v535
  %v582 = vpop.f32.mrb[0].mxu0
  %v583 = vadd.f32 %v525, %v582
  %v584 = vpop.f32.mrb[0].mxu0
  %v585 = vpop.f32.mrb[0].mxu0
  %v586 = vadd.f32 %v528, %v585
  %v587 = vpop.f32.mrb[0].mxu0
  %588 = vdwg.mxu0
  %v589 = vld [vmem:[%s10] sm:$0x1]
  %v591 = vlaneseq
  %v592 = vshrl.u32 %v591, 7
  %v593 = vsub.s32 0, %v592
  %v594 = vrot.slane %v589, %v593
  %v596 = vadd.f32 %v575, %v594
  %v597 = vadd.f32 %v578, %v594
  %v598 = vadd.f32 %v583, %v594
  %v599 = vadd.f32 %v586, %v594
  %vm600 = vcmask 523264
  %601 = vst.msk [vmem:[#allocation2] sm:$0xff] %vm600, %v596
  %602 = vst.msk [vmem:[#allocation2 + $0x8] sm:$0xff] %vm600, %v597
  %603 = vst.msk [vmem:[#allocation2 + $0x10] sm:$0xff] %vm600, %v598
  %604 = vst.msk [vmem:[#allocation2 + $0x18] sm:$0xff] %vm600, %v599
  %s605 = scalar_lea.vmem %s7, 2
  %v606 = vld [vmem:[%s605] sm:$0x3]
  %s607 = scalar_lea.vmem %s8, 4
  %v608 = vld [vmem:[%s607] sm:$0xf]
  %v610 = vsel %vm478, %v608, 0
  %612 = vmatprep.subr.bf16.mxu0 0
  %613 = vmatpush1.bf16.msra.mxu0 %v610
  %614 = vmatprep.subr.bf16.mxu0 0
  %615 = vmatpush1.bf16.msra.mxu0 0
  %616 = vmatprep.subr.bf16.mxu0 0
  %617 = vmatpush1.bf16.msra.mxu0 0
  %618 = vmatprep.subr.bf16.mxu0 0
  %619 = vmatpush1.bf16.msra.mxu0 0
  %620 = vmatprep.subr.bf16.mxu0 0
  %621 = vmatpush1.bf16.msra.mxu0 0
  %622 = vmatprep.subr.bf16.mxu0 0
  %623 = vmatpush1.bf16.msra.mxu0 0
  %624 = vmatprep.subr.bf16.mxu0 0
  %625 = vmatpush1.bf16.msra.mxu0 0
  %626 = vmatprep.subr.bf16.mxu0 0
  %627 = vmatpush1.bf16.msra.mxu0 0
  %628 = vmatprep.subr.bf16.mxu0 0
  %629 = vmatpush1.bf16.msra.mxu0 0
  %630 = vmatprep.subr.bf16.mxu0 0
  %631 = vmatpush1.bf16.msra.mxu0 0
  %632 = vmatprep.subr.bf16.mxu0 0
  %633 = vmatpush1.bf16.msra.mxu0 0
  %634 = vmatprep.subr.bf16.mxu0 0
  %635 = vmatpush1.bf16.msra.mxu0 0
  %636 = vmatprep.subr.bf16.mxu0 0
  %637 = vmatpush1.bf16.msra.mxu0 0
  %638 = vmatprep.subr.bf16.mxu0 0
  %639 = vmatpush1.bf16.msra.mxu0 0
  %640 = vmatprep.subr.bf16.mxu0 0
  %641 = vmatpush1.bf16.msra.mxu0 0
  %642 = vmatprep.subr.bf16.mxu0 0
  %643 = vmatpush1.bf16.msra.mxu0 0
  %644 = vmatprep.mubr.bf16.mxu0 0
  %645 = vmatmul.mubr.bf16.gmra.mrb[0].mxu0 %v473
  %v646 = vpop.f32.mrb[0].mxu0
  %v647 = vadd.f32 0.0, %v646
  %v648 = vpop.f32.mrb[0].mxu0
  %v649 = vpop.f32.mrb[0].mxu0
  %v650 = vadd.f32 0.0, %v649
  %v651 = vpop.f32.mrb[0].mxu0
  %652 = vmatprep.mubr.bf16.mxu0 0
  %653 = vmatmul.mubr.bf16.gmra.mrb[0].mxu0 %v476
  %v654 = vpop.f32.mrb[0].mxu0
  %v655 = vadd.f32 0.0, %v654
  %v656 = vpop.f32.mrb[0].mxu0
  %v657 = vpop.f32.mrb[0].mxu0
  %v658 = vadd.f32 0.0, %v657
  %v659 = vpop.f32.mrb[0].mxu0
  %660 = vdwg.mxu0
  %v662 = vsel %vm365, %v606, 0
  %664 = vmatprep.subr.bf16.mxu0 0
  %665 = vmatpush1.bf16.msra.mxu0 %v662
  %666 = vmatprep.subr.bf16.mxu0 0
  %667 = vmatpush1.bf16.msra.mxu0 0
  %668 = vmatprep.subr.bf16.mxu0 0
  %669 = vmatpush1.bf16.msra.mxu0 0
  %670 = vmatprep.subr.bf16.mxu0 0
  %671 = vmatpush1.bf16.msra.mxu0 0
  %672 = vmatprep.subr.bf16.mxu0 0
  %673 = vmatpush1.bf16.msra.mxu0 0
  %674 = vmatprep.subr.bf16.mxu0 0
  %675 = vmatpush1.bf16.msra.mxu0 0
  %676 = vmatprep.subr.bf16.mxu0 0
  %677 = vmatpush1.bf16.msra.mxu0 0
  %678 = vmatprep.subr.bf16.mxu0 0
  %679 = vmatpush1.bf16.msra.mxu0 0
  %680 = vmatprep.subr.bf16.mxu0 0
  %681 = vmatpush1.bf16.msra.mxu0 0
  %682 = vmatprep.subr.bf16.mxu0 0
  %683 = vmatpush1.bf16.msra.mxu0 0
  %684 = vmatprep.subr.bf16.mxu0 0
  %685 = vmatpush1.bf16.msra.mxu0 0
  %686 = vmatprep.subr.bf16.mxu0 0
  %687 = vmatpush1.bf16.msra.mxu0 0
  %688 = vmatprep.subr.bf16.mxu0 0
  %689 = vmatpush1.bf16.msra.mxu0 0
  %690 = vmatprep.subr.bf16.mxu0 0
  %691 = vmatpush1.bf16.msra.mxu0 0
  %692 = vmatprep.subr.bf16.mxu0 0
  %693 = vmatpush1.bf16.msra.mxu0 0
  %694 = vmatprep.subr.bf16.mxu0 0
  %695 = vmatpush1.bf16.msra.mxu0 0
  %696 = vmatprep.mubr.bf16.mxu0 0
  %697 = vmatmul.mubr.bf16.gmra.mrb[0].mxu0 %v532
  %v698 = vpop.f32.mrb[0].mxu0
  %v699 = vadd.f32 %v647, %v698
  %v700 = vpop.f32.mrb[0].mxu0
  %v701 = vpop.f32.mrb[0].mxu0
  %v702 = vadd.f32 %v650, %v701
  %v703 = vpop.f32.mrb[0].mxu0
  %704 = vmatprep.mubr.bf16.mxu0 0
  %705 = vmatmul.mubr.bf16.gmra.mrb[0].mxu0 %v535
  %v706 = vpop.f32.mrb[0].mxu0
  %v707 = vadd.f32 %v655, %v706
  %v708 = vpop.f32.mrb[0].mxu0
  %v709 = vpop.f32.mrb[0].mxu0
  %v710 = vadd.f32 %v658, %v709
  %v711 = vpop.f32.mrb[0].mxu0
  %712 = vdwg.mxu0
  %s713 = scalar_lea.vmem %s10, 1
  %v714 = vld [vmem:[%s713] sm:$0x1]
  %v716 = vlaneseq
  %v717 = vshrl.u32 %v716, 7
  %v718 = vsub.s32 0, %v717
  %v719 = vrot.slane %v714, %v718
  %v721 = vadd.f32 %v699, %v719
  %v722 = vadd.f32 %v702, %v719
  %v723 = vadd.f32 %v707, %v719
  %v724 = vadd.f32 %v710, %v719
  %725 = vst.msk [vmem:[#allocation3] sm:$0xff] %vm600, %v721
  %726 = vst.msk [vmem:[#allocation3 + $0x8] sm:$0xff] %vm600, %v722
  %727 = vst.msk [vmem:[#allocation3 + $0x10] sm:$0xff] %vm600, %v723
  %728 = vst.msk [vmem:[#allocation3 + $0x18] sm:$0xff] %vm600, %v724
  %v729 = vld [vmem:[%s9] sm:$0xf]
  %v730 = vld [vmem:[%s9 + $0x4] sm:$0xf]
  %s731 = scalar_lea.vmem %s9, 8
  %v732 = vld [vmem:[%s731] sm:$0xf]
  %v733 = vld [vmem:[%s731 + $0x4] sm:$0xf]
  %v734 = vld [vmem:[#allocation2] sm:$0x3]
  %v737 = vunpack.c.l.b16 %v729
  %v738 = vunpack.c.l.b16 %v730
  %v739 = vpack.c.b16 %v738, %v737
  %v742 = vsel %vm276, 0, 0
  %744 = vmatprep.subr.bf16.mxu0 0
  %745 = vmatpush1.bf16.msra.mxu0 %v739
  %746 = vmatprep.subr.bf16.mxu0 0
  %747 = vmatpush1.bf16.msra.mxu0 0
  %748 = vmatprep.subr.bf16.mxu0 0
  %749 = vmatpush1.bf16.msra.mxu0 0
  %750 = vmatprep.subr.bf16.mxu0 0
  %751 = vmatpush1.bf16.msra.mxu0 0
  %752 = vmatprep.subr.bf16.mxu0 0
  %753 = vmatpush1.bf16.msra.mxu0 0
  %754 = vmatprep.subr.bf16.mxu0 0
  %755 = vmatpush1.bf16.msra.mxu0 0
  %756 = vmatprep.subr.bf16.mxu0 0
  %757 = vmatpush1.bf16.msra.mxu0 0
  %758 = vmatprep.subr.bf16.mxu0 0
  %759 = vmatpush1.bf16.msra.mxu0 0
  %760 = vmatprep.subr.bf16.mxu0 0
  %761 = vmatpush1.bf16.msra.mxu0 0
  %762 = vmatprep.subr.bf16.mxu0 0
  %763 = vmatpush1.bf16.msra.mxu0 0
  %764 = vmatprep.subr.bf16.mxu0 0
  %765 = vmatpush1.bf16.msra.mxu0 0
  %766 = vmatprep.subr.bf16.mxu0 0
  %767 = vmatpush1.bf16.msra.mxu0 0
  %768 = vmatprep.subr.bf16.mxu0 0
  %769 = vmatpush1.bf16.msra.mxu0 0
  %770 = vmatprep.subr.bf16.mxu0 0
  %771 = vmatpush1.bf16.msra.mxu0 0
  %772 = vmatprep.subr.bf16.mxu0 0
  %773 = vmatpush1.bf16.msra.mxu0 0
  %774 = vmatprep.subr.bf16.mxu0 0
  %775 = vmatpush1.bf16.msra.mxu0 0
  %776 = vmatprep.mubr.bf16.mxu0 0
  %777 = vmatmul.mubr.bf16.gmra.mrb[0].mxu0 %v742
  %v778 = vpop.f32.mrb[0].mxu0
  %v779 = vadd.f32 0.0, %v778
  %v780 = vpop.f32.mrb[0].mxu0
  %v781 = vpop.f32.mrb[0].mxu0
  %v782 = vpop.f32.mrb[0].mxu0
  %783 = vdwg.mxu0
  %v784 = vadd.f32 %v734, %v779
  %v785 = vld [vmem:[#allocation3 + $0x1e] sm:$0x3]
  %v788 = vunpack.c.l.b16 %v732
  %v789 = vunpack.c.l.b16 %v733
  %v790 = vpack.c.b16 %v789, %v788
  %792 = vmatprep.subr.bf16.mxu0 0
  %793 = vmatpush1.bf16.msra.mxu0 %v790
  %794 = vmatprep.subr.bf16.mxu0 0
  %795 = vmatpush1.bf16.msra.mxu0 0
  %796 = vmatprep.subr.bf16.mxu0 0
  %797 = vmatpush1.bf16.msra.mxu0 0
  %798 = vmatprep.subr.bf16.mxu0 0
  %799 = vmatpush1.bf16.msra.mxu0 0
  %800 = vmatprep.subr.bf16.mxu0 0
  %801 = vmatpush1.bf16.msra.mxu0 0
  %802 = vmatprep.subr.bf16.mxu0 0
  %803 = vmatpush1.bf16.msra.mxu0 0
  %804 = vmatprep.subr.bf16.mxu0 0
  %805 = vmatpush1.bf16.msra.mxu0 0
  %806 = vmatprep.subr.bf16.mxu0 0
  %807 = vmatpush1.bf16.msra.mxu0 0
  %808 = vmatprep.subr.bf16.mxu0 0
  %809 = vmatpush1.bf16.msra.mxu0 0
  %810 = vmatprep.subr.bf16.mxu0 0
  %811 = vmatpush1.bf16.msra.mxu0 0
  %812 = vmatprep.subr.bf16.mxu0 0
  %813 = vmatpush1.bf16.msra.mxu0 0
  %814 = vmatprep.subr.bf16.mxu0 0
  %815 = vmatpush1.bf16.msra.mxu0 0
  %816 = vmatprep.subr.bf16.mxu0 0
  %817 = vmatpush1.bf16.msra.mxu0 0
  %818 = vmatprep.subr.bf16.mxu0 0
  %819 = vmatpush1.bf16.msra.mxu0 0
  %820 = vmatprep.subr.bf16.mxu0 0
  %821 = vmatpush1.bf16.msra.mxu0 0
  %822 = vmatprep.subr.bf16.mxu0 0
  %823 = vmatpush1.bf16.msra.mxu0 0
  %824 = vmatprep.mubr.bf16.mxu0 0
  %825 = vmatmul.mubr.bf16.gmra.mrb[0].mxu0 %v742
  %v826 = vpop.f32.mrb[0].mxu0
  %v827 = vadd.f32 0.0, %v826
  %v828 = vpop.f32.mrb[0].mxu0
  %v829 = vpop.f32.mrb[0].mxu0
  %v830 = vpop.f32.mrb[0].mxu0
  %831 = vdwg.mxu0
  %v832 = vadd.f32 %v785, %v827
  %v833 = vxor.u32 %v784, 2147483648
  %v834 = vmul.f32 %v833, 1.442695
  %v835 = vpow.pop %v834
  %v836 = vadd.f32 %v835, 1.0
  %v837 = vrcp.pop %v836
  %v838 = vmul.f32 1.0, %v837
  %v839 = vtanh.pop %v784
  %v840 = vmul.f32 %v838, 0.0
  %842 = vrot.lane.b32.xlu0 %v839, 96
  %v843 = vpop.permute.xlu0 %842
  %v845 = vmul.f32 %v838, %v843
  %847 = vrot.lane.b32.xlu0 %v845, 16
  %v848 = vpop.permute.xlu0 %847
  %v850 = vadd.f32 %v840, %v848
  %v851 = vtanh.pop %v850
  %853 = vrot.lane.b32.xlu0 %v851, 32
  %v854 = vpop.permute.xlu0 %853
  %v856 = vmul.f32 %v838, %v854
  %v857 = vxor.u32 %v832, 2147483648
  %v858 = vmul.f32 %v857, 1.442695
  %v859 = vpow.pop %v858
  %v860 = vadd.f32 %v859, 1.0
  %v861 = vrcp.pop %v860
  %v862 = vmul.f32 1.0, %v861
  %v863 = vtanh.pop %v832
  %v864 = vmul.f32 %v862, 0.0
  %866 = vrot.lane.b32.xlu0 %v863, 96
  %v867 = vpop.permute.xlu0 %866
  %v869 = vmul.f32 %v862, %v867
  %871 = vrot.lane.b32.xlu0 %v869, 16
  %v872 = vpop.permute.xlu0 %871
  %v874 = vadd.f32 %v864, %v872
  %v875 = vtanh.pop %v874
  %877 = vrot.lane.b32.xlu0 %v875, 32
  %v878 = vpop.permute.xlu0 %877
  %v880 = vmul.f32 %v862, %v878
  %882 = vrot.lane.b32.xlu0 %v856, 80
  %v883 = vpop.permute.xlu0 %882
  %vm885 = vcmask 123904
  %886 = vst.msk [vmem:[#allocation4] sm:$0x3] %vm885, %v883
  %888 = vrot.lane.b32.xlu0 %v880, 80
  %v889 = vpop.permute.xlu0 %888
  %891 = vst.msk [vmem:[#allocation5 + $0x1e] sm:$0x3] %vm885, %v889
  %v892 = vld [vmem:[#allocation2 + $0x2] sm:$0x3]
  %v893 = vpack.c.bf16 %v856, %v856
  %895 = vrot.lane.b32.xlu0 %v893, 80
  %v896 = vpop.permute.xlu0 %895
  %v898 = vsel %vm276, %v896, 0
  %900 = vmatprep.subr.bf16.mxu0 0
  %901 = vmatpush1.bf16.msra.mxu0 %v739
  %902 = vmatprep.subr.bf16.mxu0 0
  %903 = vmatpush1.bf16.msra.mxu0 0
  %904 = vmatprep.subr.bf16.mxu0 0
  %905 = vmatpush1.bf16.msra.mxu0 0
  %906 = vmatprep.subr.bf16.mxu0 0
  %907 = vmatpush1.bf16.msra.mxu0 0
  %908 = vmatprep.subr.bf16.mxu0 0
  %909 = vmatpush1.bf16.msra.mxu0 0
  %910 = vmatprep.subr.bf16.mxu0 0
  %911 = vmatpush1.bf16.msra.mxu0 0
  %912 = vmatprep.subr.bf16.mxu0 0
  %913 = vmatpush1.bf16.msra.mxu0 0
  %914 = vmatprep.subr.bf16.mxu0 0
  %915 = vmatpush1.bf16.msra.mxu0 0
  %916 = vmatprep.subr.bf16.mxu0 0
  %917 = vmatpush1.bf16.msra.mxu0 0
  %918 = vmatprep.subr.bf16.mxu0 0
  %919 = vmatpush1.bf16.msra.mxu0 0
  %920 = vmatprep.subr.bf16.mxu0 0
  %921 = vmatpush1.bf16.msra.mxu0 0
  %922 = vmatprep.subr.bf16.mxu0 0
  %923 = vmatpush1.bf16.msra.mxu0 0
  %924 = vmatprep.subr.bf16.mxu0 0
  %925 = vmatpush1.bf16.msra.mxu0 0
  %926 = vmatprep.subr.bf16.mxu0 0
  %927 = vmatpush1.bf16.msra.mxu0 0
  %928 = vmatprep.subr.bf16.mxu0 0
  %929 = vmatpush1.bf16.msra.mxu0 0
  %930 = vmatprep.subr.bf16.mxu0 0
  %931 = vmatpush1.bf16.msra.mxu0 0
  %932 = vmatprep.mubr.bf16.mxu0 0
  %933 = vmatmul.mubr.bf16.gmra.mrb[0].mxu0 %v898
  %v934 = vpop.f32.mrb[0].mxu0
  %v935 = vadd.f32 0.0, %v934
  %v936 = vpop.f32.mrb[0].mxu0
  %v937 = vpop.f32.mrb[0].mxu0
  %v938 = vpop.f32.mrb[0].mxu0
  %939 = vdwg.mxu0
  %v940 = vadd.f32 %v892, %v935
  %v941 = vld [vmem:[#allocation3 + $0x1c] sm:$0x3]
  %v942 = vpack.c.bf16 %v880, %v880
  %944 = vrot.lane.b32.xlu0 %v942, 80
  %v945 = vpop.permute.xlu0 %944
  %v947 = vsel %vm276, %v945, 0
  %949 = vmatprep.subr.bf16.mxu0 0
  %950 = vmatpush1.bf16.msra.mxu0 %v790
  %951 = vmatprep.subr.bf16.mxu0 0
  %952 = vmatpush1.bf16.msra.mxu0 0
  %953 = vmatprep.subr.bf16.mxu0 0
  %954 = vmatpush1.bf16.msra.mxu0 0
  %955 = vmatprep.subr.bf16.mxu0 0
  %956 = vmatpush1.bf16.msra.mxu0 0
  %957 = vmatprep.subr.bf16.mxu0 0
  %958 = vmatpush1.bf16.msra.mxu0 0
  %959 = vmatprep.subr.bf16.mxu0 0
  %960 = vmatpush1.bf16.msra.mxu0 0
  %961 = vmatprep.subr.bf16.mxu0 0
  %962 = vmatpush1.bf16.msra.mxu0 0
  %963 = vmatprep.subr.bf16.mxu0 0
  %964 = vmatpush1.bf16.msra.mxu0 0
  %965 = vmatprep.subr.bf16.mxu0 0
  %966 = vmatpush1.bf16.msra.mxu0 0
  %967 = vmatprep.subr.bf16.mxu0 0
  %968 = vmatpush1.bf16.msra.mxu0 0
  %969 = vmatprep.subr.bf16.mxu0 0
  %970 = vmatpush1.bf16.msra.mxu0 0
  %971 = vmatprep.subr.bf16.mxu0 0
  %972 = vmatpush1.bf16.msra.mxu0 0
  %973 = vmatprep.subr.bf16.mxu0 0
  %974 = vmatpush1.bf16.msra.mxu0 0
  %975 = vmatprep.subr.bf16.mxu0 0
  %976 = vmatpush1.bf16.msra.mxu0 0
  %977 = vmatprep.subr.bf16.mxu0 0
  %978 = vmatpush1.bf16.msra.mxu0 0
  %979 = vmatprep.subr.bf16.mxu0 0
  %980 = vmatpush1.bf16.msra.mxu0 0
  %981 = vmatprep.mubr.bf16.mxu0 0
  %982 = vmatmul.mubr.bf16.gmra.mrb[0].mxu0 %v947
  %v983 = vpop.f32.mrb[0].mxu0
  %v984 = vadd.f32 0.0, %v983
  %v985 = vpop.f32.mrb[0].mxu0
  %v986 = vpop.f32.mrb[0].mxu0
  %v987 = vpop.f32.mrb[0].mxu0
  %988 = vdwg.mxu0
  %v989 = vadd.f32 %v941, %v984
  %v990 = vxor.u32 %v940, 2147483648
  %v991 = vmul.f32 %v990, 1.442695
  %v992 = vpow.pop %v991
  %v993 = vadd.f32 %v992, 1.0
  %v994 = vrcp.pop %v993
  %v995 = vmul.f32 1.0, %v994
  %v996 = vtanh.pop %v940
  %v997 = vmul.f32 %v995, %v850
  %999 = vrot.lane.b32.xlu0 %v996, 96
  %v1000 = vpop.permute.xlu0 %999
  %v1002 = vmul.f32 %v995, %v1000
  %1004 = vrot.lane.b32.xlu0 %v1002, 16
  %v1005 = vpop.permute.xlu0 %1004
  %v1007 = vadd.f32 %v997, %v1005
  %v1008 = vtanh.pop %v1007
  %1010 = vrot.lane.b32.xlu0 %v1008, 32
  %v1011 = vpop.permute.xlu0 %1010
  %v1013 = vmul.f32 %v995, %v1011
  %v1014 = vxor.u32 %v989, 2147483648
  %v1015 = vmul.f32 %v1014, 1.442695
  %v1016 = vpow.pop %v1015
  %v1017 = vadd.f32 %v1016, 1.0
  %v1018 = vrcp.pop %v1017
  %v1019 = vmul.f32 1.0, %v1018
  %v1020 = vtanh.pop %v989
  %v1021 = vmul.f32 %v1019, %v874
  %1023 = vrot.lane.b32.xlu0 %v1020, 96
  %v1024 = vpop.permute.xlu0 %1023
  %v1026 = vmul.f32 %v1019, %v1024
  %1028 = vrot.lane.b32.xlu0 %v1026, 16
  %v1029 = vpop.permute.xlu0 %1028
  %v1031 = vadd.f32 %v1021, %v1029
  %v1032 = vtanh.pop %v1031
  %1034 = vrot.lane.b32.xlu0 %v1032, 32
  %v1035 = vpop.permute.xlu0 %1034
  %v1037 = vmul.f32 %v1019, %v1035
  %1039 = vrot.lane.b32.xlu0 %v1013, 80
  %v1040 = vpop.permute.xlu0 %1039
  %1042 = vst.msk [vmem:[#allocation4 + $0x2] sm:$0x3] %vm885, %v1040
  %1044 = vrot.lane.b32.xlu0 %v1037, 80
  %v1045 = vpop.permute.xlu0 %1044
  %1047 = vst.msk [vmem:[#allocation5 + $0x1c] sm:$0x3] %vm885, %v1045
  %v1048 = vld [vmem:[#allocation2 + $0x4] sm:$0x3]
  %v1049 = vpack.c.bf16 %v1013, %v1013
  %1051 = vrot.lane.b32.xlu0 %v1049, 80
  %v1052 = vpop.permute.xlu0 %1051
  %v1054 = vsel %vm276, %v1052, 0
  %1056 = vmatprep.subr.bf16.mxu0 0
  %1057 = vmatpush1.bf16.msra.mxu0 %v739
  %1058 = vmatprep.subr.bf16.mxu0 0
  %1059 = vmatpush1.bf16.msra.mxu0 0
  %1060 = vmatprep.subr.bf16.mxu0 0
  %1061 = vmatpush1.bf16.msra.mxu0 0
  %1062 = vmatprep.subr.bf16.mxu0 0
  %1063 = vmatpush1.bf16.msra.mxu0 0
  %1064 = vmatprep.subr.bf16.mxu0 0
  %1065 = vmatpush1.bf16.msra.mxu0 0
  %1066 = vmatprep.subr.bf16.mxu0 0
  %1067 = vmatpush1.bf16.msra.mxu0 0
  %1068 = vmatprep.subr.bf16.mxu0 0
  %1069 = vmatpush1.bf16.msra.mxu0 0
  %1070 = vmatprep.subr.bf16.mxu0 0
  %1071 = vmatpush1.bf16.msra.mxu0 0
  %1072 = vmatprep.subr.bf16.mxu0 0
  %1073 = vmatpush1.bf16.msra.mxu0 0
  %1074 = vmatprep.subr.bf16.mxu0 0
  %1075 = vmatpush1.bf16.msra.mxu0 0
  %1076 = vmatprep.subr.bf16.mxu0 0
  %1077 = vmatpush1.bf16.msra.mxu0 0
  %1078 = vmatprep.subr.bf16.mxu0 0
  %1079 = vmatpush1.bf16.msra.mxu0 0
  %1080 = vmatprep.subr.bf16.mxu0 0
  %1081 = vmatpush1.bf16.msra.mxu0 0
  %1082 = vmatprep.subr.bf16.mxu0 0
  %1083 = vmatpush1.bf16.msra.mxu0 0
  %1084 = vmatprep.subr.bf16.mxu0 0
  %1085 = vmatpush1.bf16.msra.mxu0 0
  %1086 = vmatprep.subr.bf16.mxu0 0
  %1087 = vmatpush1.bf16.msra.mxu0 0
  %1088 = vmatprep.mubr.bf16.mxu0 0
  %1089 = vmatmul.mubr.bf16.gmra.mrb[0].mxu0 %v1054
  %v1090 = vpop.f32.mrb[0].mxu0
  %v1091 = vadd.f32 0.0, %v1090
  %v1092 = vpop.f32.mrb[0].mxu0
  %v1093 = vpop.f32.mrb[0].mxu0
  %v1094 = vpop.f32.mrb[0].mxu0
  %1095 = vdwg.mxu0
  %v1096 = vadd.f32 %v1048, %v1091
  %v1097 = vld [vmem:[#allocation3 + $0x1a] sm:$0x3]
  %v1098 = vpack.c.bf16 %v1037, %v1037
  %1100 = vrot.lane.b32.xlu0 %v1098, 80
  %v1101 = vpop.permute.xlu0 %1100
  %v1103 = vsel %vm276, %v1101, 0
  %1105 = vmatprep.subr.bf16.mxu0 0
  %1106 = vmatpush1.bf16.msra.mxu0 %v790
  %1107 = vmatprep.subr.bf16.mxu0 0
  %1108 = vmatpush1.bf16.msra.mxu0 0
  %1109 = vmatprep.subr.bf16.mxu0 0
  %1110 = vmatpush1.bf16.msra.mxu0 0
  %1111 = vmatprep.subr.bf16.mxu0 0
  %1112 = vmatpush1.bf16.msra.mxu0 0
  %1113 = vmatprep.subr.bf16.mxu0 0
  %1114 = vmatpush1.bf16.msra.mxu0 0
  %1115 = vmatprep.subr.bf16.mxu0 0
  %1116 = vmatpush1.bf16.msra.mxu0 0
  %1117 = vmatprep.subr.bf16.mxu0 0
  %1118 = vmatpush1.bf16.msra.mxu0 0
  %1119 = vmatprep.subr.bf16.mxu0 0
  %1120 = vmatpush1.bf16.msra.mxu0 0
  %1121 = vmatprep.subr.bf16.mxu0 0
  %1122 = vmatpush1.bf16.msra.mxu0 0
  %1123 = vmatprep.subr.bf16.mxu0 0
  %1124 = vmatpush1.bf16.msra.mxu0 0
  %1125 = vmatprep.subr.bf16.mxu0 0
  %1126 = vmatpush1.bf16.msra.mxu0 0
  %1127 = vmatprep.subr.bf16.mxu0 0
  %1128 = vmatpush1.bf16.msra.mxu0 0
  %1129 = vmatprep.subr.bf16.mxu0 0
  %1130 = vmatpush1.bf16.msra.mxu0 0
  %1131 = vmatprep.subr.bf16.mxu0 0
  %1132 = vmatpush1.bf16.msra.mxu0 0
  %1133 = vmatprep.subr.bf16.mxu0 0
  %1134 = vmatpush1.bf16.msra.mxu0 0
  %1135 = vmatprep.subr.bf16.mxu0 0
  %1136 = vmatpush1.bf16.msra.mxu0 0
  %1137 = vmatprep.mubr.bf16.mxu0 0
  %1138 = vmatmul.mubr.bf16.gmra.mrb[0].mxu0 %v1103
  %v1139 = vpop.f32.mrb[0].mxu0
  %v1140 = vadd.f32 0.0, %v1139
  %v1141 = vpop.f32.mrb[0].mxu0
  %v1142 = vpop.f32.mrb[0].mxu0
  %v1143 = vpop.f32.mrb[0].mxu0
  %1144 = vdwg.mxu0
  %v1145 = vadd.f32 %v1097, %v1140
  %v1146 = vxor.u32 %v1096, 2147483648
  %v1147 = vmul.f32 %v1146, 1.442695
  %v1148 = vpow.pop %v1147
  %v1149 = vadd.f32 %v1148, 1.0
  %v1150 = vrcp.pop %v1149
  %v1151 = vmul.f32 1.0, %v1150
  %v1152 = vtanh.pop %v1096
  %v1153 = vmul.f32 %v1151, %v1007
  %1155 = vrot.lane.b32.xlu0 %v1152, 96
  %v1156 = vpop.permute.xlu0 %1155
  %v1158 = vmul.f32 %v1151, %v1156
  %1160 = vrot.lane.b32.xlu0 %v1158, 16
  %v1161 = vpop.permute.xlu0 %1160
  %v1163 = vadd.f32 %v1153, %v1161
  %v1164 = vtanh.pop %v1163
  %1166 = vrot.lane.b32.xlu0 %v1164, 32
  %v1167 = vpop.permute.xlu0 %1166
  %v1169 = vmul.f32 %v1151, %v1167
  %v1170 = vxor.u32 %v1145, 2147483648
  %v1171 = vmul.f32 %v1170, 1.442695
  %v1172 = vpow.pop %v1171
  %v1173 = vadd.f32 %v1172, 1.0
  %v1174 = vrcp.pop %v1173
  %v1175 = vmul.f32 1.0, %v1174
  %v1176 = vtanh.pop %v1145
  %v1177 = vmul.f32 %v1175, %v1031
  %1179 = vrot.lane.b32.xlu0 %v1176, 96
  %v1180 = vpop.permute.xlu0 %1179
  %v1182 = vmul.f32 %v1175, %v1180
  %1184 = vrot.lane.b32.xlu0 %v1182, 16
  %v1185 = vpop.permute.xlu0 %1184
  %v1187 = vadd.f32 %v1177, %v1185
  %v1188 = vtanh.pop %v1187
  %1190 = vrot.lane.b32.xlu0 %v1188, 32
  %v1191 = vpop.permute.xlu0 %1190
  %v1193 = vmul.f32 %v1175, %v1191
  %1195 = vrot.lane.b32.xlu0 %v1169, 80
  %v1196 = vpop.permute.xlu0 %1195
  %1198 = vst.msk [vmem:[#allocation4 + $0x4] sm:$0x3] %vm885, %v1196
  %1200 = vrot.lane.b32.xlu0 %v1193, 80
  %v1201 = vpop.permute.xlu0 %1200
  %1203 = vst.msk [vmem:[#allocation5 + $0x1a] sm:$0x3] %vm885, %v1201
  %v1204 = vld [vmem:[#allocation2 + $0x6] sm:$0x3]
  %v1205 = vpack.c.bf16 %v1169, %v1169
  %1207 = vrot.lane.b32.xlu0 %v1205, 80
  %v1208 = vpop.permute.xlu0 %1207
  %v1210 = vsel %vm276, %v1208, 0
  %1212 = vmatprep.subr.bf16.mxu0 0
  %1213 = vmatpush1.bf16.msra.mxu0 %v739
  %1214 = vmatprep.subr.bf16.mxu0 0
  %1215 = vmatpush1.bf16.msra.mxu0 0
  %1216 = vmatprep.subr.bf16.mxu0 0
  %1217 = vmatpush1.bf16.msra.mxu0 0
  %1218 = vmatprep.subr.bf16.mxu0 0
  %1219 = vmatpush1.bf16.msra.mxu0 0
  %1220 = vmatprep.subr.bf16.mxu0 0
  %1221 = vmatpush1.bf16.msra.mxu0 0
  %1222 = vmatprep.subr.bf16.mxu0 0
  %1223 = vmatpush1.bf16.msra.mxu0 0
  %1224 = vmatprep.subr.bf16.mxu0 0
  %1225 = vmatpush1.bf16.msra.mxu0 0
  %1226 = vmatprep.subr.bf16.mxu0 0
  %1227 = vmatpush1.bf16.msra.mxu0 0
  %1228 = vmatprep.subr.bf16.mxu0 0
  %1229 = vmatpush1.bf16.msra.mxu0 0
  %1230 = vmatprep.subr.bf16.mxu0 0
  %1231 = vmatpush1.bf16.msra.mxu0 0
  %1232 = vmatprep.subr.bf16.mxu0 0
  %1233 = vmatpush1.bf16.msra.mxu0 0
  %1234 = vmatprep.subr.bf16.mxu0 0
  %1235 = vmatpush1.bf16.msra.mxu0 0
  %1236 = vmatprep.subr.bf16.mxu0 0
  %1237 = vmatpush1.bf16.msra.mxu0 0
  %1238 = vmatprep.subr.bf16.mxu0 0
  %1239 = vmatpush1.bf16.msra.mxu0 0
  %1240 = vmatprep.subr.bf16.mxu0 0
  %1241 = vmatpush1.bf16.msra.mxu0 0
  %1242 = vmatprep.subr.bf16.mxu0 0
  %1243 = vmatpush1.bf16.msra.mxu0 0
  %1244 = vmatprep.mubr.bf16.mxu0 0
  %1245 = vmatmul.mubr.bf16.gmra.mrb[0].mxu0 %v1210
  %v1246 = vpop.f32.mrb[0].mxu0
  %v1247 = vadd.f32 0.0, %v1246
  %v1248 = vpop.f32.mrb[0].mxu0
  %v1249 = vpop.f32.mrb[0].mxu0
  %v1250 = vpop.f32.mrb[0].mxu0
  %1251 = vdwg.mxu0
  %v1252 = vadd.f32 %v1204, %v1247
  %v1253 = vld [vmem:[#allocation3 + $0x18] sm:$0x3]
  %v1254 = vpack.c.bf16 %v1193, %v1193
  %1256 = vrot.lane.b32.xlu0 %v1254, 80
  %v1257 = vpop.permute.xlu0 %1256
  %v1259 = vsel %vm276, %v1257, 0
  %1261 = vmatprep.subr.bf16.mxu0 0
  %1262 = vmatpush1.bf16.msra.mxu0 %v790
  %1263 = vmatprep.subr.bf16.mxu0 0
  %1264 = vmatpush1.bf16.msra.mxu0 0
  %1265 = vmatprep.subr.bf16.mxu0 0
  %1266 = vmatpush1.bf16.msra.mxu0 0
  %1267 = vmatprep.subr.bf16.mxu0 0
  %1268 = vmatpush1.bf16.msra.mxu0 0
  %1269 = vmatprep.subr.bf16.mxu0 0
  %1270 = vmatpush1.bf16.msra.mxu0 0
  %1271 = vmatprep.subr.bf16.mxu0 0
  %1272 = vmatpush1.bf16.msra.mxu0 0
  %1273 = vmatprep.subr.bf16.mxu0 0
  %1274 = vmatpush1.bf16.msra.mxu0 0
  %1275 = vmatprep.subr.bf16.mxu0 0
  %1276 = vmatpush1.bf16.msra.mxu0 0
  %1277 = vmatprep.subr.bf16.mxu0 0
  %1278 = vmatpush1.bf16.msra.mxu0 0
  %1279 = vmatprep.subr.bf16.mxu0 0
  %1280 = vmatpush1.bf16.msra.mxu0 0
  %1281 = vmatprep.subr.bf16.mxu0 0
  %1282 = vmatpush1.bf16.msra.mxu0 0
  %1283 = vmatprep.subr.bf16.mxu0 0
  %1284 = vmatpush1.bf16.msra.mxu0 0
  %1285 = vmatprep.subr.bf16.mxu0 0
  %1286 = vmatpush1.bf16.msra.mxu0 0
  %1287 = vmatprep.subr.bf16.mxu0 0
  %1288 = vmatpush1.bf16.msra.mxu0 0
  %1289 = vmatprep.subr.bf16.mxu0 0
  %1290 = vmatpush1.bf16.msra.mxu0 0
  %1291 = vmatprep.subr.bf16.mxu0 0
  %1292 = vmatpush1.bf16.msra.mxu0 0
  %1293 = vmatprep.mubr.bf16.mxu0 0
  %1294 = vmatmul.mubr.bf16.gmra.mrb[0].mxu0 %v1259
  %v1295 = vpop.f32.mrb[0].mxu0
  %v1296 = vadd.f32 0.0, %v1295
  %v1297 = vpop.f32.mrb[0].mxu0
  %v1298 = vpop.f32.mrb[0].mxu0
  %v1299 = vpop.f32.mrb[0].mxu0
  %1300 = vdwg.mxu0
  %v1301 = vadd.f32 %v1253, %v1296
  %v1302 = vxor.u32 %v1252, 2147483648
  %v1303 = vmul.f32 %v1302, 1.442695
  %v1304 = vpow.pop %v1303
  %v1305 = vadd.f32 %v1304, 1.0
  %v1306 = vrcp.pop %v1305
  %v1307 = vmul.f32 1.0, %v1306
  %v1308 = vtanh.pop %v1252
  %v1309 = vmul.f32 %v1307, %v1163
  %1311 = vrot.lane.b32.xlu0 %v1308, 96
  %v1312 = vpop.permute.xlu0 %1311
  %v1314 = vmul.f32 %v1307, %v1312
  %1316 = vrot.lane.b32.xlu0 %v1314, 16
  %v1317 = vpop.permute.xlu0 %1316
  %v1319 = vadd.f32 %v1309, %v1317
  %v1320 = vtanh.pop %v1319
  %1322 = vrot.lane.b32.xlu0 %v1320, 32
  %v1323 = vpop.permute.xlu0 %1322
  %v1325 = vmul.f32 %v1307, %v1323
  %v1326 = vxor.u32 %v1301, 2147483648
  %v1327 = vmul.f32 %v1326, 1.442695
  %v1328 = vpow.pop %v1327
  %v1329 = vadd.f32 %v1328, 1.0
  %v1330 = vrcp.pop %v1329
  %v1331 = vmul.f32 1.0, %v1330
  %v1332 = vtanh.pop %v1301
  %v1333 = vmul.f32 %v1331, %v1187
  %1335 = vrot.lane.b32.xlu0 %v1332, 96
  %v1336 = vpop.permute.xlu0 %1335
  %v1338 = vmul.f32 %v1331, %v1336
  %1340 = vrot.lane.b32.xlu0 %v1338, 16
  %v1341 = vpop.permute.xlu0 %1340
  %v1343 = vadd.f32 %v1333, %v1341
  %v1344 = vtanh.pop %v1343
  %1346 = vrot.lane.b32.xlu0 %v1344, 32
  %v1347 = vpop.permute.xlu0 %1346
  %v1349 = vmul.f32 %v1331, %v1347
  %1351 = vrot.lane.b32.xlu0 %v1325, 80
  %v1352 = vpop.permute.xlu0 %1351
  %1354 = vst.msk [vmem:[#allocation4 + $0x6] sm:$0x3] %vm885, %v1352
  %1356 = vrot.lane.b32.xlu0 %v1349, 80
  %v1357 = vpop.permute.xlu0 %1356
  %1359 = vst.msk [vmem:[#allocation5 + $0x18] sm:$0x3] %vm885, %v1357
  %v1360 = vld [vmem:[#allocation2 + $0x8] sm:$0x3]
  %v1361 = vpack.c.bf16 %v1325, %v1325
  %1363 = vrot.lane.b32.xlu0 %v1361, 80
  %v1364 = vpop.permute.xlu0 %1363
  %v1366 = vsel %vm276, %v1364, 0
  %1368 = vmatprep.subr.bf16.mxu0 0
  %1369 = vmatpush1.bf16.msra.mxu0 %v739
  %1370 = vmatprep.subr.bf16.mxu0 0
  %1371 = vmatpush1.bf16.msra.mxu0 0
  %1372 = vmatprep.subr.bf16.mxu0 0
  %1373 = vmatpush1.bf16.msra.mxu0 0
  %1374 = vmatprep.subr.bf16.mxu0 0
  %1375 = vmatpush1.bf16.msra.mxu0 0
  %1376 = vmatprep.subr.bf16.mxu0 0
  %1377 = vmatpush1.bf16.msra.mxu0 0
  %1378 = vmatprep.subr.bf16.mxu0 0
  %1379 = vmatpush1.bf16.msra.mxu0 0
  %1380 = vmatprep.subr.bf16.mxu0 0
  %1381 = vmatpush1.bf16.msra.mxu0 0
  %1382 = vmatprep.subr.bf16.mxu0 0
  %1383 = vmatpush1.bf16.msra.mxu0 0
  %1384 = vmatprep.subr.bf16.mxu0 0
  %1385 = vmatpush1.bf16.msra.mxu0 0
  %1386 = vmatprep.subr.bf16.mxu0 0
  %1387 = vmatpush1.bf16.msra.mxu0 0
  %1388 = vmatprep.subr.bf16.mxu0 0
  %1389 = vmatpush1.bf16.msra.mxu0 0
  %1390 = vmatprep.subr.bf16.mxu0 0
  %1391 = vmatpush1.bf16.msra.mxu0 0
  %1392 = vmatprep.subr.bf16.mxu0 0
  %1393 = vmatpush1.bf16.msra.mxu0 0
  %1394 = vmatprep.subr.bf16.mxu0 0
  %1395 = vmatpush1.bf16.msra.mxu0 0
  %1396 = vmatprep.subr.bf16.mxu0 0
  %1397 = vmatpush1.bf16.msra.mxu0 0
  %1398 = vmatprep.subr.bf16.mxu0 0
  %1399 = vmatpush1.bf16.msra.mxu0 0
  %1400 = vmatprep.mubr.bf16.mxu0 0
  %1401 = vmatmul.mubr.bf16.gmra.mrb[0].mxu0 %v1366
  %v1402 = vpop.f32.mrb[0].mxu0
  %v1403 = vadd.f32 0.0, %v1402
  %v1404 = vpop.f32.mrb[0].mxu0
  %v1405 = vpop.f32.mrb[0].mxu0
  %v1406 = vpop.f32.mrb[0].mxu0
  %1407 = vdwg.mxu0
  %v1408 = vadd.f32 %v1360, %v1403
  %v1409 = vld [vmem:[#allocation3 + $0x16] sm:$0x3]
  %v1410 = vpack.c.bf16 %v1349, %v1349
  %1412 = vrot.lane.b32.xlu0 %v1410, 80
  %v1413 = vpop.permute.xlu0 %1412
  %v1415 = vsel %vm276, %v1413, 0
  %1417 = vmatprep.subr.bf16.mxu0 0
  %1418 = vmatpush1.bf16.msra.mxu0 %v790
  %1419 = vmatprep.subr.bf16.mxu0 0
  %1420 = vmatpush1.bf16.msra.mxu0 0
  %1421 = vmatprep.subr.bf16.mxu0 0
  %1422 = vmatpush1.bf16.msra.mxu0 0
  %1423 = vmatprep.subr.bf16.mxu0 0
  %1424 = vmatpush1.bf16.msra.mxu0 0
  %1425 = vmatprep.subr.bf16.mxu0 0
  %1426 = vmatpush1.bf16.msra.mxu0 0
  %1427 = vmatprep.subr.bf16.mxu0 0
  %1428 = vmatpush1.bf16.msra.mxu0 0
  %1429 = vmatprep.subr.bf16.mxu0 0
  %1430 = vmatpush1.bf16.msra.mxu0 0
  %1431 = vmatprep.subr.bf16.mxu0 0
  %1432 = vmatpush1.bf16.msra.mxu0 0
  %1433 = vmatprep.subr.bf16.mxu0 0
  %1434 = vmatpush1.bf16.msra.mxu0 0
  %1435 = vmatprep.subr.bf16.mxu0 0
  %1436 = vmatpush1.bf16.msra.mxu0 0
  %1437 = vmatprep.subr.bf16.mxu0 0
  %1438 = vmatpush1.bf16.msra.mxu0 0
  %1439 = vmatprep.subr.bf16.mxu0 0
  %1440 = vmatpush1.bf16.msra.mxu0 0
  %1441 = vmatprep.subr.bf16.mxu0 0
  %1442 = vmatpush1.bf16.msra.mxu0 0
  %1443 = vmatprep.subr.bf16.mxu0 0
  %1444 = vmatpush1.bf16.msra.mxu0 0
  %1445 = vmatprep.subr.bf16.mxu0 0
  %1446 = vmatpush1.bf16.msra.mxu0 0
  %1447 = vmatprep.subr.bf16.mxu0 0
  %1448 = vmatpush1.bf16.msra.mxu0 0
  %1449 = vmatprep.mubr.bf16.mxu0 0
  %1450 = vmatmul.mubr.bf16.gmra.mrb[0].mxu0 %v1415
  %v1451 = vpop.f32.mrb[0].mxu0
  %v1452 = vadd.f32 0.0, %v1451
  %v1453 = vpop.f32.mrb[0].mxu0
  %v1454 = vpop.f32.mrb[0].mxu0
  %v1455 = vpop.f32.mrb[0].mxu0
  %1456 = vdwg.mxu0
  %v1457 = vadd.f32 %v1409, %v1452
  %v1458 = vxor.u32 %v1408, 2147483648
  %v1459 = vmul.f32 %v1458, 1.442695
  %v1460 = vpow.pop %v1459
  %v1461 = vadd.f32 %v1460, 1.0
  %v1462 = vrcp.pop %v1461
  %v1463 = vmul.f32 1.0, %v1462
  %v1464 = vtanh.pop %v1408
  %v1465 = vmul.f32 %v1463, %v1319
  %1467 = vrot.lane.b32.xlu0 %v1464, 96
  %v1468 = vpop.permute.xlu0 %1467
  %v1470 = vmul.f32 %v1463, %v1468
  %1472 = vrot.lane.b32.xlu0 %v1470, 16
  %v1473 = vpop.permute.xlu0 %1472
  %v1475 = vadd.f32 %v1465, %v1473
  %v1476 = vtanh.pop %v1475
  %1478 = vrot.lane.b32.xlu0 %v1476, 32
  %v1479 = vpop.permute.xlu0 %1478
  %v1481 = vmul.f32 %v1463, %v1479
  %v1482 = vxor.u32 %v1457, 2147483648
  %v1483 = vmul.f32 %v1482, 1.442695
  %v1484 = vpow.pop %v1483
  %v1485 = vadd.f32 %v1484, 1.0
  %v1486 = vrcp.pop %v1485
  %v1487 = vmul.f32 1.0, %v1486
  %v1488 = vtanh.pop %v1457
  %v1489 = vmul.f32 %v1487, %v1343
  %1491 = vrot.lane.b32.xlu0 %v1488, 96
  %v1492 = vpop.permute.xlu0 %1491
  %v1494 = vmul.f32 %v1487, %v1492
  %1496 = vrot.lane.b32.xlu0 %v1494, 16
  %v1497 = vpop.permute.xlu0 %1496
  %v1499 = vadd.f32 %v1489, %v1497
  %v1500 = vtanh.pop %v1499
  %1502 = vrot.lane.b32.xlu0 %v1500, 32
  %v1503 = vpop.permute.xlu0 %1502
  %v1505 = vmul.f32 %v1487, %v1503
  %1507 = vrot.lane.b32.xlu0 %v1481, 80
  %v1508 = vpop.permute.xlu0 %1507
  %1510 = vst.msk [vmem:[#allocation4 + $0x8] sm:$0x3] %vm885, %v1508
  %1512 = vrot.lane.b32.xlu0 %v1505, 80
  %v1513 = vpop.permute.xlu0 %1512
  %1515 = vst.msk [vmem:[#allocation5 + $0x16] sm:$0x3] %vm885, %v1513
  %v1516 = vld [vmem:[#allocation2 + $0xa] sm:$0x3]
  %v1517 = vpack.c.bf16 %v1481, %v1481
  %1519 = vrot.lane.b32.xlu0 %v1517, 80
  %v1520 = vpop.permute.xlu0 %1519
  %v1522 = vsel %vm276, %v1520, 0
  %1524 = vmatprep.subr.bf16.mxu0 0
  %1525 = vmatpush1.bf16.msra.mxu0 %v739
  %1526 = vmatprep.subr.bf16.mxu0 0
  %1527 = vmatpush1.bf16.msra.mxu0 0
  %1528 = vmatprep.subr.bf16.mxu0 0
  %1529 = vmatpush1.bf16.msra.mxu0 0
  %1530 = vmatprep.subr.bf16.mxu0 0
  %1531 = vmatpush1.bf16.msra.mxu0 0
  %1532 = vmatprep.subr.bf16.mxu0 0
  %1533 = vmatpush1.bf16.msra.mxu0 0
  %1534 = vmatprep.subr.bf16.mxu0 0
  %1535 = vmatpush1.bf16.msra.mxu0 0
  %1536 = vmatprep.subr.bf16.mxu0 0
  %1537 = vmatpush1.bf16.msra.mxu0 0
  %1538 = vmatprep.subr.bf16.mxu0 0
  %1539 = vmatpush1.bf16.msra.mxu0 0
  %1540 = vmatprep.subr.bf16.mxu0 0
  %1541 = vmatpush1.bf16.msra.mxu0 0
  %1542 = vmatprep.subr.bf16.mxu0 0
  %1543 = vmatpush1.bf16.msra.mxu0 0
  %1544 = vmatprep.subr.bf16.mxu0 0
  %1545 = vmatpush1.bf16.msra.mxu0 0
  %1546 = vmatprep.subr.bf16.mxu0 0
  %1547 = vmatpush1.bf16.msra.mxu0 0
  %1548 = vmatprep.subr.bf16.mxu0 0
  %1549 = vmatpush1.bf16.msra.mxu0 0
  %1550 = vmatprep.subr.bf16.mxu0 0
  %1551 = vmatpush1.bf16.msra.mxu0 0
  %1552 = vmatprep.subr.bf16.mxu0 0
  %1553 = vmatpush1.bf16.msra.mxu0 0
  %1554 = vmatprep.subr.bf16.mxu0 0
  %1555 = vmatpush1.bf16.msra.mxu0 0
  %1556 = vmatprep.mubr.bf16.mxu0 0
  %1557 = vmatmul.mubr.bf16.gmra.mrb[0].mxu0 %v1522
  %v1558 = vpop.f32.mrb[0].mxu0
  %v1559 = vadd.f32 0.0, %v1558
  %v1560 = vpop.f32.mrb[0].mxu0
  %v1561 = vpop.f32.mrb[0].mxu0
  %v1562 = vpop.f32.mrb[0].mxu0
  %1563 = vdwg.mxu0
  %v1564 = vadd.f32 %v1516, %v1559
  %v1565 = vld [vmem:[#allocation3 + $0x14] sm:$0x3]
  %v1566 = vpack.c.bf16 %v1505, %v1505
  %1568 = vrot.lane.b32.xlu0 %v1566, 80
  %v1569 = vpop.permute.xlu0 %1568
  %v1571 = vsel %vm276, %v1569, 0
  %1573 = vmatprep.subr.bf16.mxu0 0
  %1574 = vmatpush1.bf16.msra.mxu0 %v790
  %1575 = vmatprep.subr.bf16.mxu0 0
  %1576 = vmatpush1.bf16.msra.mxu0 0
  %1577 = vmatprep.subr.bf16.mxu0 0
  %1578 = vmatpush1.bf16.msra.mxu0 0
  %1579 = vmatprep.subr.bf16.mxu0 0
  %1580 = vmatpush1.bf16.msra.mxu0 0
  %1581 = vmatprep.subr.bf16.mxu0 0
  %1582 = vmatpush1.bf16.msra.mxu0 0
  %1583 = vmatprep.subr.bf16.mxu0 0
  %1584 = vmatpush1.bf16.msra.mxu0 0
  %1585 = vmatprep.subr.bf16.mxu0 0
  %1586 = vmatpush1.bf16.msra.mxu0 0
  %1587 = vmatprep.subr.bf16.mxu0 0
  %1588 = vmatpush1.bf16.msra.mxu0 0
  %1589 = vmatprep.subr.bf16.mxu0 0
  %1590 = vmatpush1.bf16.msra.mxu0 0
  %1591 = vmatprep.subr.bf16.mxu0 0
  %1592 = vmatpush1.bf16.msra.mxu0 0
  %1593 = vmatprep.subr.bf16.mxu0 0
  %1594 = vmatpush1.bf16.msra.mxu0 0
  %1595 = vmatprep.subr.bf16.mxu0 0
  %1596 = vmatpush1.bf16.msra.mxu0 0
  %1597 = vmatprep.subr.bf16.mxu0 0
  %1598 = vmatpush1.bf16.msra.mxu0 0
  %1599 = vmatprep.subr.bf16.mxu0 0
  %1600 = vmatpush1.bf16.msra.mxu0 0
  %1601 = vmatprep.subr.bf16.mxu0 0
  %1602 = vmatpush1.bf16.msra.mxu0 0
  %1603 = vmatprep.subr.bf16.mxu0 0
  %1604 = vmatpush1.bf16.msra.mxu0 0
  %1605 = vmatprep.mubr.bf16.mxu0 0
  %1606 = vmatmul.mubr.bf16.gmra.mrb[0].mxu0 %v1571
  %v1607 = vpop.f32.mrb[0].mxu0
  %v1608 = vadd.f32 0.0, %v1607
  %v1609 = vpop.f32.mrb[0].mxu0
  %v1610 = vpop.f32.mrb[0].mxu0
  %v1611 = vpop.f32.mrb[0].mxu0
  %1612 = vdwg.mxu0
  %v1613 = vadd.f32 %v1565, %v1608
  %v1614 = vxor.u32 %v1564, 2147483648
  %v1615 = vmul.f32 %v1614, 1.442695
  %v1616 = vpow.pop %v1615
  %v1617 = vadd.f32 %v1616, 1.0
  %v1618 = vrcp.pop %v1617
  %v1619 = vmul.f32 1.0, %v1618
  %v1620 = vtanh.pop %v1564
  %v1621 = vmul.f32 %v1619, %v1475
  %1623 = vrot.lane.b32.xlu0 %v1620, 96
  %v1624 = vpop.permute.xlu0 %1623
  %v1626 = vmul.f32 %v1619, %v1624
  %1628 = vrot.lane.b32.xlu0 %v1626, 16
  %v1629 = vpop.permute.xlu0 %1628
  %v1631 = vadd.f32 %v1621, %v1629
  %v1632 = vtanh.pop %v1631
  %1634 = vrot.lane.b32.xlu0 %v1632, 32
  %v1635 = vpop.permute.xlu0 %1634
  %v1637 = vmul.f32 %v1619, %v1635
  %v1638 = vxor.u32 %v1613, 2147483648
  %v1639 = vmul.f32 %v1638, 1.442695
  %v1640 = vpow.pop %v1639
  %v1641 = vadd.f32 %v1640, 1.0
  %v1642 = vrcp.pop %v1641
  %v1643 = vmul.f32 1.0, %v1642
  %v1644 = vtanh.pop %v1613
  %v1645 = vmul.f32 %v1643, %v1499
  %1647 = vrot.lane.b32.xlu0 %v1644, 96
  %v1648 = vpop.permute.xlu0 %1647
  %v1650 = vmul.f32 %v1643, %v1648
  %1652 = vrot.lane.b32.xlu0 %v1650, 16
  %v1653 = vpop.permute.xlu0 %1652
  %v1655 = vadd.f32 %v1645, %v1653
  %v1656 = vtanh.pop %v1655
  %1658 = vrot.lane.b32.xlu0 %v1656, 32
  %v1659 = vpop.permute.xlu0 %1658
  %v1661 = vmul.f32 %v1643, %v1659
  %1663 = vrot.lane.b32.xlu0 %v1637, 80
  %v1664 = vpop.permute.xlu0 %1663
  %1666 = vst.msk [vmem:[#allocation4 + $0xa] sm:$0x3] %vm885, %v1664
  %1668 = vrot.lane.b32.xlu0 %v1661, 80
  %v1669 = vpop.permute.xlu0 %1668
  %1671 = vst.msk [vmem:[#allocation5 + $0x14] sm:$0x3] %vm885, %v1669
  %v1672 = vld [vmem:[#allocation2 + $0xc] sm:$0x3]
  %v1673 = vpack.c.bf16 %v1637, %v1637
  %1675 = vrot.lane.b32.xlu0 %v1673, 80
  %v1676 = vpop.permute.xlu0 %1675
  %v1678 = vsel %vm276, %v1676, 0
  %1680 = vmatprep.subr.bf16.mxu0 0
  %1681 = vmatpush1.bf16.msra.mxu0 %v739
  %1682 = vmatprep.subr.bf16.mxu0 0
  %1683 = vmatpush1.bf16.msra.mxu0 0
  %1684 = vmatprep.subr.bf16.mxu0 0
  %1685 = vmatpush1.bf16.msra.mxu0 0
  %1686 = vmatprep.subr.bf16.mxu0 0
  %1687 = vmatpush1.bf16.msra.mxu0 0
  %1688 = vmatprep.subr.bf16.mxu0 0
  %1689 = vmatpush1.bf16.msra.mxu0 0
  %1690 = vmatprep.subr.bf16.mxu0 0
  %1691 = vmatpush1.bf16.msra.mxu0 0
  %1692 = vmatprep.subr.bf16.mxu0 0
  %1693 = vmatpush1.bf16.msra.mxu0 0
  %1694 = vmatprep.subr.bf16.mxu0 0
  %1695 = vmatpush1.bf16.msra.mxu0 0
  %1696 = vmatprep.subr.bf16.mxu0 0
  %1697 = vmatpush1.bf16.msra.mxu0 0
  %1698 = vmatprep.subr.bf16.mxu0 0
  %1699 = vmatpush1.bf16.msra.mxu0 0
  %1700 = vmatprep.subr.bf16.mxu0 0
  %1701 = vmatpush1.bf16.msra.mxu0 0
  %1702 = vmatprep.subr.bf16.mxu0 0
  %1703 = vmatpush1.bf16.msra.mxu0 0
  %1704 = vmatprep.subr.bf16.mxu0 0
  %1705 = vmatpush1.bf16.msra.mxu0 0
  %1706 = vmatprep.subr.bf16.mxu0 0
  %1707 = vmatpush1.bf16.msra.mxu0 0
  %1708 = vmatprep.subr.bf16.mxu0 0
  %1709 = vmatpush1.bf16.msra.mxu0 0
  %1710 = vmatprep.subr.bf16.mxu0 0
  %1711 = vmatpush1.bf16.msra.mxu0 0
  %1712 = vmatprep.mubr.bf16.mxu0 0
  %1713 = vmatmul.mubr.bf16.gmra.mrb[0].mxu0 %v1678
  %v1714 = vpop.f32.mrb[0].mxu0
  %v1715 = vadd.f32 0.0, %v1714
  %v1716 = vpop.f32.mrb[0].mxu0
  %v1717 = vpop.f32.mrb[0].mxu0
  %v1718 = vpop.f32.mrb[0].mxu0
  %1719 = vdwg.mxu0
  %v1720 = vadd.f32 %v1672, %v1715
  %v1721 = vld [vmem:[#allocation3 + $0x12] sm:$0x3]
  %v1722 = vpack.c.bf16 %v1661, %v1661
  %1724 = vrot.lane.b32.xlu0 %v1722, 80
  %v1725 = vpop.permute.xlu0 %1724
  %v1727 = vsel %vm276, %v1725, 0
  %1729 = vmatprep.subr.bf16.mxu0 0
  %1730 = vmatpush1.bf16.msra.mxu0 %v790
  %1731 = vmatprep.subr.bf16.mxu0 0
  %1732 = vmatpush1.bf16.msra.mxu0 0
  %1733 = vmatprep.subr.bf16.mxu0 0
  %1734 = vmatpush1.bf16.msra.mxu0 0
  %1735 = vmatprep.subr.bf16.mxu0 0
  %1736 = vmatpush1.bf16.msra.mxu0 0
  %1737 = vmatprep.subr.bf16.mxu0 0
  %1738 = vmatpush1.bf16.msra.mxu0 0
  %1739 = vmatprep.subr.bf16.mxu0 0
  %1740 = vmatpush1.bf16.msra.mxu0 0
  %1741 = vmatprep.subr.bf16.mxu0 0
  %1742 = vmatpush1.bf16.msra.mxu0 0
  %1743 = vmatprep.subr.bf16.mxu0 0
  %1744 = vmatpush1.bf16.msra.mxu0 0
  %1745 = vmatprep.subr.bf16.mxu0 0
  %1746 = vmatpush1.bf16.msra.mxu0 0
  %1747 = vmatprep.subr.bf16.mxu0 0
  %1748 = vmatpush1.bf16.msra.mxu0 0
  %1749 = vmatprep.subr.bf16.mxu0 0
  %1750 = vmatpush1.bf16.msra.mxu0 0
  %1751 = vmatprep.subr.bf16.mxu0 0
  %1752 = vmatpush1.bf16.msra.mxu0 0
  %1753 = vmatprep.subr.bf16.mxu0 0
  %1754 = vmatpush1.bf16.msra.mxu0 0
  %1755 = vmatprep.subr.bf16.mxu0 0
  %1756 = vmatpush1.bf16.msra.mxu0 0
  %1757 = vmatprep.subr.bf16.mxu0 0
  %1758 = vmatpush1.bf16.msra.mxu0 0
  %1759 = vmatprep.subr.bf16.mxu0 0
  %1760 = vmatpush1.bf16.msra.mxu0 0
  %1761 = vmatprep.mubr.bf16.mxu0 0
  %1762 = vmatmul.mubr.bf16.gmra.mrb[0].mxu0 %v1727
  %v1763 = vpop.f32.mrb[0].mxu0
  %v1764 = vadd.f32 0.0, %v1763
  %v1765 = vpop.f32.mrb[0].mxu0
  %v1766 = vpop.f32.mrb[0].mxu0
  %v1767 = vpop.f32.mrb[0].mxu0
  %1768 = vdwg.mxu0
  %v1769 = vadd.f32 %v1721, %v1764
  %v1770 = vxor.u32 %v1720, 2147483648
  %v1771 = vmul.f32 %v1770, 1.442695
  %v1772 = vpow.pop %v1771
  %v1773 = vadd.f32 %v1772, 1.0
  %v1774 = vrcp.pop %v1773
  %v1775 = vmul.f32 1.0, %v1774
  %v1776 = vtanh.pop %v1720
  %v1777 = vmul.f32 %v1775, %v1631
  %1779 = vrot.lane.b32.xlu0 %v1776, 96
  %v1780 = vpop.permute.xlu0 %1779
  %v1782 = vmul.f32 %v1775, %v1780
  %1784 = vrot.lane.b32.xlu0 %v1782, 16
  %v1785 = vpop.permute.xlu0 %1784
  %v1787 = vadd.f32 %v1777, %v1785
  %v1788 = vtanh.pop %v1787
  %1790 = vrot.lane.b32.xlu0 %v1788, 32
  %v1791 = vpop.permute.xlu0 %1790
  %v1793 = vmul.f32 %v1775, %v1791
  %v1794 = vxor.u32 %v1769, 2147483648
  %v1795 = vmul.f32 %v1794, 1.442695
  %v1796 = vpow.pop %v1795
  %v1797 = vadd.f32 %v1796, 1.0
  %v1798 = vrcp.pop %v1797
  %v1799 = vmul.f32 1.0, %v1798
  %v1800 = vtanh.pop %v1769
  %v1801 = vmul.f32 %v1799, %v1655
  %1803 = vrot.lane.b32.xlu0 %v1800, 96
  %v1804 = vpop.permute.xlu0 %1803
  %v1806 = vmul.f32 %v1799, %v1804
  %1808 = vrot.lane.b32.xlu0 %v1806, 16
  %v1809 = vpop.permute.xlu0 %1808
  %v1811 = vadd.f32 %v1801, %v1809
  %v1812 = vtanh.pop %v1811
  %1814 = vrot.lane.b32.xlu0 %v1812, 32
  %v1815 = vpop.permute.xlu0 %1814
  %v1817 = vmul.f32 %v1799, %v1815
  %1819 = vrot.lane.b32.xlu0 %v1793, 80
  %v1820 = vpop.permute.xlu0 %1819
  %1822 = vst.msk [vmem:[#allocation4 + $0xc] sm:$0x3] %vm885, %v1820
  %1824 = vrot.lane.b32.xlu0 %v1817, 80
  %v1825 = vpop.permute.xlu0 %1824
  %1827 = vst.msk [vmem:[#allocation5 + $0x12] sm:$0x3] %vm885, %v1825
  %v1828 = vld [vmem:[#allocation2 + $0xe] sm:$0x3]
  %v1829 = vpack.c.bf16 %v1793, %v1793
  %1831 = vrot.lane.b32.xlu0 %v1829, 80
  %v1832 = vpop.permute.xlu0 %1831
  %v1834 = vsel %vm276, %v1832, 0
  %1836 = vmatprep.subr.bf16.mxu0 0
  %1837 = vmatpush1.bf16.msra.mxu0 %v739
  %1838 = vmatprep.subr.bf16.mxu0 0
  %1839 = vmatpush1.bf16.msra.mxu0 0
  %1840 = vmatprep.subr.bf16.mxu0 0
  %1841 = vmatpush1.bf16.msra.mxu0 0
  %1842 = vmatprep.subr.bf16.mxu0 0
  %1843 = vmatpush1.bf16.msra.mxu0 0
  %1844 = vmatprep.subr.bf16.mxu0 0
  %1845 = vmatpush1.bf16.msra.mxu0 0
  %1846 = vmatprep.subr.bf16.mxu0 0
  %1847 = vmatpush1.bf16.msra.mxu0 0
  %1848 = vmatprep.subr.bf16.mxu0 0
  %1849 = vmatpush1.bf16.msra.mxu0 0
  %1850 = vmatprep.subr.bf16.mxu0 0
  %1851 = vmatpush1.bf16.msra.mxu0 0
  %1852 = vmatprep.subr.bf16.mxu0 0
  %1853 = vmatpush1.bf16.msra.mxu0 0
  %1854 = vmatprep.subr.bf16.mxu0 0
  %1855 = vmatpush1.bf16.msra.mxu0 0
  %1856 = vmatprep.subr.bf16.mxu0 0
  %1857 = vmatpush1.bf16.msra.mxu0 0
  %1858 = vmatprep.subr.bf16.mxu0 0
  %1859 = vmatpush1.bf16.msra.mxu0 0
  %1860 = vmatprep.subr.bf16.mxu0 0
  %1861 = vmatpush1.bf16.msra.mxu0 0
  %1862 = vmatprep.subr.bf16.mxu0 0
  %1863 = vmatpush1.bf16.msra.mxu0 0
  %1864 = vmatprep.subr.bf16.mxu0 0
  %1865 = vmatpush1.bf16.msra.mxu0 0
  %1866 = vmatprep.subr.bf16.mxu0 0
  %1867 = vmatpush1.bf16.msra.mxu0 0
  %1868 = vmatprep.mubr.bf16.mxu0 0
  %1869 = vmatmul.mubr.bf16.gmra.mrb[0].mxu0 %v1834
  %v1870 = vpop.f32.mrb[0].mxu0
  %v1871 = vadd.f32 0.0, %v1870
  %v1872 = vpop.f32.mrb[0].mxu0
  %v1873 = vpop.f32.mrb[0].mxu0
  %v1874 = vpop.f32.mrb[0].mxu0
  %1875 = vdwg.mxu0
  %v1876 = vadd.f32 %v1828, %v1871
  %v1877 = vld [vmem:[#allocation3 + $0x10] sm:$0x3]
  %v1878 = vpack.c.bf16 %v1817, %v1817
  %1880 = vrot.lane.b32.xlu0 %v1878, 80
  %v1881 = vpop.permute.xlu0 %1880
  %v1883 = vsel %vm276, %v1881, 0
  %1885 = vmatprep.subr.bf16.mxu0 0
  %1886 = vmatpush1.bf16.msra.mxu0 %v790
  %1887 = vmatprep.subr.bf16.mxu0 0
  %1888 = vmatpush1.bf16.msra.mxu0 0
  %1889 = vmatprep.subr.bf16.mxu0 0
  %1890 = vmatpush1.bf16.msra.mxu0 0
  %1891 = vmatprep.subr.bf16.mxu0 0
  %1892 = vmatpush1.bf16.msra.mxu0 0
  %1893 = vmatprep.subr.bf16.mxu0 0
  %1894 = vmatpush1.bf16.msra.mxu0 0
  %1895 = vmatprep.subr.bf16.mxu0 0
  %1896 = vmatpush1.bf16.msra.mxu0 0
  %1897 = vmatprep.subr.bf16.mxu0 0
  %1898 = vmatpush1.bf16.msra.mxu0 0
  %1899 = vmatprep.subr.bf16.mxu0 0
  %1900 = vmatpush1.bf16.msra.mxu0 0
  %1901 = vmatprep.subr.bf16.mxu0 0
  %1902 = vmatpush1.bf16.msra.mxu0 0
  %1903 = vmatprep.subr.bf16.mxu0 0
  %1904 = vmatpush1.bf16.msra.mxu0 0
  %1905 = vmatprep.subr.bf16.mxu0 0
  %1906 = vmatpush1.bf16.msra.mxu0 0
  %1907 = vmatprep.subr.bf16.mxu0 0
  %1908 = vmatpush1.bf16.msra.mxu0 0
  %1909 = vmatprep.subr.bf16.mxu0 0
  %1910 = vmatpush1.bf16.msra.mxu0 0
  %1911 = vmatprep.subr.bf16.mxu0 0
  %1912 = vmatpush1.bf16.msra.mxu0 0
  %1913 = vmatprep.subr.bf16.mxu0 0
  %1914 = vmatpush1.bf16.msra.mxu0 0
  %1915 = vmatprep.subr.bf16.mxu0 0
  %1916 = vmatpush1.bf16.msra.mxu0 0
  %1917 = vmatprep.mubr.bf16.mxu0 0
  %1918 = vmatmul.mubr.bf16.gmra.mrb[0].mxu0 %v1883
  %v1919 = vpop.f32.mrb[0].mxu0
  %v1920 = vadd.f32 0.0, %v1919
  %v1921 = vpop.f32.mrb[0].mxu0
  %v1922 = vpop.f32.mrb[0].mxu0
  %v1923 = vpop.f32.mrb[0].mxu0
  %1924 = vdwg.mxu0
  %v1925 = vadd.f32 %v1877, %v1920
  %v1926 = vxor.u32 %v1876, 2147483648
  %v1927 = vmul.f32 %v1926, 1.442695
  %v1928 = vpow.pop %v1927
  %v1929 = vadd.f32 %v1928, 1.0
  %v1930 = vrcp.pop %v1929
  %v1931 = vmul.f32 1.0, %v1930
  %v1932 = vtanh.pop %v1876
  %v1933 = vmul.f32 %v1931, %v1787
  %1935 = vrot.lane.b32.xlu0 %v1932, 96
  %v1936 = vpop.permute.xlu0 %1935
  %v1938 = vmul.f32 %v1931, %v1936
  %1940 = vrot.lane.b32.xlu0 %v1938, 16
  %v1941 = vpop.permute.xlu0 %1940
  %v1943 = vadd.f32 %v1933, %v1941
  %v1944 = vtanh.pop %v1943
  %1946 = vrot.lane.b32.xlu0 %v1944, 32
  %v1947 = vpop.permute.xlu0 %1946
  %v1949 = vmul.f32 %v1931, %v1947
  %v1950 = vxor.u32 %v1925, 2147483648
  %v1951 = vmul.f32 %v1950, 1.442695
  %v1952 = vpow.pop %v1951
  %v1953 = vadd.f32 %v1952, 1.0
  %v1954 = vrcp.pop %v1953
  %v1955 = vmul.f32 1.0, %v1954
  %v1956 = vtanh.pop %v1925
  %v1957 = vmul.f32 %v1955, %v1811
  %1959 = vrot.lane.b32.xlu0 %v1956, 96
  %v1960 = vpop.permute.xlu0 %1959
  %v1962 = vmul.f32 %v1955, %v1960
  %1964 = vrot.lane.b32.xlu0 %v1962, 16
  %v1965 = vpop.permute.xlu0 %1964
  %v1967 = vadd.f32 %v1957, %v1965
  %v1968 = vtanh.pop %v1967
  %1970 = vrot.lane.b32.xlu0 %v1968, 32
  %v1971 = vpop.permute.xlu0 %1970
  %v1973 = vmul.f32 %v1955, %v1971
  %1975 = vrot.lane.b32.xlu0 %v1949, 80
  %v1976 = vpop.permute.xlu0 %1975
  %1978 = vst.msk [vmem:[#allocation4 + $0xe] sm:$0x3] %vm885, %v1976
  %1980 = vrot.lane.b32.xlu0 %v1973, 80
  %v1981 = vpop.permute.xlu0 %1980
  %1983 = vst.msk [vmem:[#allocation5 + $0x10] sm:$0x3] %vm885, %v1981
  %v1984 = vld [vmem:[#allocation2 + $0x10] sm:$0x3]
  %v1985 = vpack.c.bf16 %v1949, %v1949
  %1987 = vrot.lane.b32.xlu0 %v1985, 80
  %v1988 = vpop.permute.xlu0 %1987
  %v1990 = vsel %vm276, %v1988, 0
  %1992 = vmatprep.subr.bf16.mxu0 0
  %1993 = vmatpush1.bf16.msra.mxu0 %v739
  %1994 = vmatprep.subr.bf16.mxu0 0
  %1995 = vmatpush1.bf16.msra.mxu0 0
  %1996 = vmatprep.subr.bf16.mxu0 0
  %1997 = vmatpush1.bf16.msra.mxu0 0
  %1998 = vmatprep.subr.bf16.mxu0 0
  %1999 = vmatpush1.bf16.msra.mxu0 0
  %2000 = vmatprep.subr.bf16.mxu0 0
  %2001 = vmatpush1.bf16.msra.mxu0 0
  %2002 = vmatprep.subr.bf16.mxu0 0
  %2003 = vmatpush1.bf16.msra.mxu0 0
  %2004 = vmatprep.subr.bf16.mxu0 0
  %2005 = vmatpush1.bf16.msra.mxu0 0
  %2006 = vmatprep.subr.bf16.mxu0 0
  %2007 = vmatpush1.bf16.msra.mxu0 0
  %2008 = vmatprep.subr.bf16.mxu0 0
  %2009 = vmatpush1.bf16.msra.mxu0 0
  %2010 = vmatprep.subr.bf16.mxu0 0
  %2011 = vmatpush1.bf16.msra.mxu0 0
  %2012 = vmatprep.subr.bf16.mxu0 0
  %2013 = vmatpush1.bf16.msra.mxu0 0
  %2014 = vmatprep.subr.bf16.mxu0 0
  %2015 = vmatpush1.bf16.msra.mxu0 0
  %2016 = vmatprep.subr.bf16.mxu0 0
  %2017 = vmatpush1.bf16.msra.mxu0 0
  %2018 = vmatprep.subr.bf16.mxu0 0
  %2019 = vmatpush1.bf16.msra.mxu0 0
  %2020 = vmatprep.subr.bf16.mxu0 0
  %2021 = vmatpush1.bf16.msra.mxu0 0
  %2022 = vmatprep.subr.bf16.mxu0 0
  %2023 = vmatpush1.bf16.msra.mxu0 0
  %2024 = vmatprep.mubr.bf16.mxu0 0
  %2025 = vmatmul.mubr.bf16.gmra.mrb[0].mxu0 %v1990
  %v2026 = vpop.f32.mrb[0].mxu0
  %v2027 = vadd.f32 0.0, %v2026
  %v2028 = vpop.f32.mrb[0].mxu0
  %v2029 = vpop.f32.mrb[0].mxu0
  %v2030 = vpop.f32.mrb[0].mxu0
  %2031 = vdwg.mxu0
  %v2032 = vadd.f32 %v1984, %v2027
  %v2033 = vld [vmem:[#allocation3 + $0xe] sm:$0x3]
  %v2034 = vpack.c.bf16 %v1973, %v1973
  %2036 = vrot.lane.b32.xlu0 %v2034, 80
  %v2037 = vpop.permute.xlu0 %2036
  %v2039 = vsel %vm276, %v2037, 0
  %2041 = vmatprep.subr.bf16.mxu0 0
  %2042 = vmatpush1.bf16.msra.mxu0 %v790
  %2043 = vmatprep.subr.bf16.mxu0 0
  %2044 = vmatpush1.bf16.msra.mxu0 0
  %2045 = vmatprep.subr.bf16.mxu0 0
  %2046 = vmatpush1.bf16.msra.mxu0 0
  %2047 = vmatprep.subr.bf16.mxu0 0
  %2048 = vmatpush1.bf16.msra.mxu0 0
  %2049 = vmatprep.subr.bf16.mxu0 0
  %2050 = vmatpush1.bf16.msra.mxu0 0
  %2051 = vmatprep.subr.bf16.mxu0 0
  %2052 = vmatpush1.bf16.msra.mxu0 0
  %2053 = vmatprep.subr.bf16.mxu0 0
  %2054 = vmatpush1.bf16.msra.mxu0 0
  %2055 = vmatprep.subr.bf16.mxu0 0
  %2056 = vmatpush1.bf16.msra.mxu0 0
  %2057 = vmatprep.subr.bf16.mxu0 0
  %2058 = vmatpush1.bf16.msra.mxu0 0
  %2059 = vmatprep.subr.bf16.mxu0 0
  %2060 = vmatpush1.bf16.msra.mxu0 0
  %2061 = vmatprep.subr.bf16.mxu0 0
  %2062 = vmatpush1.bf16.msra.mxu0 0
  %2063 = vmatprep.subr.bf16.mxu0 0
  %2064 = vmatpush1.bf16.msra.mxu0 0
  %2065 = vmatprep.subr.bf16.mxu0 0
  %2066 = vmatpush1.bf16.msra.mxu0 0
  %2067 = vmatprep.subr.bf16.mxu0 0
  %2068 = vmatpush1.bf16.msra.mxu0 0
  %2069 = vmatprep.subr.bf16.mxu0 0
  %2070 = vmatpush1.bf16.msra.mxu0 0
  %2071 = vmatprep.subr.bf16.mxu0 0
  %2072 = vmatpush1.bf16.msra.mxu0 0
  %2073 = vmatprep.mubr.bf16.mxu0 0
  %2074 = vmatmul.mubr.bf16.gmra.mrb[0].mxu0 %v2039
  %v2075 = vpop.f32.mrb[0].mxu0
  %v2076 = vadd.f32 0.0, %v2075
  %v2077 = vpop.f32.mrb[0].mxu0
  %v2078 = vpop.f32.mrb[0].mxu0
  %v2079 = vpop.f32.mrb[0].mxu0
  %2080 = vdwg.mxu0
  %v2081 = vadd.f32 %v2033, %v2076
  %v2082 = vxor.u32 %v2032, 2147483648
  %v2083 = vmul.f32 %v2082, 1.442695
  %v2084 = vpow.pop %v2083
  %v2085 = vadd.f32 %v2084, 1.0
  %v2086 = vrcp.pop %v2085
  %v2087 = vmul.f32 1.0, %v2086
  %v2088 = vtanh.pop %v2032
  %v2089 = vmul.f32 %v2087, %v1943
  %2091 = vrot.lane.b32.xlu0 %v2088, 96
  %v2092 = vpop.permute.xlu0 %2091
  %v2094 = vmul.f32 %v2087, %v2092
  %2096 = vrot.lane.b32.xlu0 %v2094, 16
  %v2097 = vpop.permute.xlu0 %2096
  %v2099 = vadd.f32 %v2089, %v2097
  %v2100 = vtanh.pop %v2099
  %2102 = vrot.lane.b32.xlu0 %v2100, 32
  %v2103 = vpop.permute.xlu0 %2102
  %v2105 = vmul.f32 %v2087, %v2103
  %v2106 = vxor.u32 %v2081, 2147483648
  %v2107 = vmul.f32 %v2106, 1.442695
  %v2108 = vpow.pop %v2107
  %v2109 = vadd.f32 %v2108, 1.0
  %v2110 = vrcp.pop %v2109
  %v2111 = vmul.f32 1.0, %v2110
  %v2112 = vtanh.pop %v2081
  %v2113 = vmul.f32 %v2111, %v1967
  %2115 = vrot.lane.b32.xlu0 %v2112, 96
  %v2116 = vpop.permute.xlu0 %2115
  %v2118 = vmul.f32 %v2111, %v2116
  %2120 = vrot.lane.b32.xlu0 %v2118, 16
  %v2121 = vpop.permute.xlu0 %2120
  %v2123 = vadd.f32 %v2113, %v2121
  %v2124 = vtanh.pop %v2123
  %2126 = vrot.lane.b32.xlu0 %v2124, 32
  %v2127 = vpop.permute.xlu0 %2126
  %v2129 = vmul.f32 %v2111, %v2127
  %2131 = vrot.lane.b32.xlu0 %v2105, 80
  %v2132 = vpop.permute.xlu0 %2131
  %2134 = vst.msk [vmem:[#allocation4 + $0x10] sm:$0x3] %vm885, %v2132
  %2136 = vrot.lane.b32.xlu0 %v2129, 80
  %v2137 = vpop.permute.xlu0 %2136
  %2139 = vst.msk [vmem:[#allocation5 + $0xe] sm:$0x3] %vm885, %v2137
  %v2140 = vld [vmem:[#allocation2 + $0x12] sm:$0x3]
  %v2141 = vpack.c.bf16 %v2105, %v2105
  %2143 = vrot.lane.b32.xlu0 %v2141, 80
  %v2144 = vpop.permute.xlu0 %2143
  %v2146 = vsel %vm276, %v2144, 0
  %2148 = vmatprep.subr.bf16.mxu0 0
  %2149 = vmatpush1.bf16.msra.mxu0 %v739
  %2150 = vmatprep.subr.bf16.mxu0 0
  %2151 = vmatpush1.bf16.msra.mxu0 0
  %2152 = vmatprep.subr.bf16.mxu0 0
  %2153 = vmatpush1.bf16.msra.mxu0 0
  %2154 = vmatprep.subr.bf16.mxu0 0
  %2155 = vmatpush1.bf16.msra.mxu0 0
  %2156 = vmatprep.subr.bf16.mxu0 0
  %2157 = vmatpush1.bf16.msra.mxu0 0
  %2158 = vmatprep.subr.bf16.mxu0 0
  %2159 = vmatpush1.bf16.msra.mxu0 0
  %2160 = vmatprep.subr.bf16.mxu0 0
  %2161 = vmatpush1.bf16.msra.mxu0 0
  %2162 = vmatprep.subr.bf16.mxu0 0
  %2163 = vmatpush1.bf16.msra.mxu0 0
  %2164 = vmatprep.subr.bf16.mxu0 0
  %2165 = vmatpush1.bf16.msra.mxu0 0
  %2166 = vmatprep.subr.bf16.mxu0 0
  %2167 = vmatpush1.bf16.msra.mxu0 0
  %2168 = vmatprep.subr.bf16.mxu0 0
  %2169 = vmatpush1.bf16.msra.mxu0 0
  %2170 = vmatprep.subr.bf16.mxu0 0
  %2171 = vmatpush1.bf16.msra.mxu0 0
  %2172 = vmatprep.subr.bf16.mxu0 0
  %2173 = vmatpush1.bf16.msra.mxu0 0
  %2174 = vmatprep.subr.bf16.mxu0 0
  %2175 = vmatpush1.bf16.msra.mxu0 0
  %2176 = vmatprep.subr.bf16.mxu0 0
  %2177 = vmatpush1.bf16.msra.mxu0 0
  %2178 = vmatprep.subr.bf16.mxu0 0
  %2179 = vmatpush1.bf16.msra.mxu0 0
  %2180 = vmatprep.mubr.bf16.mxu0 0
  %2181 = vmatmul.mubr.bf16.gmra.mrb[0].mxu0 %v2146
  %v2182 = vpop.f32.mrb[0].mxu0
  %v2183 = vadd.f32 0.0, %v2182
  %v2184 = vpop.f32.mrb[0].mxu0
  %v2185 = vpop.f32.mrb[0].mxu0
  %v2186 = vpop.f32.mrb[0].mxu0
  %2187 = vdwg.mxu0
  %v2188 = vadd.f32 %v2140, %v2183
  %v2189 = vld [vmem:[#allocation3 + $0xc] sm:$0x3]
  %v2190 = vpack.c.bf16 %v2129, %v2129
  %2192 = vrot.lane.b32.xlu0 %v2190, 80
  %v2193 = vpop.permute.xlu0 %2192
  %v2195 = vsel %vm276, %v2193, 0
  %2197 = vmatprep.subr.bf16.mxu0 0
  %2198 = vmatpush1.bf16.msra.mxu0 %v790
  %2199 = vmatprep.subr.bf16.mxu0 0
  %2200 = vmatpush1.bf16.msra.mxu0 0
  %2201 = vmatprep.subr.bf16.mxu0 0
  %2202 = vmatpush1.bf16.msra.mxu0 0
  %2203 = vmatprep.subr.bf16.mxu0 0
  %2204 = vmatpush1.bf16.msra.mxu0 0
  %2205 = vmatprep.subr.bf16.mxu0 0
  %2206 = vmatpush1.bf16.msra.mxu0 0
  %2207 = vmatprep.subr.bf16.mxu0 0
  %2208 = vmatpush1.bf16.msra.mxu0 0
  %2209 = vmatprep.subr.bf16.mxu0 0
  %2210 = vmatpush1.bf16.msra.mxu0 0
  %2211 = vmatprep.subr.bf16.mxu0 0
  %2212 = vmatpush1.bf16.msra.mxu0 0
  %2213 = vmatprep.subr.bf16.mxu0 0
  %2214 = vmatpush1.bf16.msra.mxu0 0
  %2215 = vmatprep.subr.bf16.mxu0 0
  %2216 = vmatpush1.bf16.msra.mxu0 0
  %2217 = vmatprep.subr.bf16.mxu0 0
  %2218 = vmatpush1.bf16.msra.mxu0 0
  %2219 = vmatprep.subr.bf16.mxu0 0
  %2220 = vmatpush1.bf16.msra.mxu0 0
  %2221 = vmatprep.subr.bf16.mxu0 0
  %2222 = vmatpush1.bf16.msra.mxu0 0
  %2223 = vmatprep.subr.bf16.mxu0 0
  %2224 = vmatpush1.bf16.msra.mxu0 0
  %2225 = vmatprep.subr.bf16.mxu0 0
  %2226 = vmatpush1.bf16.msra.mxu0 0
  %2227 = vmatprep.subr.bf16.mxu0 0
  %2228 = vmatpush1.bf16.msra.mxu0 0
  %2229 = vmatprep.mubr.bf16.mxu0 0
  %2230 = vmatmul.mubr.bf16.gmra.mrb[0].mxu0 %v2195
  %v2231 = vpop.f32.mrb[0].mxu0
  %v2232 = vadd.f32 0.0, %v2231
  %v2233 = vpop.f32.mrb[0].mxu0
  %v2234 = vpop.f32.mrb[0].mxu0
  %v2235 = vpop.f32.mrb[0].mxu0
  %2236 = vdwg.mxu0
  %v2237 = vadd.f32 %v2189, %v2232
  %v2238 = vxor.u32 %v2188, 2147483648
  %v2239 = vmul.f32 %v2238, 1.442695
  %v2240 = vpow.pop %v2239
  %v2241 = vadd.f32 %v2240, 1.0
  %v2242 = vrcp.pop %v2241
  %v2243 = vmul.f32 1.0, %v2242
  %v2244 = vtanh.pop %v2188
  %v2245 = vmul.f32 %v2243, %v2099
  %2247 = vrot.lane.b32.xlu0 %v2244, 96
  %v2248 = vpop.permute.xlu0 %2247
  %v2250 = vmul.f32 %v2243, %v2248
  %2252 = vrot.lane.b32.xlu0 %v2250, 16
  %v2253 = vpop.permute.xlu0 %2252
  %v2255 = vadd.f32 %v2245, %v2253
  %v2256 = vtanh.pop %v2255
  %2258 = vrot.lane.b32.xlu0 %v2256, 32
  %v2259 = vpop.permute.xlu0 %2258
  %v2261 = vmul.f32 %v2243, %v2259
  %v2262 = vxor.u32 %v2237, 2147483648
  %v2263 = vmul.f32 %v2262, 1.442695
  %v2264 = vpow.pop %v2263
  %v2265 = vadd.f32 %v2264, 1.0
  %v2266 = vrcp.pop %v2265
  %v2267 = vmul.f32 1.0, %v2266
  %v2268 = vtanh.pop %v2237
  %v2269 = vmul.f32 %v2267, %v2123
  %2271 = vrot.lane.b32.xlu0 %v2268, 96
  %v2272 = vpop.permute.xlu0 %2271
  %v2274 = vmul.f32 %v2267, %v2272
  %2276 = vrot.lane.b32.xlu0 %v2274, 16
  %v2277 = vpop.permute.xlu0 %2276
  %v2279 = vadd.f32 %v2269, %v2277
  %v2280 = vtanh.pop %v2279
  %2282 = vrot.lane.b32.xlu0 %v2280, 32
  %v2283 = vpop.permute.xlu0 %2282
  %v2285 = vmul.f32 %v2267, %v2283
  %2287 = vrot.lane.b32.xlu0 %v2261, 80
  %v2288 = vpop.permute.xlu0 %2287
  %2290 = vst.msk [vmem:[#allocation4 + $0x12] sm:$0x3] %vm885, %v2288
  %2292 = vrot.lane.b32.xlu0 %v2285, 80
  %v2293 = vpop.permute.xlu0 %2292
  %2295 = vst.msk [vmem:[#allocation5 + $0xc] sm:$0x3] %vm885, %v2293
  %v2296 = vld [vmem:[#allocation2 + $0x14] sm:$0x3]
  %v2297 = vpack.c.bf16 %v2261, %v2261
  %2299 = vrot.lane.b32.xlu0 %v2297, 80
  %v2300 = vpop.permute.xlu0 %2299
  %v2302 = vsel %vm276, %v2300, 0
  %2304 = vmatprep.subr.bf16.mxu0 0
  %2305 = vmatpush1.bf16.msra.mxu0 %v739
  %2306 = vmatprep.subr.bf16.mxu0 0
  %2307 = vmatpush1.bf16.msra.mxu0 0
  %2308 = vmatprep.subr.bf16.mxu0 0
  %2309 = vmatpush1.bf16.msra.mxu0 0
  %2310 = vmatprep.subr.bf16.mxu0 0
  %2311 = vmatpush1.bf16.msra.mxu0 0
  %2312 = vmatprep.subr.bf16.mxu0 0
  %2313 = vmatpush1.bf16.msra.mxu0 0
  %2314 = vmatprep.subr.bf16.mxu0 0
  %2315 = vmatpush1.bf16.msra.mxu0 0
  %2316 = vmatprep.subr.bf16.mxu0 0
  %2317 = vmatpush1.bf16.msra.mxu0 0
  %2318 = vmatprep.subr.bf16.mxu0 0
  %2319 = vmatpush1.bf16.msra.mxu0 0
  %2320 = vmatprep.subr.bf16.mxu0 0
  %2321 = vmatpush1.bf16.msra.mxu0 0
  %2322 = vmatprep.subr.bf16.mxu0 0
  %2323 = vmatpush1.bf16.msra.mxu0 0
  %2324 = vmatprep.subr.bf16.mxu0 0
  %2325 = vmatpush1.bf16.msra.mxu0 0
  %2326 = vmatprep.subr.bf16.mxu0 0
  %2327 = vmatpush1.bf16.msra.mxu0 0
  %2328 = vmatprep.subr.bf16.mxu0 0
  %2329 = vmatpush1.bf16.msra.mxu0 0
  %2330 = vmatprep.subr.bf16.mxu0 0
  %2331 = vmatpush1.bf16.msra.mxu0 0
  %2332 = vmatprep.subr.bf16.mxu0 0
  %2333 = vmatpush1.bf16.msra.mxu0 0
  %2334 = vmatprep.subr.bf16.mxu0 0
  %2335 = vmatpush1.bf16.msra.mxu0 0
  %2336 = vmatprep.mubr.bf16.mxu0 0
  %2337 = vmatmul.mubr.bf16.gmra.mrb[0].mxu0 %v2302
  %v2338 = vpop.f32.mrb[0].mxu0
  %v2339 = vadd.f32 0.0, %v2338
  %v2340 = vpop.f32.mrb[0].mxu0
  %v2341 = vpop.f32.mrb[0].mxu0
  %v2342 = vpop.f32.mrb[0].mxu0
  %2343 = vdwg.mxu0
  %v2344 = vadd.f32 %v2296, %v2339
  %v2345 = vld [vmem:[#allocation3 + $0xa] sm:$0x3]
  %v2346 = vpack.c.bf16 %v2285, %v2285
  %2348 = vrot.lane.b32.xlu0 %v2346, 80
  %v2349 = vpop.permute.xlu0 %2348
  %v2351 = vsel %vm276, %v2349, 0
  %2353 = vmatprep.subr.bf16.mxu0 0
  %2354 = vmatpush1.bf16.msra.mxu0 %v790
  %2355 = vmatprep.subr.bf16.mxu0 0
  %2356 = vmatpush1.bf16.msra.mxu0 0
  %2357 = vmatprep.subr.bf16.mxu0 0
  %2358 = vmatpush1.bf16.msra.mxu0 0
  %2359 = vmatprep.subr.bf16.mxu0 0
  %2360 = vmatpush1.bf16.msra.mxu0 0
  %2361 = vmatprep.subr.bf16.mxu0 0
  %2362 = vmatpush1.bf16.msra.mxu0 0
  %2363 = vmatprep.subr.bf16.mxu0 0
  %2364 = vmatpush1.bf16.msra.mxu0 0
  %2365 = vmatprep.subr.bf16.mxu0 0
  %2366 = vmatpush1.bf16.msra.mxu0 0
  %2367 = vmatprep.subr.bf16.mxu0 0
  %2368 = vmatpush1.bf16.msra.mxu0 0
  %2369 = vmatprep.subr.bf16.mxu0 0
  %2370 = vmatpush1.bf16.msra.mxu0 0
  %2371 = vmatprep.subr.bf16.mxu0 0
  %2372 = vmatpush1.bf16.msra.mxu0 0
  %2373 = vmatprep.subr.bf16.mxu0 0
  %2374 = vmatpush1.bf16.msra.mxu0 0
  %2375 = vmatprep.subr.bf16.mxu0 0
  %2376 = vmatpush1.bf16.msra.mxu0 0
  %2377 = vmatprep.subr.bf16.mxu0 0
  %2378 = vmatpush1.bf16.msra.mxu0 0
  %2379 = vmatprep.subr.bf16.mxu0 0
  %2380 = vmatpush1.bf16.msra.mxu0 0
  %2381 = vmatprep.subr.bf16.mxu0 0
  %2382 = vmatpush1.bf16.msra.mxu0 0
  %2383 = vmatprep.subr.bf16.mxu0 0
  %2384 = vmatpush1.bf16.msra.mxu0 0
  %2385 = vmatprep.mubr.bf16.mxu0 0
  %2386 = vmatmul.mubr.bf16.gmra.mrb[0].mxu0 %v2351
  %v2387 = vpop.f32.mrb[0].mxu0
  %v2388 = vadd.f32 0.0, %v2387
  %v2389 = vpop.f32.mrb[0].mxu0
  %v2390 = vpop.f32.mrb[0].mxu0
  %v2391 = vpop.f32.mrb[0].mxu0
  %2392 = vdwg.mxu0
  %v2393 = vadd.f32 %v2345, %v2388
  %v2394 = vxor.u32 %v2344, 2147483648
  %v2395 = vmul.f32 %v2394, 1.442695
  %v2396 = vpow.pop %v2395
  %v2397 = vadd.f32 %v2396, 1.0
  %v2398 = vrcp.pop %v2397
  %v2399 = vmul.f32 1.0, %v2398
  %v2400 = vtanh.pop %v2344
  %v2401 = vmul.f32 %v2399, %v2255
  %2403 = vrot.lane.b32.xlu0 %v2400, 96
  %v2404 = vpop.permute.xlu0 %2403
  %v2406 = vmul.f32 %v2399, %v2404
  %2408 = vrot.lane.b32.xlu0 %v2406, 16
  %v2409 = vpop.permute.xlu0 %2408
  %v2411 = vadd.f32 %v2401, %v2409
  %v2412 = vtanh.pop %v2411
  %2414 = vrot.lane.b32.xlu0 %v2412, 32
  %v2415 = vpop.permute.xlu0 %2414
  %v2417 = vmul.f32 %v2399, %v2415
  %v2418 = vxor.u32 %v2393, 2147483648
  %v2419 = vmul.f32 %v2418, 1.442695
  %v2420 = vpow.pop %v2419
  %v2421 = vadd.f32 %v2420, 1.0
  %v2422 = vrcp.pop %v2421
  %v2423 = vmul.f32 1.0, %v2422
  %v2424 = vtanh.pop %v2393
  %v2425 = vmul.f32 %v2423, %v2279
  %2427 = vrot.lane.b32.xlu0 %v2424, 96
  %v2428 = vpop.permute.xlu0 %2427
  %v2430 = vmul.f32 %v2423, %v2428
  %2432 = vrot.lane.b32.xlu0 %v2430, 16
  %v2433 = vpop.permute.xlu0 %2432
  %v2435 = vadd.f32 %v2425, %v2433
  %v2436 = vtanh.pop %v2435
  %2438 = vrot.lane.b32.xlu0 %v2436, 32
  %v2439 = vpop.permute.xlu0 %2438
  %v2441 = vmul.f32 %v2423, %v2439
  %2443 = vrot.lane.b32.xlu0 %v2417, 80
  %v2444 = vpop.permute.xlu0 %2443
  %2446 = vst.msk [vmem:[#allocation4 + $0x14] sm:$0x3] %vm885, %v2444
  %2448 = vrot.lane.b32.xlu0 %v2441, 80
  %v2449 = vpop.permute.xlu0 %2448
  %2451 = vst.msk [vmem:[#allocation5 + $0xa] sm:$0x3] %vm885, %v2449
  %v2452 = vld [vmem:[#allocation2 + $0x16] sm:$0x3]
  %v2453 = vpack.c.bf16 %v2417, %v2417
  %2455 = vrot.lane.b32.xlu0 %v2453, 80
  %v2456 = vpop.permute.xlu0 %2455
  %v2458 = vsel %vm276, %v2456, 0
  %2460 = vmatprep.subr.bf16.mxu0 0
  %2461 = vmatpush1.bf16.msra.mxu0 %v739
  %2462 = vmatprep.subr.bf16.mxu0 0
  %2463 = vmatpush1.bf16.msra.mxu0 0
  %2464 = vmatprep.subr.bf16.mxu0 0
  %2465 = vmatpush1.bf16.msra.mxu0 0
  %2466 = vmatprep.subr.bf16.mxu0 0
  %2467 = vmatpush1.bf16.msra.mxu0 0
  %2468 = vmatprep.subr.bf16.mxu0 0
  %2469 = vmatpush1.bf16.msra.mxu0 0
  %2470 = vmatprep.subr.bf16.mxu0 0
  %2471 = vmatpush1.bf16.msra.mxu0 0
  %2472 = vmatprep.subr.bf16.mxu0 0
  %2473 = vmatpush1.bf16.msra.mxu0 0
  %2474 = vmatprep.subr.bf16.mxu0 0
  %2475 = vmatpush1.bf16.msra.mxu0 0
  %2476 = vmatprep.subr.bf16.mxu0 0
  %2477 = vmatpush1.bf16.msra.mxu0 0
  %2478 = vmatprep.subr.bf16.mxu0 0
  %2479 = vmatpush1.bf16.msra.mxu0 0
  %2480 = vmatprep.subr.bf16.mxu0 0
  %2481 = vmatpush1.bf16.msra.mxu0 0
  %2482 = vmatprep.subr.bf16.mxu0 0
  %2483 = vmatpush1.bf16.msra.mxu0 0
  %2484 = vmatprep.subr.bf16.mxu0 0
  %2485 = vmatpush1.bf16.msra.mxu0 0
  %2486 = vmatprep.subr.bf16.mxu0 0
  %2487 = vmatpush1.bf16.msra.mxu0 0
  %2488 = vmatprep.subr.bf16.mxu0 0
  %2489 = vmatpush1.bf16.msra.mxu0 0
  %2490 = vmatprep.subr.bf16.mxu0 0
  %2491 = vmatpush1.bf16.msra.mxu0 0
  %2492 = vmatprep.mubr.bf16.mxu0 0
  %2493 = vmatmul.mubr.bf16.gmra.mrb[0].mxu0 %v2458
  %v2494 = vpop.f32.mrb[0].mxu0
  %v2495 = vadd.f32 0.0, %v2494
  %v2496 = vpop.f32.mrb[0].mxu0
  %v2497 = vpop.f32.mrb[0].mxu0
  %v2498 = vpop.f32.mrb[0].mxu0
  %2499 = vdwg.mxu0
  %v2500 = vadd.f32 %v2452, %v2495
  %v2501 = vld [vmem:[#allocation3 + $0x8] sm:$0x3]
  %v2502 = vpack.c.bf16 %v2441, %v2441
  %2504 = vrot.lane.b32.xlu0 %v2502, 80
  %v2505 = vpop.permute.xlu0 %2504
  %v2507 = vsel %vm276, %v2505, 0
  %2509 = vmatprep.subr.bf16.mxu0 0
  %2510 = vmatpush1.bf16.msra.mxu0 %v790
  %2511 = vmatprep.subr.bf16.mxu0 0
  %2512 = vmatpush1.bf16.msra.mxu0 0
  %2513 = vmatprep.subr.bf16.mxu0 0
  %2514 = vmatpush1.bf16.msra.mxu0 0
  %2515 = vmatprep.subr.bf16.mxu0 0
  %2516 = vmatpush1.bf16.msra.mxu0 0
  %2517 = vmatprep.subr.bf16.mxu0 0
  %2518 = vmatpush1.bf16.msra.mxu0 0
  %2519 = vmatprep.subr.bf16.mxu0 0
  %2520 = vmatpush1.bf16.msra.mxu0 0
  %2521 = vmatprep.subr.bf16.mxu0 0
  %2522 = vmatpush1.bf16.msra.mxu0 0
  %2523 = vmatprep.subr.bf16.mxu0 0
  %2524 = vmatpush1.bf16.msra.mxu0 0
  %2525 = vmatprep.subr.bf16.mxu0 0
  %2526 = vmatpush1.bf16.msra.mxu0 0
  %2527 = vmatprep.subr.bf16.mxu0 0
  %2528 = vmatpush1.bf16.msra.mxu0 0
  %2529 = vmatprep.subr.bf16.mxu0 0
  %2530 = vmatpush1.bf16.msra.mxu0 0
  %2531 = vmatprep.subr.bf16.mxu0 0
  %2532 = vmatpush1.bf16.msra.mxu0 0
  %2533 = vmatprep.subr.bf16.mxu0 0
  %2534 = vmatpush1.bf16.msra.mxu0 0
  %2535 = vmatprep.subr.bf16.mxu0 0
  %2536 = vmatpush1.bf16.msra.mxu0 0
  %2537 = vmatprep.subr.bf16.mxu0 0
  %2538 = vmatpush1.bf16.msra.mxu0 0
  %2539 = vmatprep.subr.bf16.mxu0 0
  %2540 = vmatpush1.bf16.msra.mxu0 0
  %2541 = vmatprep.mubr.bf16.mxu0 0
  %2542 = vmatmul.mubr.bf16.gmra.mrb[0].mxu0 %v2507
  %v2543 = vpop.f32.mrb[0].mxu0
  %v2544 = vadd.f32 0.0, %v2543
  %v2545 = vpop.f32.mrb[0].mxu0
  %v2546 = vpop.f32.mrb[0].mxu0
  %v2547 = vpop.f32.mrb[0].mxu0
  %2548 = vdwg.mxu0
  %v2549 = vadd.f32 %v2501, %v2544
  %v2550 = vxor.u32 %v2500, 2147483648
  %v2551 = vmul.f32 %v2550, 1.442695
  %v2552 = vpow.pop %v2551
  %v2553 = vadd.f32 %v2552, 1.0
  %v2554 = vrcp.pop %v2553
  %v2555 = vmul.f32 1.0, %v2554
  %v2556 = vtanh.pop %v2500
  %v2557 = vmul.f32 %v2555, %v2411
  %2559 = vrot.lane.b32.xlu0 %v2556, 96
  %v2560 = vpop.permute.xlu0 %2559
  %v2562 = vmul.f32 %v2555, %v2560
  %2564 = vrot.lane.b32.xlu0 %v2562, 16
  %v2565 = vpop.permute.xlu0 %2564
  %v2567 = vadd.f32 %v2557, %v2565
  %v2568 = vtanh.pop %v2567
  %2570 = vrot.lane.b32.xlu0 %v2568, 32
  %v2571 = vpop.permute.xlu0 %2570
  %v2573 = vmul.f32 %v2555, %v2571
  %v2574 = vxor.u32 %v2549, 2147483648
  %v2575 = vmul.f32 %v2574, 1.442695
  %v2576 = vpow.pop %v2575
  %v2577 = vadd.f32 %v2576, 1.0
  %v2578 = vrcp.pop %v2577
  %v2579 = vmul.f32 1.0, %v2578
  %v2580 = vtanh.pop %v2549
  %v2581 = vmul.f32 %v2579, %v2435
  %2583 = vrot.lane.b32.xlu0 %v2580, 96
  %v2584 = vpop.permute.xlu0 %2583
  %v2586 = vmul.f32 %v2579, %v2584
  %2588 = vrot.lane.b32.xlu0 %v2586, 16
  %v2589 = vpop.permute.xlu0 %2588
  %v2591 = vadd.f32 %v2581, %v2589
  %v2592 = vtanh.pop %v2591
  %2594 = vrot.lane.b32.xlu0 %v2592, 32
  %v2595 = vpop.permute.xlu0 %2594
  %v2597 = vmul.f32 %v2579, %v2595
  %2599 = vrot.lane.b32.xlu0 %v2573, 80
  %v2600 = vpop.permute.xlu0 %2599
  %2602 = vst.msk [vmem:[#allocation4 + $0x16] sm:$0x3] %vm885, %v2600
  %2604 = vrot.lane.b32.xlu0 %v2597, 80
  %v2605 = vpop.permute.xlu0 %2604
  %2607 = vst.msk [vmem:[#allocation5 + $0x8] sm:$0x3] %vm885, %v2605
  %v2608 = vld [vmem:[#allocation2 + $0x18] sm:$0x3]
  %v2609 = vpack.c.bf16 %v2573, %v2573
  %2611 = vrot.lane.b32.xlu0 %v2609, 80
  %v2612 = vpop.permute.xlu0 %2611
  %v2614 = vsel %vm276, %v2612, 0
  %2616 = vmatprep.subr.bf16.mxu0 0
  %2617 = vmatpush1.bf16.msra.mxu0 %v739
  %2618 = vmatprep.subr.bf16.mxu0 0
  %2619 = vmatpush1.bf16.msra.mxu0 0
  %2620 = vmatprep.subr.bf16.mxu0 0
  %2621 = vmatpush1.bf16.msra.mxu0 0
  %2622 = vmatprep.subr.bf16.mxu0 0
  %2623 = vmatpush1.bf16.msra.mxu0 0
  %2624 = vmatprep.subr.bf16.mxu0 0
  %2625 = vmatpush1.bf16.msra.mxu0 0
  %2626 = vmatprep.subr.bf16.mxu0 0
  %2627 = vmatpush1.bf16.msra.mxu0 0
  %2628 = vmatprep.subr.bf16.mxu0 0
  %2629 = vmatpush1.bf16.msra.mxu0 0
  %2630 = vmatprep.subr.bf16.mxu0 0
  %2631 = vmatpush1.bf16.msra.mxu0 0
  %2632 = vmatprep.subr.bf16.mxu0 0
  %2633 = vmatpush1.bf16.msra.mxu0 0
  %2634 = vmatprep.subr.bf16.mxu0 0
  %2635 = vmatpush1.bf16.msra.mxu0 0
  %2636 = vmatprep.subr.bf16.mxu0 0
  %2637 = vmatpush1.bf16.msra.mxu0 0
  %2638 = vmatprep.subr.bf16.mxu0 0
  %2639 = vmatpush1.bf16.msra.mxu0 0
  %2640 = vmatprep.subr.bf16.mxu0 0
  %2641 = vmatpush1.bf16.msra.mxu0 0
  %2642 = vmatprep.subr.bf16.mxu0 0
  %2643 = vmatpush1.bf16.msra.mxu0 0
  %2644 = vmatprep.subr.bf16.mxu0 0
  %2645 = vmatpush1.bf16.msra.mxu0 0
  %2646 = vmatprep.subr.bf16.mxu0 0
  %2647 = vmatpush1.bf16.msra.mxu0 0
  %2648 = vmatprep.mubr.bf16.mxu0 0
  %2649 = vmatmul.mubr.bf16.gmra.mrb[0].mxu0 %v2614
  %v2650 = vpop.f32.mrb[0].mxu0
  %v2651 = vadd.f32 0.0, %v2650
  %v2652 = vpop.f32.mrb[0].mxu0
  %v2653 = vpop.f32.mrb[0].mxu0
  %v2654 = vpop.f32.mrb[0].mxu0
  %2655 = vdwg.mxu0
  %v2656 = vadd.f32 %v2608, %v2651
  %v2657 = vld [vmem:[#allocation3 + $0x6] sm:$0x3]
  %v2658 = vpack.c.bf16 %v2597, %v2597
  %2660 = vrot.lane.b32.xlu0 %v2658, 80
  %v2661 = vpop.permute.xlu0 %2660
  %v2663 = vsel %vm276, %v2661, 0
  %2665 = vmatprep.subr.bf16.mxu0 0
  %2666 = vmatpush1.bf16.msra.mxu0 %v790
  %2667 = vmatprep.subr.bf16.mxu0 0
  %2668 = vmatpush1.bf16.msra.mxu0 0
  %2669 = vmatprep.subr.bf16.mxu0 0
  %2670 = vmatpush1.bf16.msra.mxu0 0
  %2671 = vmatprep.subr.bf16.mxu0 0
  %2672 = vmatpush1.bf16.msra.mxu0 0
  %2673 = vmatprep.subr.bf16.mxu0 0
  %2674 = vmatpush1.bf16.msra.mxu0 0
  %2675 = vmatprep.subr.bf16.mxu0 0
  %2676 = vmatpush1.bf16.msra.mxu0 0
  %2677 = vmatprep.subr.bf16.mxu0 0
  %2678 = vmatpush1.bf16.msra.mxu0 0
  %2679 = vmatprep.subr.bf16.mxu0 0
  %2680 = vmatpush1.bf16.msra.mxu0 0
  %2681 = vmatprep.subr.bf16.mxu0 0
  %2682 = vmatpush1.bf16.msra.mxu0 0
  %2683 = vmatprep.subr.bf16.mxu0 0
  %2684 = vmatpush1.bf16.msra.mxu0 0
  %2685 = vmatprep.subr.bf16.mxu0 0
  %2686 = vmatpush1.bf16.msra.mxu0 0
  %2687 = vmatprep.subr.bf16.mxu0 0
  %2688 = vmatpush1.bf16.msra.mxu0 0
  %2689 = vmatprep.subr.bf16.mxu0 0
  %2690 = vmatpush1.bf16.msra.mxu0 0
  %2691 = vmatprep.subr.bf16.mxu0 0
  %2692 = vmatpush1.bf16.msra.mxu0 0
  %2693 = vmatprep.subr.bf16.mxu0 0
  %2694 = vmatpush1.bf16.msra.mxu0 0
  %2695 = vmatprep.subr.bf16.mxu0 0
  %2696 = vmatpush1.bf16.msra.mxu0 0
  %2697 = vmatprep.mubr.bf16.mxu0 0
  %2698 = vmatmul.mubr.bf16.gmra.mrb[0].mxu0 %v2663
  %v2699 = vpop.f32.mrb[0].mxu0
  %v2700 = vadd.f32 0.0, %v2699
  %v2701 = vpop.f32.mrb[0].mxu0
  %v2702 = vpop.f32.mrb[0].mxu0
  %v2703 = vpop.f32.mrb[0].mxu0
  %2704 = vdwg.mxu0
  %v2705 = vadd.f32 %v2657, %v2700
  %v2706 = vxor.u32 %v2656, 2147483648
  %v2707 = vmul.f32 %v2706, 1.442695
  %v2708 = vpow.pop %v2707
  %v2709 = vadd.f32 %v2708, 1.0
  %v2710 = vrcp.pop %v2709
  %v2711 = vmul.f32 1.0, %v2710
  %v2712 = vtanh.pop %v2656
  %v2713 = vmul.f32 %v2711, %v2567
  %2715 = vrot.lane.b32.xlu0 %v2712, 96
  %v2716 = vpop.permute.xlu0 %2715
  %v2718 = vmul.f32 %v2711, %v2716
  %2720 = vrot.lane.b32.xlu0 %v2718, 16
  %v2721 = vpop.permute.xlu0 %2720
  %v2723 = vadd.f32 %v2713, %v2721
  %v2724 = vtanh.pop %v2723
  %2726 = vrot.lane.b32.xlu0 %v2724, 32
  %v2727 = vpop.permute.xlu0 %2726
  %v2729 = vmul.f32 %v2711, %v2727
  %v2730 = vxor.u32 %v2705, 2147483648
  %v2731 = vmul.f32 %v2730, 1.442695
  %v2732 = vpow.pop %v2731
  %v2733 = vadd.f32 %v2732, 1.0
  %v2734 = vrcp.pop %v2733
  %v2735 = vmul.f32 1.0, %v2734
  %v2736 = vtanh.pop %v2705
  %v2737 = vmul.f32 %v2735, %v2591
  %2739 = vrot.lane.b32.xlu0 %v2736, 96
  %v2740 = vpop.permute.xlu0 %2739
  %v2742 = vmul.f32 %v2735, %v2740
  %2744 = vrot.lane.b32.xlu0 %v2742, 16
  %v2745 = vpop.permute.xlu0 %2744
  %v2747 = vadd.f32 %v2737, %v2745
  %v2748 = vtanh.pop %v2747
  %2750 = vrot.lane.b32.xlu0 %v2748, 32
  %v2751 = vpop.permute.xlu0 %2750
  %v2753 = vmul.f32 %v2735, %v2751
  %2755 = vrot.lane.b32.xlu0 %v2729, 80
  %v2756 = vpop.permute.xlu0 %2755
  %2758 = vst.msk [vmem:[#allocation4 + $0x18] sm:$0x3] %vm885, %v2756
  %2760 = vrot.lane.b32.xlu0 %v2753, 80
  %v2761 = vpop.permute.xlu0 %2760
  %2763 = vst.msk [vmem:[#allocation5 + $0x6] sm:$0x3] %vm885, %v2761
  %v2764 = vld [vmem:[#allocation2 + $0x1a] sm:$0x3]
  %v2765 = vpack.c.bf16 %v2729, %v2729
  %2767 = vrot.lane.b32.xlu0 %v2765, 80
  %v2768 = vpop.permute.xlu0 %2767
  %v2770 = vsel %vm276, %v2768, 0
  %2772 = vmatprep.subr.bf16.mxu0 0
  %2773 = vmatpush1.bf16.msra.mxu0 %v739
  %2774 = vmatprep.subr.bf16.mxu0 0
  %2775 = vmatpush1.bf16.msra.mxu0 0
  %2776 = vmatprep.subr.bf16.mxu0 0
  %2777 = vmatpush1.bf16.msra.mxu0 0
  %2778 = vmatprep.subr.bf16.mxu0 0
  %2779 = vmatpush1.bf16.msra.mxu0 0
  %2780 = vmatprep.subr.bf16.mxu0 0
  %2781 = vmatpush1.bf16.msra.mxu0 0
  %2782 = vmatprep.subr.bf16.mxu0 0
  %2783 = vmatpush1.bf16.msra.mxu0 0
  %2784 = vmatprep.subr.bf16.mxu0 0
  %2785 = vmatpush1.bf16.msra.mxu0 0
  %2786 = vmatprep.subr.bf16.mxu0 0
  %2787 = vmatpush1.bf16.msra.mxu0 0
  %2788 = vmatprep.subr.bf16.mxu0 0
  %2789 = vmatpush1.bf16.msra.mxu0 0
  %2790 = vmatprep.subr.bf16.mxu0 0
  %2791 = vmatpush1.bf16.msra.mxu0 0
  %2792 = vmatprep.subr.bf16.mxu0 0
  %2793 = vmatpush1.bf16.msra.mxu0 0
  %2794 = vmatprep.subr.bf16.mxu0 0
  %2795 = vmatpush1.bf16.msra.mxu0 0
  %2796 = vmatprep.subr.bf16.mxu0 0
  %2797 = vmatpush1.bf16.msra.mxu0 0
  %2798 = vmatprep.subr.bf16.mxu0 0
  %2799 = vmatpush1.bf16.msra.mxu0 0
  %2800 = vmatprep.subr.bf16.mxu0 0
  %2801 = vmatpush1.bf16.msra.mxu0 0
  %2802 = vmatprep.subr.bf16.mxu0 0
  %2803 = vmatpush1.bf16.msra.mxu0 0
  %2804 = vmatprep.mubr.bf16.mxu0 0
  %2805 = vmatmul.mubr.bf16.gmra.mrb[0].mxu0 %v2770
  %v2806 = vpop.f32.mrb[0].mxu0
  %v2807 = vadd.f32 0.0, %v2806
  %v2808 = vpop.f32.mrb[0].mxu0
  %v2809 = vpop.f32.mrb[0].mxu0
  %v2810 = vpop.f32.mrb[0].mxu0
  %2811 = vdwg.mxu0
  %v2812 = vadd.f32 %v2764, %v2807
  %v2813 = vld [vmem:[#allocation3 + $0x4] sm:$0x3]
  %v2814 = vpack.c.bf16 %v2753, %v2753
  %2816 = vrot.lane.b32.xlu0 %v2814, 80
  %v2817 = vpop.permute.xlu0 %2816
  %v2819 = vsel %vm276, %v2817, 0
  %2821 = vmatprep.subr.bf16.mxu0 0
  %2822 = vmatpush1.bf16.msra.mxu0 %v790
  %2823 = vmatprep.subr.bf16.mxu0 0
  %2824 = vmatpush1.bf16.msra.mxu0 0
  %2825 = vmatprep.subr.bf16.mxu0 0
  %2826 = vmatpush1.bf16.msra.mxu0 0
  %2827 = vmatprep.subr.bf16.mxu0 0
  %2828 = vmatpush1.bf16.msra.mxu0 0
  %2829 = vmatprep.subr.bf16.mxu0 0
  %2830 = vmatpush1.bf16.msra.mxu0 0
  %2831 = vmatprep.subr.bf16.mxu0 0
  %2832 = vmatpush1.bf16.msra.mxu0 0
  %2833 = vmatprep.subr.bf16.mxu0 0
  %2834 = vmatpush1.bf16.msra.mxu0 0
  %2835 = vmatprep.subr.bf16.mxu0 0
  %2836 = vmatpush1.bf16.msra.mxu0 0
  %2837 = vmatprep.subr.bf16.mxu0 0
  %2838 = vmatpush1.bf16.msra.mxu0 0
  %2839 = vmatprep.subr.bf16.mxu0 0
  %2840 = vmatpush1.bf16.msra.mxu0 0
  %2841 = vmatprep.subr.bf16.mxu0 0
  %2842 = vmatpush1.bf16.msra.mxu0 0
  %2843 = vmatprep.subr.bf16.mxu0 0
  %2844 = vmatpush1.bf16.msra.mxu0 0
  %2845 = vmatprep.subr.bf16.mxu0 0
  %2846 = vmatpush1.bf16.msra.mxu0 0
  %2847 = vmatprep.subr.bf16.mxu0 0
  %2848 = vmatpush1.bf16.msra.mxu0 0
  %2849 = vmatprep.subr.bf16.mxu0 0
  %2850 = vmatpush1.bf16.msra.mxu0 0
  %2851 = vmatprep.subr.bf16.mxu0 0
  %2852 = vmatpush1.bf16.msra.mxu0 0
  %2853 = vmatprep.mubr.bf16.mxu0 0
  %2854 = vmatmul.mubr.bf16.gmra.mrb[0].mxu0 %v2819
  %v2855 = vpop.f32.mrb[0].mxu0
  %v2856 = vadd.f32 0.0, %v2855
  %v2857 = vpop.f32.mrb[0].mxu0
  %v2858 = vpop.f32.mrb[0].mxu0
  %v2859 = vpop.f32.mrb[0].mxu0
  %2860 = vdwg.mxu0
  %v2861 = vadd.f32 %v2813, %v2856
  %v2862 = vxor.u32 %v2812, 2147483648
  %v2863 = vmul.f32 %v2862, 1.442695
  %v2864 = vpow.pop %v2863
  %v2865 = vadd.f32 %v2864, 1.0
  %v2866 = vrcp.pop %v2865
  %v2867 = vmul.f32 1.0, %v2866
  %v2868 = vtanh.pop %v2812
  %v2869 = vmul.f32 %v2867, %v2723
  %2871 = vrot.lane.b32.xlu0 %v2868, 96
  %v2872 = vpop.permute.xlu0 %2871
  %v2874 = vmul.f32 %v2867, %v2872
  %2876 = vrot.lane.b32.xlu0 %v2874, 16
  %v2877 = vpop.permute.xlu0 %2876
  %v2879 = vadd.f32 %v2869, %v2877
  %v2880 = vtanh.pop %v2879
  %2882 = vrot.lane.b32.xlu0 %v2880, 32
  %v2883 = vpop.permute.xlu0 %2882
  %v2885 = vmul.f32 %v2867, %v2883
  %v2886 = vxor.u32 %v2861, 2147483648
  %v2887 = vmul.f32 %v2886, 1.442695
  %v2888 = vpow.pop %v2887
  %v2889 = vadd.f32 %v2888, 1.0
  %v2890 = vrcp.pop %v2889
  %v2891 = vmul.f32 1.0, %v2890
  %v2892 = vtanh.pop %v2861
  %v2893 = vmul.f32 %v2891, %v2747
  %2895 = vrot.lane.b32.xlu0 %v2892, 96
  %v2896 = vpop.permute.xlu0 %2895
  %v2898 = vmul.f32 %v2891, %v2896
  %2900 = vrot.lane.b32.xlu0 %v2898, 16
  %v2901 = vpop.permute.xlu0 %2900
  %v2903 = vadd.f32 %v2893, %v2901
  %v2904 = vtanh.pop %v2903
  %2906 = vrot.lane.b32.xlu0 %v2904, 32
  %v2907 = vpop.permute.xlu0 %2906
  %v2909 = vmul.f32 %v2891, %v2907
  %2911 = vrot.lane.b32.xlu0 %v2885, 80
  %v2912 = vpop.permute.xlu0 %2911
  %2914 = vst.msk [vmem:[#allocation4 + $0x1a] sm:$0x3] %vm885, %v2912
  %2916 = vrot.lane.b32.xlu0 %v2909, 80
  %v2917 = vpop.permute.xlu0 %2916
  %2919 = vst.msk [vmem:[#allocation5 + $0x4] sm:$0x3] %vm885, %v2917
  %v2920 = vld [vmem:[#allocation2 + $0x1c] sm:$0x3]
  %v2921 = vpack.c.bf16 %v2885, %v2885
  %2923 = vrot.lane.b32.xlu0 %v2921, 80
  %v2924 = vpop.permute.xlu0 %2923
  %v2926 = vsel %vm276, %v2924, 0
  %2928 = vmatprep.subr.bf16.mxu0 0
  %2929 = vmatpush1.bf16.msra.mxu0 %v739
  %2930 = vmatprep.subr.bf16.mxu0 0
  %2931 = vmatpush1.bf16.msra.mxu0 0
  %2932 = vmatprep.subr.bf16.mxu0 0
  %2933 = vmatpush1.bf16.msra.mxu0 0
  %2934 = vmatprep.subr.bf16.mxu0 0
  %2935 = vmatpush1.bf16.msra.mxu0 0
  %2936 = vmatprep.subr.bf16.mxu0 0
  %2937 = vmatpush1.bf16.msra.mxu0 0
  %2938 = vmatprep.subr.bf16.mxu0 0
  %2939 = vmatpush1.bf16.msra.mxu0 0
  %2940 = vmatprep.subr.bf16.mxu0 0
  %2941 = vmatpush1.bf16.msra.mxu0 0
  %2942 = vmatprep.subr.bf16.mxu0 0
  %2943 = vmatpush1.bf16.msra.mxu0 0
  %2944 = vmatprep.subr.bf16.mxu0 0
  %2945 = vmatpush1.bf16.msra.mxu0 0
  %2946 = vmatprep.subr.bf16.mxu0 0
  %2947 = vmatpush1.bf16.msra.mxu0 0
  %2948 = vmatprep.subr.bf16.mxu0 0
  %2949 = vmatpush1.bf16.msra.mxu0 0
  %2950 = vmatprep.subr.bf16.mxu0 0
  %2951 = vmatpush1.bf16.msra.mxu0 0
  %2952 = vmatprep.subr.bf16.mxu0 0
  %2953 = vmatpush1.bf16.msra.mxu0 0
  %2954 = vmatprep.subr.bf16.mxu0 0
  %2955 = vmatpush1.bf16.msra.mxu0 0
  %2956 = vmatprep.subr.bf16.mxu0 0
  %2957 = vmatpush1.bf16.msra.mxu0 0
  %2958 = vmatprep.subr.bf16.mxu0 0
  %2959 = vmatpush1.bf16.msra.mxu0 0
  %2960 = vmatprep.mubr.bf16.mxu0 0
  %2961 = vmatmul.mubr.bf16.gmra.mrb[0].mxu0 %v2926
  %v2962 = vpop.f32.mrb[0].mxu0
  %v2963 = vadd.f32 0.0, %v2962
  %v2964 = vpop.f32.mrb[0].mxu0
  %v2965 = vpop.f32.mrb[0].mxu0
  %v2966 = vpop.f32.mrb[0].mxu0
  %2967 = vdwg.mxu0
  %v2968 = vadd.f32 %v2920, %v2963
  %v2969 = vld [vmem:[#allocation3 + $0x2] sm:$0x3]
  %v2970 = vpack.c.bf16 %v2909, %v2909
  %2972 = vrot.lane.b32.xlu0 %v2970, 80
  %v2973 = vpop.permute.xlu0 %2972
  %v2975 = vsel %vm276, %v2973, 0
  %2977 = vmatprep.subr.bf16.mxu0 0
  %2978 = vmatpush1.bf16.msra.mxu0 %v790
  %2979 = vmatprep.subr.bf16.mxu0 0
  %2980 = vmatpush1.bf16.msra.mxu0 0
  %2981 = vmatprep.subr.bf16.mxu0 0
  %2982 = vmatpush1.bf16.msra.mxu0 0
  %2983 = vmatprep.subr.bf16.mxu0 0
  %2984 = vmatpush1.bf16.msra.mxu0 0
  %2985 = vmatprep.subr.bf16.mxu0 0
  %2986 = vmatpush1.bf16.msra.mxu0 0
  %2987 = vmatprep.subr.bf16.mxu0 0
  %2988 = vmatpush1.bf16.msra.mxu0 0
  %2989 = vmatprep.subr.bf16.mxu0 0
  %2990 = vmatpush1.bf16.msra.mxu0 0
  %2991 = vmatprep.subr.bf16.mxu0 0
  %2992 = vmatpush1.bf16.msra.mxu0 0
  %2993 = vmatprep.subr.bf16.mxu0 0
  %2994 = vmatpush1.bf16.msra.mxu0 0
  %2995 = vmatprep.subr.bf16.mxu0 0
  %2996 = vmatpush1.bf16.msra.mxu0 0
  %2997 = vmatprep.subr.bf16.mxu0 0
  %2998 = vmatpush1.bf16.msra.mxu0 0
  %2999 = vmatprep.subr.bf16.mxu0 0
  %3000 = vmatpush1.bf16.msra.mxu0 0
  %3001 = vmatprep.subr.bf16.mxu0 0
  %3002 = vmatpush1.bf16.msra.mxu0 0
  %3003 = vmatprep.subr.bf16.mxu0 0
  %3004 = vmatpush1.bf16.msra.mxu0 0
  %3005 = vmatprep.subr.bf16.mxu0 0
  %3006 = vmatpush1.bf16.msra.mxu0 0
  %3007 = vmatprep.subr.bf16.mxu0 0
  %3008 = vmatpush1.bf16.msra.mxu0 0
  %3009 = vmatprep.mubr.bf16.mxu0 0
  %3010 = vmatmul.mubr.bf16.gmra.mrb[0].mxu0 %v2975
  %v3011 = vpop.f32.mrb[0].mxu0
  %v3012 = vadd.f32 0.0, %v3011
  %v3013 = vpop.f32.mrb[0].mxu0
  %v3014 = vpop.f32.mrb[0].mxu0
  %v3015 = vpop.f32.mrb[0].mxu0
  %3016 = vdwg.mxu0
  %v3017 = vadd.f32 %v2969, %v3012
  %v3018 = vxor.u32 %v2968, 2147483648
  %v3019 = vmul.f32 %v3018, 1.442695
  %v3020 = vpow.pop %v3019
  %v3021 = vadd.f32 %v3020, 1.0
  %v3022 = vrcp.pop %v3021
  %v3023 = vmul.f32 1.0, %v3022
  %v3024 = vtanh.pop %v2968
  %v3025 = vmul.f32 %v3023, %v2879
  %3027 = vrot.lane.b32.xlu0 %v3024, 96
  %v3028 = vpop.permute.xlu0 %3027
  %v3030 = vmul.f32 %v3023, %v3028
  %3032 = vrot.lane.b32.xlu0 %v3030, 16
  %v3033 = vpop.permute.xlu0 %3032
  %v3035 = vadd.f32 %v3025, %v3033
  %v3036 = vtanh.pop %v3035
  %3038 = vrot.lane.b32.xlu0 %v3036, 32
  %v3039 = vpop.permute.xlu0 %3038
  %v3041 = vmul.f32 %v3023, %v3039
  %v3042 = vxor.u32 %v3017, 2147483648
  %v3043 = vmul.f32 %v3042, 1.442695
  %v3044 = vpow.pop %v3043
  %v3045 = vadd.f32 %v3044, 1.0
  %v3046 = vrcp.pop %v3045
  %v3047 = vmul.f32 1.0, %v3046
  %v3048 = vtanh.pop %v3017
  %v3049 = vmul.f32 %v3047, %v2903
  %3051 = vrot.lane.b32.xlu0 %v3048, 96
  %v3052 = vpop.permute.xlu0 %3051
  %v3054 = vmul.f32 %v3047, %v3052
  %3056 = vrot.lane.b32.xlu0 %v3054, 16
  %v3057 = vpop.permute.xlu0 %3056
  %v3059 = vadd.f32 %v3049, %v3057
  %v3060 = vtanh.pop %v3059
  %3062 = vrot.lane.b32.xlu0 %v3060, 32
  %v3063 = vpop.permute.xlu0 %3062
  %v3065 = vmul.f32 %v3047, %v3063
  %3067 = vrot.lane.b32.xlu0 %v3041, 80
  %v3068 = vpop.permute.xlu0 %3067
  %3070 = vst.msk [vmem:[#allocation4 + $0x1c] sm:$0x3] %vm885, %v3068
  %3072 = vrot.lane.b32.xlu0 %v3065, 80
  %v3073 = vpop.permute.xlu0 %3072
  %3075 = vst.msk [vmem:[#allocation5 + $0x2] sm:$0x3] %vm885, %v3073
  %v3076 = vld [vmem:[#allocation2 + $0x1e] sm:$0x3]
  %v3077 = vpack.c.bf16 %v3041, %v3041
  %3079 = vrot.lane.b32.xlu0 %v3077, 80
  %v3080 = vpop.permute.xlu0 %3079
  %v3082 = vsel %vm276, %v3080, 0
  %3084 = vmatprep.subr.bf16.mxu0 0
  %3085 = vmatpush1.bf16.msra.mxu0 %v739
  %3086 = vmatprep.subr.bf16.mxu0 0
  %3087 = vmatpush1.bf16.msra.mxu0 0
  %3088 = vmatprep.subr.bf16.mxu0 0
  %3089 = vmatpush1.bf16.msra.mxu0 0
  %3090 = vmatprep.subr.bf16.mxu0 0
  %3091 = vmatpush1.bf16.msra.mxu0 0
  %3092 = vmatprep.subr.bf16.mxu0 0
  %3093 = vmatpush1.bf16.msra.mxu0 0
  %3094 = vmatprep.subr.bf16.mxu0 0
  %3095 = vmatpush1.bf16.msra.mxu0 0
  %3096 = vmatprep.subr.bf16.mxu0 0
  %3097 = vmatpush1.bf16.msra.mxu0 0
  %3098 = vmatprep.subr.bf16.mxu0 0
  %3099 = vmatpush1.bf16.msra.mxu0 0
  %3100 = vmatprep.subr.bf16.mxu0 0
  %3101 = vmatpush1.bf16.msra.mxu0 0
  %3102 = vmatprep.subr.bf16.mxu0 0
  %3103 = vmatpush1.bf16.msra.mxu0 0
  %3104 = vmatprep.subr.bf16.mxu0 0
  %3105 = vmatpush1.bf16.msra.mxu0 0
  %3106 = vmatprep.subr.bf16.mxu0 0
  %3107 = vmatpush1.bf16.msra.mxu0 0
  %3108 = vmatprep.subr.bf16.mxu0 0
  %3109 = vmatpush1.bf16.msra.mxu0 0
  %3110 = vmatprep.subr.bf16.mxu0 0
  %3111 = vmatpush1.bf16.msra.mxu0 0
  %3112 = vmatprep.subr.bf16.mxu0 0
  %3113 = vmatpush1.bf16.msra.mxu0 0
  %3114 = vmatprep.subr.bf16.mxu0 0
  %3115 = vmatpush1.bf16.msra.mxu0 0
  %3116 = vmatprep.mubr.bf16.mxu0 0
  %3117 = vmatmul.mubr.bf16.gmra.mrb[0].mxu0 %v3082
  %v3118 = vpop.f32.mrb[0].mxu0
  %v3119 = vadd.f32 0.0, %v3118
  %v3120 = vpop.f32.mrb[0].mxu0
  %v3121 = vpop.f32.mrb[0].mxu0
  %v3122 = vpop.f32.mrb[0].mxu0
  %3123 = vdwg.mxu0
  %v3124 = vadd.f32 %v3076, %v3119
  %v3125 = vld [vmem:[#allocation3] sm:$0x3]
  %v3126 = vpack.c.bf16 %v3065, %v3065
  %3128 = vrot.lane.b32.xlu0 %v3126, 80
  %v3129 = vpop.permute.xlu0 %3128
  %v3131 = vsel %vm276, %v3129, 0
  %3133 = vmatprep.subr.bf16.mxu0 0
  %3134 = vmatpush1.bf16.msra.mxu0 %v790
  %3135 = vmatprep.subr.bf16.mxu0 0
  %3136 = vmatpush1.bf16.msra.mxu0 0
  %3137 = vmatprep.subr.bf16.mxu0 0
  %3138 = vmatpush1.bf16.msra.mxu0 0
  %3139 = vmatprep.subr.bf16.mxu0 0
  %3140 = vmatpush1.bf16.msra.mxu0 0
  %3141 = vmatprep.subr.bf16.mxu0 0
  %3142 = vmatpush1.bf16.msra.mxu0 0
  %3143 = vmatprep.subr.bf16.mxu0 0
  %3144 = vmatpush1.bf16.msra.mxu0 0
  %3145 = vmatprep.subr.bf16.mxu0 0
  %3146 = vmatpush1.bf16.msra.mxu0 0
  %3147 = vmatprep.subr.bf16.mxu0 0
  %3148 = vmatpush1.bf16.msra.mxu0 0
  %3149 = vmatprep.subr.bf16.mxu0 0
  %3150 = vmatpush1.bf16.msra.mxu0 0
  %3151 = vmatprep.subr.bf16.mxu0 0
  %3152 = vmatpush1.bf16.msra.mxu0 0
  %3153 = vmatprep.subr.bf16.mxu0 0
  %3154 = vmatpush1.bf16.msra.mxu0 0
  %3155 = vmatprep.subr.bf16.mxu0 0
  %3156 = vmatpush1.bf16.msra.mxu0 0
  %3157 = vmatprep.subr.bf16.mxu0 0
  %3158 = vmatpush1.bf16.msra.mxu0 0
  %3159 = vmatprep.subr.bf16.mxu0 0
  %3160 = vmatpush1.bf16.msra.mxu0 0
  %3161 = vmatprep.subr.bf16.mxu0 0
  %3162 = vmatpush1.bf16.msra.mxu0 0
  %3163 = vmatprep.subr.bf16.mxu0 0
  %3164 = vmatpush1.bf16.msra.mxu0 0
  %3165 = vmatprep.mubr.bf16.mxu0 0
  %3166 = vmatmul.mubr.bf16.gmra.mrb[0].mxu0 %v3131
  %v3167 = vpop.f32.mrb[0].mxu0
  %v3168 = vadd.f32 0.0, %v3167
  %v3169 = vpop.f32.mrb[0].mxu0
  %v3170 = vpop.f32.mrb[0].mxu0
  %v3171 = vpop.f32.mrb[0].mxu0
  %3172 = vdwg.mxu0
  %v3173 = vadd.f32 %v3125, %v3168
  %v3174 = vxor.u32 %v3124, 2147483648
  %v3175 = vmul.f32 %v3174, 1.442695
  %v3176 = vpow.pop %v3175
  %v3177 = vadd.f32 %v3176, 1.0
  %v3178 = vrcp.pop %v3177
  %v3179 = vmul.f32 1.0, %v3178
  %v3180 = vtanh.pop %v3124
  %v3181 = vmul.f32 %v3179, %v3035
  %3183 = vrot.lane.b32.xlu0 %v3180, 96
  %v3184 = vpop.permute.xlu0 %3183
  %v3186 = vmul.f32 %v3179, %v3184
  %3188 = vrot.lane.b32.xlu0 %v3186, 16
  %v3189 = vpop.permute.xlu0 %3188
  %v3191 = vadd.f32 %v3181, %v3189
  %v3192 = vtanh.pop %v3191
  %3194 = vrot.lane.b32.xlu0 %v3192, 32
  %v3195 = vpop.permute.xlu0 %3194
  %v3197 = vmul.f32 %v3179, %v3195
  %v3198 = vxor.u32 %v3173, 2147483648
  %v3199 = vmul.f32 %v3198, 1.442695
  %v3200 = vpow.pop %v3199
  %v3201 = vadd.f32 %v3200, 1.0
  %v3202 = vrcp.pop %v3201
  %v3203 = vmul.f32 1.0, %v3202
  %v3204 = vtanh.pop %v3173
  %v3205 = vmul.f32 %v3203, %v3059
  %3207 = vrot.lane.b32.xlu0 %v3204, 96
  %v3208 = vpop.permute.xlu0 %3207
  %v3210 = vmul.f32 %v3203, %v3208
  %3212 = vrot.lane.b32.xlu0 %v3210, 16
  %v3213 = vpop.permute.xlu0 %3212
  %v3215 = vadd.f32 %v3205, %v3213
  %v3216 = vtanh.pop %v3215
  %3218 = vrot.lane.b32.xlu0 %v3216, 32
  %v3219 = vpop.permute.xlu0 %3218
  %v3221 = vmul.f32 %v3203, %v3219
  %3223 = vrot.lane.b32.xlu0 %v3197, 80
  %v3224 = vpop.permute.xlu0 %3223
  %3226 = vst.msk [vmem:[#allocation4 + $0x1e] sm:$0x3] %vm885, %v3224
  %3228 = vrot.lane.b32.xlu0 %v3221, 80
  %v3229 = vpop.permute.xlu0 %3228
  %3231 = vst.msk [vmem:[#allocation5] sm:$0x3] %vm885, %v3229
  %v3232 = vld [vmem:[#allocation4] sm:$0xff]
  %v3233 = vld [vmem:[#allocation4 + $0x8] sm:$0xff]
  %v3234 = vld [vmem:[#allocation4 + $0x10] sm:$0xff]
  %v3235 = vld [vmem:[#allocation4 + $0x18] sm:$0xff]
  %v3236 = vld [vmem:[#allocation5] sm:$0xff]
  %v3237 = vld [vmem:[#allocation5 + $0x8] sm:$0xff]
  %v3238 = vld [vmem:[#allocation5 + $0x10] sm:$0xff]
  %v3239 = vld [vmem:[#allocation5 + $0x18] sm:$0xff]
  %v3240 = vld [vmem:[%s11] sm:$0xf]
  %v3241 = vld [vmem:[%s11 + $0x4] sm:$0xf]
  %v3242 = vpack.c.bf16 %v3233, %v3232
  %v3243 = vpack.c.bf16 %v3235, %v3234
  %v3244 = vld [vmem:[%s12] sm:$0xf]
  %v3245 = vld [vmem:[%s12 + $0x4] sm:$0xf]
  %v3246 = vpack.c.bf16 %v3237, %v3236
  %v3247 = vpack.c.bf16 %v3239, %v3238
  %v3250 = vunpack.c.l.b16 %v3244
  %v3251 = vunpack.c.l.b16 %v3245
  %v3252 = vpack.c.b16 %v3251, %v3250
  %v3255 = vsel %vm276, %v3246, 0
  %v3258 = vsel %vm276, %v3247, 0
  %3260 = vmatprep.subr.bf16.mxu0 0
  %3261 = vmatpush1.bf16.msra.mxu0 %v3252
  %3262 = vmatprep.subr.bf16.mxu0 0
  %3263 = vmatpush1.bf16.msra.mxu0 0
  %3264 = vmatprep.subr.bf16.mxu0 0
  %3265 = vmatpush1.bf16.msra.mxu0 0
  %3266 = vmatprep.subr.bf16.mxu0 0
  %3267 = vmatpush1.bf16.msra.mxu0 0
  %3268 = vmatprep.subr.bf16.mxu0 0
  %3269 = vmatpush1.bf16.msra.mxu0 0
  %3270 = vmatprep.subr.bf16.mxu0 0
  %3271 = vmatpush1.bf16.msra.mxu0 0
  %3272 = vmatprep.subr.bf16.mxu0 0
  %3273 = vmatpush1.bf16.msra.mxu0 0
  %3274 = vmatprep.subr.bf16.mxu0 0
  %3275 = vmatpush1.bf16.msra.mxu0 0
  %3276 = vmatprep.subr.bf16.mxu0 0
  %3277 = vmatpush1.bf16.msra.mxu0 0
  %3278 = vmatprep.subr.bf16.mxu0 0
  %3279 = vmatpush1.bf16.msra.mxu0 0
  %3280 = vmatprep.subr.bf16.mxu0 0
  %3281 = vmatpush1.bf16.msra.mxu0 0
  %3282 = vmatprep.subr.bf16.mxu0 0
  %3283 = vmatpush1.bf16.msra.mxu0 0
  %3284 = vmatprep.subr.bf16.mxu0 0
  %3285 = vmatpush1.bf16.msra.mxu0 0
  %3286 = vmatprep.subr.bf16.mxu0 0
  %3287 = vmatpush1.bf16.msra.mxu0 0
  %3288 = vmatprep.subr.bf16.mxu0 0
  %3289 = vmatpush1.bf16.msra.mxu0 0
  %3290 = vmatprep.subr.bf16.mxu0 0
  %3291 = vmatpush1.bf16.msra.mxu0 0
  %3292 = vmatprep.mubr.bf16.mxu0 0
  %3293 = vmatmul.mubr.bf16.gmra.mrb[0].mxu0 %v3255
  %v3294 = vpop.f32.mrb[0].mxu0
  %v3295 = vadd.f32 0.0, %v3294
  %v3296 = vpop.f32.mrb[0].mxu0
  %v3297 = vpop.f32.mrb[0].mxu0
  %v3298 = vadd.f32 0.0, %v3297
  %v3299 = vpop.f32.mrb[0].mxu0
  %3300 = vmatprep.mubr.bf16.mxu0 0
  %3301 = vmatmul.mubr.bf16.gmra.mrb[0].mxu0 %v3258
  %v3302 = vpop.f32.mrb[0].mxu0
  %v3303 = vadd.f32 0.0, %v3302
  %v3304 = vpop.f32.mrb[0].mxu0
  %v3305 = vpop.f32.mrb[0].mxu0
  %v3306 = vadd.f32 0.0, %v3305
  %v3307 = vpop.f32.mrb[0].mxu0
  %3308 = vdwg.mxu0
  %v3311 = vunpack.c.l.b16 %v3240
  %v3312 = vunpack.c.l.b16 %v3241
  %v3313 = vpack.c.b16 %v3312, %v3311
  %v3316 = vsel %vm276, %v3242, 0
  %v3319 = vsel %vm276, %v3243, 0
  %3321 = vmatprep.subr.bf16.mxu0 0
  %3322 = vmatpush1.bf16.msra.mxu0 %v3313
  %3323 = vmatprep.subr.bf16.mxu0 0
  %3324 = vmatpush1.bf16.msra.mxu0 0
  %3325 = vmatprep.subr.bf16.mxu0 0
  %3326 = vmatpush1.bf16.msra.mxu0 0
  %3327 = vmatprep.subr.bf16.mxu0 0
  %3328 = vmatpush1.bf16.msra.mxu0 0
  %3329 = vmatprep.subr.bf16.mxu0 0
  %3330 = vmatpush1.bf16.msra.mxu0 0
  %3331 = vmatprep.subr.bf16.mxu0 0
  %3332 = vmatpush1.bf16.msra.mxu0 0
  %3333 = vmatprep.subr.bf16.mxu0 0
  %3334 = vmatpush1.bf16.msra.mxu0 0
  %3335 = vmatprep.subr.bf16.mxu0 0
  %3336 = vmatpush1.bf16.msra.mxu0 0
  %3337 = vmatprep.subr.bf16.mxu0 0
  %3338 = vmatpush1.bf16.msra.mxu0 0
  %3339 = vmatprep.subr.bf16.mxu0 0
  %3340 = vmatpush1.bf16.msra.mxu0 0
  %3341 = vmatprep.subr.bf16.mxu0 0
  %3342 = vmatpush1.bf16.msra.mxu0 0
  %3343 = vmatprep.subr.bf16.mxu0 0
  %3344 = vmatpush1.bf16.msra.mxu0 0
  %3345 = vmatprep.subr.bf16.mxu0 0
  %3346 = vmatpush1.bf16.msra.mxu0 0
  %3347 = vmatprep.subr.bf16.mxu0 0
  %3348 = vmatpush1.bf16.msra.mxu0 0
  %3349 = vmatprep.subr.bf16.mxu0 0
  %3350 = vmatpush1.bf16.msra.mxu0 0
  %3351 = vmatprep.subr.bf16.mxu0 0
  %3352 = vmatpush1.bf16.msra.mxu0 0
  %3353 = vmatprep.mubr.bf16.mxu0 0
  %3354 = vmatmul.mubr.bf16.gmra.mrb[0].mxu0 %v3316
  %v3355 = vpop.f32.mrb[0].mxu0
  %v3356 = vadd.f32 %v3295, %v3355
  %v3357 = vpop.f32.mrb[0].mxu0
  %v3358 = vpop.f32.mrb[0].mxu0
  %v3359 = vadd.f32 %v3298, %v3358
  %v3360 = vpop.f32.mrb[0].mxu0
  %3361 = vmatprep.mubr.bf16.mxu0 0
  %3362 = vmatmul.mubr.bf16.gmra.mrb[0].mxu0 %v3319
  %v3363 = vpop.f32.mrb[0].mxu0
  %v3364 = vadd.f32 %v3303, %v3363
  %v3365 = vpop.f32.mrb[0].mxu0
  %v3366 = vpop.f32.mrb[0].mxu0
  %v3367 = vadd.f32 %v3306, %v3366
  %v3368 = vpop.f32.mrb[0].mxu0
  %3369 = vdwg.mxu0
  %v3370 = vld [vmem:[%s14] sm:$0x1]
  %v3372 = vlaneseq
  %v3373 = vshrl.u32 %v3372, 7
  %v3374 = vsub.s32 0, %v3373
  %v3375 = vrot.slane %v3370, %v3374
  %v3377 = vadd.f32 %v3356, %v3375
  %v3378 = vadd.f32 %v3359, %v3375
  %v3379 = vadd.f32 %v3364, %v3375
  %v3380 = vadd.f32 %v3367, %v3375
  %3381 = vst.msk [vmem:[#allocation6] sm:$0xff] %vm600, %v3377
  %3382 = vst.msk [vmem:[#allocation6 + $0x8] sm:$0xff] %vm600, %v3378
  %3383 = vst.msk [vmem:[#allocation6 + $0x10] sm:$0xff] %vm600, %v3379
  %3384 = vst.msk [vmem:[#allocation6 + $0x18] sm:$0xff] %vm600, %v3380
  %s3385 = scalar_lea.vmem %s11, 8
  %v3386 = vld [vmem:[%s3385] sm:$0xf]
  %v3387 = vld [vmem:[%s3385 + $0x4] sm:$0xf]
  %s3388 = scalar_lea.vmem %s12, 8
  %v3389 = vld [vmem:[%s3388] sm:$0xf]
  %v3390 = vld [vmem:[%s3388 + $0x4] sm:$0xf]
  %v3393 = vunpack.c.l.b16 %v3389
  %v3394 = vunpack.c.l.b16 %v3390
  %v3395 = vpack.c.b16 %v3394, %v3393
  %3397 = vmatprep.subr.bf16.mxu0 0
  %3398 = vmatpush1.bf16.msra.mxu0 %v3395
  %3399 = vmatprep.subr.bf16.mxu0 0
  %3400 = vmatpush1.bf16.msra.mxu0 0
  %3401 = vmatprep.subr.bf16.mxu0 0
  %3402 = vmatpush1.bf16.msra.mxu0 0
  %3403 = vmatprep.subr.bf16.mxu0 0
  %3404 = vmatpush1.bf16.msra.mxu0 0
  %3405 = vmatprep.subr.bf16.mxu0 0
  %3406 = vmatpush1.bf16.msra.mxu0 0
  %3407 = vmatprep.subr.bf16.mxu0 0
  %3408 = vmatpush1.bf16.msra.mxu0 0
  %3409 = vmatprep.subr.bf16.mxu0 0
  %3410 = vmatpush1.bf16.msra.mxu0 0
  %3411 = vmatprep.subr.bf16.mxu0 0
  %3412 = vmatpush1.bf16.msra.mxu0 0
  %3413 = vmatprep.subr.bf16.mxu0 0
  %3414 = vmatpush1.bf16.msra.mxu0 0
  %3415 = vmatprep.subr.bf16.mxu0 0
  %3416 = vmatpush1.bf16.msra.mxu0 0
  %3417 = vmatprep.subr.bf16.mxu0 0
  %3418 = vmatpush1.bf16.msra.mxu0 0
  %3419 = vmatprep.subr.bf16.mxu0 0
  %3420 = vmatpush1.bf16.msra.mxu0 0
  %3421 = vmatprep.subr.bf16.mxu0 0
  %3422 = vmatpush1.bf16.msra.mxu0 0
  %3423 = vmatprep.subr.bf16.mxu0 0
  %3424 = vmatpush1.bf16.msra.mxu0 0
  %3425 = vmatprep.subr.bf16.mxu0 0
  %3426 = vmatpush1.bf16.msra.mxu0 0
  %3427 = vmatprep.subr.bf16.mxu0 0
  %3428 = vmatpush1.bf16.msra.mxu0 0
  %3429 = vmatprep.mubr.bf16.mxu0 0
  %3430 = vmatmul.mubr.bf16.gmra.mrb[0].mxu0 %v3255
  %v3431 = vpop.f32.mrb[0].mxu0
  %v3432 = vadd.f32 0.0, %v3431
  %v3433 = vpop.f32.mrb[0].mxu0
  %v3434 = vpop.f32.mrb[0].mxu0
  %v3435 = vadd.f32 0.0, %v3434
  %v3436 = vpop.f32.mrb[0].mxu0
  %3437 = vmatprep.mubr.bf16.mxu0 0
  %3438 = vmatmul.mubr.bf16.gmra.mrb[0].mxu0 %v3258
  %v3439 = vpop.f32.mrb[0].mxu0
  %v3440 = vadd.f32 0.0, %v3439
  %v3441 = vpop.f32.mrb[0].mxu0
  %v3442 = vpop.f32.mrb[0].mxu0
  %v3443 = vadd.f32 0.0, %v3442
  %v3444 = vpop.f32.mrb[0].mxu0
  %3445 = vdwg.mxu0
  %v3448 = vunpack.c.l.b16 %v3386
  %v3449 = vunpack.c.l.b16 %v3387
  %v3450 = vpack.c.b16 %v3449, %v3448
  %3452 = vmatprep.subr.bf16.mxu0 0
  %3453 = vmatpush1.bf16.msra.mxu0 %v3450
  %3454 = vmatprep.subr.bf16.mxu0 0
  %3455 = vmatpush1.bf16.msra.mxu0 0
  %3456 = vmatprep.subr.bf16.mxu0 0
  %3457 = vmatpush1.bf16.msra.mxu0 0
  %3458 = vmatprep.subr.bf16.mxu0 0
  %3459 = vmatpush1.bf16.msra.mxu0 0
  %3460 = vmatprep.subr.bf16.mxu0 0
  %3461 = vmatpush1.bf16.msra.mxu0 0
  %3462 = vmatprep.subr.bf16.mxu0 0
  %3463 = vmatpush1.bf16.msra.mxu0 0
  %3464 = vmatprep.subr.bf16.mxu0 0
  %3465 = vmatpush1.bf16.msra.mxu0 0
  %3466 = vmatprep.subr.bf16.mxu0 0
  %3467 = vmatpush1.bf16.msra.mxu0 0
  %3468 = vmatprep.subr.bf16.mxu0 0
  %3469 = vmatpush1.bf16.msra.mxu0 0
  %3470 = vmatprep.subr.bf16.mxu0 0
  %3471 = vmatpush1.bf16.msra.mxu0 0
  %3472 = vmatprep.subr.bf16.mxu0 0
  %3473 = vmatpush1.bf16.msra.mxu0 0
  %3474 = vmatprep.subr.bf16.mxu0 0
  %3475 = vmatpush1.bf16.msra.mxu0 0
  %3476 = vmatprep.subr.bf16.mxu0 0
  %3477 = vmatpush1.bf16.msra.mxu0 0
  %3478 = vmatprep.subr.bf16.mxu0 0
  %3479 = vmatpush1.bf16.msra.mxu0 0
  %3480 = vmatprep.subr.bf16.mxu0 0
  %3481 = vmatpush1.bf16.msra.mxu0 0
  %3482 = vmatprep.subr.bf16.mxu0 0
  %3483 = vmatpush1.bf16.msra.mxu0 0
  %3484 = vmatprep.mubr.bf16.mxu0 0
  %3485 = vmatmul.mubr.bf16.gmra.mrb[0].mxu0 %v3316
  %v3486 = vpop.f32.mrb[0].mxu0
  %v3487 = vadd.f32 %v3432, %v3486
  %v3488 = vpop.f32.mrb[0].mxu0
  %v3489 = vpop.f32.mrb[0].mxu0
  %v3490 = vadd.f32 %v3435, %v3489
  %v3491 = vpop.f32.mrb[0].mxu0
  %3492 = vmatprep.mubr.bf16.mxu0 0
  %3493 = vmatmul.mubr.bf16.gmra.mrb[0].mxu0 %v3319
  %v3494 = vpop.f32.mrb[0].mxu0
  %v3495 = vadd.f32 %v3440, %v3494
  %v3496 = vpop.f32.mrb[0].mxu0
  %v3497 = vpop.f32.mrb[0].mxu0
  %v3498 = vadd.f32 %v3443, %v3497
  %v3499 = vpop.f32.mrb[0].mxu0
  %3500 = vdwg.mxu0
  %s3501 = scalar_lea.vmem %s14, 1
  %v3502 = vld [vmem:[%s3501] sm:$0x1]
  %v3504 = vlaneseq
  %v3505 = vshrl.u32 %v3504, 7
  %v3506 = vsub.s32 0, %v3505
  %v3507 = vrot.slane %v3502, %v3506
  %v3509 = vadd.f32 %v3487, %v3507
  %v3510 = vadd.f32 %v3490, %v3507
  %v3511 = vadd.f32 %v3495, %v3507
  %v3512 = vadd.f32 %v3498, %v3507
  %3513 = vst.msk [vmem:[#allocation7] sm:$0xff] %vm600, %v3509
  %3514 = vst.msk [vmem:[#allocation7 + $0x8] sm:$0xff] %vm600, %v3510
  %3515 = vst.msk [vmem:[#allocation7 + $0x10] sm:$0xff] %vm600, %v3511
  %3516 = vst.msk [vmem:[#allocation7 + $0x18] sm:$0xff] %vm600, %v3512
  %v3517 = vld [vmem:[%s13] sm:$0xf]
  %v3518 = vld [vmem:[%s13 + $0x4] sm:$0xf]
  %s3519 = scalar_lea.vmem %s13, 8
  %v3520 = vld [vmem:[%s3519] sm:$0xf]
  %v3521 = vld [vmem:[%s3519 + $0x4] sm:$0xf]
  %v3522 = vld [vmem:[#allocation6] sm:$0x3]
  %v3525 = vunpack.c.l.b16 %v3517
  %v3526 = vunpack.c.l.b16 %v3518
  %v3527 = vpack.c.b16 %v3526, %v3525
  %3529 = vmatprep.subr.bf16.mxu0 0
  %3530 = vmatpush1.bf16.msra.mxu0 %v3527
  %3531 = vmatprep.subr.bf16.mxu0 0
  %3532 = vmatpush1.bf16.msra.mxu0 0
  %3533 = vmatprep.subr.bf16.mxu0 0
  %3534 = vmatpush1.bf16.msra.mxu0 0
  %3535 = vmatprep.subr.bf16.mxu0 0
  %3536 = vmatpush1.bf16.msra.mxu0 0
  %3537 = vmatprep.subr.bf16.mxu0 0
  %3538 = vmatpush1.bf16.msra.mxu0 0
  %3539 = vmatprep.subr.bf16.mxu0 0
  %3540 = vmatpush1.bf16.msra.mxu0 0
  %3541 = vmatprep.subr.bf16.mxu0 0
  %3542 = vmatpush1.bf16.msra.mxu0 0
  %3543 = vmatprep.subr.bf16.mxu0 0
  %3544 = vmatpush1.bf16.msra.mxu0 0
  %3545 = vmatprep.subr.bf16.mxu0 0
  %3546 = vmatpush1.bf16.msra.mxu0 0
  %3547 = vmatprep.subr.bf16.mxu0 0
  %3548 = vmatpush1.bf16.msra.mxu0 0
  %3549 = vmatprep.subr.bf16.mxu0 0
  %3550 = vmatpush1.bf16.msra.mxu0 0
  %3551 = vmatprep.subr.bf16.mxu0 0
  %3552 = vmatpush1.bf16.msra.mxu0 0
  %3553 = vmatprep.subr.bf16.mxu0 0
  %3554 = vmatpush1.bf16.msra.mxu0 0
  %3555 = vmatprep.subr.bf16.mxu0 0
  %3556 = vmatpush1.bf16.msra.mxu0 0
  %3557 = vmatprep.subr.bf16.mxu0 0
  %3558 = vmatpush1.bf16.msra.mxu0 0
  %3559 = vmatprep.subr.bf16.mxu0 0
  %3560 = vmatpush1.bf16.msra.mxu0 0
  %3561 = vmatprep.mubr.bf16.mxu0 0
  %3562 = vmatmul.mubr.bf16.gmra.mrb[0].mxu0 %v742
  %v3563 = vpop.f32.mrb[0].mxu0
  %v3564 = vadd.f32 0.0, %v3563
  %v3565 = vpop.f32.mrb[0].mxu0
  %v3566 = vpop.f32.mrb[0].mxu0
  %v3567 = vpop.f32.mrb[0].mxu0
  %3568 = vdwg.mxu0
  %v3569 = vadd.f32 %v3522, %v3564
  %v3570 = vld [vmem:[#allocation7 + $0x1e] sm:$0x3]
  %v3573 = vunpack.c.l.b16 %v3520
  %v3574 = vunpack.c.l.b16 %v3521
  %v3575 = vpack.c.b16 %v3574, %v3573
  %3577 = vmatprep.subr.bf16.mxu0 0
  %3578 = vmatpush1.bf16.msra.mxu0 %v3575
  %3579 = vmatprep.subr.bf16.mxu0 0
  %3580 = vmatpush1.bf16.msra.mxu0 0
  %3581 = vmatprep.subr.bf16.mxu0 0
  %3582 = vmatpush1.bf16.msra.mxu0 0
  %3583 = vmatprep.subr.bf16.mxu0 0
  %3584 = vmatpush1.bf16.msra.mxu0 0
  %3585 = vmatprep.subr.bf16.mxu0 0
  %3586 = vmatpush1.bf16.msra.mxu0 0
  %3587 = vmatprep.subr.bf16.mxu0 0
  %3588 = vmatpush1.bf16.msra.mxu0 0
  %3589 = vmatprep.subr.bf16.mxu0 0
  %3590 = vmatpush1.bf16.msra.mxu0 0
  %3591 = vmatprep.subr.bf16.mxu0 0
  %3592 = vmatpush1.bf16.msra.mxu0 0
  %3593 = vmatprep.subr.bf16.mxu0 0
  %3594 = vmatpush1.bf16.msra.mxu0 0
  %3595 = vmatprep.subr.bf16.mxu0 0
  %3596 = vmatpush1.bf16.msra.mxu0 0
  %3597 = vmatprep.subr.bf16.mxu0 0
  %3598 = vmatpush1.bf16.msra.mxu0 0
  %3599 = vmatprep.subr.bf16.mxu0 0
  %3600 = vmatpush1.bf16.msra.mxu0 0
  %3601 = vmatprep.subr.bf16.mxu0 0
  %3602 = vmatpush1.bf16.msra.mxu0 0
  %3603 = vmatprep.subr.bf16.mxu0 0
  %3604 = vmatpush1.bf16.msra.mxu0 0
  %3605 = vmatprep.subr.bf16.mxu0 0
  %3606 = vmatpush1.bf16.msra.mxu0 0
  %3607 = vmatprep.subr.bf16.mxu0 0
  %3608 = vmatpush1.bf16.msra.mxu0 0
  %3609 = vmatprep.mubr.bf16.mxu0 0
  %3610 = vmatmul.mubr.bf16.gmra.mrb[0].mxu0 %v742
  %v3611 = vpop.f32.mrb[0].mxu0
  %v3612 = vadd.f32 0.0, %v3611
  %v3613 = vpop.f32.mrb[0].mxu0
  %v3614 = vpop.f32.mrb[0].mxu0
  %v3615 = vpop.f32.mrb[0].mxu0
  %3616 = vdwg.mxu0
  %v3617 = vadd.f32 %v3570, %v3612
  %v3618 = vxor.u32 %v3569, 2147483648
  %v3619 = vmul.f32 %v3618, 1.442695
  %v3620 = vpow.pop %v3619
  %v3621 = vadd.f32 %v3620, 1.0
  %v3622 = vrcp.pop %v3621
  %v3623 = vmul.f32 1.0, %v3622
  %v3624 = vtanh.pop %v3569
  %v3625 = vmul.f32 %v3623, 0.0
  %3627 = vrot.lane.b32.xlu0 %v3624, 96
  %v3628 = vpop.permute.xlu0 %3627
  %v3630 = vmul.f32 %v3623, %v3628
  %3632 = vrot.lane.b32.xlu0 %v3630, 16
  %v3633 = vpop.permute.xlu0 %3632
  %v3635 = vadd.f32 %v3625, %v3633
  %v3636 = vtanh.pop %v3635
  %3638 = vrot.lane.b32.xlu0 %v3636, 32
  %v3639 = vpop.permute.xlu0 %3638
  %v3641 = vmul.f32 %v3623, %v3639
  %v3642 = vxor.u32 %v3617, 2147483648
  %v3643 = vmul.f32 %v3642, 1.442695
  %v3644 = vpow.pop %v3643
  %v3645 = vadd.f32 %v3644, 1.0
  %v3646 = vrcp.pop %v3645
  %v3647 = vmul.f32 1.0, %v3646
  %v3648 = vtanh.pop %v3617
  %v3649 = vmul.f32 %v3647, 0.0
  %3651 = vrot.lane.b32.xlu0 %v3648, 96
  %v3652 = vpop.permute.xlu0 %3651
  %v3654 = vmul.f32 %v3647, %v3652
  %3656 = vrot.lane.b32.xlu0 %v3654, 16
  %v3657 = vpop.permute.xlu0 %3656
  %v3659 = vadd.f32 %v3649, %v3657
  %v3660 = vtanh.pop %v3659
  %3662 = vrot.lane.b32.xlu0 %v3660, 32
  %v3663 = vpop.permute.xlu0 %3662
  %v3665 = vmul.f32 %v3647, %v3663
  %3667 = vrot.lane.b32.xlu0 %v3641, 80
  %v3668 = vpop.permute.xlu0 %3667
  %3670 = vst.msk [vmem:[#allocation8] sm:$0x3] %vm885, %v3668
  %3672 = vrot.lane.b32.xlu0 %v3665, 80
  %v3673 = vpop.permute.xlu0 %3672
  %3675 = vst.msk [vmem:[#allocation9 + $0x1e] sm:$0x3] %vm885, %v3673
  %v3676 = vld [vmem:[#allocation6 + $0x2] sm:$0x3]
  %v3677 = vpack.c.bf16 %v3641, %v3641
  %3679 = vrot.lane.b32.xlu0 %v3677, 80
  %v3680 = vpop.permute.xlu0 %3679
  %v3682 = vsel %vm276, %v3680, 0
  %3684 = vmatprep.subr.bf16.mxu0 0
  %3685 = vmatpush1.bf16.msra.mxu0 %v3527
  %3686 = vmatprep.subr.bf16.mxu0 0
  %3687 = vmatpush1.bf16.msra.mxu0 0
  %3688 = vmatprep.subr.bf16.mxu0 0
  %3689 = vmatpush1.bf16.msra.mxu0 0
  %3690 = vmatprep.subr.bf16.mxu0 0
  %3691 = vmatpush1.bf16.msra.mxu0 0
  %3692 = vmatprep.subr.bf16.mxu0 0
  %3693 = vmatpush1.bf16.msra.mxu0 0
  %3694 = vmatprep.subr.bf16.mxu0 0
  %3695 = vmatpush1.bf16.msra.mxu0 0
  %3696 = vmatprep.subr.bf16.mxu0 0
  %3697 = vmatpush1.bf16.msra.mxu0 0
  %3698 = vmatprep.subr.bf16.mxu0 0
  %3699 = vmatpush1.bf16.msra.mxu0 0
  %3700 = vmatprep.subr.bf16.mxu0 0
  %3701 = vmatpush1.bf16.msra.mxu0 0
  %3702 = vmatprep.subr.bf16.mxu0 0
  %3703 = vmatpush1.bf16.msra.mxu0 0
  %3704 = vmatprep.subr.bf16.mxu0 0
  %3705 = vmatpush1.bf16.msra.mxu0 0
  %3706 = vmatprep.subr.bf16.mxu0 0
  %3707 = vmatpush1.bf16.msra.mxu0 0
  %3708 = vmatprep.subr.bf16.mxu0 0
  %3709 = vmatpush1.bf16.msra.mxu0 0
  %3710 = vmatprep.subr.bf16.mxu0 0
  %3711 = vmatpush1.bf16.msra.mxu0 0
  %3712 = vmatprep.subr.bf16.mxu0 0
  %3713 = vmatpush1.bf16.msra.mxu0 0
  %3714 = vmatprep.subr.bf16.mxu0 0
  %3715 = vmatpush1.bf16.msra.mxu0 0
  %3716 = vmatprep.mubr.bf16.mxu0 0
  %3717 = vmatmul.mubr.bf16.gmra.mrb[0].mxu0 %v3682
  %v3718 = vpop.f32.mrb[0].mxu0
  %v3719 = vadd.f32 0.0, %v3718
  %v3720 = vpop.f32.mrb[0].mxu0
  %v3721 = vpop.f32.mrb[0].mxu0
  %v3722 = vpop.f32.mrb[0].mxu0
  %3723 = vdwg.mxu0
  %v3724 = vadd.f32 %v3676, %v3719
  %v3725 = vld [vmem:[#allocation7 + $0x1c] sm:$0x3]
  %v3726 = vpack.c.bf16 %v3665, %v3665
  %3728 = vrot.lane.b32.xlu0 %v3726, 80
  %v3729 = vpop.permute.xlu0 %3728
  %v3731 = vsel %vm276, %v3729, 0
  %3733 = vmatprep.subr.bf16.mxu0 0
  %3734 = vmatpush1.bf16.msra.mxu0 %v3575
  %3735 = vmatprep.subr.bf16.mxu0 0
  %3736 = vmatpush1.bf16.msra.mxu0 0
  %3737 = vmatprep.subr.bf16.mxu0 0
  %3738 = vmatpush1.bf16.msra.mxu0 0
  %3739 = vmatprep.subr.bf16.mxu0 0
  %3740 = vmatpush1.bf16.msra.mxu0 0
  %3741 = vmatprep.subr.bf16.mxu0 0
  %3742 = vmatpush1.bf16.msra.mxu0 0
  %3743 = vmatprep.subr.bf16.mxu0 0
  %3744 = vmatpush1.bf16.msra.mxu0 0
  %3745 = vmatprep.subr.bf16.mxu0 0
  %3746 = vmatpush1.bf16.msra.mxu0 0
  %3747 = vmatprep.subr.bf16.mxu0 0
  %3748 = vmatpush1.bf16.msra.mxu0 0
  %3749 = vmatprep.subr.bf16.mxu0 0
  %3750 = vmatpush1.bf16.msra.mxu0 0
  %3751 = vmatprep.subr.bf16.mxu0 0
  %3752 = vmatpush1.bf16.msra.mxu0 0
  %3753 = vmatprep.subr.bf16.mxu0 0
  %3754 = vmatpush1.bf16.msra.mxu0 0
  %3755 = vmatprep.subr.bf16.mxu0 0
  %3756 = vmatpush1.bf16.msra.mxu0 0
  %3757 = vmatprep.subr.bf16.mxu0 0
  %3758 = vmatpush1.bf16.msra.mxu0 0
  %3759 = vmatprep.subr.bf16.mxu0 0
  %3760 = vmatpush1.bf16.msra.mxu0 0
  %3761 = vmatprep.subr.bf16.mxu0 0
  %3762 = vmatpush1.bf16.msra.mxu0 0
  %3763 = vmatprep.subr.bf16.mxu0 0
  %3764 = vmatpush1.bf16.msra.mxu0 0
  %3765 = vmatprep.mubr.bf16.mxu0 0
  %3766 = vmatmul.mubr.bf16.gmra.mrb[0].mxu0 %v3731
  %v3767 = vpop.f32.mrb[0].mxu0
  %v3768 = vadd.f32 0.0, %v3767
  %v3769 = vpop.f32.mrb[0].mxu0
  %v3770 = vpop.f32.mrb[0].mxu0
  %v3771 = vpop.f32.mrb[0].mxu0
  %3772 = vdwg.mxu0
  %v3773 = vadd.f32 %v3725, %v3768
  %v3774 = vxor.u32 %v3724, 2147483648
  %v3775 = vmul.f32 %v3774, 1.442695
  %v3776 = vpow.pop %v3775
  %v3777 = vadd.f32 %v3776, 1.0
  %v3778 = vrcp.pop %v3777
  %v3779 = vmul.f32 1.0, %v3778
  %v3780 = vtanh.pop %v3724
  %v3781 = vmul.f32 %v3779, %v3635
  %3783 = vrot.lane.b32.xlu0 %v3780, 96
  %v3784 = vpop.permute.xlu0 %3783
  %v3786 = vmul.f32 %v3779, %v3784
  %3788 = vrot.lane.b32.xlu0 %v3786, 16
  %v3789 = vpop.permute.xlu0 %3788
  %v3791 = vadd.f32 %v3781, %v3789
  %v3792 = vtanh.pop %v3791
  %3794 = vrot.lane.b32.xlu0 %v3792, 32
  %v3795 = vpop.permute.xlu0 %3794
  %v3797 = vmul.f32 %v3779, %v3795
  %v3798 = vxor.u32 %v3773, 2147483648
  %v3799 = vmul.f32 %v3798, 1.442695
  %v3800 = vpow.pop %v3799
  %v3801 = vadd.f32 %v3800, 1.0
  %v3802 = vrcp.pop %v3801
  %v3803 = vmul.f32 1.0, %v3802
  %v3804 = vtanh.pop %v3773
  %v3805 = vmul.f32 %v3803, %v3659
  %3807 = vrot.lane.b32.xlu0 %v3804, 96
  %v3808 = vpop.permute.xlu0 %3807
  %v3810 = vmul.f32 %v3803, %v3808
  %3812 = vrot.lane.b32.xlu0 %v3810, 16
  %v3813 = vpop.permute.xlu0 %3812
  %v3815 = vadd.f32 %v3805, %v3813
  %v3816 = vtanh.pop %v3815
  %3818 = vrot.lane.b32.xlu0 %v3816, 32
  %v3819 = vpop.permute.xlu0 %3818
  %v3821 = vmul.f32 %v3803, %v3819
  %3823 = vrot.lane.b32.xlu0 %v3797, 80
  %v3824 = vpop.permute.xlu0 %3823
  %3826 = vst.msk [vmem:[#allocation8 + $0x2] sm:$0x3] %vm885, %v3824
  %3828 = vrot.lane.b32.xlu0 %v3821, 80
  %v3829 = vpop.permute.xlu0 %3828
  %3831 = vst.msk [vmem:[#allocation9 + $0x1c] sm:$0x3] %vm885, %v3829
  %v3832 = vld [vmem:[#allocation6 + $0x4] sm:$0x3]
  %v3833 = vpack.c.bf16 %v3797, %v3797
  %3835 = vrot.lane.b32.xlu0 %v3833, 80
  %v3836 = vpop.permute.xlu0 %3835
  %v3838 = vsel %vm276, %v3836, 0
  %3840 = vmatprep.subr.bf16.mxu0 0
  %3841 = vmatpush1.bf16.msra.mxu0 %v3527
  %3842 = vmatprep.subr.bf16.mxu0 0
  %3843 = vmatpush1.bf16.msra.mxu0 0
  %3844 = vmatprep.subr.bf16.mxu0 0
  %3845 = vmatpush1.bf16.msra.mxu0 0
  %3846 = vmatprep.subr.bf16.mxu0 0
  %3847 = vmatpush1.bf16.msra.mxu0 0
  %3848 = vmatprep.subr.bf16.mxu0 0
  %3849 = vmatpush1.bf16.msra.mxu0 0
  %3850 = vmatprep.subr.bf16.mxu0 0
  %3851 = vmatpush1.bf16.msra.mxu0 0
  %3852 = vmatprep.subr.bf16.mxu0 0
  %3853 = vmatpush1.bf16.msra.mxu0 0
  %3854 = vmatprep.subr.bf16.mxu0 0
  %3855 = vmatpush1.bf16.msra.mxu0 0
  %3856 = vmatprep.subr.bf16.mxu0 0
  %3857 = vmatpush1.bf16.msra.mxu0 0
  %3858 = vmatprep.subr.bf16.mxu0 0
  %3859 = vmatpush1.bf16.msra.mxu0 0
  %3860 = vmatprep.subr.bf16.mxu0 0
  %3861 = vmatpush1.bf16.msra.mxu0 0
  %3862 = vmatprep.subr.bf16.mxu0 0
  %3863 = vmatpush1.bf16.msra.mxu0 0
  %3864 = vmatprep.subr.bf16.mxu0 0
  %3865 = vmatpush1.bf16.msra.mxu0 0
  %3866 = vmatprep.subr.bf16.mxu0 0
  %3867 = vmatpush1.bf16.msra.mxu0 0
  %3868 = vmatprep.subr.bf16.mxu0 0
  %3869 = vmatpush1.bf16.msra.mxu0 0
  %3870 = vmatprep.subr.bf16.mxu0 0
  %3871 = vmatpush1.bf16.msra.mxu0 0
  %3872 = vmatprep.mubr.bf16.mxu0 0
  %3873 = vmatmul.mubr.bf16.gmra.mrb[0].mxu0 %v3838
  %v3874 = vpop.f32.mrb[0].mxu0
  %v3875 = vadd.f32 0.0, %v3874
  %v3876 = vpop.f32.mrb[0].mxu0
  %v3877 = vpop.f32.mrb[0].mxu0
  %v3878 = vpop.f32.mrb[0].mxu0
  %3879 = vdwg.mxu0
  %v3880 = vadd.f32 %v3832, %v3875
  %v3881 = vld [vmem:[#allocation7 + $0x1a] sm:$0x3]
  %v3882 = vpack.c.bf16 %v3821, %v3821
  %3884 = vrot.lane.b32.xlu0 %v3882, 80
  %v3885 = vpop.permute.xlu0 %3884
  %v3887 = vsel %vm276, %v3885, 0
  %3889 = vmatprep.subr.bf16.mxu0 0
  %3890 = vmatpush1.bf16.msra.mxu0 %v3575
  %3891 = vmatprep.subr.bf16.mxu0 0
  %3892 = vmatpush1.bf16.msra.mxu0 0
  %3893 = vmatprep.subr.bf16.mxu0 0
  %3894 = vmatpush1.bf16.msra.mxu0 0
  %3895 = vmatprep.subr.bf16.mxu0 0
  %3896 = vmatpush1.bf16.msra.mxu0 0
  %3897 = vmatprep.subr.bf16.mxu0 0
  %3898 = vmatpush1.bf16.msra.mxu0 0
  %3899 = vmatprep.subr.bf16.mxu0 0
  %3900 = vmatpush1.bf16.msra.mxu0 0
  %3901 = vmatprep.subr.bf16.mxu0 0
  %3902 = vmatpush1.bf16.msra.mxu0 0
  %3903 = vmatprep.subr.bf16.mxu0 0
  %3904 = vmatpush1.bf16.msra.mxu0 0
  %3905 = vmatprep.subr.bf16.mxu0 0
  %3906 = vmatpush1.bf16.msra.mxu0 0
  %3907 = vmatprep.subr.bf16.mxu0 0
  %3908 = vmatpush1.bf16.msra.mxu0 0
  %3909 = vmatprep.subr.bf16.mxu0 0
  %3910 = vmatpush1.bf16.msra.mxu0 0
  %3911 = vmatprep.subr.bf16.mxu0 0
  %3912 = vmatpush1.bf16.msra.mxu0 0
  %3913 = vmatprep.subr.bf16.mxu0 0
  %3914 = vmatpush1.bf16.msra.mxu0 0
  %3915 = vmatprep.subr.bf16.mxu0 0
  %3916 = vmatpush1.bf16.msra.mxu0 0
  %3917 = vmatprep.subr.bf16.mxu0 0
  %3918 = vmatpush1.bf16.msra.mxu0 0
  %3919 = vmatprep.subr.bf16.mxu0 0
  %3920 = vmatpush1.bf16.msra.mxu0 0
  %3921 = vmatprep.mubr.bf16.mxu0 0
  %3922 = vmatmul.mubr.bf16.gmra.mrb[0].mxu0 %v3887
  %v3923 = vpop.f32.mrb[0].mxu0
  %v3924 = vadd.f32 0.0, %v3923
  %v3925 = vpop.f32.mrb[0].mxu0
  %v3926 = vpop.f32.mrb[0].mxu0
  %v3927 = vpop.f32.mrb[0].mxu0
  %3928 = vdwg.mxu0
  %v3929 = vadd.f32 %v3881, %v3924
  %v3930 = vxor.u32 %v3880, 2147483648
  %v3931 = vmul.f32 %v3930, 1.442695
  %v3932 = vpow.pop %v3931
  %v3933 = vadd.f32 %v3932, 1.0
  %v3934 = vrcp.pop %v3933
  %v3935 = vmul.f32 1.0, %v3934
  %v3936 = vtanh.pop %v3880
  %v3937 = vmul.f32 %v3935, %v3791
  %3939 = vrot.lane.b32.xlu0 %v3936, 96
  %v3940 = vpop.permute.xlu0 %3939
  %v3942 = vmul.f32 %v3935, %v3940
  %3944 = vrot.lane.b32.xlu0 %v3942, 16
  %v3945 = vpop.permute.xlu0 %3944
  %v3947 = vadd.f32 %v3937, %v3945
  %v3948 = vtanh.pop %v3947
  %3950 = vrot.lane.b32.xlu0 %v3948, 32
  %v3951 = vpop.permute.xlu0 %3950
  %v3953 = vmul.f32 %v3935, %v3951
  %v3954 = vxor.u32 %v3929, 2147483648
  %v3955 = vmul.f32 %v3954, 1.442695
  %v3956 = vpow.pop %v3955
  %v3957 = vadd.f32 %v3956, 1.0
  %v3958 = vrcp.pop %v3957
  %v3959 = vmul.f32 1.0, %v3958
  %v3960 = vtanh.pop %v3929
  %v3961 = vmul.f32 %v3959, %v3815
  %3963 = vrot.lane.b32.xlu0 %v3960, 96
  %v3964 = vpop.permute.xlu0 %3963
  %v3966 = vmul.f32 %v3959, %v3964
  %3968 = vrot.lane.b32.xlu0 %v3966, 16
  %v3969 = vpop.permute.xlu0 %3968
  %v3971 = vadd.f32 %v3961, %v3969
  %v3972 = vtanh.pop %v3971
  %3974 = vrot.lane.b32.xlu0 %v3972, 32
  %v3975 = vpop.permute.xlu0 %3974
  %v3977 = vmul.f32 %v3959, %v3975
  %3979 = vrot.lane.b32.xlu0 %v3953, 80
  %v3980 = vpop.permute.xlu0 %3979
  %3982 = vst.msk [vmem:[#allocation8 + $0x4] sm:$0x3] %vm885, %v3980
  %3984 = vrot.lane.b32.xlu0 %v3977, 80
  %v3985 = vpop.permute.xlu0 %3984
  %3987 = vst.msk [vmem:[#allocation9 + $0x1a] sm:$0x3] %vm885, %v3985
  %v3988 = vld [vmem:[#allocation6 + $0x6] sm:$0x3]
  %v3989 = vpack.c.bf16 %v3953, %v3953
  %3991 = vrot.lane.b32.xlu0 %v3989, 80
  %v3992 = vpop.permute.xlu0 %3991
  %v3994 = vsel %vm276, %v3992, 0
  %3996 = vmatprep.subr.bf16.mxu0 0
  %3997 = vmatpush1.bf16.msra.mxu0 %v3527
  %3998 = vmatprep.subr.bf16.mxu0 0
  %3999 = vmatpush1.bf16.msra.mxu0 0
  %4000 = vmatprep.subr.bf16.mxu0 0
  %4001 = vmatpush1.bf16.msra.mxu0 0
  %4002 = vmatprep.subr.bf16.mxu0 0
  %4003 = vmatpush1.bf16.msra.mxu0 0
  %4004 = vmatprep.subr.bf16.mxu0 0
  %4005 = vmatpush1.bf16.msra.mxu0 0
  %4006 = vmatprep.subr.bf16.mxu0 0
  %4007 = vmatpush1.bf16.msra.mxu0 0
  %4008 = vmatprep.subr.bf16.mxu0 0
  %4009 = vmatpush1.bf16.msra.mxu0 0
  %4010 = vmatprep.subr.bf16.mxu0 0
  %4011 = vmatpush1.bf16.msra.mxu0 0
  %4012 = vmatprep.subr.bf16.mxu0 0
  %4013 = vmatpush1.bf16.msra.mxu0 0
  %4014 = vmatprep.subr.bf16.mxu0 0
  %4015 = vmatpush1.bf16.msra.mxu0 0
  %4016 = vmatprep.subr.bf16.mxu0 0
  %4017 = vmatpush1.bf16.msra.mxu0 0
  %4018 = vmatprep.subr.bf16.mxu0 0
  %4019 = vmatpush1.bf16.msra.mxu0 0
  %4020 = vmatprep.subr.bf16.mxu0 0
  %4021 = vmatpush1.bf16.msra.mxu0 0
  %4022 = vmatprep.subr.bf16.mxu0 0
  %4023 = vmatpush1.bf16.msra.mxu0 0
  %4024 = vmatprep.subr.bf16.mxu0 0
  %4025 = vmatpush1.bf16.msra.mxu0 0
  %4026 = vmatprep.subr.bf16.mxu0 0
  %4027 = vmatpush1.bf16.msra.mxu0 0
  %4028 = vmatprep.mubr.bf16.mxu0 0
  %4029 = vmatmul.mubr.bf16.gmra.mrb[0].mxu0 %v3994
  %v4030 = vpop.f32.mrb[0].mxu0
  %v4031 = vadd.f32 0.0, %v4030
  %v4032 = vpop.f32.mrb[0].mxu0
  %v4033 = vpop.f32.mrb[0].mxu0
  %v4034 = vpop.f32.mrb[0].mxu0
  %4035 = vdwg.mxu0
  %v4036 = vadd.f32 %v3988, %v4031
  %v4037 = vld [vmem:[#allocation7 + $0x18] sm:$0x3]
  %v4038 = vpack.c.bf16 %v3977, %v3977
  %4040 = vrot.lane.b32.xlu0 %v4038, 80
  %v4041 = vpop.permute.xlu0 %4040
  %v4043 = vsel %vm276, %v4041, 0
  %4045 = vmatprep.subr.bf16.mxu0 0
  %4046 = vmatpush1.bf16.msra.mxu0 %v3575
  %4047 = vmatprep.subr.bf16.mxu0 0
  %4048 = vmatpush1.bf16.msra.mxu0 0
  %4049 = vmatprep.subr.bf16.mxu0 0
  %4050 = vmatpush1.bf16.msra.mxu0 0
  %4051 = vmatprep.subr.bf16.mxu0 0
  %4052 = vmatpush1.bf16.msra.mxu0 0
  %4053 = vmatprep.subr.bf16.mxu0 0
  %4054 = vmatpush1.bf16.msra.mxu0 0
  %4055 = vmatprep.subr.bf16.mxu0 0
  %4056 = vmatpush1.bf16.msra.mxu0 0
  %4057 = vmatprep.subr.bf16.mxu0 0
  %4058 = vmatpush1.bf16.msra.mxu0 0
  %4059 = vmatprep.subr.bf16.mxu0 0
  %4060 = vmatpush1.bf16.msra.mxu0 0
  %4061 = vmatprep.subr.bf16.mxu0 0
  %4062 = vmatpush1.bf16.msra.mxu0 0
  %4063 = vmatprep.subr.bf16.mxu0 0
  %4064 = vmatpush1.bf16.msra.mxu0 0
  %4065 = vmatprep.subr.bf16.mxu0 0
  %4066 = vmatpush1.bf16.msra.mxu0 0
  %4067 = vmatprep.subr.bf16.mxu0 0
  %4068 = vmatpush1.bf16.msra.mxu0 0
  %4069 = vmatprep.subr.bf16.mxu0 0
  %4070 = vmatpush1.bf16.msra.mxu0 0
  %4071 = vmatprep.subr.bf16.mxu0 0
  %4072 = vmatpush1.bf16.msra.mxu0 0
  %4073 = vmatprep.subr.bf16.mxu0 0
  %4074 = vmatpush1.bf16.msra.mxu0 0
  %4075 = vmatprep.subr.bf16.mxu0 0
  %4076 = vmatpush1.bf16.msra.mxu0 0
  %4077 = vmatprep.mubr.bf16.mxu0 0
  %4078 = vmatmul.mubr.bf16.gmra.mrb[0].mxu0 %v4043
  %v4079 = vpop.f32.mrb[0].mxu0
  %v4080 = vadd.f32 0.0, %v4079
  %v4081 = vpop.f32.mrb[0].mxu0
  %v4082 = vpop.f32.mrb[0].mxu0
  %v4083 = vpop.f32.mrb[0].mxu0
  %4084 = vdwg.mxu0
  %v4085 = vadd.f32 %v4037, %v4080
  %v4086 = vxor.u32 %v4036, 2147483648
  %v4087 = vmul.f32 %v4086, 1.442695
  %v4088 = vpow.pop %v4087
  %v4089 = vadd.f32 %v4088, 1.0
  %v4090 = vrcp.pop %v4089
  %v4091 = vmul.f32 1.0, %v4090
  %v4092 = vtanh.pop %v4036
  %v4093 = vmul.f32 %v4091, %v3947
  %4095 = vrot.lane.b32.xlu0 %v4092, 96
  %v4096 = vpop.permute.xlu0 %4095
  %v4098 = vmul.f32 %v4091, %v4096
  %4100 = vrot.lane.b32.xlu0 %v4098, 16
  %v4101 = vpop.permute.xlu0 %4100
  %v4103 = vadd.f32 %v4093, %v4101
  %v4104 = vtanh.pop %v4103
  %4106 = vrot.lane.b32.xlu0 %v4104, 32
  %v4107 = vpop.permute.xlu0 %4106
  %v4109 = vmul.f32 %v4091, %v4107
  %v4110 = vxor.u32 %v4085, 2147483648
  %v4111 = vmul.f32 %v4110, 1.442695
  %v4112 = vpow.pop %v4111
  %v4113 = vadd.f32 %v4112, 1.0
  %v4114 = vrcp.pop %v4113
  %v4115 = vmul.f32 1.0, %v4114
  %v4116 = vtanh.pop %v4085
  %v4117 = vmul.f32 %v4115, %v3971
  %4119 = vrot.lane.b32.xlu0 %v4116, 96
  %v4120 = vpop.permute.xlu0 %4119
  %v4122 = vmul.f32 %v4115, %v4120
  %4124 = vrot.lane.b32.xlu0 %v4122, 16
  %v4125 = vpop.permute.xlu0 %4124
  %v4127 = vadd.f32 %v4117, %v4125
  %v4128 = vtanh.pop %v4127
  %4130 = vrot.lane.b32.xlu0 %v4128, 32
  %v4131 = vpop.permute.xlu0 %4130
  %v4133 = vmul.f32 %v4115, %v4131
  %4135 = vrot.lane.b32.xlu0 %v4109, 80
  %v4136 = vpop.permute.xlu0 %4135
  %4138 = vst.msk [vmem:[#allocation8 + $0x6] sm:$0x3] %vm885, %v4136
  %4140 = vrot.lane.b32.xlu0 %v4133, 80
  %v4141 = vpop.permute.xlu0 %4140
  %4143 = vst.msk [vmem:[#allocation9 + $0x18] sm:$0x3] %vm885, %v4141
  %v4144 = vld [vmem:[#allocation6 + $0x8] sm:$0x3]
  %v4145 = vpack.c.bf16 %v4109, %v4109
  %4147 = vrot.lane.b32.xlu0 %v4145, 80
  %v4148 = vpop.permute.xlu0 %4147
  %v4150 = vsel %vm276, %v4148, 0
  %4152 = vmatprep.subr.bf16.mxu0 0
  %4153 = vmatpush1.bf16.msra.mxu0 %v3527
  %4154 = vmatprep.subr.bf16.mxu0 0
  %4155 = vmatpush1.bf16.msra.mxu0 0
  %4156 = vmatprep.subr.bf16.mxu0 0
  %4157 = vmatpush1.bf16.msra.mxu0 0
  %4158 = vmatprep.subr.bf16.mxu0 0
  %4159 = vmatpush1.bf16.msra.mxu0 0
  %4160 = vmatprep.subr.bf16.mxu0 0
  %4161 = vmatpush1.bf16.msra.mxu0 0
  %4162 = vmatprep.subr.bf16.mxu0 0
  %4163 = vmatpush1.bf16.msra.mxu0 0
  %4164 = vmatprep.subr.bf16.mxu0 0
  %4165 = vmatpush1.bf16.msra.mxu0 0
  %4166 = vmatprep.subr.bf16.mxu0 0
  %4167 = vmatpush1.bf16.msra.mxu0 0
  %4168 = vmatprep.subr.bf16.mxu0 0
  %4169 = vmatpush1.bf16.msra.mxu0 0
  %4170 = vmatprep.subr.bf16.mxu0 0
  %4171 = vmatpush1.bf16.msra.mxu0 0
  %4172 = vmatprep.subr.bf16.mxu0 0
  %4173 = vmatpush1.bf16.msra.mxu0 0
  %4174 = vmatprep.subr.bf16.mxu0 0
  %4175 = vmatpush1.bf16.msra.mxu0 0
  %4176 = vmatprep.subr.bf16.mxu0 0
  %4177 = vmatpush1.bf16.msra.mxu0 0
  %4178 = vmatprep.subr.bf16.mxu0 0
  %4179 = vmatpush1.bf16.msra.mxu0 0
  %4180 = vmatprep.subr.bf16.mxu0 0
  %4181 = vmatpush1.bf16.msra.mxu0 0
  %4182 = vmatprep.subr.bf16.mxu0 0
  %4183 = vmatpush1.bf16.msra.mxu0 0
  %4184 = vmatprep.mubr.bf16.mxu0 0
  %4185 = vmatmul.mubr.bf16.gmra.mrb[0].mxu0 %v4150
  %v4186 = vpop.f32.mrb[0].mxu0
  %v4187 = vadd.f32 0.0, %v4186
  %v4188 = vpop.f32.mrb[0].mxu0
  %v4189 = vpop.f32.mrb[0].mxu0
  %v4190 = vpop.f32.mrb[0].mxu0
  %4191 = vdwg.mxu0
  %v4192 = vadd.f32 %v4144, %v4187
  %v4193 = vld [vmem:[#allocation7 + $0x16] sm:$0x3]
  %v4194 = vpack.c.bf16 %v4133, %v4133
  %4196 = vrot.lane.b32.xlu0 %v4194, 80
  %v4197 = vpop.permute.xlu0 %4196
  %v4199 = vsel %vm276, %v4197, 0
  %4201 = vmatprep.subr.bf16.mxu0 0
  %4202 = vmatpush1.bf16.msra.mxu0 %v3575
  %4203 = vmatprep.subr.bf16.mxu0 0
  %4204 = vmatpush1.bf16.msra.mxu0 0
  %4205 = vmatprep.subr.bf16.mxu0 0
  %4206 = vmatpush1.bf16.msra.mxu0 0
  %4207 = vmatprep.subr.bf16.mxu0 0
  %4208 = vmatpush1.bf16.msra.mxu0 0
  %4209 = vmatprep.subr.bf16.mxu0 0
  %4210 = vmatpush1.bf16.msra.mxu0 0
  %4211 = vmatprep.subr.bf16.mxu0 0
  %4212 = vmatpush1.bf16.msra.mxu0 0
  %4213 = vmatprep.subr.bf16.mxu0 0
  %4214 = vmatpush1.bf16.msra.mxu0 0
  %4215 = vmatprep.subr.bf16.mxu0 0
  %4216 = vmatpush1.bf16.msra.mxu0 0
  %4217 = vmatprep.subr.bf16.mxu0 0
  %4218 = vmatpush1.bf16.msra.mxu0 0
  %4219 = vmatprep.subr.bf16.mxu0 0
  %4220 = vmatpush1.bf16.msra.mxu0 0
  %4221 = vmatprep.subr.bf16.mxu0 0
  %4222 = vmatpush1.bf16.msra.mxu0 0
  %4223 = vmatprep.subr.bf16.mxu0 0
  %4224 = vmatpush1.bf16.msra.mxu0 0
  %4225 = vmatprep.subr.bf16.mxu0 0
  %4226 = vmatpush1.bf16.msra.mxu0 0
  %4227 = vmatprep.subr.bf16.mxu0 0
  %4228 = vmatpush1.bf16.msra.mxu0 0
  %4229 = vmatprep.subr.bf16.mxu0 0
  %4230 = vmatpush1.bf16.msra.mxu0 0
  %4231 = vmatprep.subr.bf16.mxu0 0
  %4232 = vmatpush1.bf16.msra.mxu0 0
  %4233 = vmatprep.mubr.bf16.mxu0 0
  %4234 = vmatmul.mubr.bf16.gmra.mrb[0].mxu0 %v4199
  %v4235 = vpop.f32.mrb[0].mxu0
  %v4236 = vadd.f32 0.0, %v4235
  %v4237 = vpop.f32.mrb[0].mxu0
  %v4238 = vpop.f32.mrb[0].mxu0
  %v4239 = vpop.f32.mrb[0].mxu0
  %4240 = vdwg.mxu0
  %v4241 = vadd.f32 %v4193, %v4236
  %v4242 = vxor.u32 %v4192, 2147483648
  %v4243 = vmul.f32 %v4242, 1.442695
  %v4244 = vpow.pop %v4243
  %v4245 = vadd.f32 %v4244, 1.0
  %v4246 = vrcp.pop %v4245
  %v4247 = vmul.f32 1.0, %v4246
  %v4248 = vtanh.pop %v4192
  %v4249 = vmul.f32 %v4247, %v4103
  %4251 = vrot.lane.b32.xlu0 %v4248, 96
  %v4252 = vpop.permute.xlu0 %4251
  %v4254 = vmul.f32 %v4247, %v4252
  %4256 = vrot.lane.b32.xlu0 %v4254, 16
  %v4257 = vpop.permute.xlu0 %4256
  %v4259 = vadd.f32 %v4249, %v4257
  %v4260 = vtanh.pop %v4259
  %4262 = vrot.lane.b32.xlu0 %v4260, 32
  %v4263 = vpop.permute.xlu0 %4262
  %v4265 = vmul.f32 %v4247, %v4263
  %v4266 = vxor.u32 %v4241, 2147483648
  %v4267 = vmul.f32 %v4266, 1.442695
  %v4268 = vpow.pop %v4267
  %v4269 = vadd.f32 %v4268, 1.0
  %v4270 = vrcp.pop %v4269
  %v4271 = vmul.f32 1.0, %v4270
  %v4272 = vtanh.pop %v4241
  %v4273 = vmul.f32 %v4271, %v4127
  %4275 = vrot.lane.b32.xlu0 %v4272, 96
  %v4276 = vpop.permute.xlu0 %4275
  %v4278 = vmul.f32 %v4271, %v4276
  %4280 = vrot.lane.b32.xlu0 %v4278, 16
  %v4281 = vpop.permute.xlu0 %4280
  %v4283 = vadd.f32 %v4273, %v4281
  %v4284 = vtanh.pop %v4283
  %4286 = vrot.lane.b32.xlu0 %v4284, 32
  %v4287 = vpop.permute.xlu0 %4286
  %v4289 = vmul.f32 %v4271, %v4287
  %4291 = vrot.lane.b32.xlu0 %v4265, 80
  %v4292 = vpop.permute.xlu0 %4291
  %4294 = vst.msk [vmem:[#allocation8 + $0x8] sm:$0x3] %vm885, %v4292
  %4296 = vrot.lane.b32.xlu0 %v4289, 80
  %v4297 = vpop.permute.xlu0 %4296
  %4299 = vst.msk [vmem:[#allocation9 + $0x16] sm:$0x3] %vm885, %v4297
  %v4300 = vld [vmem:[#allocation6 + $0xa] sm:$0x3]
  %v4301 = vpack.c.bf16 %v4265, %v4265
  %4303 = vrot.lane.b32.xlu0 %v4301, 80
  %v4304 = vpop.permute.xlu0 %4303
  %v4306 = vsel %vm276, %v4304, 0
  %4308 = vmatprep.subr.bf16.mxu0 0
  %4309 = vmatpush1.bf16.msra.mxu0 %v3527
  %4310 = vmatprep.subr.bf16.mxu0 0
  %4311 = vmatpush1.bf16.msra.mxu0 0
  %4312 = vmatprep.subr.bf16.mxu0 0
  %4313 = vmatpush1.bf16.msra.mxu0 0
  %4314 = vmatprep.subr.bf16.mxu0 0
  %4315 = vmatpush1.bf16.msra.mxu0 0
  %4316 = vmatprep.subr.bf16.mxu0 0
  %4317 = vmatpush1.bf16.msra.mxu0 0
  %4318 = vmatprep.subr.bf16.mxu0 0
  %4319 = vmatpush1.bf16.msra.mxu0 0
  %4320 = vmatprep.subr.bf16.mxu0 0
  %4321 = vmatpush1.bf16.msra.mxu0 0
  %4322 = vmatprep.subr.bf16.mxu0 0
  %4323 = vmatpush1.bf16.msra.mxu0 0
  %4324 = vmatprep.subr.bf16.mxu0 0
  %4325 = vmatpush1.bf16.msra.mxu0 0
  %4326 = vmatprep.subr.bf16.mxu0 0
  %4327 = vmatpush1.bf16.msra.mxu0 0
  %4328 = vmatprep.subr.bf16.mxu0 0
  %4329 = vmatpush1.bf16.msra.mxu0 0
  %4330 = vmatprep.subr.bf16.mxu0 0
  %4331 = vmatpush1.bf16.msra.mxu0 0
  %4332 = vmatprep.subr.bf16.mxu0 0
  %4333 = vmatpush1.bf16.msra.mxu0 0
  %4334 = vmatprep.subr.bf16.mxu0 0
  %4335 = vmatpush1.bf16.msra.mxu0 0
  %4336 = vmatprep.subr.bf16.mxu0 0
  %4337 = vmatpush1.bf16.msra.mxu0 0
  %4338 = vmatprep.subr.bf16.mxu0 0
  %4339 = vmatpush1.bf16.msra.mxu0 0
  %4340 = vmatprep.mubr.bf16.mxu0 0
  %4341 = vmatmul.mubr.bf16.gmra.mrb[0].mxu0 %v4306
  %v4342 = vpop.f32.mrb[0].mxu0
  %v4343 = vadd.f32 0.0, %v4342
  %v4344 = vpop.f32.mrb[0].mxu0
  %v4345 = vpop.f32.mrb[0].mxu0
  %v4346 = vpop.f32.mrb[0].mxu0
  %4347 = vdwg.mxu0
  %v4348 = vadd.f32 %v4300, %v4343
  %v4349 = vld [vmem:[#allocation7 + $0x14] sm:$0x3]
  %v4350 = vpack.c.bf16 %v4289, %v4289
  %4352 = vrot.lane.b32.xlu0 %v4350, 80
  %v4353 = vpop.permute.xlu0 %4352
  %v4355 = vsel %vm276, %v4353, 0
  %4357 = vmatprep.subr.bf16.mxu0 0
  %4358 = vmatpush1.bf16.msra.mxu0 %v3575
  %4359 = vmatprep.subr.bf16.mxu0 0
  %4360 = vmatpush1.bf16.msra.mxu0 0
  %4361 = vmatprep.subr.bf16.mxu0 0
  %4362 = vmatpush1.bf16.msra.mxu0 0
  %4363 = vmatprep.subr.bf16.mxu0 0
  %4364 = vmatpush1.bf16.msra.mxu0 0
  %4365 = vmatprep.subr.bf16.mxu0 0
  %4366 = vmatpush1.bf16.msra.mxu0 0
  %4367 = vmatprep.subr.bf16.mxu0 0
  %4368 = vmatpush1.bf16.msra.mxu0 0
  %4369 = vmatprep.subr.bf16.mxu0 0
  %4370 = vmatpush1.bf16.msra.mxu0 0
  %4371 = vmatprep.subr.bf16.mxu0 0
  %4372 = vmatpush1.bf16.msra.mxu0 0
  %4373 = vmatprep.subr.bf16.mxu0 0
  %4374 = vmatpush1.bf16.msra.mxu0 0
  %4375 = vmatprep.subr.bf16.mxu0 0
  %4376 = vmatpush1.bf16.msra.mxu0 0
  %4377 = vmatprep.subr.bf16.mxu0 0
  %4378 = vmatpush1.bf16.msra.mxu0 0
  %4379 = vmatprep.subr.bf16.mxu0 0
  %4380 = vmatpush1.bf16.msra.mxu0 0
  %4381 = vmatprep.subr.bf16.mxu0 0
  %4382 = vmatpush1.bf16.msra.mxu0 0
  %4383 = vmatprep.subr.bf16.mxu0 0
  %4384 = vmatpush1.bf16.msra.mxu0 0
  %4385 = vmatprep.subr.bf16.mxu0 0
  %4386 = vmatpush1.bf16.msra.mxu0 0
  %4387 = vmatprep.subr.bf16.mxu0 0
  %4388 = vmatpush1.bf16.msra.mxu0 0
  %4389 = vmatprep.mubr.bf16.mxu0 0
  %4390 = vmatmul.mubr.bf16.gmra.mrb[0].mxu0 %v4355
  %v4391 = vpop.f32.mrb[0].mxu0
  %v4392 = vadd.f32 0.0, %v4391
  %v4393 = vpop.f32.mrb[0].mxu0
  %v4394 = vpop.f32.mrb[0].mxu0
  %v4395 = vpop.f32.mrb[0].mxu0
  %4396 = vdwg.mxu0
  %v4397 = vadd.f32 %v4349, %v4392
  %v4398 = vxor.u32 %v4348, 2147483648
  %v4399 = vmul.f32 %v4398, 1.442695
  %v4400 = vpow.pop %v4399
  %v4401 = vadd.f32 %v4400, 1.0
  %v4402 = vrcp.pop %v4401
  %v4403 = vmul.f32 1.0, %v4402
  %v4404 = vtanh.pop %v4348
  %v4405 = vmul.f32 %v4403, %v4259
  %4407 = vrot.lane.b32.xlu0 %v4404, 96
  %v4408 = vpop.permute.xlu0 %4407
  %v4410 = vmul.f32 %v4403, %v4408
  %4412 = vrot.lane.b32.xlu0 %v4410, 16
  %v4413 = vpop.permute.xlu0 %4412
  %v4415 = vadd.f32 %v4405, %v4413
  %v4416 = vtanh.pop %v4415
  %4418 = vrot.lane.b32.xlu0 %v4416, 32
  %v4419 = vpop.permute.xlu0 %4418
  %v4421 = vmul.f32 %v4403, %v4419
  %v4422 = vxor.u32 %v4397, 2147483648
  %v4423 = vmul.f32 %v4422, 1.442695
  %v4424 = vpow.pop %v4423
  %v4425 = vadd.f32 %v4424, 1.0
  %v4426 = vrcp.pop %v4425
  %v4427 = vmul.f32 1.0, %v4426
  %v4428 = vtanh.pop %v4397
  %v4429 = vmul.f32 %v4427, %v4283
  %4431 = vrot.lane.b32.xlu0 %v4428, 96
  %v4432 = vpop.permute.xlu0 %4431
  %v4434 = vmul.f32 %v4427, %v4432
  %4436 = vrot.lane.b32.xlu0 %v4434, 16
  %v4437 = vpop.permute.xlu0 %4436
  %v4439 = vadd.f32 %v4429, %v4437
  %v4440 = vtanh.pop %v4439
  %4442 = vrot.lane.b32.xlu0 %v4440, 32
  %v4443 = vpop.permute.xlu0 %4442
  %v4445 = vmul.f32 %v4427, %v4443
  %4447 = vrot.lane.b32.xlu0 %v4421, 80
  %v4448 = vpop.permute.xlu0 %4447
  %4450 = vst.msk [vmem:[#allocation8 + $0xa] sm:$0x3] %vm885, %v4448
  %4452 = vrot.lane.b32.xlu0 %v4445, 80
  %v4453 = vpop.permute.xlu0 %4452
  %4455 = vst.msk [vmem:[#allocation9 + $0x14] sm:$0x3] %vm885, %v4453
  %v4456 = vld [vmem:[#allocation6 + $0xc] sm:$0x3]
  %v4457 = vpack.c.bf16 %v4421, %v4421
  %4459 = vrot.lane.b32.xlu0 %v4457, 80
  %v4460 = vpop.permute.xlu0 %4459
  %v4462 = vsel %vm276, %v4460, 0
  %4464 = vmatprep.subr.bf16.mxu0 0
  %4465 = vmatpush1.bf16.msra.mxu0 %v3527
  %4466 = vmatprep.subr.bf16.mxu0 0
  %4467 = vmatpush1.bf16.msra.mxu0 0
  %4468 = vmatprep.subr.bf16.mxu0 0
  %4469 = vmatpush1.bf16.msra.mxu0 0
  %4470 = vmatprep.subr.bf16.mxu0 0
  %4471 = vmatpush1.bf16.msra.mxu0 0
  %4472 = vmatprep.subr.bf16.mxu0 0
  %4473 = vmatpush1.bf16.msra.mxu0 0
  %4474 = vmatprep.subr.bf16.mxu0 0
  %4475 = vmatpush1.bf16.msra.mxu0 0
  %4476 = vmatprep.subr.bf16.mxu0 0
  %4477 = vmatpush1.bf16.msra.mxu0 0
  %4478 = vmatprep.subr.bf16.mxu0 0
  %4479 = vmatpush1.bf16.msra.mxu0 0
  %4480 = vmatprep.subr.bf16.mxu0 0
  %4481 = vmatpush1.bf16.msra.mxu0 0
  %4482 = vmatprep.subr.bf16.mxu0 0
  %4483 = vmatpush1.bf16.msra.mxu0 0
  %4484 = vmatprep.subr.bf16.mxu0 0
  %4485 = vmatpush1.bf16.msra.mxu0 0
  %4486 = vmatprep.subr.bf16.mxu0 0
  %4487 = vmatpush1.bf16.msra.mxu0 0
  %4488 = vmatprep.subr.bf16.mxu0 0
  %4489 = vmatpush1.bf16.msra.mxu0 0
  %4490 = vmatprep.subr.bf16.mxu0 0
  %4491 = vmatpush1.bf16.msra.mxu0 0
  %4492 = vmatprep.subr.bf16.mxu0 0
  %4493 = vmatpush1.bf16.msra.mxu0 0
  %4494 = vmatprep.subr.bf16.mxu0 0
  %4495 = vmatpush1.bf16.msra.mxu0 0
  %4496 = vmatprep.mubr.bf16.mxu0 0
  %4497 = vmatmul.mubr.bf16.gmra.mrb[0].mxu0 %v4462
  %v4498 = vpop.f32.mrb[0].mxu0
  %v4499 = vadd.f32 0.0, %v4498
  %v4500 = vpop.f32.mrb[0].mxu0
  %v4501 = vpop.f32.mrb[0].mxu0
  %v4502 = vpop.f32.mrb[0].mxu0
  %4503 = vdwg.mxu0
  %v4504 = vadd.f32 %v4456, %v4499
  %v4505 = vld [vmem:[#allocation7 + $0x12] sm:$0x3]
  %v4506 = vpack.c.bf16 %v4445, %v4445
  %4508 = vrot.lane.b32.xlu0 %v4506, 80
  %v4509 = vpop.permute.xlu0 %4508
  %v4511 = vsel %vm276, %v4509, 0
  %4513 = vmatprep.subr.bf16.mxu0 0
  %4514 = vmatpush1.bf16.msra.mxu0 %v3575
  %4515 = vmatprep.subr.bf16.mxu0 0
  %4516 = vmatpush1.bf16.msra.mxu0 0
  %4517 = vmatprep.subr.bf16.mxu0 0
  %4518 = vmatpush1.bf16.msra.mxu0 0
  %4519 = vmatprep.subr.bf16.mxu0 0
  %4520 = vmatpush1.bf16.msra.mxu0 0
  %4521 = vmatprep.subr.bf16.mxu0 0
  %4522 = vmatpush1.bf16.msra.mxu0 0
  %4523 = vmatprep.subr.bf16.mxu0 0
  %4524 = vmatpush1.bf16.msra.mxu0 0
  %4525 = vmatprep.subr.bf16.mxu0 0
  %4526 = vmatpush1.bf16.msra.mxu0 0
  %4527 = vmatprep.subr.bf16.mxu0 0
  %4528 = vmatpush1.bf16.msra.mxu0 0
  %4529 = vmatprep.subr.bf16.mxu0 0
  %4530 = vmatpush1.bf16.msra.mxu0 0
  %4531 = vmatprep.subr.bf16.mxu0 0
  %4532 = vmatpush1.bf16.msra.mxu0 0
  %4533 = vmatprep.subr.bf16.mxu0 0
  %4534 = vmatpush1.bf16.msra.mxu0 0
  %4535 = vmatprep.subr.bf16.mxu0 0
  %4536 = vmatpush1.bf16.msra.mxu0 0
  %4537 = vmatprep.subr.bf16.mxu0 0
  %4538 = vmatpush1.bf16.msra.mxu0 0
  %4539 = vmatprep.subr.bf16.mxu0 0
  %4540 = vmatpush1.bf16.msra.mxu0 0
  %4541 = vmatprep.subr.bf16.mxu0 0
  %4542 = vmatpush1.bf16.msra.mxu0 0
  %4543 = vmatprep.subr.bf16.mxu0 0
  %4544 = vmatpush1.bf16.msra.mxu0 0
  %4545 = vmatprep.mubr.bf16.mxu0 0
  %4546 = vmatmul.mubr.bf16.gmra.mrb[0].mxu0 %v4511
  %v4547 = vpop.f32.mrb[0].mxu0
  %v4548 = vadd.f32 0.0, %v4547
  %v4549 = vpop.f32.mrb[0].mxu0
  %v4550 = vpop.f32.mrb[0].mxu0
  %v4551 = vpop.f32.mrb[0].mxu0
  %4552 = vdwg.mxu0
  %v4553 = vadd.f32 %v4505, %v4548
  %v4554 = vxor.u32 %v4504, 2147483648
  %v4555 = vmul.f32 %v4554, 1.442695
  %v4556 = vpow.pop %v4555
  %v4557 = vadd.f32 %v4556, 1.0
  %v4558 = vrcp.pop %v4557
  %v4559 = vmul.f32 1.0, %v4558
  %v4560 = vtanh.pop %v4504
  %v4561 = vmul.f32 %v4559, %v4415
  %4563 = vrot.lane.b32.xlu0 %v4560, 96
  %v4564 = vpop.permute.xlu0 %4563
  %v4566 = vmul.f32 %v4559, %v4564
  %4568 = vrot.lane.b32.xlu0 %v4566, 16
  %v4569 = vpop.permute.xlu0 %4568
  %v4571 = vadd.f32 %v4561, %v4569
  %v4572 = vtanh.pop %v4571
  %4574 = vrot.lane.b32.xlu0 %v4572, 32
  %v4575 = vpop.permute.xlu0 %4574
  %v4577 = vmul.f32 %v4559, %v4575
  %v4578 = vxor.u32 %v4553, 2147483648
  %v4579 = vmul.f32 %v4578, 1.442695
  %v4580 = vpow.pop %v4579
  %v4581 = vadd.f32 %v4580, 1.0
  %v4582 = vrcp.pop %v4581
  %v4583 = vmul.f32 1.0, %v4582
  %v4584 = vtanh.pop %v4553
  %v4585 = vmul.f32 %v4583, %v4439
  %4587 = vrot.lane.b32.xlu0 %v4584, 96
  %v4588 = vpop.permute.xlu0 %4587
  %v4590 = vmul.f32 %v4583, %v4588
  %4592 = vrot.lane.b32.xlu0 %v4590, 16
  %v4593 = vpop.permute.xlu0 %4592
  %v4595 = vadd.f32 %v4585, %v4593
  %v4596 = vtanh.pop %v4595
  %4598 = vrot.lane.b32.xlu0 %v4596, 32
  %v4599 = vpop.permute.xlu0 %4598
  %v4601 = vmul.f32 %v4583, %v4599
  %4603 = vrot.lane.b32.xlu0 %v4577, 80
  %v4604 = vpop.permute.xlu0 %4603
  %4606 = vst.msk [vmem:[#allocation8 + $0xc] sm:$0x3] %vm885, %v4604
  %4608 = vrot.lane.b32.xlu0 %v4601, 80
  %v4609 = vpop.permute.xlu0 %4608
  %4611 = vst.msk [vmem:[#allocation9 + $0x12] sm:$0x3] %vm885, %v4609
  %v4612 = vld [vmem:[#allocation6 + $0xe] sm:$0x3]
  %v4613 = vpack.c.bf16 %v4577, %v4577
  %4615 = vrot.lane.b32.xlu0 %v4613, 80
  %v4616 = vpop.permute.xlu0 %4615
  %v4618 = vsel %vm276, %v4616, 0
  %4620 = vmatprep.subr.bf16.mxu0 0
  %4621 = vmatpush1.bf16.msra.mxu0 %v3527
  %4622 = vmatprep.subr.bf16.mxu0 0
  %4623 = vmatpush1.bf16.msra.mxu0 0
  %4624 = vmatprep.subr.bf16.mxu0 0
  %4625 = vmatpush1.bf16.msra.mxu0 0
  %4626 = vmatprep.subr.bf16.mxu0 0
  %4627 = vmatpush1.bf16.msra.mxu0 0
  %4628 = vmatprep.subr.bf16.mxu0 0
  %4629 = vmatpush1.bf16.msra.mxu0 0
  %4630 = vmatprep.subr.bf16.mxu0 0
  %4631 = vmatpush1.bf16.msra.mxu0 0
  %4632 = vmatprep.subr.bf16.mxu0 0
  %4633 = vmatpush1.bf16.msra.mxu0 0
  %4634 = vmatprep.subr.bf16.mxu0 0
  %4635 = vmatpush1.bf16.msra.mxu0 0
  %4636 = vmatprep.subr.bf16.mxu0 0
  %4637 = vmatpush1.bf16.msra.mxu0 0
  %4638 = vmatprep.subr.bf16.mxu0 0
  %4639 = vmatpush1.bf16.msra.mxu0 0
  %4640 = vmatprep.subr.bf16.mxu0 0
  %4641 = vmatpush1.bf16.msra.mxu0 0
  %4642 = vmatprep.subr.bf16.mxu0 0
  %4643 = vmatpush1.bf16.msra.mxu0 0
  %4644 = vmatprep.subr.bf16.mxu0 0
  %4645 = vmatpush1.bf16.msra.mxu0 0
  %4646 = vmatprep.subr.bf16.mxu0 0
  %4647 = vmatpush1.bf16.msra.mxu0 0
  %4648 = vmatprep.subr.bf16.mxu0 0
  %4649 = vmatpush1.bf16.msra.mxu0 0
  %4650 = vmatprep.subr.bf16.mxu0 0
  %4651 = vmatpush1.bf16.msra.mxu0 0
  %4652 = vmatprep.mubr.bf16.mxu0 0
  %4653 = vmatmul.mubr.bf16.gmra.mrb[0].mxu0 %v4618
  %v4654 = vpop.f32.mrb[0].mxu0
  %v4655 = vadd.f32 0.0, %v4654
  %v4656 = vpop.f32.mrb[0].mxu0
  %v4657 = vpop.f32.mrb[0].mxu0
  %v4658 = vpop.f32.mrb[0].mxu0
  %4659 = vdwg.mxu0
  %v4660 = vadd.f32 %v4612, %v4655
  %v4661 = vld [vmem:[#allocation7 + $0x10] sm:$0x3]
  %v4662 = vpack.c.bf16 %v4601, %v4601
  %4664 = vrot.lane.b32.xlu0 %v4662, 80
  %v4665 = vpop.permute.xlu0 %4664
  %v4667 = vsel %vm276, %v4665, 0
  %4669 = vmatprep.subr.bf16.mxu0 0
  %4670 = vmatpush1.bf16.msra.mxu0 %v3575
  %4671 = vmatprep.subr.bf16.mxu0 0
  %4672 = vmatpush1.bf16.msra.mxu0 0
  %4673 = vmatprep.subr.bf16.mxu0 0
  %4674 = vmatpush1.bf16.msra.mxu0 0
  %4675 = vmatprep.subr.bf16.mxu0 0
  %4676 = vmatpush1.bf16.msra.mxu0 0
  %4677 = vmatprep.subr.bf16.mxu0 0
  %4678 = vmatpush1.bf16.msra.mxu0 0
  %4679 = vmatprep.subr.bf16.mxu0 0
  %4680 = vmatpush1.bf16.msra.mxu0 0
  %4681 = vmatprep.subr.bf16.mxu0 0
  %4682 = vmatpush1.bf16.msra.mxu0 0
  %4683 = vmatprep.subr.bf16.mxu0 0
  %4684 = vmatpush1.bf16.msra.mxu0 0
  %4685 = vmatprep.subr.bf16.mxu0 0
  %4686 = vmatpush1.bf16.msra.mxu0 0
  %4687 = vmatprep.subr.bf16.mxu0 0
  %4688 = vmatpush1.bf16.msra.mxu0 0
  %4689 = vmatprep.subr.bf16.mxu0 0
  %4690 = vmatpush1.bf16.msra.mxu0 0
  %4691 = vmatprep.subr.bf16.mxu0 0
  %4692 = vmatpush1.bf16.msra.mxu0 0
  %4693 = vmatprep.subr.bf16.mxu0 0
  %4694 = vmatpush1.bf16.msra.mxu0 0
  %4695 = vmatprep.subr.bf16.mxu0 0
  %4696 = vmatpush1.bf16.msra.mxu0 0
  %4697 = vmatprep.subr.bf16.mxu0 0
  %4698 = vmatpush1.bf16.msra.mxu0 0
  %4699 = vmatprep.subr.bf16.mxu0 0
  %4700 = vmatpush1.bf16.msra.mxu0 0
  %4701 = vmatprep.mubr.bf16.mxu0 0
  %4702 = vmatmul.mubr.bf16.gmra.mrb[0].mxu0 %v4667
  %v4703 = vpop.f32.mrb[0].mxu0
  %v4704 = vadd.f32 0.0, %v4703
  %v4705 = vpop.f32.mrb[0].mxu0
  %v4706 = vpop.f32.mrb[0].mxu0
  %v4707 = vpop.f32.mrb[0].mxu0
  %4708 = vdwg.mxu0
  %v4709 = vadd.f32 %v4661, %v4704
  %v4710 = vxor.u32 %v4660, 2147483648
  %v4711 = vmul.f32 %v4710, 1.442695
  %v4712 = vpow.pop %v4711
  %v4713 = vadd.f32 %v4712, 1.0
  %v4714 = vrcp.pop %v4713
  %v4715 = vmul.f32 1.0, %v4714
  %v4716 = vtanh.pop %v4660
  %v4717 = vmul.f32 %v4715, %v4571
  %4719 = vrot.lane.b32.xlu0 %v4716, 96
  %v4720 = vpop.permute.xlu0 %4719
  %v4722 = vmul.f32 %v4715, %v4720
  %4724 = vrot.lane.b32.xlu0 %v4722, 16
  %v4725 = vpop.permute.xlu0 %4724
  %v4727 = vadd.f32 %v4717, %v4725
  %v4728 = vtanh.pop %v4727
  %4730 = vrot.lane.b32.xlu0 %v4728, 32
  %v4731 = vpop.permute.xlu0 %4730
  %v4733 = vmul.f32 %v4715, %v4731
  %v4734 = vxor.u32 %v4709, 2147483648
  %v4735 = vmul.f32 %v4734, 1.442695
  %v4736 = vpow.pop %v4735
  %v4737 = vadd.f32 %v4736, 1.0
  %v4738 = vrcp.pop %v4737
  %v4739 = vmul.f32 1.0, %v4738
  %v4740 = vtanh.pop %v4709
  %v4741 = vmul.f32 %v4739, %v4595
  %4743 = vrot.lane.b32.xlu0 %v4740, 96
  %v4744 = vpop.permute.xlu0 %4743
  %v4746 = vmul.f32 %v4739, %v4744
  %4748 = vrot.lane.b32.xlu0 %v4746, 16
  %v4749 = vpop.permute.xlu0 %4748
  %v4751 = vadd.f32 %v4741, %v4749
  %v4752 = vtanh.pop %v4751
  %4754 = vrot.lane.b32.xlu0 %v4752, 32
  %v4755 = vpop.permute.xlu0 %4754
  %v4757 = vmul.f32 %v4739, %v4755
  %4759 = vrot.lane.b32.xlu0 %v4733, 80
  %v4760 = vpop.permute.xlu0 %4759
  %4762 = vst.msk [vmem:[#allocation8 + $0xe] sm:$0x3] %vm885, %v4760
  %4764 = vrot.lane.b32.xlu0 %v4757, 80
  %v4765 = vpop.permute.xlu0 %4764
  %4767 = vst.msk [vmem:[#allocation9 + $0x10] sm:$0x3] %vm885, %v4765
  %v4768 = vld [vmem:[#allocation6 + $0x10] sm:$0x3]
  %v4769 = vpack.c.bf16 %v4733, %v4733
  %4771 = vrot.lane.b32.xlu0 %v4769, 80
  %v4772 = vpop.permute.xlu0 %4771
  %v4774 = vsel %vm276, %v4772, 0
  %4776 = vmatprep.subr.bf16.mxu0 0
  %4777 = vmatpush1.bf16.msra.mxu0 %v3527
  %4778 = vmatprep.subr.bf16.mxu0 0
  %4779 = vmatpush1.bf16.msra.mxu0 0
  %4780 = vmatprep.subr.bf16.mxu0 0
  %4781 = vmatpush1.bf16.msra.mxu0 0
  %4782 = vmatprep.subr.bf16.mxu0 0
  %4783 = vmatpush1.bf16.msra.mxu0 0
  %4784 = vmatprep.subr.bf16.mxu0 0
  %4785 = vmatpush1.bf16.msra.mxu0 0
  %4786 = vmatprep.subr.bf16.mxu0 0
  %4787 = vmatpush1.bf16.msra.mxu0 0
  %4788 = vmatprep.subr.bf16.mxu0 0
  %4789 = vmatpush1.bf16.msra.mxu0 0
  %4790 = vmatprep.subr.bf16.mxu0 0
  %4791 = vmatpush1.bf16.msra.mxu0 0
  %4792 = vmatprep.subr.bf16.mxu0 0
  %4793 = vmatpush1.bf16.msra.mxu0 0
  %4794 = vmatprep.subr.bf16.mxu0 0
  %4795 = vmatpush1.bf16.msra.mxu0 0
  %4796 = vmatprep.subr.bf16.mxu0 0
  %4797 = vmatpush1.bf16.msra.mxu0 0
  %4798 = vmatprep.subr.bf16.mxu0 0
  %4799 = vmatpush1.bf16.msra.mxu0 0
  %4800 = vmatprep.subr.bf16.mxu0 0
  %4801 = vmatpush1.bf16.msra.mxu0 0
  %4802 = vmatprep.subr.bf16.mxu0 0
  %4803 = vmatpush1.bf16.msra.mxu0 0
  %4804 = vmatprep.subr.bf16.mxu0 0
  %4805 = vmatpush1.bf16.msra.mxu0 0
  %4806 = vmatprep.subr.bf16.mxu0 0
  %4807 = vmatpush1.bf16.msra.mxu0 0
  %4808 = vmatprep.mubr.bf16.mxu0 0
  %4809 = vmatmul.mubr.bf16.gmra.mrb[0].mxu0 %v4774
  %v4810 = vpop.f32.mrb[0].mxu0
  %v4811 = vadd.f32 0.0, %v4810
  %v4812 = vpop.f32.mrb[0].mxu0
  %v4813 = vpop.f32.mrb[0].mxu0
  %v4814 = vpop.f32.mrb[0].mxu0
  %4815 = vdwg.mxu0
  %v4816 = vadd.f32 %v4768, %v4811
  %v4817 = vld [vmem:[#allocation7 + $0xe] sm:$0x3]
  %v4818 = vpack.c.bf16 %v4757, %v4757
  %4820 = vrot.lane.b32.xlu0 %v4818, 80
  %v4821 = vpop.permute.xlu0 %4820
  %v4823 = vsel %vm276, %v4821, 0
  %4825 = vmatprep.subr.bf16.mxu0 0
  %4826 = vmatpush1.bf16.msra.mxu0 %v3575
  %4827 = vmatprep.subr.bf16.mxu0 0
  %4828 = vmatpush1.bf16.msra.mxu0 0
  %4829 = vmatprep.subr.bf16.mxu0 0
  %4830 = vmatpush1.bf16.msra.mxu0 0
  %4831 = vmatprep.subr.bf16.mxu0 0
  %4832 = vmatpush1.bf16.msra.mxu0 0
  %4833 = vmatprep.subr.bf16.mxu0 0
  %4834 = vmatpush1.bf16.msra.mxu0 0
  %4835 = vmatprep.subr.bf16.mxu0 0
  %4836 = vmatpush1.bf16.msra.mxu0 0
  %4837 = vmatprep.subr.bf16.mxu0 0
  %4838 = vmatpush1.bf16.msra.mxu0 0
  %4839 = vmatprep.subr.bf16.mxu0 0
  %4840 = vmatpush1.bf16.msra.mxu0 0
  %4841 = vmatprep.subr.bf16.mxu0 0
  %4842 = vmatpush1.bf16.msra.mxu0 0
  %4843 = vmatprep.subr.bf16.mxu0 0
  %4844 = vmatpush1.bf16.msra.mxu0 0
  %4845 = vmatprep.subr.bf16.mxu0 0
  %4846 = vmatpush1.bf16.msra.mxu0 0
  %4847 = vmatprep.subr.bf16.mxu0 0
  %4848 = vmatpush1.bf16.msra.mxu0 0
  %4849 = vmatprep.subr.bf16.mxu0 0
  %4850 = vmatpush1.bf16.msra.mxu0 0
  %4851 = vmatprep.subr.bf16.mxu0 0
  %4852 = vmatpush1.bf16.msra.mxu0 0
  %4853 = vmatprep.subr.bf16.mxu0 0
  %4854 = vmatpush1.bf16.msra.mxu0 0
  %4855 = vmatprep.subr.bf16.mxu0 0
  %4856 = vmatpush1.bf16.msra.mxu0 0
  %4857 = vmatprep.mubr.bf16.mxu0 0
  %4858 = vmatmul.mubr.bf16.gmra.mrb[0].mxu0 %v4823
  %v4859 = vpop.f32.mrb[0].mxu0
  %v4860 = vadd.f32 0.0, %v4859
  %v4861 = vpop.f32.mrb[0].mxu0
  %v4862 = vpop.f32.mrb[0].mxu0
  %v4863 = vpop.f32.mrb[0].mxu0
  %4864 = vdwg.mxu0
  %v4865 = vadd.f32 %v4817, %v4860
  %v4866 = vxor.u32 %v4816, 2147483648
  %v4867 = vmul.f32 %v4866, 1.442695
  %v4868 = vpow.pop %v4867
  %v4869 = vadd.f32 %v4868, 1.0
  %v4870 = vrcp.pop %v4869
  %v4871 = vmul.f32 1.0, %v4870
  %v4872 = vtanh.pop %v4816
  %v4873 = vmul.f32 %v4871, %v4727
  %4875 = vrot.lane.b32.xlu0 %v4872, 96
  %v4876 = vpop.permute.xlu0 %4875
  %v4878 = vmul.f32 %v4871, %v4876
  %4880 = vrot.lane.b32.xlu0 %v4878, 16
  %v4881 = vpop.permute.xlu0 %4880
  %v4883 = vadd.f32 %v4873, %v4881
  %v4884 = vtanh.pop %v4883
  %4886 = vrot.lane.b32.xlu0 %v4884, 32
  %v4887 = vpop.permute.xlu0 %4886
  %v4889 = vmul.f32 %v4871, %v4887
  %v4890 = vxor.u32 %v4865, 2147483648
  %v4891 = vmul.f32 %v4890, 1.442695
  %v4892 = vpow.pop %v4891
  %v4893 = vadd.f32 %v4892, 1.0
  %v4894 = vrcp.pop %v4893
  %v4895 = vmul.f32 1.0, %v4894
  %v4896 = vtanh.pop %v4865
  %v4897 = vmul.f32 %v4895, %v4751
  %4899 = vrot.lane.b32.xlu0 %v4896, 96
  %v4900 = vpop.permute.xlu0 %4899
  %v4902 = vmul.f32 %v4895, %v4900
  %4904 = vrot.lane.b32.xlu0 %v4902, 16
  %v4905 = vpop.permute.xlu0 %4904
  %v4907 = vadd.f32 %v4897, %v4905
  %v4908 = vtanh.pop %v4907
  %4910 = vrot.lane.b32.xlu0 %v4908, 32
  %v4911 = vpop.permute.xlu0 %4910
  %v4913 = vmul.f32 %v4895, %v4911
  %4915 = vrot.lane.b32.xlu0 %v4889, 80
  %v4916 = vpop.permute.xlu0 %4915
  %4918 = vst.msk [vmem:[#allocation8 + $0x10] sm:$0x3] %vm885, %v4916
  %4920 = vrot.lane.b32.xlu0 %v4913, 80
  %v4921 = vpop.permute.xlu0 %4920
  %4923 = vst.msk [vmem:[#allocation9 + $0xe] sm:$0x3] %vm885, %v4921
  %v4924 = vld [vmem:[#allocation6 + $0x12] sm:$0x3]
  %v4925 = vpack.c.bf16 %v4889, %v4889
  %4927 = vrot.lane.b32.xlu0 %v4925, 80
  %v4928 = vpop.permute.xlu0 %4927
  %v4930 = vsel %vm276, %v4928, 0
  %4932 = vmatprep.subr.bf16.mxu0 0
  %4933 = vmatpush1.bf16.msra.mxu0 %v3527
  %4934 = vmatprep.subr.bf16.mxu0 0
  %4935 = vmatpush1.bf16.msra.mxu0 0
  %4936 = vmatprep.subr.bf16.mxu0 0
  %4937 = vmatpush1.bf16.msra.mxu0 0
  %4938 = vmatprep.subr.bf16.mxu0 0
  %4939 = vmatpush1.bf16.msra.mxu0 0
  %4940 = vmatprep.subr.bf16.mxu0 0
  %4941 = vmatpush1.bf16.msra.mxu0 0
  %4942 = vmatprep.subr.bf16.mxu0 0
  %4943 = vmatpush1.bf16.msra.mxu0 0
  %4944 = vmatprep.subr.bf16.mxu0 0
  %4945 = vmatpush1.bf16.msra.mxu0 0
  %4946 = vmatprep.subr.bf16.mxu0 0
  %4947 = vmatpush1.bf16.msra.mxu0 0
  %4948 = vmatprep.subr.bf16.mxu0 0
  %4949 = vmatpush1.bf16.msra.mxu0 0
  %4950 = vmatprep.subr.bf16.mxu0 0
  %4951 = vmatpush1.bf16.msra.mxu0 0
  %4952 = vmatprep.subr.bf16.mxu0 0
  %4953 = vmatpush1.bf16.msra.mxu0 0
  %4954 = vmatprep.subr.bf16.mxu0 0
  %4955 = vmatpush1.bf16.msra.mxu0 0
  %4956 = vmatprep.subr.bf16.mxu0 0
  %4957 = vmatpush1.bf16.msra.mxu0 0
  %4958 = vmatprep.subr.bf16.mxu0 0
  %4959 = vmatpush1.bf16.msra.mxu0 0
  %4960 = vmatprep.subr.bf16.mxu0 0
  %4961 = vmatpush1.bf16.msra.mxu0 0
  %4962 = vmatprep.subr.bf16.mxu0 0
  %4963 = vmatpush1.bf16.msra.mxu0 0
  %4964 = vmatprep.mubr.bf16.mxu0 0
  %4965 = vmatmul.mubr.bf16.gmra.mrb[0].mxu0 %v4930
  %v4966 = vpop.f32.mrb[0].mxu0
  %v4967 = vadd.f32 0.0, %v4966
  %v4968 = vpop.f32.mrb[0].mxu0
  %v4969 = vpop.f32.mrb[0].mxu0
  %v4970 = vpop.f32.mrb[0].mxu0
  %4971 = vdwg.mxu0
  %v4972 = vadd.f32 %v4924, %v4967
  %v4973 = vld [vmem:[#allocation7 + $0xc] sm:$0x3]
  %v4974 = vpack.c.bf16 %v4913, %v4913
  %4976 = vrot.lane.b32.xlu0 %v4974, 80
  %v4977 = vpop.permute.xlu0 %4976
  %v4979 = vsel %vm276, %v4977, 0
  %4981 = vmatprep.subr.bf16.mxu0 0
  %4982 = vmatpush1.bf16.msra.mxu0 %v3575
  %4983 = vmatprep.subr.bf16.mxu0 0
  %4984 = vmatpush1.bf16.msra.mxu0 0
  %4985 = vmatprep.subr.bf16.mxu0 0
  %4986 = vmatpush1.bf16.msra.mxu0 0
  %4987 = vmatprep.subr.bf16.mxu0 0
  %4988 = vmatpush1.bf16.msra.mxu0 0
  %4989 = vmatprep.subr.bf16.mxu0 0
  %4990 = vmatpush1.bf16.msra.mxu0 0
  %4991 = vmatprep.subr.bf16.mxu0 0
  %4992 = vmatpush1.bf16.msra.mxu0 0
  %4993 = vmatprep.subr.bf16.mxu0 0
  %4994 = vmatpush1.bf16.msra.mxu0 0
  %4995 = vmatprep.subr.bf16.mxu0 0
  %4996 = vmatpush1.bf16.msra.mxu0 0
  %4997 = vmatprep.subr.bf16.mxu0 0
  %4998 = vmatpush1.bf16.msra.mxu0 0
  %4999 = vmatprep.subr.bf16.mxu0 0
  %5000 = vmatpush1.bf16.msra.mxu0 0
  %5001 = vmatprep.subr.bf16.mxu0 0
  %5002 = vmatpush1.bf16.msra.mxu0 0
  %5003 = vmatprep.subr.bf16.mxu0 0
  %5004 = vmatpush1.bf16.msra.mxu0 0
  %5005 = vmatprep.subr.bf16.mxu0 0
  %5006 = vmatpush1.bf16.msra.mxu0 0
  %5007 = vmatprep.subr.bf16.mxu0 0
  %5008 = vmatpush1.bf16.msra.mxu0 0
  %5009 = vmatprep.subr.bf16.mxu0 0
  %5010 = vmatpush1.bf16.msra.mxu0 0
  %5011 = vmatprep.subr.bf16.mxu0 0
  %5012 = vmatpush1.bf16.msra.mxu0 0
  %5013 = vmatprep.mubr.bf16.mxu0 0
  %5014 = vmatmul.mubr.bf16.gmra.mrb[0].mxu0 %v4979
  %v5015 = vpop.f32.mrb[0].mxu0
  %v5016 = vadd.f32 0.0, %v5015
  %v5017 = vpop.f32.mrb[0].mxu0
  %v5018 = vpop.f32.mrb[0].mxu0
  %v5019 = vpop.f32.mrb[0].mxu0
  %5020 = vdwg.mxu0
  %v5021 = vadd.f32 %v4973, %v5016
  %v5022 = vxor.u32 %v4972, 2147483648
  %v5023 = vmul.f32 %v5022, 1.442695
  %v5024 = vpow.pop %v5023
  %v5025 = vadd.f32 %v5024, 1.0
  %v5026 = vrcp.pop %v5025
  %v5027 = vmul.f32 1.0, %v5026
  %v5028 = vtanh.pop %v4972
  %v5029 = vmul.f32 %v5027, %v4883
  %5031 = vrot.lane.b32.xlu0 %v5028, 96
  %v5032 = vpop.permute.xlu0 %5031
  %v5034 = vmul.f32 %v5027, %v5032
  %5036 = vrot.lane.b32.xlu0 %v5034, 16
  %v5037 = vpop.permute.xlu0 %5036
  %v5039 = vadd.f32 %v5029, %v5037
  %v5040 = vtanh.pop %v5039
  %5042 = vrot.lane.b32.xlu0 %v5040, 32
  %v5043 = vpop.permute.xlu0 %5042
  %v5045 = vmul.f32 %v5027, %v5043
  %v5046 = vxor.u32 %v5021, 2147483648
  %v5047 = vmul.f32 %v5046, 1.442695
  %v5048 = vpow.pop %v5047
  %v5049 = vadd.f32 %v5048, 1.0
  %v5050 = vrcp.pop %v5049
  %v5051 = vmul.f32 1.0, %v5050
  %v5052 = vtanh.pop %v5021
  %v5053 = vmul.f32 %v5051, %v4907
  %5055 = vrot.lane.b32.xlu0 %v5052, 96
  %v5056 = vpop.permute.xlu0 %5055
  %v5058 = vmul.f32 %v5051, %v5056
  %5060 = vrot.lane.b32.xlu0 %v5058, 16
  %v5061 = vpop.permute.xlu0 %5060
  %v5063 = vadd.f32 %v5053, %v5061
  %v5064 = vtanh.pop %v5063
  %5066 = vrot.lane.b32.xlu0 %v5064, 32
  %v5067 = vpop.permute.xlu0 %5066
  %v5069 = vmul.f32 %v5051, %v5067
  %5071 = vrot.lane.b32.xlu0 %v5045, 80
  %v5072 = vpop.permute.xlu0 %5071
  %5074 = vst.msk [vmem:[#allocation8 + $0x12] sm:$0x3] %vm885, %v5072
  %5076 = vrot.lane.b32.xlu0 %v5069, 80
  %v5077 = vpop.permute.xlu0 %5076
  %5079 = vst.msk [vmem:[#allocation9 + $0xc] sm:$0x3] %vm885, %v5077
  %v5080 = vld [vmem:[#allocation6 + $0x14] sm:$0x3]
  %v5081 = vpack.c.bf16 %v5045, %v5045
  %5083 = vrot.lane.b32.xlu0 %v5081, 80
  %v5084 = vpop.permute.xlu0 %5083
  %v5086 = vsel %vm276, %v5084, 0
  %5088 = vmatprep.subr.bf16.mxu0 0
  %5089 = vmatpush1.bf16.msra.mxu0 %v3527
  %5090 = vmatprep.subr.bf16.mxu0 0
  %5091 = vmatpush1.bf16.msra.mxu0 0
  %5092 = vmatprep.subr.bf16.mxu0 0
  %5093 = vmatpush1.bf16.msra.mxu0 0
  %5094 = vmatprep.subr.bf16.mxu0 0
  %5095 = vmatpush1.bf16.msra.mxu0 0
  %5096 = vmatprep.subr.bf16.mxu0 0
  %5097 = vmatpush1.bf16.msra.mxu0 0
  %5098 = vmatprep.subr.bf16.mxu0 0
  %5099 = vmatpush1.bf16.msra.mxu0 0
  %5100 = vmatprep.subr.bf16.mxu0 0
  %5101 = vmatpush1.bf16.msra.mxu0 0
  %5102 = vmatprep.subr.bf16.mxu0 0
  %5103 = vmatpush1.bf16.msra.mxu0 0
  %5104 = vmatprep.subr.bf16.mxu0 0
  %5105 = vmatpush1.bf16.msra.mxu0 0
  %5106 = vmatprep.subr.bf16.mxu0 0
  %5107 = vmatpush1.bf16.msra.mxu0 0
  %5108 = vmatprep.subr.bf16.mxu0 0
  %5109 = vmatpush1.bf16.msra.mxu0 0
  %5110 = vmatprep.subr.bf16.mxu0 0
  %5111 = vmatpush1.bf16.msra.mxu0 0
  %5112 = vmatprep.subr.bf16.mxu0 0
  %5113 = vmatpush1.bf16.msra.mxu0 0
  %5114 = vmatprep.subr.bf16.mxu0 0
  %5115 = vmatpush1.bf16.msra.mxu0 0
  %5116 = vmatprep.subr.bf16.mxu0 0
  %5117 = vmatpush1.bf16.msra.mxu0 0
  %5118 = vmatprep.subr.bf16.mxu0 0
  %5119 = vmatpush1.bf16.msra.mxu0 0
  %5120 = vmatprep.mubr.bf16.mxu0 0
  %5121 = vmatmul.mubr.bf16.gmra.mrb[0].mxu0 %v5086
  %v5122 = vpop.f32.mrb[0].mxu0
  %v5123 = vadd.f32 0.0, %v5122
  %v5124 = vpop.f32.mrb[0].mxu0
  %v5125 = vpop.f32.mrb[0].mxu0
  %v5126 = vpop.f32.mrb[0].mxu0
  %5127 = vdwg.mxu0
  %v5128 = vadd.f32 %v5080, %v5123
  %v5129 = vld [vmem:[#allocation7 + $0xa] sm:$0x3]
  %v5130 = vpack.c.bf16 %v5069, %v5069
  %5132 = vrot.lane.b32.xlu0 %v5130, 80
  %v5133 = vpop.permute.xlu0 %5132
  %v5135 = vsel %vm276, %v5133, 0
  %5137 = vmatprep.subr.bf16.mxu0 0
  %5138 = vmatpush1.bf16.msra.mxu0 %v3575
  %5139 = vmatprep.subr.bf16.mxu0 0
  %5140 = vmatpush1.bf16.msra.mxu0 0
  %5141 = vmatprep.subr.bf16.mxu0 0
  %5142 = vmatpush1.bf16.msra.mxu0 0
  %5143 = vmatprep.subr.bf16.mxu0 0
  %5144 = vmatpush1.bf16.msra.mxu0 0
  %5145 = vmatprep.subr.bf16.mxu0 0
  %5146 = vmatpush1.bf16.msra.mxu0 0
  %5147 = vmatprep.subr.bf16.mxu0 0
  %5148 = vmatpush1.bf16.msra.mxu0 0
  %5149 = vmatprep.subr.bf16.mxu0 0
  %5150 = vmatpush1.bf16.msra.mxu0 0
  %5151 = vmatprep.subr.bf16.mxu0 0
  %5152 = vmatpush1.bf16.msra.mxu0 0
  %5153 = vmatprep.subr.bf16.mxu0 0
  %5154 = vmatpush1.bf16.msra.mxu0 0
  %5155 = vmatprep.subr.bf16.mxu0 0
  %5156 = vmatpush1.bf16.msra.mxu0 0
  %5157 = vmatprep.subr.bf16.mxu0 0
  %5158 = vmatpush1.bf16.msra.mxu0 0
  %5159 = vmatprep.subr.bf16.mxu0 0
  %5160 = vmatpush1.bf16.msra.mxu0 0
  %5161 = vmatprep.subr.bf16.mxu0 0
  %5162 = vmatpush1.bf16.msra.mxu0 0
  %5163 = vmatprep.subr.bf16.mxu0 0
  %5164 = vmatpush1.bf16.msra.mxu0 0
  %5165 = vmatprep.subr.bf16.mxu0 0
  %5166 = vmatpush1.bf16.msra.mxu0 0
  %5167 = vmatprep.subr.bf16.mxu0 0
  %5168 = vmatpush1.bf16.msra.mxu0 0
  %5169 = vmatprep.mubr.bf16.mxu0 0
  %5170 = vmatmul.mubr.bf16.gmra.mrb[0].mxu0 %v5135
  %v5171 = vpop.f32.mrb[0].mxu0
  %v5172 = vadd.f32 0.0, %v5171
  %v5173 = vpop.f32.mrb[0].mxu0
  %v5174 = vpop.f32.mrb[0].mxu0
  %v5175 = vpop.f32.mrb[0].mxu0
  %5176 = vdwg.mxu0
  %v5177 = vadd.f32 %v5129, %v5172
  %v5178 = vxor.u32 %v5128, 2147483648
  %v5179 = vmul.f32 %v5178, 1.442695
  %v5180 = vpow.pop %v5179
  %v5181 = vadd.f32 %v5180, 1.0
  %v5182 = vrcp.pop %v5181
  %v5183 = vmul.f32 1.0, %v5182
  %v5184 = vtanh.pop %v5128
  %v5185 = vmul.f32 %v5183, %v5039
  %5187 = vrot.lane.b32.xlu0 %v5184, 96
  %v5188 = vpop.permute.xlu0 %5187
  %v5190 = vmul.f32 %v5183, %v5188
  %5192 = vrot.lane.b32.xlu0 %v5190, 16
  %v5193 = vpop.permute.xlu0 %5192
  %v5195 = vadd.f32 %v5185, %v5193
  %v5196 = vtanh.pop %v5195
  %5198 = vrot.lane.b32.xlu0 %v5196, 32
  %v5199 = vpop.permute.xlu0 %5198
  %v5201 = vmul.f32 %v5183, %v5199
  %v5202 = vxor.u32 %v5177, 2147483648
  %v5203 = vmul.f32 %v5202, 1.442695
  %v5204 = vpow.pop %v5203
  %v5205 = vadd.f32 %v5204, 1.0
  %v5206 = vrcp.pop %v5205
  %v5207 = vmul.f32 1.0, %v5206
  %v5208 = vtanh.pop %v5177
  %v5209 = vmul.f32 %v5207, %v5063
  %5211 = vrot.lane.b32.xlu0 %v5208, 96
  %v5212 = vpop.permute.xlu0 %5211
  %v5214 = vmul.f32 %v5207, %v5212
  %5216 = vrot.lane.b32.xlu0 %v5214, 16
  %v5217 = vpop.permute.xlu0 %5216
  %v5219 = vadd.f32 %v5209, %v5217
  %v5220 = vtanh.pop %v5219
  %5222 = vrot.lane.b32.xlu0 %v5220, 32
  %v5223 = vpop.permute.xlu0 %5222
  %v5225 = vmul.f32 %v5207, %v5223
  %5227 = vrot.lane.b32.xlu0 %v5201, 80
  %v5228 = vpop.permute.xlu0 %5227
  %5230 = vst.msk [vmem:[#allocation8 + $0x14] sm:$0x3] %vm885, %v5228
  %5232 = vrot.lane.b32.xlu0 %v5225, 80
  %v5233 = vpop.permute.xlu0 %5232
  %5235 = vst.msk [vmem:[#allocation9 + $0xa] sm:$0x3] %vm885, %v5233
  %v5236 = vld [vmem:[#allocation6 + $0x16] sm:$0x3]
  %v5237 = vpack.c.bf16 %v5201, %v5201
  %5239 = vrot.lane.b32.xlu0 %v5237, 80
  %v5240 = vpop.permute.xlu0 %5239
  %v5242 = vsel %vm276, %v5240, 0
  %5244 = vmatprep.subr.bf16.mxu0 0
  %5245 = vmatpush1.bf16.msra.mxu0 %v3527
  %5246 = vmatprep.subr.bf16.mxu0 0
  %5247 = vmatpush1.bf16.msra.mxu0 0
  %5248 = vmatprep.subr.bf16.mxu0 0
  %5249 = vmatpush1.bf16.msra.mxu0 0
  %5250 = vmatprep.subr.bf16.mxu0 0
  %5251 = vmatpush1.bf16.msra.mxu0 0
  %5252 = vmatprep.subr.bf16.mxu0 0
  %5253 = vmatpush1.bf16.msra.mxu0 0
  %5254 = vmatprep.subr.bf16.mxu0 0
  %5255 = vmatpush1.bf16.msra.mxu0 0
  %5256 = vmatprep.subr.bf16.mxu0 0
  %5257 = vmatpush1.bf16.msra.mxu0 0
  %5258 = vmatprep.subr.bf16.mxu0 0
  %5259 = vmatpush1.bf16.msra.mxu0 0
  %5260 = vmatprep.subr.bf16.mxu0 0
  %5261 = vmatpush1.bf16.msra.mxu0 0
  %5262 = vmatprep.subr.bf16.mxu0 0
  %5263 = vmatpush1.bf16.msra.mxu0 0
  %5264 = vmatprep.subr.bf16.mxu0 0
  %5265 = vmatpush1.bf16.msra.mxu0 0
  %5266 = vmatprep.subr.bf16.mxu0 0
  %5267 = vmatpush1.bf16.msra.mxu0 0
  %5268 = vmatprep.subr.bf16.mxu0 0
  %5269 = vmatpush1.bf16.msra.mxu0 0
  %5270 = vmatprep.subr.bf16.mxu0 0
  %5271 = vmatpush1.bf16.msra.mxu0 0
  %5272 = vmatprep.subr.bf16.mxu0 0
  %5273 = vmatpush1.bf16.msra.mxu0 0
  %5274 = vmatprep.subr.bf16.mxu0 0
  %5275 = vmatpush1.bf16.msra.mxu0 0
  %5276 = vmatprep.mubr.bf16.mxu0 0
  %5277 = vmatmul.mubr.bf16.gmra.mrb[0].mxu0 %v5242
  %v5278 = vpop.f32.mrb[0].mxu0
  %v5279 = vadd.f32 0.0, %v5278
  %v5280 = vpop.f32.mrb[0].mxu0
  %v5281 = vpop.f32.mrb[0].mxu0
  %v5282 = vpop.f32.mrb[0].mxu0
  %5283 = vdwg.mxu0
  %v5284 = vadd.f32 %v5236, %v5279
  %v5285 = vld [vmem:[#allocation7 + $0x8] sm:$0x3]
  %v5286 = vpack.c.bf16 %v5225, %v5225
  %5288 = vrot.lane.b32.xlu0 %v5286, 80
  %v5289 = vpop.permute.xlu0 %5288
  %v5291 = vsel %vm276, %v5289, 0
  %5293 = vmatprep.subr.bf16.mxu0 0
  %5294 = vmatpush1.bf16.msra.mxu0 %v3575
  %5295 = vmatprep.subr.bf16.mxu0 0
  %5296 = vmatpush1.bf16.msra.mxu0 0
  %5297 = vmatprep.subr.bf16.mxu0 0
  %5298 = vmatpush1.bf16.msra.mxu0 0
  %5299 = vmatprep.subr.bf16.mxu0 0
  %5300 = vmatpush1.bf16.msra.mxu0 0
  %5301 = vmatprep.subr.bf16.mxu0 0
  %5302 = vmatpush1.bf16.msra.mxu0 0
  %5303 = vmatprep.subr.bf16.mxu0 0
  %5304 = vmatpush1.bf16.msra.mxu0 0
  %5305 = vmatprep.subr.bf16.mxu0 0
  %5306 = vmatpush1.bf16.msra.mxu0 0
  %5307 = vmatprep.subr.bf16.mxu0 0
  %5308 = vmatpush1.bf16.msra.mxu0 0
  %5309 = vmatprep.subr.bf16.mxu0 0
  %5310 = vmatpush1.bf16.msra.mxu0 0
  %5311 = vmatprep.subr.bf16.mxu0 0
  %5312 = vmatpush1.bf16.msra.mxu0 0
  %5313 = vmatprep.subr.bf16.mxu0 0
  %5314 = vmatpush1.bf16.msra.mxu0 0
  %5315 = vmatprep.subr.bf16.mxu0 0
  %5316 = vmatpush1.bf16.msra.mxu0 0
  %5317 = vmatprep.subr.bf16.mxu0 0
  %5318 = vmatpush1.bf16.msra.mxu0 0
  %5319 = vmatprep.subr.bf16.mxu0 0
  %5320 = vmatpush1.bf16.msra.mxu0 0
  %5321 = vmatprep.subr.bf16.mxu0 0
  %5322 = vmatpush1.bf16.msra.mxu0 0
  %5323 = vmatprep.subr.bf16.mxu0 0
  %5324 = vmatpush1.bf16.msra.mxu0 0
  %5325 = vmatprep.mubr.bf16.mxu0 0
  %5326 = vmatmul.mubr.bf16.gmra.mrb[0].mxu0 %v5291
  %v5327 = vpop.f32.mrb[0].mxu0
  %v5328 = vadd.f32 0.0, %v5327
  %v5329 = vpop.f32.mrb[0].mxu0
  %v5330 = vpop.f32.mrb[0].mxu0
  %v5331 = vpop.f32.mrb[0].mxu0
  %5332 = vdwg.mxu0
  %v5333 = vadd.f32 %v5285, %v5328
  %v5334 = vxor.u32 %v5284, 2147483648
  %v5335 = vmul.f32 %v5334, 1.442695
  %v5336 = vpow.pop %v5335
  %v5337 = vadd.f32 %v5336, 1.0
  %v5338 = vrcp.pop %v5337
  %v5339 = vmul.f32 1.0, %v5338
  %v5340 = vtanh.pop %v5284
  %v5341 = vmul.f32 %v5339, %v5195
  %5343 = vrot.lane.b32.xlu0 %v5340, 96
  %v5344 = vpop.permute.xlu0 %5343
  %v5346 = vmul.f32 %v5339, %v5344
  %5348 = vrot.lane.b32.xlu0 %v5346, 16
  %v5349 = vpop.permute.xlu0 %5348
  %v5351 = vadd.f32 %v5341, %v5349
  %v5352 = vtanh.pop %v5351
  %5354 = vrot.lane.b32.xlu0 %v5352, 32
  %v5355 = vpop.permute.xlu0 %5354
  %v5357 = vmul.f32 %v5339, %v5355
  %v5358 = vxor.u32 %v5333, 2147483648
  %v5359 = vmul.f32 %v5358, 1.442695
  %v5360 = vpow.pop %v5359
  %v5361 = vadd.f32 %v5360, 1.0
  %v5362 = vrcp.pop %v5361
  %v5363 = vmul.f32 1.0, %v5362
  %v5364 = vtanh.pop %v5333
  %v5365 = vmul.f32 %v5363, %v5219
  %5367 = vrot.lane.b32.xlu0 %v5364, 96
  %v5368 = vpop.permute.xlu0 %5367
  %v5370 = vmul.f32 %v5363, %v5368
  %5372 = vrot.lane.b32.xlu0 %v5370, 16
  %v5373 = vpop.permute.xlu0 %5372
  %v5375 = vadd.f32 %v5365, %v5373
  %v5376 = vtanh.pop %v5375
  %5378 = vrot.lane.b32.xlu0 %v5376, 32
  %v5379 = vpop.permute.xlu0 %5378
  %v5381 = vmul.f32 %v5363, %v5379
  %5383 = vrot.lane.b32.xlu0 %v5357, 80
  %v5384 = vpop.permute.xlu0 %5383
  %5386 = vst.msk [vmem:[#allocation8 + $0x16] sm:$0x3] %vm885, %v5384
  %5388 = vrot.lane.b32.xlu0 %v5381, 80
  %v5389 = vpop.permute.xlu0 %5388
  %5391 = vst.msk [vmem:[#allocation9 + $0x8] sm:$0x3] %vm885, %v5389
  %v5392 = vld [vmem:[#allocation6 + $0x18] sm:$0x3]
  %v5393 = vpack.c.bf16 %v5357, %v5357
  %5395 = vrot.lane.b32.xlu0 %v5393, 80
  %v5396 = vpop.permute.xlu0 %5395
  %v5398 = vsel %vm276, %v5396, 0
  %5400 = vmatprep.subr.bf16.mxu0 0
  %5401 = vmatpush1.bf16.msra.mxu0 %v3527
  %5402 = vmatprep.subr.bf16.mxu0 0
  %5403 = vmatpush1.bf16.msra.mxu0 0
  %5404 = vmatprep.subr.bf16.mxu0 0
  %5405 = vmatpush1.bf16.msra.mxu0 0
  %5406 = vmatprep.subr.bf16.mxu0 0
  %5407 = vmatpush1.bf16.msra.mxu0 0
  %5408 = vmatprep.subr.bf16.mxu0 0
  %5409 = vmatpush1.bf16.msra.mxu0 0
  %5410 = vmatprep.subr.bf16.mxu0 0
  %5411 = vmatpush1.bf16.msra.mxu0 0
  %5412 = vmatprep.subr.bf16.mxu0 0
  %5413 = vmatpush1.bf16.msra.mxu0 0
  %5414 = vmatprep.subr.bf16.mxu0 0
  %5415 = vmatpush1.bf16.msra.mxu0 0
  %5416 = vmatprep.subr.bf16.mxu0 0
  %5417 = vmatpush1.bf16.msra.mxu0 0
  %5418 = vmatprep.subr.bf16.mxu0 0
  %5419 = vmatpush1.bf16.msra.mxu0 0
  %5420 = vmatprep.subr.bf16.mxu0 0
  %5421 = vmatpush1.bf16.msra.mxu0 0
  %5422 = vmatprep.subr.bf16.mxu0 0
  %5423 = vmatpush1.bf16.msra.mxu0 0
  %5424 = vmatprep.subr.bf16.mxu0 0
  %5425 = vmatpush1.bf16.msra.mxu0 0
  %5426 = vmatprep.subr.bf16.mxu0 0
  %5427 = vmatpush1.bf16.msra.mxu0 0
  %5428 = vmatprep.subr.bf16.mxu0 0
  %5429 = vmatpush1.bf16.msra.mxu0 0
  %5430 = vmatprep.subr.bf16.mxu0 0
  %5431 = vmatpush1.bf16.msra.mxu0 0
  %5432 = vmatprep.mubr.bf16.mxu0 0
  %5433 = vmatmul.mubr.bf16.gmra.mrb[0].mxu0 %v5398
  %v5434 = vpop.f32.mrb[0].mxu0
  %v5435 = vadd.f32 0.0, %v5434
  %v5436 = vpop.f32.mrb[0].mxu0
  %v5437 = vpop.f32.mrb[0].mxu0
  %v5438 = vpop.f32.mrb[0].mxu0
  %5439 = vdwg.mxu0
  %v5440 = vadd.f32 %v5392, %v5435
  %v5441 = vld [vmem:[#allocation7 + $0x6] sm:$0x3]
  %v5442 = vpack.c.bf16 %v5381, %v5381
  %5444 = vrot.lane.b32.xlu0 %v5442, 80
  %v5445 = vpop.permute.xlu0 %5444
  %v5447 = vsel %vm276, %v5445, 0
  %5449 = vmatprep.subr.bf16.mxu0 0
  %5450 = vmatpush1.bf16.msra.mxu0 %v3575
  %5451 = vmatprep.subr.bf16.mxu0 0
  %5452 = vmatpush1.bf16.msra.mxu0 0
  %5453 = vmatprep.subr.bf16.mxu0 0
  %5454 = vmatpush1.bf16.msra.mxu0 0
  %5455 = vmatprep.subr.bf16.mxu0 0
  %5456 = vmatpush1.bf16.msra.mxu0 0
  %5457 = vmatprep.subr.bf16.mxu0 0
  %5458 = vmatpush1.bf16.msra.mxu0 0
  %5459 = vmatprep.subr.bf16.mxu0 0
  %5460 = vmatpush1.bf16.msra.mxu0 0
  %5461 = vmatprep.subr.bf16.mxu0 0
  %5462 = vmatpush1.bf16.msra.mxu0 0
  %5463 = vmatprep.subr.bf16.mxu0 0
  %5464 = vmatpush1.bf16.msra.mxu0 0
  %5465 = vmatprep.subr.bf16.mxu0 0
  %5466 = vmatpush1.bf16.msra.mxu0 0
  %5467 = vmatprep.subr.bf16.mxu0 0
  %5468 = vmatpush1.bf16.msra.mxu0 0
  %5469 = vmatprep.subr.bf16.mxu0 0
  %5470 = vmatpush1.bf16.msra.mxu0 0
  %5471 = vmatprep.subr.bf16.mxu0 0
  %5472 = vmatpush1.bf16.msra.mxu0 0
  %5473 = vmatprep.subr.bf16.mxu0 0
  %5474 = vmatpush1.bf16.msra.mxu0 0
  %5475 = vmatprep.subr.bf16.mxu0 0
  %5476 = vmatpush1.bf16.msra.mxu0 0
  %5477 = vmatprep.subr.bf16.mxu0 0
  %5478 = vmatpush1.bf16.msra.mxu0 0
  %5479 = vmatprep.subr.bf16.mxu0 0
  %5480 = vmatpush1.bf16.msra.mxu0 0
  %5481 = vmatprep.mubr.bf16.mxu0 0
  %5482 = vmatmul.mubr.bf16.gmra.mrb[0].mxu0 %v5447
  %v5483 = vpop.f32.mrb[0].mxu0
  %v5484 = vadd.f32 0.0, %v5483
  %v5485 = vpop.f32.mrb[0].mxu0
  %v5486 = vpop.f32.mrb[0].mxu0
  %v5487 = vpop.f32.mrb[0].mxu0
  %5488 = vdwg.mxu0
  %v5489 = vadd.f32 %v5441, %v5484
  %v5490 = vxor.u32 %v5440, 2147483648
  %v5491 = vmul.f32 %v5490, 1.442695
  %v5492 = vpow.pop %v5491
  %v5493 = vadd.f32 %v5492, 1.0
  %v5494 = vrcp.pop %v5493
  %v5495 = vmul.f32 1.0, %v5494
  %v5496 = vtanh.pop %v5440
  %v5497 = vmul.f32 %v5495, %v5351
  %5499 = vrot.lane.b32.xlu0 %v5496, 96
  %v5500 = vpop.permute.xlu0 %5499
  %v5502 = vmul.f32 %v5495, %v5500
  %5504 = vrot.lane.b32.xlu0 %v5502, 16
  %v5505 = vpop.permute.xlu0 %5504
  %v5507 = vadd.f32 %v5497, %v5505
  %v5508 = vtanh.pop %v5507
  %5510 = vrot.lane.b32.xlu0 %v5508, 32
  %v5511 = vpop.permute.xlu0 %5510
  %v5513 = vmul.f32 %v5495, %v5511
  %v5514 = vxor.u32 %v5489, 2147483648
  %v5515 = vmul.f32 %v5514, 1.442695
  %v5516 = vpow.pop %v5515
  %v5517 = vadd.f32 %v5516, 1.0
  %v5518 = vrcp.pop %v5517
  %v5519 = vmul.f32 1.0, %v5518
  %v5520 = vtanh.pop %v5489
  %v5521 = vmul.f32 %v5519, %v5375
  %5523 = vrot.lane.b32.xlu0 %v5520, 96
  %v5524 = vpop.permute.xlu0 %5523
  %v5526 = vmul.f32 %v5519, %v5524
  %5528 = vrot.lane.b32.xlu0 %v5526, 16
  %v5529 = vpop.permute.xlu0 %5528
  %v5531 = vadd.f32 %v5521, %v5529
  %v5532 = vtanh.pop %v5531
  %5534 = vrot.lane.b32.xlu0 %v5532, 32
  %v5535 = vpop.permute.xlu0 %5534
  %v5537 = vmul.f32 %v5519, %v5535
  %5539 = vrot.lane.b32.xlu0 %v5513, 80
  %v5540 = vpop.permute.xlu0 %5539
  %5542 = vst.msk [vmem:[#allocation8 + $0x18] sm:$0x3] %vm885, %v5540
  %5544 = vrot.lane.b32.xlu0 %v5537, 80
  %v5545 = vpop.permute.xlu0 %5544
  %5547 = vst.msk [vmem:[#allocation9 + $0x6] sm:$0x3] %vm885, %v5545
  %v5548 = vld [vmem:[#allocation6 + $0x1a] sm:$0x3]
  %v5549 = vpack.c.bf16 %v5513, %v5513
  %5551 = vrot.lane.b32.xlu0 %v5549, 80
  %v5552 = vpop.permute.xlu0 %5551
  %v5554 = vsel %vm276, %v5552, 0
  %5556 = vmatprep.subr.bf16.mxu0 0
  %5557 = vmatpush1.bf16.msra.mxu0 %v3527
  %5558 = vmatprep.subr.bf16.mxu0 0
  %5559 = vmatpush1.bf16.msra.mxu0 0
  %5560 = vmatprep.subr.bf16.mxu0 0
  %5561 = vmatpush1.bf16.msra.mxu0 0
  %5562 = vmatprep.subr.bf16.mxu0 0
  %5563 = vmatpush1.bf16.msra.mxu0 0
  %5564 = vmatprep.subr.bf16.mxu0 0
  %5565 = vmatpush1.bf16.msra.mxu0 0
  %5566 = vmatprep.subr.bf16.mxu0 0
  %5567 = vmatpush1.bf16.msra.mxu0 0
  %5568 = vmatprep.subr.bf16.mxu0 0
  %5569 = vmatpush1.bf16.msra.mxu0 0
  %5570 = vmatprep.subr.bf16.mxu0 0
  %5571 = vmatpush1.bf16.msra.mxu0 0
  %5572 = vmatprep.subr.bf16.mxu0 0
  %5573 = vmatpush1.bf16.msra.mxu0 0
  %5574 = vmatprep.subr.bf16.mxu0 0
  %5575 = vmatpush1.bf16.msra.mxu0 0
  %5576 = vmatprep.subr.bf16.mxu0 0
  %5577 = vmatpush1.bf16.msra.mxu0 0
  %5578 = vmatprep.subr.bf16.mxu0 0
  %5579 = vmatpush1.bf16.msra.mxu0 0
  %5580 = vmatprep.subr.bf16.mxu0 0
  %5581 = vmatpush1.bf16.msra.mxu0 0
  %5582 = vmatprep.subr.bf16.mxu0 0
  %5583 = vmatpush1.bf16.msra.mxu0 0
  %5584 = vmatprep.subr.bf16.mxu0 0
  %5585 = vmatpush1.bf16.msra.mxu0 0
  %5586 = vmatprep.subr.bf16.mxu0 0
  %5587 = vmatpush1.bf16.msra.mxu0 0
  %5588 = vmatprep.mubr.bf16.mxu0 0
  %5589 = vmatmul.mubr.bf16.gmra.mrb[0].mxu0 %v5554
  %v5590 = vpop.f32.mrb[0].mxu0
  %v5591 = vadd.f32 0.0, %v5590
  %v5592 = vpop.f32.mrb[0].mxu0
  %v5593 = vpop.f32.mrb[0].mxu0
  %v5594 = vpop.f32.mrb[0].mxu0
  %5595 = vdwg.mxu0
  %v5596 = vadd.f32 %v5548, %v5591
  %v5597 = vld [vmem:[#allocation7 + $0x4] sm:$0x3]
  %v5598 = vpack.c.bf16 %v5537, %v5537
  %5600 = vrot.lane.b32.xlu0 %v5598, 80
  %v5601 = vpop.permute.xlu0 %5600
  %v5603 = vsel %vm276, %v5601, 0
  %5605 = vmatprep.subr.bf16.mxu0 0
  %5606 = vmatpush1.bf16.msra.mxu0 %v3575
  %5607 = vmatprep.subr.bf16.mxu0 0
  %5608 = vmatpush1.bf16.msra.mxu0 0
  %5609 = vmatprep.subr.bf16.mxu0 0
  %5610 = vmatpush1.bf16.msra.mxu0 0
  %5611 = vmatprep.subr.bf16.mxu0 0
  %5612 = vmatpush1.bf16.msra.mxu0 0
  %5613 = vmatprep.subr.bf16.mxu0 0
  %5614 = vmatpush1.bf16.msra.mxu0 0
  %5615 = vmatprep.subr.bf16.mxu0 0
  %5616 = vmatpush1.bf16.msra.mxu0 0
  %5617 = vmatprep.subr.bf16.mxu0 0
  %5618 = vmatpush1.bf16.msra.mxu0 0
  %5619 = vmatprep.subr.bf16.mxu0 0
  %5620 = vmatpush1.bf16.msra.mxu0 0
  %5621 = vmatprep.subr.bf16.mxu0 0
  %5622 = vmatpush1.bf16.msra.mxu0 0
  %5623 = vmatprep.subr.bf16.mxu0 0
  %5624 = vmatpush1.bf16.msra.mxu0 0
  %5625 = vmatprep.subr.bf16.mxu0 0
  %5626 = vmatpush1.bf16.msra.mxu0 0
  %5627 = vmatprep.subr.bf16.mxu0 0
  %5628 = vmatpush1.bf16.msra.mxu0 0
  %5629 = vmatprep.subr.bf16.mxu0 0
  %5630 = vmatpush1.bf16.msra.mxu0 0
  %5631 = vmatprep.subr.bf16.mxu0 0
  %5632 = vmatpush1.bf16.msra.mxu0 0
  %5633 = vmatprep.subr.bf16.mxu0 0
  %5634 = vmatpush1.bf16.msra.mxu0 0
  %5635 = vmatprep.subr.bf16.mxu0 0
  %5636 = vmatpush1.bf16.msra.mxu0 0
  %5637 = vmatprep.mubr.bf16.mxu0 0
  %5638 = vmatmul.mubr.bf16.gmra.mrb[0].mxu0 %v5603
  %v5639 = vpop.f32.mrb[0].mxu0
  %v5640 = vadd.f32 0.0, %v5639
  %v5641 = vpop.f32.mrb[0].mxu0
  %v5642 = vpop.f32.mrb[0].mxu0
  %v5643 = vpop.f32.mrb[0].mxu0
  %5644 = vdwg.mxu0
  %v5645 = vadd.f32 %v5597, %v5640
  %v5646 = vxor.u32 %v5596, 2147483648
  %v5647 = vmul.f32 %v5646, 1.442695
  %v5648 = vpow.pop %v5647
  %v5649 = vadd.f32 %v5648, 1.0
  %v5650 = vrcp.pop %v5649
  %v5651 = vmul.f32 1.0, %v5650
  %v5652 = vtanh.pop %v5596
  %v5653 = vmul.f32 %v5651, %v5507
  %5655 = vrot.lane.b32.xlu0 %v5652, 96
  %v5656 = vpop.permute.xlu0 %5655
  %v5658 = vmul.f32 %v5651, %v5656
  %5660 = vrot.lane.b32.xlu0 %v5658, 16
  %v5661 = vpop.permute.xlu0 %5660
  %v5663 = vadd.f32 %v5653, %v5661
  %v5664 = vtanh.pop %v5663
  %5666 = vrot.lane.b32.xlu0 %v5664, 32
  %v5667 = vpop.permute.xlu0 %5666
  %v5669 = vmul.f32 %v5651, %v5667
  %v5670 = vxor.u32 %v5645, 2147483648
  %v5671 = vmul.f32 %v5670, 1.442695
  %v5672 = vpow.pop %v5671
  %v5673 = vadd.f32 %v5672, 1.0
  %v5674 = vrcp.pop %v5673
  %v5675 = vmul.f32 1.0, %v5674
  %v5676 = vtanh.pop %v5645
  %v5677 = vmul.f32 %v5675, %v5531
  %5679 = vrot.lane.b32.xlu0 %v5676, 96
  %v5680 = vpop.permute.xlu0 %5679
  %v5682 = vmul.f32 %v5675, %v5680
  %5684 = vrot.lane.b32.xlu0 %v5682, 16
  %v5685 = vpop.permute.xlu0 %5684
  %v5687 = vadd.f32 %v5677, %v5685
  %v5688 = vtanh.pop %v5687
  %5690 = vrot.lane.b32.xlu0 %v5688, 32
  %v5691 = vpop.permute.xlu0 %5690
  %v5693 = vmul.f32 %v5675, %v5691
  %5695 = vrot.lane.b32.xlu0 %v5669, 80
  %v5696 = vpop.permute.xlu0 %5695
  %5698 = vst.msk [vmem:[#allocation8 + $0x1a] sm:$0x3] %vm885, %v5696
  %5700 = vrot.lane.b32.xlu0 %v5693, 80
  %v5701 = vpop.permute.xlu0 %5700
  %5703 = vst.msk [vmem:[#allocation9 + $0x4] sm:$0x3] %vm885, %v5701
  %v5704 = vld [vmem:[#allocation6 + $0x1c] sm:$0x3]
  %v5705 = vpack.c.bf16 %v5669, %v5669
  %5707 = vrot.lane.b32.xlu0 %v5705, 80
  %v5708 = vpop.permute.xlu0 %5707
  %v5710 = vsel %vm276, %v5708, 0
  %5712 = vmatprep.subr.bf16.mxu0 0
  %5713 = vmatpush1.bf16.msra.mxu0 %v3527
  %5714 = vmatprep.subr.bf16.mxu0 0
  %5715 = vmatpush1.bf16.msra.mxu0 0
  %5716 = vmatprep.subr.bf16.mxu0 0
  %5717 = vmatpush1.bf16.msra.mxu0 0
  %5718 = vmatprep.subr.bf16.mxu0 0
  %5719 = vmatpush1.bf16.msra.mxu0 0
  %5720 = vmatprep.subr.bf16.mxu0 0
  %5721 = vmatpush1.bf16.msra.mxu0 0
  %5722 = vmatprep.subr.bf16.mxu0 0
  %5723 = vmatpush1.bf16.msra.mxu0 0
  %5724 = vmatprep.subr.bf16.mxu0 0
  %5725 = vmatpush1.bf16.msra.mxu0 0
  %5726 = vmatprep.subr.bf16.mxu0 0
  %5727 = vmatpush1.bf16.msra.mxu0 0
  %5728 = vmatprep.subr.bf16.mxu0 0
  %5729 = vmatpush1.bf16.msra.mxu0 0
  %5730 = vmatprep.subr.bf16.mxu0 0
  %5731 = vmatpush1.bf16.msra.mxu0 0
  %5732 = vmatprep.subr.bf16.mxu0 0
  %5733 = vmatpush1.bf16.msra.mxu0 0
  %5734 = vmatprep.subr.bf16.mxu0 0
  %5735 = vmatpush1.bf16.msra.mxu0 0
  %5736 = vmatprep.subr.bf16.mxu0 0
  %5737 = vmatpush1.bf16.msra.mxu0 0
  %5738 = vmatprep.subr.bf16.mxu0 0
  %5739 = vmatpush1.bf16.msra.mxu0 0
  %5740 = vmatprep.subr.bf16.mxu0 0
  %5741 = vmatpush1.bf16.msra.mxu0 0
  %5742 = vmatprep.subr.bf16.mxu0 0
  %5743 = vmatpush1.bf16.msra.mxu0 0
  %5744 = vmatprep.mubr.bf16.mxu0 0
  %5745 = vmatmul.mubr.bf16.gmra.mrb[0].mxu0 %v5710
  %v5746 = vpop.f32.mrb[0].mxu0
  %v5747 = vadd.f32 0.0, %v5746
  %v5748 = vpop.f32.mrb[0].mxu0
  %v5749 = vpop.f32.mrb[0].mxu0
  %v5750 = vpop.f32.mrb[0].mxu0
  %5751 = vdwg.mxu0
  %v5752 = vadd.f32 %v5704, %v5747
  %v5753 = vld [vmem:[#allocation7 + $0x2] sm:$0x3]
  %v5754 = vpack.c.bf16 %v5693, %v5693
  %5756 = vrot.lane.b32.xlu0 %v5754, 80
  %v5757 = vpop.permute.xlu0 %5756
  %v5759 = vsel %vm276, %v5757, 0
  %5761 = vmatprep.subr.bf16.mxu0 0
  %5762 = vmatpush1.bf16.msra.mxu0 %v3575
  %5763 = vmatprep.subr.bf16.mxu0 0
  %5764 = vmatpush1.bf16.msra.mxu0 0
  %5765 = vmatprep.subr.bf16.mxu0 0
  %5766 = vmatpush1.bf16.msra.mxu0 0
  %5767 = vmatprep.subr.bf16.mxu0 0
  %5768 = vmatpush1.bf16.msra.mxu0 0
  %5769 = vmatprep.subr.bf16.mxu0 0
  %5770 = vmatpush1.bf16.msra.mxu0 0
  %5771 = vmatprep.subr.bf16.mxu0 0
  %5772 = vmatpush1.bf16.msra.mxu0 0
  %5773 = vmatprep.subr.bf16.mxu0 0
  %5774 = vmatpush1.bf16.msra.mxu0 0
  %5775 = vmatprep.subr.bf16.mxu0 0
  %5776 = vmatpush1.bf16.msra.mxu0 0
  %5777 = vmatprep.subr.bf16.mxu0 0
  %5778 = vmatpush1.bf16.msra.mxu0 0
  %5779 = vmatprep.subr.bf16.mxu0 0
  %5780 = vmatpush1.bf16.msra.mxu0 0
  %5781 = vmatprep.subr.bf16.mxu0 0
  %5782 = vmatpush1.bf16.msra.mxu0 0
  %5783 = vmatprep.subr.bf16.mxu0 0
  %5784 = vmatpush1.bf16.msra.mxu0 0
  %5785 = vmatprep.subr.bf16.mxu0 0
  %5786 = vmatpush1.bf16.msra.mxu0 0
  %5787 = vmatprep.subr.bf16.mxu0 0
  %5788 = vmatpush1.bf16.msra.mxu0 0
  %5789 = vmatprep.subr.bf16.mxu0 0
  %5790 = vmatpush1.bf16.msra.mxu0 0
  %5791 = vmatprep.subr.bf16.mxu0 0
  %5792 = vmatpush1.bf16.msra.mxu0 0
  %5793 = vmatprep.mubr.bf16.mxu0 0
  %5794 = vmatmul.mubr.bf16.gmra.mrb[0].mxu0 %v5759
  %v5795 = vpop.f32.mrb[0].mxu0
  %v5796 = vadd.f32 0.0, %v5795
  %v5797 = vpop.f32.mrb[0].mxu0
  %v5798 = vpop.f32.mrb[0].mxu0
  %v5799 = vpop.f32.mrb[0].mxu0
  %5800 = vdwg.mxu0
  %v5801 = vadd.f32 %v5753, %v5796
  %v5802 = vxor.u32 %v5752, 2147483648
  %v5803 = vmul.f32 %v5802, 1.442695
  %v5804 = vpow.pop %v5803
  %v5805 = vadd.f32 %v5804, 1.0
  %v5806 = vrcp.pop %v5805
  %v5807 = vmul.f32 1.0, %v5806
  %v5808 = vtanh.pop %v5752
  %v5809 = vmul.f32 %v5807, %v5663
  %5811 = vrot.lane.b32.xlu0 %v5808, 96
  %v5812 = vpop.permute.xlu0 %5811
  %v5814 = vmul.f32 %v5807, %v5812
  %5816 = vrot.lane.b32.xlu0 %v5814, 16
  %v5817 = vpop.permute.xlu0 %5816
  %v5819 = vadd.f32 %v5809, %v5817
  %v5820 = vtanh.pop %v5819
  %5822 = vrot.lane.b32.xlu0 %v5820, 32
  %v5823 = vpop.permute.xlu0 %5822
  %v5825 = vmul.f32 %v5807, %v5823
  %v5826 = vxor.u32 %v5801, 2147483648
  %v5827 = vmul.f32 %v5826, 1.442695
  %v5828 = vpow.pop %v5827
  %v5829 = vadd.f32 %v5828, 1.0
  %v5830 = vrcp.pop %v5829
  %v5831 = vmul.f32 1.0, %v5830
  %v5832 = vtanh.pop %v5801
  %v5833 = vmul.f32 %v5831, %v5687
  %5835 = vrot.lane.b32.xlu0 %v5832, 96
  %v5836 = vpop.permute.xlu0 %5835
  %v5838 = vmul.f32 %v5831, %v5836
  %5840 = vrot.lane.b32.xlu0 %v5838, 16
  %v5841 = vpop.permute.xlu0 %5840
  %v5843 = vadd.f32 %v5833, %v5841
  %v5844 = vtanh.pop %v5843
  %5846 = vrot.lane.b32.xlu0 %v5844, 32
  %v5847 = vpop.permute.xlu0 %5846
  %v5849 = vmul.f32 %v5831, %v5847
  %5851 = vrot.lane.b32.xlu0 %v5825, 80
  %v5852 = vpop.permute.xlu0 %5851
  %5854 = vst.msk [vmem:[#allocation8 + $0x1c] sm:$0x3] %vm885, %v5852
  %5856 = vrot.lane.b32.xlu0 %v5849, 80
  %v5857 = vpop.permute.xlu0 %5856
  %5859 = vst.msk [vmem:[#allocation9 + $0x2] sm:$0x3] %vm885, %v5857
  %v5860 = vld [vmem:[#allocation6 + $0x1e] sm:$0x3]
  %v5861 = vpack.c.bf16 %v5825, %v5825
  %5863 = vrot.lane.b32.xlu0 %v5861, 80
  %v5864 = vpop.permute.xlu0 %5863
  %v5866 = vsel %vm276, %v5864, 0
  %5868 = vmatprep.subr.bf16.mxu0 0
  %5869 = vmatpush1.bf16.msra.mxu0 %v3527
  %5870 = vmatprep.subr.bf16.mxu0 0
  %5871 = vmatpush1.bf16.msra.mxu0 0
  %5872 = vmatprep.subr.bf16.mxu0 0
  %5873 = vmatpush1.bf16.msra.mxu0 0
  %5874 = vmatprep.subr.bf16.mxu0 0
  %5875 = vmatpush1.bf16.msra.mxu0 0
  %5876 = vmatprep.subr.bf16.mxu0 0
  %5877 = vmatpush1.bf16.msra.mxu0 0
  %5878 = vmatprep.subr.bf16.mxu0 0
  %5879 = vmatpush1.bf16.msra.mxu0 0
  %5880 = vmatprep.subr.bf16.mxu0 0
  %5881 = vmatpush1.bf16.msra.mxu0 0
  %5882 = vmatprep.subr.bf16.mxu0 0
  %5883 = vmatpush1.bf16.msra.mxu0 0
  %5884 = vmatprep.subr.bf16.mxu0 0
  %5885 = vmatpush1.bf16.msra.mxu0 0
  %5886 = vmatprep.subr.bf16.mxu0 0
  %5887 = vmatpush1.bf16.msra.mxu0 0
  %5888 = vmatprep.subr.bf16.mxu0 0
  %5889 = vmatpush1.bf16.msra.mxu0 0
  %5890 = vmatprep.subr.bf16.mxu0 0
  %5891 = vmatpush1.bf16.msra.mxu0 0
  %5892 = vmatprep.subr.bf16.mxu0 0
  %5893 = vmatpush1.bf16.msra.mxu0 0
  %5894 = vmatprep.subr.bf16.mxu0 0
  %5895 = vmatpush1.bf16.msra.mxu0 0
  %5896 = vmatprep.subr.bf16.mxu0 0
  %5897 = vmatpush1.bf16.msra.mxu0 0
  %5898 = vmatprep.subr.bf16.mxu0 0
  %5899 = vmatpush1.bf16.msra.mxu0 0
  %5900 = vmatprep.mubr.bf16.mxu0 0
  %5901 = vmatmul.mubr.bf16.gmra.mrb[0].mxu0 %v5866
  %v5902 = vpop.f32.mrb[0].mxu0
  %v5903 = vadd.f32 0.0, %v5902
  %v5904 = vpop.f32.mrb[0].mxu0
  %v5905 = vpop.f32.mrb[0].mxu0
  %v5906 = vpop.f32.mrb[0].mxu0
  %5907 = vdwg.mxu0
  %v5908 = vadd.f32 %v5860, %v5903
  %v5909 = vld [vmem:[#allocation7] sm:$0x3]
  %v5910 = vpack.c.bf16 %v5849, %v5849
  %5912 = vrot.lane.b32.xlu0 %v5910, 80
  %v5913 = vpop.permute.xlu0 %5912
  %v5915 = vsel %vm276, %v5913, 0
  %5917 = vmatprep.subr.bf16.mxu0 0
  %5918 = vmatpush1.bf16.msra.mxu0 %v3575
  %5919 = vmatprep.subr.bf16.mxu0 0
  %5920 = vmatpush1.bf16.msra.mxu0 0
  %5921 = vmatprep.subr.bf16.mxu0 0
  %5922 = vmatpush1.bf16.msra.mxu0 0
  %5923 = vmatprep.subr.bf16.mxu0 0
  %5924 = vmatpush1.bf16.msra.mxu0 0
  %5925 = vmatprep.subr.bf16.mxu0 0
  %5926 = vmatpush1.bf16.msra.mxu0 0
  %5927 = vmatprep.subr.bf16.mxu0 0
  %5928 = vmatpush1.bf16.msra.mxu0 0
  %5929 = vmatprep.subr.bf16.mxu0 0
  %5930 = vmatpush1.bf16.msra.mxu0 0
  %5931 = vmatprep.subr.bf16.mxu0 0
  %5932 = vmatpush1.bf16.msra.mxu0 0
  %5933 = vmatprep.subr.bf16.mxu0 0
  %5934 = vmatpush1.bf16.msra.mxu0 0
  %5935 = vmatprep.subr.bf16.mxu0 0
  %5936 = vmatpush1.bf16.msra.mxu0 0
  %5937 = vmatprep.subr.bf16.mxu0 0
  %5938 = vmatpush1.bf16.msra.mxu0 0
  %5939 = vmatprep.subr.bf16.mxu0 0
  %5940 = vmatpush1.bf16.msra.mxu0 0
  %5941 = vmatprep.subr.bf16.mxu0 0
  %5942 = vmatpush1.bf16.msra.mxu0 0
  %5943 = vmatprep.subr.bf16.mxu0 0
  %5944 = vmatpush1.bf16.msra.mxu0 0
  %5945 = vmatprep.subr.bf16.mxu0 0
  %5946 = vmatpush1.bf16.msra.mxu0 0
  %5947 = vmatprep.subr.bf16.mxu0 0
  %5948 = vmatpush1.bf16.msra.mxu0 0
  %5949 = vmatprep.mubr.bf16.mxu0 0
  %5950 = vmatmul.mubr.bf16.gmra.mrb[0].mxu0 %v5915
  %v5951 = vpop.f32.mrb[0].mxu0
  %v5952 = vadd.f32 0.0, %v5951
  %v5953 = vpop.f32.mrb[0].mxu0
  %v5954 = vpop.f32.mrb[0].mxu0
  %v5955 = vpop.f32.mrb[0].mxu0
  %5956 = vdwg.mxu0
  %v5957 = vadd.f32 %v5909, %v5952
  %v5958 = vxor.u32 %v5908, 2147483648
  %v5959 = vmul.f32 %v5958, 1.442695
  %v5960 = vpow.pop %v5959
  %v5961 = vadd.f32 %v5960, 1.0
  %v5962 = vrcp.pop %v5961
  %v5963 = vmul.f32 1.0, %v5962
  %v5964 = vtanh.pop %v5908
  %v5965 = vmul.f32 %v5963, %v5819
  %5967 = vrot.lane.b32.xlu0 %v5964, 96
  %v5968 = vpop.permute.xlu0 %5967
  %v5970 = vmul.f32 %v5963, %v5968
  %5972 = vrot.lane.b32.xlu0 %v5970, 16
  %v5973 = vpop.permute.xlu0 %5972
  %v5975 = vadd.f32 %v5965, %v5973
  %v5976 = vtanh.pop %v5975
  %5978 = vrot.lane.b32.xlu0 %v5976, 32
  %v5979 = vpop.permute.xlu0 %5978
  %v5981 = vmul.f32 %v5963, %v5979
  %v5982 = vxor.u32 %v5957, 2147483648
  %v5983 = vmul.f32 %v5982, 1.442695
  %v5984 = vpow.pop %v5983
  %v5985 = vadd.f32 %v5984, 1.0
  %v5986 = vrcp.pop %v5985
  %v5987 = vmul.f32 1.0, %v5986
  %v5988 = vtanh.pop %v5957
  %v5989 = vmul.f32 %v5987, %v5843
  %5991 = vrot.lane.b32.xlu0 %v5988, 96
  %v5992 = vpop.permute.xlu0 %5991
  %v5994 = vmul.f32 %v5987, %v5992
  %5996 = vrot.lane.b32.xlu0 %v5994, 16
  %v5997 = vpop.permute.xlu0 %5996
  %v5999 = vadd.f32 %v5989, %v5997
  %v6000 = vtanh.pop %v5999
  %6002 = vrot.lane.b32.xlu0 %v6000, 32
  %v6003 = vpop.permute.xlu0 %6002
  %v6005 = vmul.f32 %v5987, %v6003
  %6007 = vrot.lane.b32.xlu0 %v5981, 80
  %v6008 = vpop.permute.xlu0 %6007
  %6010 = vst.msk [vmem:[#allocation8 + $0x1e] sm:$0x3] %vm885, %v6008
  %6012 = vrot.lane.b32.xlu0 %v6005, 80
  %v6013 = vpop.permute.xlu0 %6012
  %6015 = vst.msk [vmem:[#allocation9] sm:$0x3] %vm885, %v6013
  %v6016 = vld [vmem:[#allocation8 + $0xc] sm:$0x3]
  %v6017 = vld [vmem:[%s15] sm:$0xf]
  %v6018 = vld [vmem:[%s15 + $0x4] sm:$0xf]
  %v6019 = vpack.c.bf16 %v6016, %v6016
  %v6020 = vld [vmem:[#allocation9 + $0xc] sm:$0x3]
  %v6021 = vld [vmem:[%s16] sm:$0xf]
  %v6022 = vld [vmem:[%s16 + $0x4] sm:$0xf]
  %v6023 = vpack.c.bf16 %v6020, %v6020
  %v6026 = vunpack.c.l.b16 %v6021
  %v6027 = vunpack.c.l.b16 %v6022
  %v6028 = vpack.c.b16 %v6027, %v6026
  %v6031 = vsel %vm276, %v6023, 0
  %6033 = vmatprep.subr.bf16.mxu0 0
  %6034 = vmatpush1.bf16.msra.mxu0 %v6028
  %6035 = vmatprep.subr.bf16.mxu0 0
  %6036 = vmatpush1.bf16.msra.mxu0 0
  %6037 = vmatprep.subr.bf16.mxu0 0
  %6038 = vmatpush1.bf16.msra.mxu0 0
  %6039 = vmatprep.subr.bf16.mxu0 0
  %6040 = vmatpush1.bf16.msra.mxu0 0
  %6041 = vmatprep.subr.bf16.mxu0 0
  %6042 = vmatpush1.bf16.msra.mxu0 0
  %6043 = vmatprep.subr.bf16.mxu0 0
  %6044 = vmatpush1.bf16.msra.mxu0 0
  %6045 = vmatprep.subr.bf16.mxu0 0
  %6046 = vmatpush1.bf16.msra.mxu0 0
  %6047 = vmatprep.subr.bf16.mxu0 0
  %6048 = vmatpush1.bf16.msra.mxu0 0
  %6049 = vmatprep.subr.bf16.mxu0 0
  %6050 = vmatpush1.bf16.msra.mxu0 0
  %6051 = vmatprep.subr.bf16.mxu0 0
  %6052 = vmatpush1.bf16.msra.mxu0 0
  %6053 = vmatprep.subr.bf16.mxu0 0
  %6054 = vmatpush1.bf16.msra.mxu0 0
  %6055 = vmatprep.subr.bf16.mxu0 0
  %6056 = vmatpush1.bf16.msra.mxu0 0
  %6057 = vmatprep.subr.bf16.mxu0 0
  %6058 = vmatpush1.bf16.msra.mxu0 0
  %6059 = vmatprep.subr.bf16.mxu0 0
  %6060 = vmatpush1.bf16.msra.mxu0 0
  %6061 = vmatprep.subr.bf16.mxu0 0
  %6062 = vmatpush1.bf16.msra.mxu0 0
  %6063 = vmatprep.subr.bf16.mxu0 0
  %6064 = vmatpush1.bf16.msra.mxu0 0
  %6065 = vmatprep.mubr.bf16.mxu0 0
  %6066 = vmatmul.mubr.bf16.gmra.mrb[0].mxu0 %v6031
  %v6067 = vpop.f32.mrb[0].mxu0
  %v6068 = vadd.f32 0.0, %v6067
  %v6069 = vpop.f32.mrb[0].mxu0
  %v6070 = vpop.f32.mrb[0].mxu0
  %v6071 = vpop.f32.mrb[0].mxu0
  %6072 = vdwg.mxu0
  %v6075 = vunpack.c.l.b16 %v6017
  %v6076 = vunpack.c.l.b16 %v6018
  %v6077 = vpack.c.b16 %v6076, %v6075
  %v6080 = vsel %vm276, %v6019, 0
  %6082 = vmatprep.subr.bf16.mxu0 0
  %6083 = vmatpush1.bf16.msra.mxu0 %v6077
  %6084 = vmatprep.subr.bf16.mxu0 0
  %6085 = vmatpush1.bf16.msra.mxu0 0
  %6086 = vmatprep.subr.bf16.mxu0 0
  %6087 = vmatpush1.bf16.msra.mxu0 0
  %6088 = vmatprep.subr.bf16.mxu0 0
  %6089 = vmatpush1.bf16.msra.mxu0 0
  %6090 = vmatprep.subr.bf16.mxu0 0
  %6091 = vmatpush1.bf16.msra.mxu0 0
  %6092 = vmatprep.subr.bf16.mxu0 0
  %6093 = vmatpush1.bf16.msra.mxu0 0
  %6094 = vmatprep.subr.bf16.mxu0 0
  %6095 = vmatpush1.bf16.msra.mxu0 0
  %6096 = vmatprep.subr.bf16.mxu0 0
  %6097 = vmatpush1.bf16.msra.mxu0 0
  %6098 = vmatprep.subr.bf16.mxu0 0
  %6099 = vmatpush1.bf16.msra.mxu0 0
  %6100 = vmatprep.subr.bf16.mxu0 0
  %6101 = vmatpush1.bf16.msra.mxu0 0
  %6102 = vmatprep.subr.bf16.mxu0 0
  %6103 = vmatpush1.bf16.msra.mxu0 0
  %6104 = vmatprep.subr.bf16.mxu0 0
  %6105 = vmatpush1.bf16.msra.mxu0 0
  %6106 = vmatprep.subr.bf16.mxu0 0
  %6107 = vmatpush1.bf16.msra.mxu0 0
  %6108 = vmatprep.subr.bf16.mxu0 0
  %6109 = vmatpush1.bf16.msra.mxu0 0
  %6110 = vmatprep.subr.bf16.mxu0 0
  %6111 = vmatpush1.bf16.msra.mxu0 0
  %6112 = vmatprep.subr.bf16.mxu0 0
  %6113 = vmatpush1.bf16.msra.mxu0 0
  %6114 = vmatprep.mubr.bf16.mxu0 0
  %6115 = vmatmul.mubr.bf16.gmra.mrb[0].mxu0 %v6080
  %v6116 = vpop.f32.mrb[0].mxu0
  %v6117 = vadd.f32 %v6068, %v6116
  %v6118 = vpop.f32.mrb[0].mxu0
  %v6119 = vpop.f32.mrb[0].mxu0
  %v6120 = vpop.f32.mrb[0].mxu0
  %6121 = vdwg.mxu0
  %v6122 = vld [vmem:[#allocation8 + $0xe] sm:$0x3]
  %s6123 = scalar_lea.vmem %s15, 8
  %v6124 = vld [vmem:[%s6123] sm:$0xf]
  %v6125 = vld [vmem:[%s6123 + $0x4] sm:$0xf]
  %v6126 = vpack.c.bf16 %v6122, %v6122
  %v6129 = vunpack.c.l.b16 %v6124
  %v6130 = vunpack.c.l.b16 %v6125
  %v6131 = vpack.c.b16 %v6130, %v6129
  %v6134 = vsel %vm276, %v6126, 0
  %6136 = vmatprep.subr.bf16.mxu0 0
  %6137 = vmatpush1.bf16.msra.mxu0 %v6131
  %6138 = vmatprep.subr.bf16.mxu0 0
  %6139 = vmatpush1.bf16.msra.mxu0 0
  %6140 = vmatprep.subr.bf16.mxu0 0
  %6141 = vmatpush1.bf16.msra.mxu0 0
  %6142 = vmatprep.subr.bf16.mxu0 0
  %6143 = vmatpush1.bf16.msra.mxu0 0
  %6144 = vmatprep.subr.bf16.mxu0 0
  %6145 = vmatpush1.bf16.msra.mxu0 0
  %6146 = vmatprep.subr.bf16.mxu0 0
  %6147 = vmatpush1.bf16.msra.mxu0 0
  %6148 = vmatprep.subr.bf16.mxu0 0
  %6149 = vmatpush1.bf16.msra.mxu0 0
  %6150 = vmatprep.subr.bf16.mxu0 0
  %6151 = vmatpush1.bf16.msra.mxu0 0
  %6152 = vmatprep.subr.bf16.mxu0 0
  %6153 = vmatpush1.bf16.msra.mxu0 0
  %6154 = vmatprep.subr.bf16.mxu0 0
  %6155 = vmatpush1.bf16.msra.mxu0 0
  %6156 = vmatprep.subr.bf16.mxu0 0
  %6157 = vmatpush1.bf16.msra.mxu0 0
  %6158 = vmatprep.subr.bf16.mxu0 0
  %6159 = vmatpush1.bf16.msra.mxu0 0
  %6160 = vmatprep.subr.bf16.mxu0 0
  %6161 = vmatpush1.bf16.msra.mxu0 0
  %6162 = vmatprep.subr.bf16.mxu0 0
  %6163 = vmatpush1.bf16.msra.mxu0 0
  %6164 = vmatprep.subr.bf16.mxu0 0
  %6165 = vmatpush1.bf16.msra.mxu0 0
  %6166 = vmatprep.subr.bf16.mxu0 0
  %6167 = vmatpush1.bf16.msra.mxu0 0
  %6168 = vmatprep.mubr.bf16.mxu0 0
  %6169 = vmatmul.mubr.bf16.gmra.mrb[0].mxu0 %v6134
  %v6170 = vpop.f32.mrb[0].mxu0
  %v6171 = vadd.f32 0.0, %v6170
  %v6172 = vpop.f32.mrb[0].mxu0
  %v6173 = vpop.f32.mrb[0].mxu0
  %v6174 = vpop.f32.mrb[0].mxu0
  %6175 = vdwg.mxu0
  %v6176 = vadd.f32 %v6117, %v6171
  %v6177 = vld [vmem:[#allocation9 + $0xe] sm:$0x3]
  %s6178 = scalar_lea.vmem %s16, 8
  %v6179 = vld [vmem:[%s6178] sm:$0xf]
  %v6180 = vld [vmem:[%s6178 + $0x4] sm:$0xf]
  %v6181 = vpack.c.bf16 %v6177, %v6177
  %v6184 = vunpack.c.l.b16 %v6179
  %v6185 = vunpack.c.l.b16 %v6180
  %v6186 = vpack.c.b16 %v6185, %v6184
  %v6189 = vsel %vm276, %v6181, 0
  %6191 = vmatprep.subr.bf16.mxu0 0
  %6192 = vmatpush1.bf16.msra.mxu0 %v6186
  %6193 = vmatprep.subr.bf16.mxu0 0
  %6194 = vmatpush1.bf16.msra.mxu0 0
  %6195 = vmatprep.subr.bf16.mxu0 0
  %6196 = vmatpush1.bf16.msra.mxu0 0
  %6197 = vmatprep.subr.bf16.mxu0 0
  %6198 = vmatpush1.bf16.msra.mxu0 0
  %6199 = vmatprep.subr.bf16.mxu0 0
  %6200 = vmatpush1.bf16.msra.mxu0 0
  %6201 = vmatprep.subr.bf16.mxu0 0
  %6202 = vmatpush1.bf16.msra.mxu0 0
  %6203 = vmatprep.subr.bf16.mxu0 0
  %6204 = vmatpush1.bf16.msra.mxu0 0
  %6205 = vmatprep.subr.bf16.mxu0 0
  %6206 = vmatpush1.bf16.msra.mxu0 0
  %6207 = vmatprep.subr.bf16.mxu0 0
  %6208 = vmatpush1.bf16.msra.mxu0 0
  %6209 = vmatprep.subr.bf16.mxu0 0
  %6210 = vmatpush1.bf16.msra.mxu0 0
  %6211 = vmatprep.subr.bf16.mxu0 0
  %6212 = vmatpush1.bf16.msra.mxu0 0
  %6213 = vmatprep.subr.bf16.mxu0 0
  %6214 = vmatpush1.bf16.msra.mxu0 0
  %6215 = vmatprep.subr.bf16.mxu0 0
  %6216 = vmatpush1.bf16.msra.mxu0 0
  %6217 = vmatprep.subr.bf16.mxu0 0
  %6218 = vmatpush1.bf16.msra.mxu0 0
  %6219 = vmatprep.subr.bf16.mxu0 0
  %6220 = vmatpush1.bf16.msra.mxu0 0
  %6221 = vmatprep.subr.bf16.mxu0 0
  %6222 = vmatpush1.bf16.msra.mxu0 0
  %6223 = vmatprep.mubr.bf16.mxu0 0
  %6224 = vmatmul.mubr.bf16.gmra.mrb[0].mxu0 %v6189
  %v6225 = vpop.f32.mrb[0].mxu0
  %v6226 = vadd.f32 0.0, %v6225
  %v6227 = vpop.f32.mrb[0].mxu0
  %v6228 = vpop.f32.mrb[0].mxu0
  %v6229 = vpop.f32.mrb[0].mxu0
  %6230 = vdwg.mxu0
  %v6231 = vadd.f32 %v6176, %v6226
  %v6232 = vld [vmem:[#allocation8 + $0x10] sm:$0x3]
  %s6233 = scalar_lea.vmem %s15, 16
  %v6234 = vld [vmem:[%s6233] sm:$0xf]
  %v6235 = vld [vmem:[%s6233 + $0x4] sm:$0xf]
  %v6236 = vpack.c.bf16 %v6232, %v6232
  %v6239 = vunpack.c.l.b16 %v6234
  %v6240 = vunpack.c.l.b16 %v6235
  %v6241 = vpack.c.b16 %v6240, %v6239
  %v6244 = vsel %vm276, %v6236, 0
  %6246 = vmatprep.subr.bf16.mxu0 0
  %6247 = vmatpush1.bf16.msra.mxu0 %v6241
  %6248 = vmatprep.subr.bf16.mxu0 0
  %6249 = vmatpush1.bf16.msra.mxu0 0
  %6250 = vmatprep.subr.bf16.mxu0 0
  %6251 = vmatpush1.bf16.msra.mxu0 0
  %6252 = vmatprep.subr.bf16.mxu0 0
  %6253 = vmatpush1.bf16.msra.mxu0 0
  %6254 = vmatprep.subr.bf16.mxu0 0
  %6255 = vmatpush1.bf16.msra.mxu0 0
  %6256 = vmatprep.subr.bf16.mxu0 0
  %6257 = vmatpush1.bf16.msra.mxu0 0
  %6258 = vmatprep.subr.bf16.mxu0 0
  %6259 = vmatpush1.bf16.msra.mxu0 0
  %6260 = vmatprep.subr.bf16.mxu0 0
  %6261 = vmatpush1.bf16.msra.mxu0 0
  %6262 = vmatprep.subr.bf16.mxu0 0
  %6263 = vmatpush1.bf16.msra.mxu0 0
  %6264 = vmatprep.subr.bf16.mxu0 0
  %6265 = vmatpush1.bf16.msra.mxu0 0
  %6266 = vmatprep.subr.bf16.mxu0 0
  %6267 = vmatpush1.bf16.msra.mxu0 0
  %6268 = vmatprep.subr.bf16.mxu0 0
  %6269 = vmatpush1.bf16.msra.mxu0 0
  %6270 = vmatprep.subr.bf16.mxu0 0
  %6271 = vmatpush1.bf16.msra.mxu0 0
  %6272 = vmatprep.subr.bf16.mxu0 0
  %6273 = vmatpush1.bf16.msra.mxu0 0
  %6274 = vmatprep.subr.bf16.mxu0 0
  %6275 = vmatpush1.bf16.msra.mxu0 0
  %6276 = vmatprep.subr.bf16.mxu0 0
  %6277 = vmatpush1.bf16.msra.mxu0 0
  %6278 = vmatprep.mubr.bf16.mxu0 0
  %6279 = vmatmul.mubr.bf16.gmra.mrb[0].mxu0 %v6244
  %v6280 = vpop.f32.mrb[0].mxu0
  %v6281 = vadd.f32 0.0, %v6280
  %v6282 = vpop.f32.mrb[0].mxu0
  %v6283 = vpop.f32.mrb[0].mxu0
  %v6284 = vpop.f32.mrb[0].mxu0
  %6285 = vdwg.mxu0
  %v6286 = vadd.f32 %v6231, %v6281
  %v6287 = vld [vmem:[#allocation9 + $0x10] sm:$0x3]
  %s6288 = scalar_lea.vmem %s16, 16
  %v6289 = vld [vmem:[%s6288] sm:$0xf]
  %v6290 = vld [vmem:[%s6288 + $0x4] sm:$0xf]
  %v6291 = vpack.c.bf16 %v6287, %v6287
  %v6294 = vunpack.c.l.b16 %v6289
  %v6295 = vunpack.c.l.b16 %v6290
  %v6296 = vpack.c.b16 %v6295, %v6294
  %v6299 = vsel %vm276, %v6291, 0
  %6301 = vmatprep.subr.bf16.mxu0 0
  %6302 = vmatpush1.bf16.msra.mxu0 %v6296
  %6303 = vmatprep.subr.bf16.mxu0 0
  %6304 = vmatpush1.bf16.msra.mxu0 0
  %6305 = vmatprep.subr.bf16.mxu0 0
  %6306 = vmatpush1.bf16.msra.mxu0 0
  %6307 = vmatprep.subr.bf16.mxu0 0
  %6308 = vmatpush1.bf16.msra.mxu0 0
  %6309 = vmatprep.subr.bf16.mxu0 0
  %6310 = vmatpush1.bf16.msra.mxu0 0
  %6311 = vmatprep.subr.bf16.mxu0 0
  %6312 = vmatpush1.bf16.msra.mxu0 0
  %6313 = vmatprep.subr.bf16.mxu0 0
  %6314 = vmatpush1.bf16.msra.mxu0 0
  %6315 = vmatprep.subr.bf16.mxu0 0
  %6316 = vmatpush1.bf16.msra.mxu0 0
  %6317 = vmatprep.subr.bf16.mxu0 0
  %6318 = vmatpush1.bf16.msra.mxu0 0
  %6319 = vmatprep.subr.bf16.mxu0 0
  %6320 = vmatpush1.bf16.msra.mxu0 0
  %6321 = vmatprep.subr.bf16.mxu0 0
  %6322 = vmatpush1.bf16.msra.mxu0 0
  %6323 = vmatprep.subr.bf16.mxu0 0
  %6324 = vmatpush1.bf16.msra.mxu0 0
  %6325 = vmatprep.subr.bf16.mxu0 0
  %6326 = vmatpush1.bf16.msra.mxu0 0
  %6327 = vmatprep.subr.bf16.mxu0 0
  %6328 = vmatpush1.bf16.msra.mxu0 0
  %6329 = vmatprep.subr.bf16.mxu0 0
  %6330 = vmatpush1.bf16.msra.mxu0 0
  %6331 = vmatprep.subr.bf16.mxu0 0
  %6332 = vmatpush1.bf16.msra.mxu0 0
  %6333 = vmatprep.mubr.bf16.mxu0 0
  %6334 = vmatmul.mubr.bf16.gmra.mrb[0].mxu0 %v6299
  %v6335 = vpop.f32.mrb[0].mxu0
  %v6336 = vadd.f32 0.0, %v6335
  %v6337 = vpop.f32.mrb[0].mxu0
  %v6338 = vpop.f32.mrb[0].mxu0
  %v6339 = vpop.f32.mrb[0].mxu0
  %6340 = vdwg.mxu0
  %v6341 = vadd.f32 %v6286, %v6336
  %v6342 = vld [vmem:[#allocation8 + $0x12] sm:$0x3]
  %s6343 = scalar_lea.vmem %s15, 24
  %v6344 = vld [vmem:[%s6343] sm:$0xf]
  %v6345 = vld [vmem:[%s6343 + $0x4] sm:$0xf]
  %v6346 = vpack.c.bf16 %v6342, %v6342
  %v6349 = vunpack.c.l.b16 %v6344
  %v6350 = vunpack.c.l.b16 %v6345
  %v6351 = vpack.c.b16 %v6350, %v6349
  %v6354 = vsel %vm276, %v6346, 0
  %6356 = vmatprep.subr.bf16.mxu0 0
  %6357 = vmatpush1.bf16.msra.mxu0 %v6351
  %6358 = vmatprep.subr.bf16.mxu0 0
  %6359 = vmatpush1.bf16.msra.mxu0 0
  %6360 = vmatprep.subr.bf16.mxu0 0
  %6361 = vmatpush1.bf16.msra.mxu0 0
  %6362 = vmatprep.subr.bf16.mxu0 0
  %6363 = vmatpush1.bf16.msra.mxu0 0
  %6364 = vmatprep.subr.bf16.mxu0 0
  %6365 = vmatpush1.bf16.msra.mxu0 0
  %6366 = vmatprep.subr.bf16.mxu0 0
  %6367 = vmatpush1.bf16.msra.mxu0 0
  %6368 = vmatprep.subr.bf16.mxu0 0
  %6369 = vmatpush1.bf16.msra.mxu0 0
  %6370 = vmatprep.subr.bf16.mxu0 0
  %6371 = vmatpush1.bf16.msra.mxu0 0
  %6372 = vmatprep.subr.bf16.mxu0 0
  %6373 = vmatpush1.bf16.msra.mxu0 0
  %6374 = vmatprep.subr.bf16.mxu0 0
  %6375 = vmatpush1.bf16.msra.mxu0 0
  %6376 = vmatprep.subr.bf16.mxu0 0
  %6377 = vmatpush1.bf16.msra.mxu0 0
  %6378 = vmatprep.subr.bf16.mxu0 0
  %6379 = vmatpush1.bf16.msra.mxu0 0
  %6380 = vmatprep.subr.bf16.mxu0 0
  %6381 = vmatpush1.bf16.msra.mxu0 0
  %6382 = vmatprep.subr.bf16.mxu0 0
  %6383 = vmatpush1.bf16.msra.mxu0 0
  %6384 = vmatprep.subr.bf16.mxu0 0
  %6385 = vmatpush1.bf16.msra.mxu0 0
  %6386 = vmatprep.subr.bf16.mxu0 0
  %6387 = vmatpush1.bf16.msra.mxu0 0
  %6388 = vmatprep.mubr.bf16.mxu0 0
  %6389 = vmatmul.mubr.bf16.gmra.mrb[0].mxu0 %v6354
  %v6390 = vpop.f32.mrb[0].mxu0
  %v6391 = vadd.f32 0.0, %v6390
  %v6392 = vpop.f32.mrb[0].mxu0
  %v6393 = vpop.f32.mrb[0].mxu0
  %v6394 = vpop.f32.mrb[0].mxu0
  %6395 = vdwg.mxu0
  %v6396 = vadd.f32 %v6341, %v6391
  %v6397 = vld [vmem:[#allocation9 + $0x12] sm:$0x3]
  %s6398 = scalar_lea.vmem %s16, 24
  %v6399 = vld [vmem:[%s6398] sm:$0xf]
  %v6400 = vld [vmem:[%s6398 + $0x4] sm:$0xf]
  %v6401 = vpack.c.bf16 %v6397, %v6397
  %v6404 = vunpack.c.l.b16 %v6399
  %v6405 = vunpack.c.l.b16 %v6400
  %v6406 = vpack.c.b16 %v6405, %v6404
  %v6409 = vsel %vm276, %v6401, 0
  %6411 = vmatprep.subr.bf16.mxu0 0
  %6412 = vmatpush1.bf16.msra.mxu0 %v6406
  %6413 = vmatprep.subr.bf16.mxu0 0
  %6414 = vmatpush1.bf16.msra.mxu0 0
  %6415 = vmatprep.subr.bf16.mxu0 0
  %6416 = vmatpush1.bf16.msra.mxu0 0
  %6417 = vmatprep.subr.bf16.mxu0 0
  %6418 = vmatpush1.bf16.msra.mxu0 0
  %6419 = vmatprep.subr.bf16.mxu0 0
  %6420 = vmatpush1.bf16.msra.mxu0 0
  %6421 = vmatprep.subr.bf16.mxu0 0
  %6422 = vmatpush1.bf16.msra.mxu0 0
  %6423 = vmatprep.subr.bf16.mxu0 0
  %6424 = vmatpush1.bf16.msra.mxu0 0
  %6425 = vmatprep.subr.bf16.mxu0 0
  %6426 = vmatpush1.bf16.msra.mxu0 0
  %6427 = vmatprep.subr.bf16.mxu0 0
  %6428 = vmatpush1.bf16.msra.mxu0 0
  %6429 = vmatprep.subr.bf16.mxu0 0
  %6430 = vmatpush1.bf16.msra.mxu0 0
  %6431 = vmatprep.subr.bf16.mxu0 0
  %6432 = vmatpush1.bf16.msra.mxu0 0
  %6433 = vmatprep.subr.bf16.mxu0 0
  %6434 = vmatpush1.bf16.msra.mxu0 0
  %6435 = vmatprep.subr.bf16.mxu0 0
  %6436 = vmatpush1.bf16.msra.mxu0 0
  %6437 = vmatprep.subr.bf16.mxu0 0
  %6438 = vmatpush1.bf16.msra.mxu0 0
  %6439 = vmatprep.subr.bf16.mxu0 0
  %6440 = vmatpush1.bf16.msra.mxu0 0
  %6441 = vmatprep.subr.bf16.mxu0 0
  %6442 = vmatpush1.bf16.msra.mxu0 0
  %6443 = vmatprep.mubr.bf16.mxu0 0
  %6444 = vmatmul.mubr.bf16.gmra.mrb[0].mxu0 %v6409
  %v6445 = vpop.f32.mrb[0].mxu0
  %v6446 = vadd.f32 0.0, %v6445
  %v6447 = vpop.f32.mrb[0].mxu0
  %v6448 = vpop.f32.mrb[0].mxu0
  %v6449 = vpop.f32.mrb[0].mxu0
  %6450 = vdwg.mxu0
  %v6451 = vadd.f32 %v6396, %v6446
  %v6452 = vld [vmem:[#allocation8 + $0x14] sm:$0x3]
  %s6453 = scalar_lea.vmem %s15, 32
  %v6454 = vld [vmem:[%s6453] sm:$0xf]
  %v6455 = vld [vmem:[%s6453 + $0x4] sm:$0xf]
  %v6456 = vpack.c.bf16 %v6452, %v6452
  %v6459 = vunpack.c.l.b16 %v6454
  %v6460 = vunpack.c.l.b16 %v6455
  %v6461 = vpack.c.b16 %v6460, %v6459
  %v6464 = vsel %vm276, %v6456, 0
  %6466 = vmatprep.subr.bf16.mxu0 0
  %6467 = vmatpush1.bf16.msra.mxu0 %v6461
  %6468 = vmatprep.subr.bf16.mxu0 0
  %6469 = vmatpush1.bf16.msra.mxu0 0
  %6470 = vmatprep.subr.bf16.mxu0 0
  %6471 = vmatpush1.bf16.msra.mxu0 0
  %6472 = vmatprep.subr.bf16.mxu0 0
  %6473 = vmatpush1.bf16.msra.mxu0 0
  %6474 = vmatprep.subr.bf16.mxu0 0
  %6475 = vmatpush1.bf16.msra.mxu0 0
  %6476 = vmatprep.subr.bf16.mxu0 0
  %6477 = vmatpush1.bf16.msra.mxu0 0
  %6478 = vmatprep.subr.bf16.mxu0 0
  %6479 = vmatpush1.bf16.msra.mxu0 0
  %6480 = vmatprep.subr.bf16.mxu0 0
  %6481 = vmatpush1.bf16.msra.mxu0 0
  %6482 = vmatprep.subr.bf16.mxu0 0
  %6483 = vmatpush1.bf16.msra.mxu0 0
  %6484 = vmatprep.subr.bf16.mxu0 0
  %6485 = vmatpush1.bf16.msra.mxu0 0
  %6486 = vmatprep.subr.bf16.mxu0 0
  %6487 = vmatpush1.bf16.msra.mxu0 0
  %6488 = vmatprep.subr.bf16.mxu0 0
  %6489 = vmatpush1.bf16.msra.mxu0 0
  %6490 = vmatprep.subr.bf16.mxu0 0
  %6491 = vmatpush1.bf16.msra.mxu0 0
  %6492 = vmatprep.subr.bf16.mxu0 0
  %6493 = vmatpush1.bf16.msra.mxu0 0
  %6494 = vmatprep.subr.bf16.mxu0 0
  %6495 = vmatpush1.bf16.msra.mxu0 0
  %6496 = vmatprep.subr.bf16.mxu0 0
  %6497 = vmatpush1.bf16.msra.mxu0 0
  %6498 = vmatprep.mubr.bf16.mxu0 0
  %6499 = vmatmul.mubr.bf16.gmra.mrb[0].mxu0 %v6464
  %v6500 = vpop.f32.mrb[0].mxu0
  %v6501 = vadd.f32 0.0, %v6500
  %v6502 = vpop.f32.mrb[0].mxu0
  %v6503 = vpop.f32.mrb[0].mxu0
  %v6504 = vpop.f32.mrb[0].mxu0
  %6505 = vdwg.mxu0
  %v6506 = vadd.f32 %v6451, %v6501
  %v6507 = vld [vmem:[#allocation9 + $0x14] sm:$0x3]
  %s6508 = scalar_lea.vmem %s16, 32
  %v6509 = vld [vmem:[%s6508] sm:$0xf]
  %v6510 = vld [vmem:[%s6508 + $0x4] sm:$0xf]
  %v6511 = vpack.c.bf16 %v6507, %v6507
  %v6514 = vunpack.c.l.b16 %v6509
  %v6515 = vunpack.c.l.b16 %v6510
  %v6516 = vpack.c.b16 %v6515, %v6514
  %v6519 = vsel %vm276, %v6511, 0
  %6521 = vmatprep.subr.bf16.mxu0 0
  %6522 = vmatpush1.bf16.msra.mxu0 %v6516
  %6523 = vmatprep.subr.bf16.mxu0 0
  %6524 = vmatpush1.bf16.msra.mxu0 0
  %6525 = vmatprep.subr.bf16.mxu0 0
  %6526 = vmatpush1.bf16.msra.mxu0 0
  %6527 = vmatprep.subr.bf16.mxu0 0
  %6528 = vmatpush1.bf16.msra.mxu0 0
  %6529 = vmatprep.subr.bf16.mxu0 0
  %6530 = vmatpush1.bf16.msra.mxu0 0
  %6531 = vmatprep.subr.bf16.mxu0 0
  %6532 = vmatpush1.bf16.msra.mxu0 0
  %6533 = vmatprep.subr.bf16.mxu0 0
  %6534 = vmatpush1.bf16.msra.mxu0 0
  %6535 = vmatprep.subr.bf16.mxu0 0
  %6536 = vmatpush1.bf16.msra.mxu0 0
  %6537 = vmatprep.subr.bf16.mxu0 0
  %6538 = vmatpush1.bf16.msra.mxu0 0
  %6539 = vmatprep.subr.bf16.mxu0 0
  %6540 = vmatpush1.bf16.msra.mxu0 0
  %6541 = vmatprep.subr.bf16.mxu0 0
  %6542 = vmatpush1.bf16.msra.mxu0 0
  %6543 = vmatprep.subr.bf16.mxu0 0
  %6544 = vmatpush1.bf16.msra.mxu0 0
  %6545 = vmatprep.subr.bf16.mxu0 0
  %6546 = vmatpush1.bf16.msra.mxu0 0
  %6547 = vmatprep.subr.bf16.mxu0 0
  %6548 = vmatpush1.bf16.msra.mxu0 0
  %6549 = vmatprep.subr.bf16.mxu0 0
  %6550 = vmatpush1.bf16.msra.mxu0 0
  %6551 = vmatprep.subr.bf16.mxu0 0
  %6552 = vmatpush1.bf16.msra.mxu0 0
  %6553 = vmatprep.mubr.bf16.mxu0 0
  %6554 = vmatmul.mubr.bf16.gmra.mrb[0].mxu0 %v6519
  %v6555 = vpop.f32.mrb[0].mxu0
  %v6556 = vadd.f32 0.0, %v6555
  %v6557 = vpop.f32.mrb[0].mxu0
  %v6558 = vpop.f32.mrb[0].mxu0
  %v6559 = vpop.f32.mrb[0].mxu0
  %6560 = vdwg.mxu0
  %v6561 = vadd.f32 %v6506, %v6556
  %v6562 = vld [vmem:[%s17] sm:$0x1]
  %v6564 = vlaneseq
  %v6565 = vshrl.u32 %v6564, 7
  %v6566 = vsub.s32 0, %v6565
  %v6567 = vrot.slane %v6562, %v6566
  %v6569 = vadd.f32 %v6561, %v6567
  %v6570 = vmax.f32 %v6569, 0.0
  %v6571 = vld [vmem:[%s18] sm:$0xf]
  %v6572 = vld [vmem:[%s18 + $0x4] sm:$0xf]
  %v6573 = vld [vmem:[%s18 + $0x8] sm:$0xf]
  %v6574 = vld [vmem:[%s18 + $0xc] sm:$0xf]
  %v6575 = vpack.c.bf16 %v6570, %v6570
  %v6576 = vld [vmem:[#allocation10] sm:$0x1]
  %v6578 = vlaneseq
  %v6579 = vshrl.u32 %v6578, 7
  %v6580 = vsub.s32 0, %v6579
  %v6581 = vrot.slane %v6576, %v6580
  %v6587 = vunpack.c.l.b16 %v6571
  %v6588 = vunpack.c.l.b16 %v6572
  %v6589 = vunpack.c.l.b16 %v6573
  %v6590 = vunpack.c.l.b16 %v6574
  %v6591 = vpack.c.b16 %v6588, %v6587
  %v6592 = vpack.c.b16 %v6590, %v6589
  %v6596 = vsel %vm296, %v6575, 0
  %6598 = vmatprep.subr.bf16.mxu0 0
  %6599 = vmatpush1.bf16.msra.mxu0 %v6591
  %6600 = vmatprep.subr.bf16.mxu0 0
  %6601 = vmatpush1.bf16.msra.mxu0 %v6592
  %6602 = vmatprep.subr.bf16.mxu0 0
  %6603 = vmatpush1.bf16.msra.mxu0 0
  %6604 = vmatprep.subr.bf16.mxu0 0
  %6605 = vmatpush1.bf16.msra.mxu0 0
  %6606 = vmatprep.subr.bf16.mxu0 0
  %6607 = vmatpush1.bf16.msra.mxu0 0
  %6608 = vmatprep.subr.bf16.mxu0 0
  %6609 = vmatpush1.bf16.msra.mxu0 0
  %6610 = vmatprep.subr.bf16.mxu0 0
  %6611 = vmatpush1.bf16.msra.mxu0 0
  %6612 = vmatprep.subr.bf16.mxu0 0
  %6613 = vmatpush1.bf16.msra.mxu0 0
  %6614 = vmatprep.subr.bf16.mxu0 0
  %6615 = vmatpush1.bf16.msra.mxu0 0
  %6616 = vmatprep.subr.bf16.mxu0 0
  %6617 = vmatpush1.bf16.msra.mxu0 0
  %6618 = vmatprep.subr.bf16.mxu0 0
  %6619 = vmatpush1.bf16.msra.mxu0 0
  %6620 = vmatprep.subr.bf16.mxu0 0
  %6621 = vmatpush1.bf16.msra.mxu0 0
  %6622 = vmatprep.subr.bf16.mxu0 0
  %6623 = vmatpush1.bf16.msra.mxu0 0
  %6624 = vmatprep.subr.bf16.mxu0 0
  %6625 = vmatpush1.bf16.msra.mxu0 0
  %6626 = vmatprep.subr.bf16.mxu0 0
  %6627 = vmatpush1.bf16.msra.mxu0 0
  %6628 = vmatprep.subr.bf16.mxu0 0
  %6629 = vmatpush1.bf16.msra.mxu0 0
  %6630 = vmatprep.mubr.bf16.mxu0 0
  %6631 = vmatmul.mubr.bf16.gmra.mrb[0].mxu0 %v6596
  %v6632 = vpop.f32.mrb[0].mxu0
  %v6633 = vadd.f32 %v6581, %v6632
  %v6634 = vpop.f32.mrb[0].mxu0
  %v6635 = vpop.f32.mrb[0].mxu0
  %v6636 = vpop.f32.mrb[0].mxu0
  %6637 = vdwg.mxu0
  %v6638 = vxor.u32 %v6633, 2147483648
  %v6639 = vmul.f32 %v6638, 1.442695
  %v6640 = vpow.pop %v6639
  %v6641 = vadd.f32 %v6640, 1.0
  %v6642 = vrcp.pop %v6641
  %v6643 = vmul.f32 1.0, %v6642
  %vm6644 = vcmask 1024
  %6645 = vst.msk [vmem:[%s20] sm:$0x3] %vm6644, %v6643
  // Predicated region
  $region82: #{cnn1_rnn_ffnn_forward.1} parent=0 // pred_check
    _
  $region83: #{cnn1_rnn_ffnn_forward.1} parent=0 // pred_check_branch
    %6647 = sbr.rel (0) target = $region85
  $region84: #{cnn1_rnn_ffnn_forward.1} parent=0 // pred_region
    _
  $region85: #{cnn1_rnn_ffnn_forward.1} parent=0 // pred_fallthru
    _
  // Predicated region
  $region86: #{cnn1_rnn_ffnn_forward.1} parent=0 // pred_check
    _
  $region87: #{cnn1_rnn_ffnn_forward.1} parent=0 // pred_check_branch
    %6649 = sbr.rel (0) target = $region89
  $region88: #{cnn1_rnn_ffnn_forward.1} parent=0 // pred_region
    _
  $region89: #{cnn1_rnn_ffnn_forward.1} parent=0 // pred_fallthru
    _

</llo_original>
